<compile_context>
chip_gen: v7x
topology: tpu7x:2x2x1
jax: 0.10.0
libtpu: 0.0.40
codegen_flags: <defaults>
</compile_context>

<pallas_src>
import functools

import jax
import jax.numpy as jnp
from jax.experimental import pallas as pl
from jax.experimental.pallas import tpu as pltpu


# ----------------------------- helpers -----------------------------

def _round_up(x, m):
    return ((x + m - 1) // m) * m


@functools.lru_cache(maxsize=None)
def _vmem_budget():
    """Generation-aware scoped-VMEM cap (leave headroom below physical VMEM)."""
    try:
        info = pltpu.get_tpu_info()
        cap = int(getattr(info, "vmem_capacity_bytes", 64 * 1024 * 1024))
        return int(min(cap * 3 // 4, 100 * 1024 * 1024))
    except Exception:
        return 48 * 1024 * 1024          # safe on v5e/v6e (128 MiB) and v7x (64 MiB)


def _cparams(dims, block_bytes):
    limit = int(min(max(16 * 1024 * 1024, 2 * block_bytes + (4 << 20)),
                    _vmem_budget()))
    return pltpu.CompilerParams(dimension_semantics=dims, vmem_limit_bytes=limit)


def _ln(x, g, b, eps=1e-5):
    mu = jnp.mean(x, axis=-1, keepdims=True)
    var = jnp.mean(jnp.square(x - mu), axis=-1, keepdims=True)
    return (x - mu) * jax.lax.rsqrt(var + eps) * g + b


# ----------------------------- fused MLP kernel -----------------------------

def _mlp_kernel(*refs, acts, pre_ln, has_resid, post_ln):
    o_ref = refs[-1]
    idx = 0
    y = refs[idx][...].astype(jnp.float32); idx += 1            # [TM, K]
    if pre_ln:
        g = refs[idx][...]; bb = refs[idx + 1][...]; idx += 2
        y = _ln(y, g, bb)
    resid = None
    if has_resid:
        resid = refs[idx][...].astype(jnp.float32); idx += 1
    for act in acts:
        w = refs[idx][...]; bb = refs[idx + 1][...]; idx += 2    # bf16 weights
        y = jnp.dot(y.astype(w.dtype), w,
                    preferred_element_type=jnp.float32) + bb.astype(jnp.float32)
        if act == "relu":
            y = jnp.maximum(y, 0.0)
        elif act == "sigmoid":
            y = jax.nn.sigmoid(y)
    if has_resid:
        y = y + resid
    if post_ln:
        g = refs[idx][...]; bb = refs[idx + 1][...]; idx += 2
        y = _ln(y, g, bb)
    o_ref[...] = y.astype(o_ref.dtype)


def mlp_call(x, layers, acts, *, pre_ln=None, residual=None, post_ln=None,
             out_dtype=jnp.float32, tile_m=1024):
    """Fused [optional LN] -> (linear+act)* -> [optional +residual, LN].

    x: [..., K] (any float dtype, upcast in-kernel); layers: list of
    {"w": [K_i, N_i] bf16, "b": [1, N_i] f32}.  Rows are tiled with a
    'parallel' grid; weights stay VMEM-resident; ragged last block handled by
    Pallas (no XLA-side pad/slice passes).
    """
    assert len(layers) == len(acts)
    lead = x.shape[:-1]
    K = x.shape[-1]
    n_out = layers[-1]["w"].shape[-1]

    x2 = x.reshape(-1, K)
    M = x2.shape[0]
    tm = max(8, min(tile_m, _round_up(M, 8)))
    grid = (pl.cdiv(M, tm),)

    inputs = [x2]
    in_specs = [pl.BlockSpec((tm, K), lambda i: (i, 0))]
    nbytes = tm * K * x2.dtype.itemsize

    if pre_ln is not None:
        inputs += [pre_ln["g"], pre_ln["b"]]
        in_specs += [pl.BlockSpec((1, K), lambda i: (0, 0)),
                     pl.BlockSpec((1, K), lambda i: (0, 0))]
        nbytes += 2 * K * 4
    if residual is not None:
        r2 = residual.reshape(-1, n_out)
        inputs.append(r2)
        in_specs.append(pl.BlockSpec((tm, n_out), lambda i: (i, 0)))
        nbytes += tm * n_out * r2.dtype.itemsize
    for layer in layers:
        w, b = layer["w"], layer["b"]
        inputs += [w, b]
        in_specs += [pl.BlockSpec(w.shape, lambda i: (0, 0)),
                     pl.BlockSpec(b.shape, lambda i: (0, 0))]
        nbytes += w.size * w.dtype.itemsize + b.size * 4
    if post_ln is not None:
        inputs += [post_ln["g"], post_ln["b"]]
        in_specs += [pl.BlockSpec((1, n_out), lambda i: (0, 0)),
                     pl.BlockSpec((1, n_out), lambda i: (0, 0))]
        nbytes += 2 * n_out * 4
    nbytes += tm * n_out * jnp.dtype(out_dtype).itemsize

    out = pl.pallas_call(
        functools.partial(_mlp_kernel, acts=tuple(acts),
                          pre_ln=pre_ln is not None,
                          has_resid=residual is not None,
                          post_ln=post_ln is not None),
        out_shape=jax.ShapeDtypeStruct((M, n_out), out_dtype),
        grid=grid,
        in_specs=in_specs,
        out_specs=pl.BlockSpec((tm, n_out), lambda i: (i, 0)),
        compiler_params=_cparams(("parallel",), nbytes),
    )(*inputs)
    return out.reshape(*lead, n_out)


# ----------------------------- mask-logits kernel -----------------------------

def _mask_kernel(e_ref, f_ref, o_ref):
    o_ref[0] = jnp.einsum("qd,nd->qn", e_ref[0], f_ref[0],
                          preferred_element_type=jnp.float32)


def mask_matmul(point_feat, mask_embed, tile_n=None):
    """point_feat: [B,N,D] bf16, mask_embed: [B,Q,D] bf16 -> [B,Q,N] f32.

    Lane-dense output (N in the lane dim); mask_embed resident across point
    tiles; ragged last point tile handled by Pallas (no pad / slice passes).
    """
    B, N, D = point_feat.shape
    Q = mask_embed.shape[1]
    if tile_n is None:
        tile_n = 8192 if _vmem_budget() >= 80 * 1024 * 1024 else 4096
    tn = N if N <= tile_n else tile_n
    grid = (B, pl.cdiv(N, tn))
    nbytes = Q * D * 2 + tn * D * 2 + Q * tn * 4

    return pl.pallas_call(
        _mask_kernel,
        out_shape=jax.ShapeDtypeStruct((B, Q, N), jnp.float32),
        grid=grid,
        in_specs=[
            pl.BlockSpec((1, Q, D), lambda b, n: (b, 0, 0)),
            pl.BlockSpec((1, tn, D), lambda b, n: (b, n, 0)),
        ],
        out_specs=pl.BlockSpec((1, Q, tn), lambda b, n: (b, 0, n)),
        compiler_params=_cparams(("parallel", "parallel"), nbytes),
    )(mask_embed, point_feat)


# ------------------- fused lin_squeeze + K/V projection -------------------

def _kv_kernel(f_ref, pos_ref, ws_ref, bs_ref, wk_ref, bk_ref, wv_ref, bv_ref,
               k_out, v_out):
    f = f_ref[...].astype(jnp.bfloat16)                               # [TM, C]
    src = jnp.dot(f, ws_ref[...],
                  preferred_element_type=jnp.float32) + bs_ref[...]   # [TM, D]
    kin = (src + pos_ref[...].astype(jnp.float32)).astype(jnp.bfloat16)
    k = jnp.dot(kin, wk_ref[...],
                preferred_element_type=jnp.float32) + bk_ref[...]
    v = jnp.dot(src.astype(jnp.bfloat16), wv_ref[...],
                preferred_element_type=jnp.float32) + bv_ref[...]
    k_out[...] = k.astype(k_out.dtype)
    v_out[...] = v.astype(v_out.dtype)


def kv_project(feat, pos_enc, squeeze_p, k_p, v_p, *, tile_m=2048):
    """feat: [B,S,C], pos_enc: [B,S,D] -> (k, v): [B,S,D] bf16 each."""
    B, S, C = feat.shape
    D = squeeze_p["w"].shape[-1]
    M = B * S
    f2 = feat.reshape(M, C)
    p2 = pos_enc.reshape(M, D)
    tm = max(8, min(tile_m, _round_up(M, 8)))
    grid = (pl.cdiv(M, tm),)

    params = [squeeze_p["w"], squeeze_p["b"], k_p["w"], k_p["b"],
              v_p["w"], v_p["b"]]
    nbytes = tm * (C * f2.dtype.itemsize + D * p2.dtype.itemsize + 4 * D)
    nbytes += sum(p.size * p.dtype.itemsize for p in params)

    k2, v2 = pl.pallas_call(
        _kv_kernel,
        out_shape=(jax.ShapeDtypeStruct((M, D), jnp.bfloat16),
                   jax.ShapeDtypeStruct((M, D), jnp.bfloat16)),
        grid=grid,
        in_specs=[pl.BlockSpec((tm, C), lambda i: (i, 0)),
                  pl.BlockSpec((tm, D), lambda i: (i, 0))]
                 + [pl.BlockSpec(p.shape, lambda i: (0, 0)) for p in params],
        out_specs=(pl.BlockSpec((tm, D), lambda i: (i, 0)),
                   pl.BlockSpec((tm, D), lambda i: (i, 0))),
        compiler_params=_cparams(("parallel",), nbytes),
    )(f2, p2, *params)
    return k2.reshape(B, S, D), v2.reshape(B, S, D)


# -------------------- flash-tiled masked cross-attention --------------------

def _cross_attn_kernel(q_ref, qp_ref, wq_ref, bq_ref, k_ref, v_ref, m_ref,
                       o_ref, m_sc, l_sc, acc_sc, *, num_heads, scale):
    si = pl.program_id(1)

    @pl.when(si == 0)
    def _():
        m_sc[...] = jnp.full_like(m_sc, -1e30)
        l_sc[...] = jnp.zeros_like(l_sc)
        acc_sc[...] = jnp.zeros_like(acc_sc)

    # q projection (+pos, +bias, *scale) recomputed per S tile -- Q*D*D flops,
    # negligible vs the Q*tS*D attention work, and saves one HBM round trip.
    qin = q_ref[0].astype(jnp.float32) + qp_ref[0].astype(jnp.float32)   # [Q, D]
    q = (jnp.dot(qin.astype(jnp.bfloat16), wq_ref[...],
                 preferred_element_type=jnp.float32)
         + bq_ref[...].astype(jnp.float32)) * scale
    q = q.astype(jnp.bfloat16)

    k = k_ref[0]                                    # [tS, D] bf16
    v = v_ref[0]                                    # [tS, D] bf16
    masked = m_ref[0] != 0                          # [Q, tS] (1 = not allowed)
    D = q.shape[-1]
    dh = D // num_heads

    for h in range(num_heads):
        sl = slice(h * dh, (h + 1) * dh)
        s = jnp.einsum("qd,sd->qs", q[:, sl], k[:, sl],
                       preferred_element_type=jnp.float32)           # [Q, tS]
        m_prev = m_sc[h]                                              # [Q, 1]
        m_new = jnp.maximum(m_prev, jnp.max(s, axis=-1, keepdims=True))
        alpha = jnp.exp(m_prev - m_new)
        p = jnp.where(masked, 0.0, jnp.exp(s - m_new))
        l_sc[h] = alpha * l_sc[h] + jnp.sum(p, axis=-1, keepdims=True)
        acc_sc[h] = alpha * acc_sc[h] + jnp.einsum(
            "qs,sd->qd", p.astype(jnp.bfloat16), v[:, sl],
            preferred_element_type=jnp.float32)
        m_sc[h] = m_new

    @pl.when(si == pl.num_programs(1) - 1)
    def _():
        parts = [acc_sc[h] * pl.reciprocal(l_sc[h], approx=True)
                 for h in range(num_heads)]
        o_ref[0] = jnp.concatenate(parts, axis=-1).astype(o_ref.dtype)


def cross_attention_flash(queries, query_pos, q_p, k_mem, v_mem, mask_i8,
                          num_heads, *, tile_s=2048):
    """queries/query_pos: [B,Q,D] f32, k/v: [B,S,D] bf16, mask_i8: [B,Q,S] int8
    (1 = query may NOT attend).  Returns merged-head output [B,Q,D] bf16."""
    B, Q, D = queries.shape
    S = k_mem.shape[1]
    dh = D // num_heads
    scale = 1.0 / (dh ** 0.5)

    if S <= tile_s:
        ts, Sp = S, S
    else:
        ts = tile_s
        Sp = _round_up(S, ts)
        if Sp != S:
            pad = Sp - S
            k_mem = jnp.pad(k_mem, ((0, 0), (0, pad), (0, 0)))
            v_mem = jnp.pad(v_mem, ((0, 0), (0, pad), (0, 0)))
            mask_i8 = jnp.pad(mask_i8, ((0, 0), (0, 0), (0, pad)),
                              constant_values=jnp.int8(1))
    grid = (B, Sp // ts)
    nbytes = (2 * Q * D * 4 + D * D * 2 + D * 4
              + 2 * ts * D * 2 + Q * ts + Q * D * 2)

    return pl.pallas_call(
        functools.partial(_cross_attn_kernel, num_heads=num_heads, scale=scale),
        out_shape=jax.ShapeDtypeStruct((B, Q, D), jnp.bfloat16),
        grid=grid,
        in_specs=[
            pl.BlockSpec((1, Q, D), lambda b, s: (b, 0, 0)),     # queries
            pl.BlockSpec((1, Q, D), lambda b, s: (b, 0, 0)),     # query_pos
            pl.BlockSpec(q_p["w"].shape, lambda b, s: (0, 0)),   # Wq (resident)
            pl.BlockSpec(q_p["b"].shape, lambda b, s: (0, 0)),   # bq (resident)
            pl.BlockSpec((1, ts, D), lambda b, s: (b, s, 0)),    # k tile
            pl.BlockSpec((1, ts, D), lambda b, s: (b, s, 0)),    # v tile
            pl.BlockSpec((1, Q, ts), lambda b, s: (b, 0, s)),    # mask tile
        ],
        out_specs=pl.BlockSpec((1, Q, D), lambda b, s: (b, 0, 0)),
        scratch_shapes=[pltpu.VMEM((num_heads, Q, 1), jnp.float32),
                        pltpu.VMEM((num_heads, Q, 1), jnp.float32),
                        pltpu.VMEM((num_heads, Q, dh), jnp.float32)],
        compiler_params=_cparams(("parallel", "arbitrary"), nbytes),
    )(queries, query_pos, q_p["w"], q_p["b"], k_mem, v_mem, mask_i8)


# ------------- fused query update (cross-out-proj -> self-attn -> FFN) -------------

def _query_update_kernel(att_ref, q_ref, qp_ref,
                         woc_ref, boc_ref, gc_ref, bc_ref,
                         wqk_ref, bqk_ref, wv_ref, bv_ref,
                         wos_ref, bos_ref, gs_ref, bs_ref,
                         w1_ref, b1_ref, w2_ref, b2_ref, gf_ref, bf_ref,
                         o_ref, *, num_heads):
    attn = att_ref[0]                                       # [Q, D] bf16
    queries = q_ref[0].astype(jnp.float32)                  # [Q, D]
    qpos = qp_ref[0].astype(jnp.float32)
    D = queries.shape[-1]
    dh = D // num_heads
    scale = 1.0 / (dh ** 0.5)

    # cross-attention out-projection + residual + LayerNorm (post-norm)
    x = jnp.dot(attn, woc_ref[...],
                preferred_element_type=jnp.float32) + boc_ref[...]
    q_ca = _ln(queries + x, gc_ref[...], bc_ref[...])

    # self-attention: q/k from (q_ca + pos), v from q_ca; QK fused into one matmul
    t = (q_ca + qpos).astype(jnp.bfloat16)
    qk = jnp.dot(t, wqk_ref[...],
                 preferred_element_type=jnp.float32) + bqk_ref[...]   # [Q, 2D]
    v = jnp.dot(q_ca.astype(jnp.bfloat16), wv_ref[...],
                preferred_element_type=jnp.float32) + bv_ref[...]     # [Q, D]
    ql = (qk[:, :D] * scale).astype(jnp.bfloat16)
    kl = qk[:, D:].astype(jnp.bfloat16)
    vb = v.astype(jnp.bfloat16)

    heads = []
    for h in range(num_heads):
        sl = slice(h * dh, (h + 1) * dh)
        s = jnp.einsum("qd,kd->qk", ql[:, sl], kl[:, sl],
                       preferred_element_type=jnp.float32)            # [Q, Q]
        s = s - jnp.max(s, axis=-1, keepdims=True)
        p = jnp.exp(s)
        p = p * pl.reciprocal(jnp.sum(p, axis=-1, keepdims=True), approx=True)
        heads.append(jnp.einsum("qk,kd->qd", p.astype(jnp.bfloat16), vb[:, sl],
                                preferred_element_type=jnp.float32))
    sa = jnp.concatenate(heads, axis=-1)                               # [Q, D]

    x2 = jnp.dot(sa.astype(jnp.bfloat16), wos_ref[...],
                 preferred_element_type=jnp.float32) + bos_ref[...]
    q_sa = _ln(q_ca + x2, gs_ref[...], bs_ref[...])

    # FFN + residual + LayerNorm (post-norm)
    h1 = jnp.dot(q_sa.astype(jnp.bfloat16), w1_ref[...],
                 preferred_element_type=jnp.float32) + b1_ref[...]
    h1 = jnp.maximum(h1, 0.0)
    h2 = jnp.dot(h1.astype(jnp.bfloat16), w2_ref[...],
                 preferred_element_type=jnp.float32) + b2_ref[...]
    o_ref[0] = _ln(q_sa + h2, gf_ref[...], bf_ref[...]).astype(o_ref.dtype)


def query_update(attn_out, queries, query_pos, cross_p, self_p, ffn_p, num_heads):
    """attn_out: [B,Q,D] bf16 (cross-attn, heads merged, pre out-proj);
    queries/query_pos: [B,Q,D] f32.  Returns new queries [B,Q,D] f32."""
    B, Q, D = queries.shape
    at_s = self_p["attn"]
    wqk = jnp.concatenate([at_s["q"]["w"], at_s["k"]["w"]], axis=1)
    bqk = jnp.concatenate([at_s["q"]["b"], at_s["k"]["b"]], axis=1)
    params = [
        cross_p["attn"]["o"]["w"], cross_p["attn"]["o"]["b"],
        cross_p["norm"]["g"], cross_p["norm"]["b"],
        wqk, bqk, at_s["v"]["w"], at_s["v"]["b"],
        at_s["o"]["w"], at_s["o"]["b"],
        self_p["norm"]["g"], self_p["norm"]["b"],
        ffn_p["lin1"]["w"], ffn_p["lin1"]["b"],
        ffn_p["lin2"]["w"], ffn_p["lin2"]["b"],
        ffn_p["norm"]["g"], ffn_p["norm"]["b"],
    ]
    nbytes = sum(p.size * p.dtype.itemsize for p in params) + 4 * Q * D * 4
    in_specs = [pl.BlockSpec((1, Q, D), lambda b: (b, 0, 0))] * 3 \
             + [pl.BlockSpec(p.shape, lambda b: (0, 0)) for p in params]

    return pl.pallas_call(
        functools.partial(_query_update_kernel, num_heads=num_heads),
        out_shape=jax.ShapeDtypeStruct((B, Q, D), jnp.float32),
        grid=(B,),
        in_specs=in_specs,
        out_specs=pl.BlockSpec((1, Q, D), lambda b: (b, 0, 0)),
        compiler_params=_cparams(("parallel",), nbytes),
    )(attn_out, queries, query_pos, *params)


# ----------------------------- plain-JAX glue -----------------------------

def sine_pos_enc(coords, mins, maxs, d_pos, temperature=10000.0):
    """coords: [B,N,d_in], mins/maxs: [B,d_in] -> [B,N,d_pos]."""
    B, N, d_in = coords.shape
    normed = (coords - mins[:, None, :]) / jnp.maximum(
        maxs[:, None, :] - mins[:, None, :], 1e-6)
    base = d_pos // d_in
    outs = []
    for d in range(d_in):
        cdim = base if d < d_in - 1 else d_pos - base * (d_in - 1)
        raw = normed[..., d] * 2.0 * jnp.pi                    # [B,N]
        idx = jnp.arange(cdim, dtype=jnp.float32)
        dim_t = temperature ** (2.0 * jnp.floor(idx / 2.0) / cdim)
        pos = raw[..., None] / dim_t                           # [B,N,cdim]
        emb = jnp.stack([jnp.sin(pos[..., 0::2]), jnp.cos(pos[..., 1::2])],
                        axis=-1).reshape(B, N, -1)
        outs.append(emb)
    return jnp.concatenate(outs, axis=-1)


def avgpool_pairs(x, axis=1):
    """Pairwise mean along `axis` (stand-in for MinkowskiAvgPooling k=2,s=2)."""
    shp = x.shape
    n = shp[axis]
    new_shape = shp[:axis] + (n // 2, 2) + shp[axis + 1:]
    return x.reshape(new_shape).mean(axis=axis + 1)


# ----------------------------- parameters -----------------------------

def _init_linear(key, k_in, n_out, scale=0.05):
    kw, kb = jax.random.split(key)
    return {"w": (jax.random.normal(kw, (k_in, n_out), jnp.float32)
                  * scale).astype(jnp.bfloat16),
            "b": jax.random.normal(kb, (1, n_out), jnp.float32) * scale}


def _init_mha(key, d):
    ks = jax.random.split(key, 4)
    return {"q": _init_linear(ks[0], d, d), "k": _init_linear(ks[1], d, d),
            "v": _init_linear(ks[2], d, d), "o": _init_linear(ks[3], d, d)}


def _init_ln(d):
    return {"g": jnp.ones((1, d), jnp.float32), "b": jnp.zeros((1, d), jnp.float32)}


def init_params(key, *, mask_dim, num_levels, sizes, pf_in, num_labels, dim_ff):
    keys = iter(jax.random.split(key, 64))
    p = {
        "point_features_head": _init_linear(next(keys), pf_in, mask_dim),
        "query_projection": [_init_linear(next(keys), mask_dim, mask_dim),
                             _init_linear(next(keys), mask_dim, mask_dim)],
        "decoder_norm": _init_ln(mask_dim),
        "mask_embed_head": [_init_linear(next(keys), mask_dim, mask_dim),
                            _init_linear(next(keys), mask_dim, mask_dim)],
        "class_embed_head": _init_linear(next(keys), mask_dim, num_labels + 1),
        "bbox_embed_head": [_init_linear(next(keys), mask_dim, mask_dim),
                            _init_linear(next(keys), mask_dim, mask_dim),
                            _init_linear(next(keys), mask_dim, 6)],
        "lin_squeeze": [], "cross": [], "self": [], "ffn": [],
    }
    for h in range(num_levels):
        p["lin_squeeze"].append(_init_linear(next(keys), sizes[h], mask_dim))
        p["cross"].append({"attn": _init_mha(next(keys), mask_dim),
                           "norm": _init_ln(mask_dim)})
        p["self"].append({"attn": _init_mha(next(keys), mask_dim),
                          "norm": _init_ln(mask_dim)})
        p["ffn"].append({"lin1": _init_linear(next(keys), mask_dim, dim_ff),
                         "lin2": _init_linear(next(keys), dim_ff, mask_dim),
                         "norm": _init_ln(mask_dim)})
    return p


# ----------------------------- Mask4Former forward -----------------------------

def mask_module(p, queries, point_features_bf16, pooled_feats,
                num_pooling_steps=0):
    dn = p["decoder_norm"]
    # decoder_norm (pre-LN) is fused into each head kernel.
    mask_embed = mlp_call(queries, p["mask_embed_head"], ("relu", "none"),
                          pre_ln=dn, out_dtype=jnp.bfloat16)
    out_cls = mlp_call(queries, [p["class_embed_head"]], ("none",), pre_ln=dn)
    out_bbox = mlp_call(queries, p["bbox_embed_head"],
                        ("relu", "relu", "sigmoid"), pre_ln=dn)

    masks_qn = mask_matmul(point_features_bf16, mask_embed)      # [B, Q, N]
    masks = jnp.swapaxes(masks_qn, 1, 2)                         # [B, N, Q]

    if num_pooling_steps != 0:
        # logits are linear in point features, so pooling the logits equals
        # a matmul against pre-pooled features (no XLA passes over [B,Q,N]);
        # sigmoid(x) < 0.5  <=>  x < 0.
        am = mask_matmul(pooled_feats[num_pooling_steps], mask_embed)  # [B,Q,S]
        attn_mask = am < 0.0                                     # True = masked
        return out_cls, out_bbox, masks, attn_mask
    return out_cls, out_bbox, masks


def mask4former_forward(params, all_features, raw_coordinates, *,
                        num_queries, num_heads, num_decoders, num_levels, mask_dim):
    B = raw_coordinates.shape[0]

    # point feature head (1x1 "conv" == per-point linear); bf16 output feeds
    # the mask matmuls directly (halves HBM traffic on the largest tensor).
    point_features = mlp_call(all_features[-1], [params["point_features_head"]],
                              ("none",), out_dtype=jnp.bfloat16)   # [B, N_pts, D]

    # pre-pooled point features (for attention-mask logits), computed ONCE.
    pooled_feats = [point_features]
    pf = point_features.astype(jnp.float32)
    for _ in range(num_levels):
        pf = avgpool_pairs(pf, axis=1)
        pooled_feats.append(pf.astype(jnp.bfloat16))

    # positional encodings per level (coarsest ... finest), pooling coords 2x/level
    c = raw_coordinates
    pos_encodings = []
    for _ in range(num_levels + 1):
        mins = c.min(axis=1)
        maxs = c.max(axis=1)
        enc = sine_pos_enc(c[..., :3], mins[:, :3], maxs[:, :3], mask_dim)
        enc = enc + sine_pos_enc(c[..., 3:4], mins[:, 3:4], maxs[:, 3:4], mask_dim)
        pos_encodings.append(enc.astype(jnp.bfloat16))
        c = avgpool_pairs(c, axis=1)
    pos_encodings = pos_encodings[::-1]

    # queries from (deterministic stand-in for FPS) sampled coordinates
    sampled_coords = raw_coordinates[:, :num_queries, :3]
    mins3 = raw_coordinates[..., :3].min(axis=1)
    maxs3 = raw_coordinates[..., :3].max(axis=1)
    query_pos = sine_pos_enc(sampled_coords, mins3, maxs3, mask_dim)   # [B, Q, D]
    query_pos = mlp_call(query_pos, params["query_projection"], ("relu", "relu"))
    queries = jnp.zeros_like(query_pos)                                # [B, Q, D]

    preds_class, preds_bbox, preds_mask = [], [], []
    for _ in range(num_decoders):
        for h in range(num_levels):
            out_cls, out_bbox, out_mask, attn_mask = mask_module(
                params, queries, point_features, pooled_feats, num_levels - h)

            feat = all_features[h]                                     # [B, S, C_h]
            S = feat.shape[1]
            assert pooled_feats[num_levels - h].shape[1] == S

            # attn_mask: [B, Q, S] bool, True = query may NOT attend to point.
            all_masked = jnp.sum(attn_mask, axis=2) == S               # [B, Q]
            attn_mask = jnp.where(all_masked[:, :, None], False, attn_mask)
            mem_mask_i8 = attn_mask.astype(jnp.int8)                   # [B, Q, S]

            # fused lin_squeeze + K/V projection (bf16 k/v, no src round trip)
            ca = params["cross"][h]
            k_mem, v_mem = kv_project(feat, pos_encodings[h],
                                      params["lin_squeeze"][h],
                                      ca["attn"]["k"], ca["attn"]["v"])

            # flash-tiled masked cross-attention (heads merged, lane-dense out)
            attn_out = cross_attention_flash(queries, query_pos, ca["attn"]["q"],
                                             k_mem, v_mem, mem_mask_i8, num_heads)

            # one fused kernel: cross out-proj+res+LN -> self-attn -> FFN
            queries = query_update(attn_out, queries, query_pos,
                                   ca, params["self"][h], params["ffn"][h],
                                   num_heads)

            preds_class.append(out_cls)
            preds_bbox.append(out_bbox)
            preds_mask.append(out_mask)

    out_cls, out_bbox, out_mask = mask_module(params, queries, point_features,
                                              pooled_feats)
    preds_class.append(out_cls)
    preds_bbox.append(out_bbox)
    preds_mask.append(out_mask)

    aux = [{"pred_logits": a, "pred_bboxs": b, "pred_masks": c}
           for a, b, c in zip(preds_class[:-1], preds_bbox[:-1], preds_mask[:-1])]
    return {"pred_logits": preds_class[-1],
            "pred_bboxs": preds_bbox[-1],
            "pred_masks": preds_mask[-1],
            "aux_outputs": aux}


# ----------------------------- demo -----------------------------

if __name__ == "__main__":
    # small config
    B = 2
    NUM_QUERIES = 8
    NUM_HEADS = 4
    NUM_DECODERS = 1
    NUM_LEVELS = 2
    MASK_DIM = 32
    DIM_FF = 64
    NUM_LABELS = 5
    N_PTS = 64                       # finest level point count
    LEVEL_SIZES = [16, 32]           # coarsest -> finer (matches 2x pooling/level)
    FEAT_DIMS = [24, 16]             # backbone PLANES[-5:][:num_levels]
    PF_IN = 16                       # backbone PLANES[7]

    key = jax.random.PRNGKey(0)
    k_par, k_c, k0, k1, k2 = jax.random.split(key, 5)

    params = init_params(k_par, mask_dim=MASK_DIM, num_levels=NUM_LEVELS,
                         sizes=FEAT_DIMS, pf_in=PF_IN, num_labels=NUM_LABELS,
                         dim_ff=DIM_FF)

    raw_coordinates = jax.random.uniform(k_c, (B, N_PTS, 4), jnp.float32) * 10.0
    all_features = [
        jax.random.normal(k0, (B, LEVEL_SIZES[0], FEAT_DIMS[0]), jnp.float32),
        jax.random.normal(k1, (B, LEVEL_SIZES[1], FEAT_DIMS[1]), jnp.float32),
        jax.random.normal(k2, (B, N_PTS, PF_IN), jnp.float32),
    ]

    fwd = jax.jit(functools.partial(
        mask4former_forward,
        num_queries=NUM_QUERIES, num_heads=NUM_HEADS, num_decoders=NUM_DECODERS,
        num_levels=NUM_LEVELS, mask_dim=MASK_DIM))

    out = fwd(params, all_features, raw_coordinates)

    jax.block_until_ready(out["pred_logits"])
    jax.block_until_ready(out["pred_bboxs"])
    jax.block_until_ready(out["pred_masks"])

    assert out["pred_logits"].shape == (B, NUM_QUERIES, NUM_LABELS + 1)
    assert out["pred_bboxs"].shape == (B, NUM_QUERIES, 6)
    assert out["pred_masks"].shape == (B, N_PTS, NUM_QUERIES)
    assert len(out["aux_outputs"]) == NUM_DECODERS * NUM_LEVELS
    assert bool(jnp.all(jnp.isfinite(out["pred_masks"])))
    print("KERNEL_OK")
</pallas_src>

<mosaic_0001>
module attributes {stable_mosaic.version = 11 : i64} {
  func.func @_kv_kernel(%arg0: i32, %arg1: memref<32x24xf32, #tpu.memory_space<vmem>>, %arg2: memref<32x32xbf16, #tpu.memory_space<vmem>>, %arg3: memref<24x32xbf16, #tpu.memory_space<vmem>>, %arg4: memref<1x32xf32, #tpu.memory_space<vmem>>, %arg5: memref<32x32xbf16, #tpu.memory_space<vmem>>, %arg6: memref<1x32xf32, #tpu.memory_space<vmem>>, %arg7: memref<32x32xbf16, #tpu.memory_space<vmem>>, %arg8: memref<1x32xf32, #tpu.memory_space<vmem>>, %arg9: memref<32x32xbf16, #tpu.memory_space<vmem>>, %arg10: memref<32x32xbf16, #tpu.memory_space<vmem>>) attributes {dimension_semantics = [#tpu.dimension_semantics<parallel>], iteration_bounds = array<i64: 1>, scalar_prefetch = 0 : i64, scratch_operands = 0 : i64, tpu.core_type = #tpu.core_type<tc>, window_params = [{transform_indices = @transform_0, window_bounds = array<i64: 32, 24>}, {transform_indices = @transform_1, window_bounds = array<i64: 32, 32>}, {pipeline_mode = #tpu.pipeline_mode<synchronous>, transform_indices = @transform_2, window_bounds = array<i64: 24, 32>}, {pipeline_mode = #tpu.pipeline_mode<synchronous>, transform_indices = @transform_3, window_bounds = array<i64: 1, 32>}, {pipeline_mode = #tpu.pipeline_mode<synchronous>, transform_indices = @transform_4, window_bounds = array<i64: 32, 32>}, {pipeline_mode = #tpu.pipeline_mode<synchronous>, transform_indices = @transform_5, window_bounds = array<i64: 1, 32>}, {pipeline_mode = #tpu.pipeline_mode<synchronous>, transform_indices = @transform_6, window_bounds = array<i64: 32, 32>}, {pipeline_mode = #tpu.pipeline_mode<synchronous>, transform_indices = @transform_7, window_bounds = array<i64: 1, 32>}, {transform_indices = @transform_8, window_bounds = array<i64: 32, 32>}, {transform_indices = @transform_9, window_bounds = array<i64: 32, 32>}]} {
    %c0 = arith.constant 0 : index
    %c0_0 = arith.constant 0 : index
    %0 = vector.load %arg1[%c0, %c0_0] : memref<32x24xf32, #tpu.memory_space<vmem>>, vector<32x24xf32>
    %1 = arith.truncf %0 : vector<32x24xf32> to vector<32x24xbf16>
    %c0_1 = arith.constant 0 : index
    %c0_2 = arith.constant 0 : index
    %2 = vector.load %arg3[%c0_1, %c0_2] : memref<24x32xbf16, #tpu.memory_space<vmem>>, vector<24x32xbf16>
    %cst = arith.constant dense<0.000000e+00> : vector<32x32xf32>
    %3 = tpu.matmul %1, %2, %cst {dimension_numbers = #tpu.dot_dimension_numbers<[1], [0], [0], [1], [0, 0, 1, 1], [], []>} : vector<32x24xbf16>, vector<24x32xbf16>, vector<32x32xf32> -> vector<32x32xf32>
    %c0_3 = arith.constant 0 : index
    %c0_4 = arith.constant 0 : index
    %4 = vector.load %arg4[%c0_3, %c0_4] : memref<1x32xf32, #tpu.memory_space<vmem>>, vector<1x32xf32>
    %5 = vector.broadcast %4 : vector<1x32xf32> to vector<32x32xf32>
    %6 = arith.addf %3, %5 : vector<32x32xf32>
    %c0_5 = arith.constant 0 : index
    %c0_6 = arith.constant 0 : index
    %7 = vector.load %arg2[%c0_5, %c0_6] : memref<32x32xbf16, #tpu.memory_space<vmem>>, vector<32x32xbf16>
    %8 = arith.extf %7 : vector<32x32xbf16> to vector<32x32xf32>
    %9 = arith.addf %6, %8 : vector<32x32xf32>
    %10 = arith.truncf %9 : vector<32x32xf32> to vector<32x32xbf16>
    %c0_7 = arith.constant 0 : index
    %c0_8 = arith.constant 0 : index
    %11 = vector.load %arg5[%c0_7, %c0_8] : memref<32x32xbf16, #tpu.memory_space<vmem>>, vector<32x32xbf16>
    %cst_9 = arith.constant dense<0.000000e+00> : vector<32x32xf32>
    %12 = tpu.matmul %10, %11, %cst_9 {dimension_numbers = #tpu.dot_dimension_numbers<[1], [0], [0], [1], [0, 0, 1, 1], [], []>} : vector<32x32xbf16>, vector<32x32xbf16>, vector<32x32xf32> -> vector<32x32xf32>
    %c0_10 = arith.constant 0 : index
    %c0_11 = arith.constant 0 : index
    %13 = vector.load %arg6[%c0_10, %c0_11] : memref<1x32xf32, #tpu.memory_space<vmem>>, vector<1x32xf32>
    %14 = vector.broadcast %13 : vector<1x32xf32> to vector<32x32xf32>
    %15 = arith.addf %12, %14 : vector<32x32xf32>
    %16 = arith.truncf %6 : vector<32x32xf32> to vector<32x32xbf16>
    %c0_12 = arith.constant 0 : index
    %c0_13 = arith.constant 0 : index
    %17 = vector.load %arg7[%c0_12, %c0_13] : memref<32x32xbf16, #tpu.memory_space<vmem>>, vector<32x32xbf16>
    %cst_14 = arith.constant dense<0.000000e+00> : vector<32x32xf32>
    %18 = tpu.matmul %16, %17, %cst_14 {dimension_numbers = #tpu.dot_dimension_numbers<[1], [0], [0], [1], [0, 0, 1, 1], [], []>} : vector<32x32xbf16>, vector<32x32xbf16>, vector<32x32xf32> -> vector<32x32xf32>
    %c0_15 = arith.constant 0 : index
    %c0_16 = arith.constant 0 : index
    %19 = vector.load %arg8[%c0_15, %c0_16] : memref<1x32xf32, #tpu.memory_space<vmem>>, vector<1x32xf32>
    %20 = vector.broadcast %19 : vector<1x32xf32> to vector<32x32xf32>
    %21 = arith.addf %18, %20 : vector<32x32xf32>
    %22 = arith.truncf %15 : vector<32x32xf32> to vector<32x32xbf16>
    %c0_17 = arith.constant 0 : index
    %c0_18 = arith.constant 0 : index
    %23 = vector.load %arg9[%c0_17, %c0_18] : memref<32x32xbf16, #tpu.memory_space<vmem>>, vector<32x32xbf16>
    tpu.vector_store %arg9[%c0_17, %c0_18], %22 {strides = array<i32>} : memref<32x32xbf16, #tpu.memory_space<vmem>>, vector<32x32xbf16>,
    %24 = arith.truncf %21 : vector<32x32xf32> to vector<32x32xbf16>
    %c0_19 = arith.constant 0 : index
    %c0_20 = arith.constant 0 : index
    %25 = vector.load %arg10[%c0_19, %c0_20] : memref<32x32xbf16, #tpu.memory_space<vmem>>, vector<32x32xbf16>
    tpu.vector_store %arg10[%c0_19, %c0_20], %24 {strides = array<i32>} : memref<32x32xbf16, #tpu.memory_space<vmem>>, vector<32x32xbf16>,
    return
  }
  func.func @transform_0(%arg0: i32) -> (i32, i32) {
    %c0_i32 = arith.constant 0 : i32
    %c0_i32_0 = arith.constant 0 : i32
    return %arg0, %c0_i32 : i32, i32
  }
  func.func @transform_1(%arg0: i32) -> (i32, i32) {
    %c0_i32 = arith.constant 0 : i32
    %c0_i32_0 = arith.constant 0 : i32
    return %arg0, %c0_i32 : i32, i32
  }
  func.func @transform_2(%arg0: i32) -> (i32, i32) {
    %c0_i32 = arith.constant 0 : i32
    %c0_i32_0 = arith.constant 0 : i32
    %c0_i32_1 = arith.constant 0 : i32
    return %c0_i32, %c0_i32_0 : i32, i32
  }
  func.func @transform_3(%arg0: i32) -> (i32, i32) {
    %c0_i32 = arith.constant 0 : i32
    %c0_i32_0 = arith.constant 0 : i32
    %c0_i32_1 = arith.constant 0 : i32
    return %c0_i32, %c0_i32_0 : i32, i32
  }
  func.func @transform_4(%arg0: i32) -> (i32, i32) {
    %c0_i32 = arith.constant 0 : i32
    %c0_i32_0 = arith.constant 0 : i32
    %c0_i32_1 = arith.constant 0 : i32
    return %c0_i32, %c0_i32_0 : i32, i32
  }
  func.func @transform_5(%arg0: i32) -> (i32, i32) {
    %c0_i32 = arith.constant 0 : i32
    %c0_i32_0 = arith.constant 0 : i32
    %c0_i32_1 = arith.constant 0 : i32
    return %c0_i32, %c0_i32_0 : i32, i32
  }
  func.func @transform_6(%arg0: i32) -> (i32, i32) {
    %c0_i32 = arith.constant 0 : i32
    %c0_i32_0 = arith.constant 0 : i32
    %c0_i32_1 = arith.constant 0 : i32
    return %c0_i32, %c0_i32_0 : i32, i32
  }
  func.func @transform_7(%arg0: i32) -> (i32, i32) {
    %c0_i32 = arith.constant 0 : i32
    %c0_i32_0 = arith.constant 0 : i32
    %c0_i32_1 = arith.constant 0 : i32
    return %c0_i32, %c0_i32_0 : i32, i32
  }
  func.func @transform_8(%arg0: i32) -> (i32, i32) {
    %c0_i32 = arith.constant 0 : i32
    %c0_i32_0 = arith.constant 0 : i32
    return %arg0, %c0_i32 : i32, i32
  }
  func.func @transform_9(%arg0: i32) -> (i32, i32) {
    %c0_i32 = arith.constant 0 : i32
    %c0_i32_0 = arith.constant 0 : i32
    return %arg0, %c0_i32 : i32, i32
  }
}

module attributes {stable_mosaic.version = 11 : i64} {
  func.func @_mlp_kernel(%arg0: i32, %arg1: memref<16x32xf32, #tpu.memory_space<vmem>>, %arg2: memref<32x32xbf16, #tpu.memory_space<vmem>>, %arg3: memref<1x32xf32, #tpu.memory_space<vmem>>, %arg4: memref<32x32xbf16, #tpu.memory_space<vmem>>, %arg5: memref<1x32xf32, #tpu.memory_space<vmem>>, %arg6: memref<16x32xf32, #tpu.memory_space<vmem>>) attributes {dimension_semantics = [#tpu.dimension_semantics<parallel>], iteration_bounds = array<i64: 1>, scalar_prefetch = 0 : i64, scratch_operands = 0 : i64, tpu.core_type = #tpu.core_type<tc>, window_params = [{transform_indices = @transform_0, window_bounds = array<i64: 16, 32>}, {pipeline_mode = #tpu.pipeline_mode<synchronous>, transform_indices = @transform_1, window_bounds = array<i64: 32, 32>}, {pipeline_mode = #tpu.pipeline_mode<synchronous>, transform_indices = @transform_2, window_bounds = array<i64: 1, 32>}, {pipeline_mode = #tpu.pipeline_mode<synchronous>, transform_indices = @transform_3, window_bounds = array<i64: 32, 32>}, {pipeline_mode = #tpu.pipeline_mode<synchronous>, transform_indices = @transform_4, window_bounds = array<i64: 1, 32>}, {transform_indices = @transform_5, window_bounds = array<i64: 16, 32>}]} {
    %c0 = arith.constant 0 : index
    %c0_0 = arith.constant 0 : index
    %0 = vector.load %arg1[%c0, %c0_0] : memref<16x32xf32, #tpu.memory_space<vmem>>, vector<16x32xf32>
    %c0_1 = arith.constant 0 : index
    %c0_2 = arith.constant 0 : index
    %1 = vector.load %arg2[%c0_1, %c0_2] : memref<32x32xbf16, #tpu.memory_space<vmem>>, vector<32x32xbf16>
    %c0_3 = arith.constant 0 : index
    %c0_4 = arith.constant 0 : index
    %2 = vector.load %arg3[%c0_3, %c0_4] : memref<1x32xf32, #tpu.memory_space<vmem>>, vector<1x32xf32>
    %3 = arith.truncf %0 : vector<16x32xf32> to vector<16x32xbf16>
    %cst = arith.constant dense<0.000000e+00> : vector<16x32xf32>
    %4 = tpu.matmul %3, %1, %cst {dimension_numbers = #tpu.dot_dimension_numbers<[1], [0], [0], [1], [0, 0, 1, 1], [], []>} : vector<16x32xbf16>, vector<32x32xbf16>, vector<16x32xf32> -> vector<16x32xf32>
    %5 = vector.broadcast %2 : vector<1x32xf32> to vector<16x32xf32>
    %6 = arith.addf %4, %5 : vector<16x32xf32>
    %cst_5 = arith.constant 0.000000e+00 : f32
    %7 = vector.broadcast %cst_5 : f32 to vector<16x32xf32>
    %8 = arith.maximumf %6, %7 : vector<16x32xf32>
    %c0_6 = arith.constant 0 : index
    %c0_7 = arith.constant 0 : index
    %9 = vector.load %arg4[%c0_6, %c0_7] : memref<32x32xbf16, #tpu.memory_space<vmem>>, vector<32x32xbf16>
    %c0_8 = arith.constant 0 : index
    %c0_9 = arith.constant 0 : index
    %10 = vector.load %arg5[%c0_8, %c0_9] : memref<1x32xf32, #tpu.memory_space<vmem>>, vector<1x32xf32>
    %11 = arith.truncf %8 : vector<16x32xf32> to vector<16x32xbf16>
    %cst_10 = arith.constant dense<0.000000e+00> : vector<16x32xf32>
    %12 = tpu.matmul %11, %9, %cst_10 {dimension_numbers = #tpu.dot_dimension_numbers<[1], [0], [0], [1], [0, 0, 1, 1], [], []>} : vector<16x32xbf16>, vector<32x32xbf16>, vector<16x32xf32> -> vector<16x32xf32>
    %13 = vector.broadcast %10 : vector<1x32xf32> to vector<16x32xf32>
    %14 = arith.addf %12, %13 : vector<16x32xf32>
    %cst_11 = arith.constant 0.000000e+00 : f32
    %15 = vector.broadcast %cst_11 : f32 to vector<16x32xf32>
    %16 = arith.maximumf %14, %15 : vector<16x32xf32>
    %c0_12 = arith.constant 0 : index
    %c0_13 = arith.constant 0 : index
    %17 = vector.load %arg6[%c0_12, %c0_13] : memref<16x32xf32, #tpu.memory_space<vmem>>, vector<16x32xf32>
    tpu.vector_store %arg6[%c0_12, %c0_13], %16 {strides = array<i32>} : memref<16x32xf32, #tpu.memory_space<vmem>>, vector<16x32xf32>,
    return
  }
  func.func @transform_0(%arg0: i32) -> (i32, i32) {
    %c0_i32 = arith.constant 0 : i32
    %c0_i32_0 = arith.constant 0 : i32
    return %arg0, %c0_i32 : i32, i32
  }
  func.func @transform_1(%arg0: i32) -> (i32, i32) {
    %c0_i32 = arith.constant 0 : i32
    %c0_i32_0 = arith.constant 0 : i32
    %c0_i32_1 = arith.constant 0 : i32
    return %c0_i32, %c0_i32_0 : i32, i32
  }
  func.func @transform_2(%arg0: i32) -> (i32, i32) {
    %c0_i32 = arith.constant 0 : i32
    %c0_i32_0 = arith.constant 0 : i32
    %c0_i32_1 = arith.constant 0 : i32
    return %c0_i32, %c0_i32_0 : i32, i32
  }
  func.func @transform_3(%arg0: i32) -> (i32, i32) {
    %c0_i32 = arith.constant 0 : i32
    %c0_i32_0 = arith.constant 0 : i32
    %c0_i32_1 = arith.constant 0 : i32
    return %c0_i32, %c0_i32_0 : i32, i32
  }
  func.func @transform_4(%arg0: i32) -> (i32, i32) {
    %c0_i32 = arith.constant 0 : i32
    %c0_i32_0 = arith.constant 0 : i32
    %c0_i32_1 = arith.constant 0 : i32
    return %c0_i32, %c0_i32_0 : i32, i32
  }
  func.func @transform_5(%arg0: i32) -> (i32, i32) {
    %c0_i32 = arith.constant 0 : i32
    %c0_i32_0 = arith.constant 0 : i32
    return %arg0, %c0_i32 : i32, i32
  }
}

module attributes {stable_mosaic.version = 11 : i64} {
  func.func @_mlp_kernel(%arg0: i32, %arg1: memref<16x32xf32, #tpu.memory_space<vmem>>, %arg2: memref<1x32xf32, #tpu.memory_space<vmem>>, %arg3: memref<1x32xf32, #tpu.memory_space<vmem>>, %arg4: memref<32x32xbf16, #tpu.memory_space<vmem>>, %arg5: memref<1x32xf32, #tpu.memory_space<vmem>>, %arg6: memref<32x32xbf16, #tpu.memory_space<vmem>>, %arg7: memref<1x32xf32, #tpu.memory_space<vmem>>, %arg8: memref<16x32xbf16, #tpu.memory_space<vmem>>) attributes {dimension_semantics = [#tpu.dimension_semantics<parallel>], iteration_bounds = array<i64: 1>, scalar_prefetch = 0 : i64, scratch_operands = 0 : i64, tpu.core_type = #tpu.core_type<tc>, window_params = [{transform_indices = @transform_0, window_bounds = array<i64: 16, 32>}, {pipeline_mode = #tpu.pipeline_mode<synchronous>, transform_indices = @transform_1, window_bounds = array<i64: 1, 32>}, {pipeline_mode = #tpu.pipeline_mode<synchronous>, transform_indices = @transform_2, window_bounds = array<i64: 1, 32>}, {pipeline_mode = #tpu.pipeline_mode<synchronous>, transform_indices = @transform_3, window_bounds = array<i64: 32, 32>}, {pipeline_mode = #tpu.pipeline_mode<synchronous>, transform_indices = @transform_4, window_bounds = array<i64: 1, 32>}, {pipeline_mode = #tpu.pipeline_mode<synchronous>, transform_indices = @transform_5, window_bounds = array<i64: 32, 32>}, {pipeline_mode = #tpu.pipeline_mode<synchronous>, transform_indices = @transform_6, window_bounds = array<i64: 1, 32>}, {transform_indices = @transform_7, window_bounds = array<i64: 16, 32>}]} {
    %c0 = arith.constant 0 : index
    %c0_0 = arith.constant 0 : index
    %0 = vector.load %arg1[%c0, %c0_0] : memref<16x32xf32, #tpu.memory_space<vmem>>, vector<16x32xf32>
    %c0_1 = arith.constant 0 : index
    %c0_2 = arith.constant 0 : index
    %1 = vector.load %arg2[%c0_1, %c0_2] : memref<1x32xf32, #tpu.memory_space<vmem>>, vector<1x32xf32>
    %c0_3 = arith.constant 0 : index
    %c0_4 = arith.constant 0 : index
    %2 = vector.load %arg3[%c0_3, %c0_4] : memref<1x32xf32, #tpu.memory_space<vmem>>, vector<1x32xf32>
    %cst = arith.constant dense<0.000000e+00> : vector<16xf32>
    %3 = vector.multi_reduction <add>, %0, %cst [1] : vector<16x32xf32> to vector<16xf32>
    %4 = vector.shape_cast %3 : vector<16xf32> to vector<16x1xf32>
    %cst_5 = arith.constant 3.200000e+01 : f32
    %5 = vector.broadcast %cst_5 : f32 to vector<16x1xf32>
    %6 = arith.divf %4, %5 : vector<16x1xf32>
    %7 = vector.broadcast %6 : vector<16x1xf32> to vector<16x32xf32>
    %8 = arith.subf %0, %7 : vector<16x32xf32>
    %9 = arith.mulf %8, %8 : vector<16x32xf32>
    %cst_6 = arith.constant dense<0.000000e+00> : vector<16xf32>
    %10 = vector.multi_reduction <add>, %9, %cst_6 [1] : vector<16x32xf32> to vector<16xf32>
    %11 = vector.shape_cast %10 : vector<16xf32> to vector<16x1xf32>
    %cst_7 = arith.constant 3.200000e+01 : f32
    %12 = vector.broadcast %cst_7 : f32 to vector<16x1xf32>
    %13 = arith.divf %11, %12 : vector<16x1xf32>
    %14 = vector.broadcast %6 : vector<16x1xf32> to vector<16x32xf32>
    %15 = arith.subf %0, %14 : vector<16x32xf32>
    %cst_8 = arith.constant 9.99999974E-6 : f32
    %16 = vector.broadcast %cst_8 : f32 to vector<16x1xf32>
    %17 = arith.addf %13, %16 : vector<16x1xf32>
    %18 = math.rsqrt %17 : vector<16x1xf32>
    %19 = vector.broadcast %18 : vector<16x1xf32> to vector<16x32xf32>
    %20 = arith.mulf %15, %19 : vector<16x32xf32>
    %21 = vector.broadcast %1 : vector<1x32xf32> to vector<16x32xf32>
    %22 = arith.mulf %20, %21 : vector<16x32xf32>
    %23 = vector.broadcast %2 : vector<1x32xf32> to vector<16x32xf32>
    %24 = arith.addf %22, %23 : vector<16x32xf32>
    %c0_9 = arith.constant 0 : index
    %c0_10 = arith.constant 0 : index
    %25 = vector.load %arg4[%c0_9, %c0_10] : memref<32x32xbf16, #tpu.memory_space<vmem>>, vector<32x32xbf16>
    %c0_11 = arith.constant 0 : index
    %c0_12 = arith.constant 0 : index
    %26 = vector.load %arg5[%c0_11, %c0_12] : memref<1x32xf32, #tpu.memory_space<vmem>>, vector<1x32xf32>
    %27 = arith.truncf %24 : vector<16x32xf32> to vector<16x32xbf16>
    %cst_13 = arith.constant dense<0.000000e+00> : vector<16x32xf32>
    %28 = tpu.matmul %27, %25, %cst_13 {dimension_numbers = #tpu.dot_dimension_numbers<[1], [0], [0], [1], [0, 0, 1, 1], [], []>} : vector<16x32xbf16>, vector<32x32xbf16>, vector<16x32xf32> -> vector<16x32xf32>
    %29 = vector.broadcast %26 : vector<1x32xf32> to vector<16x32xf32>
    %30 = arith.addf %28, %29 : vector<16x32xf32>
    %cst_14 = arith.constant 0.000000e+00 : f32
    %31 = vector.broadcast %cst_14 : f32 to vector<16x32xf32>
    %32 = arith.maximumf %30, %31 : vector<16x32xf32>
    %c0_15 = arith.constant 0 : index
    %c0_16 = arith.constant 0 : index
    %33 = vector.load %arg6[%c0_15, %c0_16] : memref<32x32xbf16, #tpu.memory_space<vmem>>, vector<32x32xbf16>
    %c0_17 = arith.constant 0 : index
    %c0_18 = arith.constant 0 : index
    %34 = vector.load %arg7[%c0_17, %c0_18] : memref<1x32xf32, #tpu.memory_space<vmem>>, vector<1x32xf32>
    %35 = arith.truncf %32 : vector<16x32xf32> to vector<16x32xbf16>
    %cst_19 = arith.constant dense<0.000000e+00> : vector<16x32xf32>
    %36 = tpu.matmul %35, %33, %cst_19 {dimension_numbers = #tpu.dot_dimension_numbers<[1], [0], [0], [1], [0, 0, 1, 1], [], []>} : vector<16x32xbf16>, vector<32x32xbf16>, vector<16x32xf32> -> vector<16x32xf32>
    %37 = vector.broadcast %34 : vector<1x32xf32> to vector<16x32xf32>
    %38 = arith.addf %36, %37 : vector<16x32xf32>
    %39 = arith.truncf %38 : vector<16x32xf32> to vector<16x32xbf16>
    %c0_20 = arith.constant 0 : index
    %c0_21 = arith.constant 0 : index
    %40 = vector.load %arg8[%c0_20, %c0_21] : memref<16x32xbf16, #tpu.memory_space<vmem>>, vector<16x32xbf16>
    tpu.vector_store %arg8[%c0_20, %c0_21], %39 {strides = array<i32>} : memref<16x32xbf16, #tpu.memory_space<vmem>>, vector<16x32xbf16>,
    return
  }
  func.func @transform_0(%arg0: i32) -> (i32, i32) {
    %c0_i32 = arith.constant 0 : i32
    %c0_i32_0 = arith.constant 0 : i32
    return %arg0, %c0_i32 : i32, i32
  }
  func.func @transform_1(%arg0: i32) -> (i32, i32) {
    %c0_i32 = arith.constant 0 : i32
    %c0_i32_0 = arith.constant 0 : i32
    %c0_i32_1 = arith.constant 0 : i32
    return %c0_i32, %c0_i32_0 : i32, i32
  }
  func.func @transform_2(%arg0: i32) -> (i32, i32) {
    %c0_i32 = arith.constant 0 : i32
    %c0_i32_0 = arith.constant 0 : i32
    %c0_i32_1 = arith.constant 0 : i32
    return %c0_i32, %c0_i32_0 : i32, i32
  }
  func.func @transform_3(%arg0: i32) -> (i32, i32) {
    %c0_i32 = arith.constant 0 : i32
    %c0_i32_0 = arith.constant 0 : i32
    %c0_i32_1 = arith.constant 0 : i32
    return %c0_i32, %c0_i32_0 : i32, i32
  }
  func.func @transform_4(%arg0: i32) -> (i32, i32) {
    %c0_i32 = arith.constant 0 : i32
    %c0_i32_0 = arith.constant 0 : i32
    %c0_i32_1 = arith.constant 0 : i32
    return %c0_i32, %c0_i32_0 : i32, i32
  }
  func.func @transform_5(%arg0: i32) -> (i32, i32) {
    %c0_i32 = arith.constant 0 : i32
    %c0_i32_0 = arith.constant 0 : i32
    %c0_i32_1 = arith.constant 0 : i32
    return %c0_i32, %c0_i32_0 : i32, i32
  }
  func.func @transform_6(%arg0: i32) -> (i32, i32) {
    %c0_i32 = arith.constant 0 : i32
    %c0_i32_0 = arith.constant 0 : i32
    %c0_i32_1 = arith.constant 0 : i32
    return %c0_i32, %c0_i32_0 : i32, i32
  }
  func.func @transform_7(%arg0: i32) -> (i32, i32) {
    %c0_i32 = arith.constant 0 : i32
    %c0_i32_0 = arith.constant 0 : i32
    return %arg0, %c0_i32 : i32, i32
  }
}

module attributes {stable_mosaic.version = 11 : i64} {
  func.func @_mlp_kernel(%arg0: i32, %arg1: memref<128x16xf32, #tpu.memory_space<vmem>>, %arg2: memref<16x32xbf16, #tpu.memory_space<vmem>>, %arg3: memref<1x32xf32, #tpu.memory_space<vmem>>, %arg4: memref<128x32xbf16, #tpu.memory_space<vmem>>) attributes {dimension_semantics = [#tpu.dimension_semantics<parallel>], iteration_bounds = array<i64: 1>, scalar_prefetch = 0 : i64, scratch_operands = 0 : i64, tpu.core_type = #tpu.core_type<tc>, window_params = [{transform_indices = @transform_0, window_bounds = array<i64: 128, 16>}, {pipeline_mode = #tpu.pipeline_mode<synchronous>, transform_indices = @transform_1, window_bounds = array<i64: 16, 32>}, {pipeline_mode = #tpu.pipeline_mode<synchronous>, transform_indices = @transform_2, window_bounds = array<i64: 1, 32>}, {transform_indices = @transform_3, window_bounds = array<i64: 128, 32>}]} {
    %c0 = arith.constant 0 : index
    %c0_0 = arith.constant 0 : index
    %0 = vector.load %arg1[%c0, %c0_0] : memref<128x16xf32, #tpu.memory_space<vmem>>, vector<128x16xf32>
    %c0_1 = arith.constant 0 : index
    %c0_2 = arith.constant 0 : index
    %1 = vector.load %arg2[%c0_1, %c0_2] : memref<16x32xbf16, #tpu.memory_space<vmem>>, vector<16x32xbf16>
    %c0_3 = arith.constant 0 : index
    %c0_4 = arith.constant 0 : index
    %2 = vector.load %arg3[%c0_3, %c0_4] : memref<1x32xf32, #tpu.memory_space<vmem>>, vector<1x32xf32>
    %3 = arith.truncf %0 : vector<128x16xf32> to vector<128x16xbf16>
    %cst = arith.constant dense<0.000000e+00> : vector<128x32xf32>
    %4 = tpu.matmul %3, %1, %cst {dimension_numbers = #tpu.dot_dimension_numbers<[1], [0], [0], [1], [0, 0, 1, 1], [], []>} : vector<128x16xbf16>, vector<16x32xbf16>, vector<128x32xf32> -> vector<128x32xf32>
    %5 = vector.broadcast %2 : vector<1x32xf32> to vector<128x32xf32>
    %6 = arith.addf %4, %5 : vector<128x32xf32>
    %7 = arith.truncf %6 : vector<128x32xf32> to vector<128x32xbf16>
    %c0_5 = arith.constant 0 : index
    %c0_6 = arith.constant 0 : index
    %8 = vector.load %arg4[%c0_5, %c0_6] : memref<128x32xbf16, #tpu.memory_space<vmem>>, vector<128x32xbf16>
    tpu.vector_store %arg4[%c0_5, %c0_6], %7 {strides = array<i32>} : memref<128x32xbf16, #tpu.memory_space<vmem>>, vector<128x32xbf16>,
    return
  }
  func.func @transform_0(%arg0: i32) -> (i32, i32) {
    %c0_i32 = arith.constant 0 : i32
    %c0_i32_0 = arith.constant 0 : i32
    return %arg0, %c0_i32 : i32, i32
  }
  func.func @transform_1(%arg0: i32) -> (i32, i32) {
    %c0_i32 = arith.constant 0 : i32
    %c0_i32_0 = arith.constant 0 : i32
    %c0_i32_1 = arith.constant 0 : i32
    return %c0_i32, %c0_i32_0 : i32, i32
  }
  func.func @transform_2(%arg0: i32) -> (i32, i32) {
    %c0_i32 = arith.constant 0 : i32
    %c0_i32_0 = arith.constant 0 : i32
    %c0_i32_1 = arith.constant 0 : i32
    return %c0_i32, %c0_i32_0 : i32, i32
  }
  func.func @transform_3(%arg0: i32) -> (i32, i32) {
    %c0_i32 = arith.constant 0 : i32
    %c0_i32_0 = arith.constant 0 : i32
    return %arg0, %c0_i32 : i32, i32
  }
}

module attributes {stable_mosaic.version = 11 : i64} {
  func.func @_mask_kernel(%arg0: i32, %arg1: i32, %arg2: memref<1x8x32xbf16, #tpu.memory_space<vmem>>, %arg3: memref<1x16x32xbf16, #tpu.memory_space<vmem>>, %arg4: memref<1x8x16xf32, #tpu.memory_space<vmem>>) attributes {dimension_semantics = [#tpu.dimension_semantics<parallel>, #tpu.dimension_semantics<parallel>], iteration_bounds = array<i64: 2, 1>, scalar_prefetch = 0 : i64, scratch_operands = 0 : i64, tpu.core_type = #tpu.core_type<tc>, window_params = [{transform_indices = @transform_0, window_bounds = array<i64: 1, 8, 32>}, {transform_indices = @transform_1, window_bounds = array<i64: 1, 16, 32>}, {transform_indices = @transform_2, window_bounds = array<i64: 1, 8, 16>}]} {
    %c0 = arith.constant 0 : index
    %c0_0 = arith.constant 0 : index
    %c0_1 = arith.constant 0 : index
    %0 = vector.load %arg2[%c0, %c0_0, %c0_1] : memref<1x8x32xbf16, #tpu.memory_space<vmem>>, vector<1x8x32xbf16>
    %1 = vector.shape_cast %0 : vector<1x8x32xbf16> to vector<8x32xbf16>
    %c0_2 = arith.constant 0 : index
    %c0_3 = arith.constant 0 : index
    %c0_4 = arith.constant 0 : index
    %2 = vector.load %arg3[%c0_2, %c0_3, %c0_4] : memref<1x16x32xbf16, #tpu.memory_space<vmem>>, vector<1x16x32xbf16>
    %3 = vector.shape_cast %2 : vector<1x16x32xbf16> to vector<16x32xbf16>
    "tpu.trace_start"() <{level = 10 : i32, message = "qd,nd->qn"}> : () -> ()
    %cst = arith.constant dense<0.000000e+00> : vector<8x16xf32>
    %4 = tpu.matmul %1, %3, %cst {dimension_numbers = #tpu.dot_dimension_numbers<[1], [1], [0], [0], [0, 0, 1, 0], [], []>} : vector<8x32xbf16>, vector<16x32xbf16>, vector<8x16xf32> -> vector<8x16xf32>
    "tpu.trace_stop"() : () -> ()
    %c0_5 = arith.constant 0 : index
    %c0_6 = arith.constant 0 : index
    %c0_7 = arith.constant 0 : index
    %5 = vector.load %arg4[%c0_5, %c0_6, %c0_7] : memref<1x8x16xf32, #tpu.memory_space<vmem>>, vector<1x8x16xf32>
    %6 = vector.shape_cast %5 : vector<1x8x16xf32> to vector<8x16xf32>
    %7 = vector.shape_cast %4 : vector<8x16xf32> to vector<1x8x16xf32>
    tpu.vector_store %arg4[%c0_5, %c0_6, %c0_7], %7 {strides = array<i32>} : memref<1x8x16xf32, #tpu.memory_space<vmem>>, vector<1x8x16xf32>,
    return
  }
  func.func @transform_0(%arg0: i32, %arg1: i32) -> (i32, i32, i32) {
    %c0_i32 = arith.constant 0 : i32
    %c0_i32_0 = arith.constant 0 : i32
    %c0_i32_1 = arith.constant 0 : i32
    return %arg0, %c0_i32, %c0_i32_0 : i32, i32, i32
  }
  func.func @transform_1(%arg0: i32, %arg1: i32) -> (i32, i32, i32) {
    %c0_i32 = arith.constant 0 : i32
    %c0_i32_0 = arith.constant 0 : i32
    return %arg0, %arg1, %c0_i32 : i32, i32, i32
  }
  func.func @transform_2(%arg0: i32, %arg1: i32) -> (i32, i32, i32) {
    %c0_i32 = arith.constant 0 : i32
    %c0_i32_0 = arith.constant 0 : i32
    return %arg0, %c0_i32, %arg1 : i32, i32, i32
  }
}

module attributes {stable_mosaic.version = 11 : i64} {
  func.func @_query_update_kernel(%arg0: i32, %arg1: memref<1x8x32xbf16, #tpu.memory_space<vmem>>, %arg2: memref<1x8x32xf32, #tpu.memory_space<vmem>>, %arg3: memref<1x8x32xf32, #tpu.memory_space<vmem>>, %arg4: memref<32x32xbf16, #tpu.memory_space<vmem>>, %arg5: memref<1x32xf32, #tpu.memory_space<vmem>>, %arg6: memref<1x32xf32, #tpu.memory_space<vmem>>, %arg7: memref<1x32xf32, #tpu.memory_space<vmem>>, %arg8: memref<32x64xbf16, #tpu.memory_space<vmem>>, %arg9: memref<1x64xf32, #tpu.memory_space<vmem>>, %arg10: memref<32x32xbf16, #tpu.memory_space<vmem>>, %arg11: memref<1x32xf32, #tpu.memory_space<vmem>>, %arg12: memref<32x32xbf16, #tpu.memory_space<vmem>>, %arg13: memref<1x32xf32, #tpu.memory_space<vmem>>, %arg14: memref<1x32xf32, #tpu.memory_space<vmem>>, %arg15: memref<1x32xf32, #tpu.memory_space<vmem>>, %arg16: memref<32x64xbf16, #tpu.memory_space<vmem>>, %arg17: memref<1x64xf32, #tpu.memory_space<vmem>>, %arg18: memref<64x32xbf16, #tpu.memory_space<vmem>>, %arg19: memref<1x32xf32, #tpu.memory_space<vmem>>, %arg20: memref<1x32xf32, #tpu.memory_space<vmem>>, %arg21: memref<1x32xf32, #tpu.memory_space<vmem>>, %arg22: memref<1x8x32xf32, #tpu.memory_space<vmem>>) attributes {dimension_semantics = [#tpu.dimension_semantics<parallel>], iteration_bounds = array<i64: 2>, scalar_prefetch = 0 : i64, scratch_operands = 0 : i64, tpu.core_type = #tpu.core_type<tc>, window_params = [{transform_indices = @transform_0, window_bounds = array<i64: 1, 8, 32>}, {transform_indices = @transform_1, window_bounds = array<i64: 1, 8, 32>}, {transform_indices = @transform_2, window_bounds = array<i64: 1, 8, 32>}, {pipeline_mode = #tpu.pipeline_mode<synchronous>, transform_indices = @transform_3, window_bounds = array<i64: 32, 32>}, {pipeline_mode = #tpu.pipeline_mode<synchronous>, transform_indices = @transform_4, window_bounds = array<i64: 1, 32>}, {pipeline_mode = #tpu.pipeline_mode<synchronous>, transform_indices = @transform_5, window_bounds = array<i64: 1, 32>}, {pipeline_mode = #tpu.pipeline_mode<synchronous>, transform_indices = @transform_6, window_bounds = array<i64: 1, 32>}, {pipeline_mode = #tpu.pipeline_mode<synchronous>, transform_indices = @transform_7, window_bounds = array<i64: 32, 64>}, {pipeline_mode = #tpu.pipeline_mode<synchronous>, transform_indices = @transform_8, window_bounds = array<i64: 1, 64>}, {pipeline_mode = #tpu.pipeline_mode<synchronous>, transform_indices = @transform_9, window_bounds = array<i64: 32, 32>}, {pipeline_mode = #tpu.pipeline_mode<synchronous>, transform_indices = @transform_10, window_bounds = array<i64: 1, 32>}, {pipeline_mode = #tpu.pipeline_mode<synchronous>, transform_indices = @transform_11, window_bounds = array<i64: 32, 32>}, {pipeline_mode = #tpu.pipeline_mode<synchronous>, transform_indices = @transform_12, window_bounds = array<i64: 1, 32>}, {pipeline_mode = #tpu.pipeline_mode<synchronous>, transform_indices = @transform_13, window_bounds = array<i64: 1, 32>}, {pipeline_mode = #tpu.pipeline_mode<synchronous>, transform_indices = @transform_14, window_bounds = array<i64: 1, 32>}, {pipeline_mode = #tpu.pipeline_mode<synchronous>, transform_indices = @transform_15, window_bounds = array<i64: 32, 64>}, {pipeline_mode = #tpu.pipeline_mode<synchronous>, transform_indices = @transform_16, window_bounds = array<i64: 1, 64>}, {pipeline_mode = #tpu.pipeline_mode<synchronous>, transform_indices = @transform_17, window_bounds = array<i64: 64, 32>}, {pipeline_mode = #tpu.pipeline_mode<synchronous>, transform_indices = @transform_18, window_bounds = array<i64: 1, 32>}, {pipeline_mode = #tpu.pipeline_mode<synchronous>, transform_indices = @transform_19, window_bounds = array<i64: 1, 32>}, {pipeline_mode = #tpu.pipeline_mode<synchronous>, transform_indices = @transform_20, window_bounds = array<i64: 1, 32>}, {transform_indices = @transform_21, window_bounds = array<i64: 1, 8, 32>}]} {
    %c0 = arith.constant 0 : index
    %c0_0 = arith.constant 0 : index
    %c0_1 = arith.constant 0 : index
    %0 = vector.load %arg1[%c0, %c0_0, %c0_1] : memref<1x8x32xbf16, #tpu.memory_space<vmem>>, vector<1x8x32xbf16>
    %1 = vector.shape_cast %0 : vector<1x8x32xbf16> to vector<8x32xbf16>
    %c0_2 = arith.constant 0 : index
    %c0_3 = arith.constant 0 : index
    %c0_4 = arith.constant 0 : index
    %2 = vector.load %arg2[%c0_2, %c0_3, %c0_4] : memref<1x8x32xf32, #tpu.memory_space<vmem>>, vector<1x8x32xf32>
    %3 = vector.shape_cast %2 : vector<1x8x32xf32> to vector<8x32xf32>
    %c0_5 = arith.constant 0 : index
    %c0_6 = arith.constant 0 : index
    %c0_7 = arith.constant 0 : index
    %4 = vector.load %arg3[%c0_5, %c0_6, %c0_7] : memref<1x8x32xf32, #tpu.memory_space<vmem>>, vector<1x8x32xf32>
    %5 = vector.shape_cast %4 : vector<1x8x32xf32> to vector<8x32xf32>
    %c0_8 = arith.constant 0 : index
    %c0_9 = arith.constant 0 : index
    %6 = vector.load %arg4[%c0_8, %c0_9] : memref<32x32xbf16, #tpu.memory_space<vmem>>, vector<32x32xbf16>
    %cst = arith.constant dense<0.000000e+00> : vector<8x32xf32>
    %7 = tpu.matmul %1, %6, %cst {dimension_numbers = #tpu.dot_dimension_numbers<[1], [0], [0], [1], [0, 0, 1, 1], [], []>} : vector<8x32xbf16>, vector<32x32xbf16>, vector<8x32xf32> -> vector<8x32xf32>
    %c0_10 = arith.constant 0 : index
    %c0_11 = arith.constant 0 : index
    %8 = vector.load %arg5[%c0_10, %c0_11] : memref<1x32xf32, #tpu.memory_space<vmem>>, vector<1x32xf32>
    %9 = vector.broadcast %8 : vector<1x32xf32> to vector<8x32xf32>
    %10 = arith.addf %7, %9 : vector<8x32xf32>
    %11 = arith.addf %3, %10 : vector<8x32xf32>
    %c0_12 = arith.constant 0 : index
    %c0_13 = arith.constant 0 : index
    %12 = vector.load %arg6[%c0_12, %c0_13] : memref<1x32xf32, #tpu.memory_space<vmem>>, vector<1x32xf32>
    %c0_14 = arith.constant 0 : index
    %c0_15 = arith.constant 0 : index
    %13 = vector.load %arg7[%c0_14, %c0_15] : memref<1x32xf32, #tpu.memory_space<vmem>>, vector<1x32xf32>
    %cst_16 = arith.constant dense<0.000000e+00> : vector<8xf32>
    %14 = vector.multi_reduction <add>, %11, %cst_16 [1] : vector<8x32xf32> to vector<8xf32>
    %15 = vector.shape_cast %14 : vector<8xf32> to vector<8x1xf32>
    %cst_17 = arith.constant 3.200000e+01 : f32
    %16 = vector.broadcast %cst_17 : f32 to vector<8x1xf32>
    %17 = arith.divf %15, %16 : vector<8x1xf32>
    %18 = vector.broadcast %17 : vector<8x1xf32> to vector<8x32xf32>
    %19 = arith.subf %11, %18 : vector<8x32xf32>
    %20 = arith.mulf %19, %19 : vector<8x32xf32>
    %cst_18 = arith.constant dense<0.000000e+00> : vector<8xf32>
    %21 = vector.multi_reduction <add>, %20, %cst_18 [1] : vector<8x32xf32> to vector<8xf32>
    %22 = vector.shape_cast %21 : vector<8xf32> to vector<8x1xf32>
    %cst_19 = arith.constant 3.200000e+01 : f32
    %23 = vector.broadcast %cst_19 : f32 to vector<8x1xf32>
    %24 = arith.divf %22, %23 : vector<8x1xf32>
    %25 = vector.broadcast %17 : vector<8x1xf32> to vector<8x32xf32>
    %26 = arith.subf %11, %25 : vector<8x32xf32>
    %cst_20 = arith.constant 9.99999974E-6 : f32
    %27 = vector.broadcast %cst_20 : f32 to vector<8x1xf32>
    %28 = arith.addf %24, %27 : vector<8x1xf32>
    %29 = math.rsqrt %28 : vector<8x1xf32>
    %30 = vector.broadcast %29 : vector<8x1xf32> to vector<8x32xf32>
    %31 = arith.mulf %26, %30 : vector<8x32xf32>
    %32 = vector.broadcast %12 : vector<1x32xf32> to vector<8x32xf32>
    %33 = arith.mulf %31, %32 : vector<8x32xf32>
    %34 = vector.broadcast %13 : vector<1x32xf32> to vector<8x32xf32>
    %35 = arith.addf %33, %34 : vector<8x32xf32>
    %36 = arith.addf %35, %5 : vector<8x32xf32>
    %37 = arith.truncf %36 : vector<8x32xf32> to vector<8x32xbf16>
    %c0_21 = arith.constant 0 : index
    %c0_22 = arith.constant 0 : index
    %38 = vector.load %arg8[%c0_21, %c0_22] : memref<32x64xbf16, #tpu.memory_space<vmem>>, vector<32x64xbf16>
    %cst_23 = arith.constant dense<0.000000e+00> : vector<8x64xf32>
    %39 = tpu.matmul %37, %38, %cst_23 {dimension_numbers = #tpu.dot_dimension_numbers<[1], [0], [0], [1], [0, 0, 1, 1], [], []>} : vector<8x32xbf16>, vector<32x64xbf16>, vector<8x64xf32> -> vector<8x64xf32>
    %c0_24 = arith.constant 0 : index
    %c0_25 = arith.constant 0 : index
    %40 = vector.load %arg9[%c0_24, %c0_25] : memref<1x64xf32, #tpu.memory_space<vmem>>, vector<1x64xf32>
    %41 = vector.broadcast %40 : vector<1x64xf32> to vector<8x64xf32>
    %42 = arith.addf %39, %41 : vector<8x64xf32>
    %43 = arith.truncf %35 : vector<8x32xf32> to vector<8x32xbf16>
    %c0_26 = arith.constant 0 : index
    %c0_27 = arith.constant 0 : index
    %44 = vector.load %arg10[%c0_26, %c0_27] : memref<32x32xbf16, #tpu.memory_space<vmem>>, vector<32x32xbf16>
    %cst_28 = arith.constant dense<0.000000e+00> : vector<8x32xf32>
    %45 = tpu.matmul %43, %44, %cst_28 {dimension_numbers = #tpu.dot_dimension_numbers<[1], [0], [0], [1], [0, 0, 1, 1], [], []>} : vector<8x32xbf16>, vector<32x32xbf16>, vector<8x32xf32> -> vector<8x32xf32>
    %c0_29 = arith.constant 0 : index
    %c0_30 = arith.constant 0 : index
    %46 = vector.load %arg11[%c0_29, %c0_30] : memref<1x32xf32, #tpu.memory_space<vmem>>, vector<1x32xf32>
    %47 = vector.broadcast %46 : vector<1x32xf32> to vector<8x32xf32>
    %48 = arith.addf %45, %47 : vector<8x32xf32>
    %49 = vector.extract_strided_slice %42 {offsets = [0, 0], sizes = [8, 32], strides = [1, 1]} : vector<8x64xf32> to vector<8x32xf32>
    %cst_31 = arith.constant 0.353553385 : f32
    %50 = vector.broadcast %cst_31 : f32 to vector<8x32xf32>
    %51 = arith.mulf %49, %50 : vector<8x32xf32>
    %52 = arith.truncf %51 : vector<8x32xf32> to vector<8x32xbf16>
    %53 = vector.extract_strided_slice %42 {offsets = [0, 32], sizes = [8, 32], strides = [1, 1]} : vector<8x64xf32> to vector<8x32xf32>
    %54 = arith.truncf %53 : vector<8x32xf32> to vector<8x32xbf16>
    %55 = arith.truncf %48 : vector<8x32xf32> to vector<8x32xbf16>
    %56 = vector.extract_strided_slice %52 {offsets = [0, 0], sizes = [8, 8], strides = [1, 1]} : vector<8x32xbf16> to vector<8x8xbf16>
    %57 = vector.extract_strided_slice %54 {offsets = [0, 0], sizes = [8, 8], strides = [1, 1]} : vector<8x32xbf16> to vector<8x8xbf16>
    "tpu.trace_start"() <{level = 10 : i32, message = "qd,kd->qk"}> : () -> ()
    %cst_32 = arith.constant dense<0.000000e+00> : vector<8x8xf32>
    %58 = tpu.matmul %56, %57, %cst_32 {dimension_numbers = #tpu.dot_dimension_numbers<[1], [1], [0], [0], [0, 0, 1, 0], [], []>} : vector<8x8xbf16>, vector<8x8xbf16>, vector<8x8xf32> -> vector<8x8xf32>
    "tpu.trace_stop"() : () -> ()
    %cst_33 = arith.constant dense<0xFF800000> : vector<8xf32>
    %59 = vector.multi_reduction <maximumf>, %58, %cst_33 [1] : vector<8x8xf32> to vector<8xf32>
    %60 = vector.shape_cast %59 : vector<8xf32> to vector<8x1xf32>
    %61 = vector.broadcast %60 : vector<8x1xf32> to vector<8x8xf32>
    %62 = arith.subf %58, %61 : vector<8x8xf32>
    %63 = math.exp %62 : vector<8x8xf32>
    %cst_34 = arith.constant dense<0.000000e+00> : vector<8xf32>
    %64 = vector.multi_reduction <add>, %63, %cst_34 [1] : vector<8x8xf32> to vector<8xf32>
    %65 = vector.shape_cast %64 : vector<8xf32> to vector<8x1xf32>
    %66 = tpu.reciprocal %65 {approx = true} : vector<8x1xf32> -> vector<8x1xf32>
    %67 = vector.broadcast %66 : vector<8x1xf32> to vector<8x8xf32>
    %68 = arith.mulf %63, %67 : vector<8x8xf32>
    %69 = arith.truncf %68 : vector<8x8xf32> to vector<8x8xbf16>
    %70 = vector.extract_strided_slice %55 {offsets = [0, 0], sizes = [8, 8], strides = [1, 1]} : vector<8x32xbf16> to vector<8x8xbf16>
    "tpu.trace_start"() <{level = 10 : i32, message = "qk,kd->qd"}> : () -> ()
    %cst_35 = arith.constant dense<0.000000e+00> : vector<8x8xf32>
    %71 = tpu.matmul %69, %70, %cst_35 {dimension_numbers = #tpu.dot_dimension_numbers<[1], [0], [0], [1], [0, 0, 1, 1], [], []>} : vector<8x8xbf16>, vector<8x8xbf16>, vector<8x8xf32> -> vector<8x8xf32>
    "tpu.trace_stop"() : () -> ()
    %72 = vector.extract_strided_slice %52 {offsets = [0, 8], sizes = [8, 8], strides = [1, 1]} : vector<8x32xbf16> to vector<8x8xbf16>
    %73 = vector.extract_strided_slice %54 {offsets = [0, 8], sizes = [8, 8], strides = [1, 1]} : vector<8x32xbf16> to vector<8x8xbf16>
    "tpu.trace_start"() <{level = 10 : i32, message = "qd,kd->qk"}> : () -> ()
    %cst_36 = arith.constant dense<0.000000e+00> : vector<8x8xf32>
    %74 = tpu.matmul %72, %73, %cst_36 {dimension_numbers = #tpu.dot_dimension_numbers<[1], [1], [0], [0], [0, 0, 1, 0], [], []>} : vector<8x8xbf16>, vector<8x8xbf16>, vector<8x8xf32> -> vector<8x8xf32>
    "tpu.trace_stop"() : () -> ()
    %cst_37 = arith.constant dense<0xFF800000> : vector<8xf32>
    %75 = vector.multi_reduction <maximumf>, %74, %cst_37 [1] : vector<8x8xf32> to vector<8xf32>
    %76 = vector.shape_cast %75 : vector<8xf32> to vector<8x1xf32>
    %77 = vector.broadcast %76 : vector<8x1xf32> to vector<8x8xf32>
    %78 = arith.subf %74, %77 : vector<8x8xf32>
    %79 = math.exp %78 : vector<8x8xf32>
    %cst_38 = arith.constant dense<0.000000e+00> : vector<8xf32>
    %80 = vector.multi_reduction <add>, %79, %cst_38 [1] : vector<8x8xf32> to vector<8xf32>
    %81 = vector.shape_cast %80 : vector<8xf32> to vector<8x1xf32>
    %82 = tpu.reciprocal %81 {approx = true} : vector<8x1xf32> -> vector<8x1xf32>
    %83 = vector.broadcast %82 : vector<8x1xf32> to vector<8x8xf32>
    %84 = arith.mulf %79, %83 : vector<8x8xf32>
    %85 = arith.truncf %84 : vector<8x8xf32> to vector<8x8xbf16>
    %86 = vector.extract_strided_slice %55 {offsets = [0, 8], sizes = [8, 8], strides = [1, 1]} : vector<8x32xbf16> to vector<8x8xbf16>
    "tpu.trace_start"() <{level = 10 : i32, message = "qk,kd->qd"}> : () -> ()
    %cst_39 = arith.constant dense<0.000000e+00> : vector<8x8xf32>
    %87 = tpu.matmul %85, %86, %cst_39 {dimension_numbers = #tpu.dot_dimension_numbers<[1], [0], [0], [1], [0, 0, 1, 1], [], []>} : vector<8x8xbf16>, vector<8x8xbf16>, vector<8x8xf32> -> vector<8x8xf32>
    "tpu.trace_stop"() : () -> ()
    %88 = vector.extract_strided_slice %52 {offsets = [0, 16], sizes = [8, 8], strides = [1, 1]} : vector<8x32xbf16> to vector<8x8xbf16>
    %89 = vector.extract_strided_slice %54 {offsets = [0, 16], sizes = [8, 8], strides = [1, 1]} : vector<8x32xbf16> to vector<8x8xbf16>
    "tpu.trace_start"() <{level = 10 : i32, message = "qd,kd->qk"}> : () -> ()
    %cst_40 = arith.constant dense<0.000000e+00> : vector<8x8xf32>
    %90 = tpu.matmul %88, %89, %cst_40 {dimension_numbers = #tpu.dot_dimension_numbers<[1], [1], [0], [0], [0, 0, 1, 0], [], []>} : vector<8x8xbf16>, vector<8x8xbf16>, vector<8x8xf32> -> vector<8x8xf32>
    "tpu.trace_stop"() : () -> ()
    %cst_41 = arith.constant dense<0xFF800000> : vector<8xf32>
    %91 = vector.multi_reduction <maximumf>, %90, %cst_41 [1] : vector<8x8xf32> to vector<8xf32>
    %92 = vector.shape_cast %91 : vector<8xf32> to vector<8x1xf32>
    %93 = vector.broadcast %92 : vector<8x1xf32> to vector<8x8xf32>
    %94 = arith.subf %90, %93 : vector<8x8xf32>
    %95 = math.exp %94 : vector<8x8xf32>
    %cst_42 = arith.constant dense<0.000000e+00> : vector<8xf32>
    %96 = vector.multi_reduction <add>, %95, %cst_42 [1] : vector<8x8xf32> to vector<8xf32>
    %97 = vector.shape_cast %96 : vector<8xf32> to vector<8x1xf32>
    %98 = tpu.reciprocal %97 {approx = true} : vector<8x1xf32> -> vector<8x1xf32>
    %99 = vector.broadcast %98 : vector<8x1xf32> to vector<8x8xf32>
    %100 = arith.mulf %95, %99 : vector<8x8xf32>
    %101 = arith.truncf %100 : vector<8x8xf32> to vector<8x8xbf16>
    %102 = vector.extract_strided_slice %55 {offsets = [0, 16], sizes = [8, 8], strides = [1, 1]} : vector<8x32xbf16> to vector<8x8xbf16>
    "tpu.trace_start"() <{level = 10 : i32, message = "qk,kd->qd"}> : () -> ()
    %cst_43 = arith.constant dense<0.000000e+00> : vector<8x8xf32>
    %103 = tpu.matmul %101, %102, %cst_43 {dimension_numbers = #tpu.dot_dimension_numbers<[1], [0], [0], [1], [0, 0, 1, 1], [], []>} : vector<8x8xbf16>, vector<8x8xbf16>, vector<8x8xf32> -> vector<8x8xf32>
    "tpu.trace_stop"() : () -> ()
    %104 = vector.extract_strided_slice %52 {offsets = [0, 24], sizes = [8, 8], strides = [1, 1]} : vector<8x32xbf16> to vector<8x8xbf16>
    %105 = vector.extract_strided_slice %54 {offsets = [0, 24], sizes = [8, 8], strides = [1, 1]} : vector<8x32xbf16> to vector<8x8xbf16>
    "tpu.trace_start"() <{level = 10 : i32, message = "qd,kd->qk"}> : () -> ()
    %cst_44 = arith.constant dense<0.000000e+00> : vector<8x8xf32>
    %106 = tpu.matmul %104, %105, %cst_44 {dimension_numbers = #tpu.dot_dimension_numbers<[1], [1], [0], [0], [0, 0, 1, 0], [], []>} : vector<8x8xbf16>, vector<8x8xbf16>, vector<8x8xf32> -> vector<8x8xf32>
    "tpu.trace_stop"() : () -> ()
    %cst_45 = arith.constant dense<0xFF800000> : vector<8xf32>
    %107 = vector.multi_reduction <maximumf>, %106, %cst_45 [1] : vector<8x8xf32> to vector<8xf32>
    %108 = vector.shape_cast %107 : vector<8xf32> to vector<8x1xf32>
    %109 = vector.broadcast %108 : vector<8x1xf32> to vector<8x8xf32>
    %110 = arith.subf %106, %109 : vector<8x8xf32>
    %111 = math.exp %110 : vector<8x8xf32>
    %cst_46 = arith.constant dense<0.000000e+00> : vector<8xf32>
    %112 = vector.multi_reduction <add>, %111, %cst_46 [1] : vector<8x8xf32> to vector<8xf32>
    %113 = vector.shape_cast %112 : vector<8xf32> to vector<8x1xf32>
    %114 = tpu.reciprocal %113 {approx = true} : vector<8x1xf32> -> vector<8x1xf32>
    %115 = vector.broadcast %114 : vector<8x1xf32> to vector<8x8xf32>
    %116 = arith.mulf %111, %115 : vector<8x8xf32>
    %117 = arith.truncf %116 : vector<8x8xf32> to vector<8x8xbf16>
    %118 = vector.extract_strided_slice %55 {offsets = [0, 24], sizes = [8, 8], strides = [1, 1]} : vector<8x32xbf16> to vector<8x8xbf16>
    "tpu.trace_start"() <{level = 10 : i32, message = "qk,kd->qd"}> : () -> ()
    %cst_47 = arith.constant dense<0.000000e+00> : vector<8x8xf32>
    %119 = tpu.matmul %117, %118, %cst_47 {dimension_numbers = #tpu.dot_dimension_numbers<[1], [0], [0], [1], [0, 0, 1, 1], [], []>} : vector<8x8xbf16>, vector<8x8xbf16>, vector<8x8xf32> -> vector<8x8xf32>
    "tpu.trace_stop"() : () -> ()
    %120 = tpu.concatenate %71, %87, %103, %119 in 1 : vector<8x8xf32>, vector<8x8xf32>, vector<8x8xf32>, vector<8x8xf32> -> vector<8x32xf32>
    %121 = arith.truncf %120 : vector<8x32xf32> to vector<8x32xbf16>
    %c0_48 = arith.constant 0 : index
    %c0_49 = arith.constant 0 : index
    %122 = vector.load %arg12[%c0_48, %c0_49] : memref<32x32xbf16, #tpu.memory_space<vmem>>, vector<32x32xbf16>
    %cst_50 = arith.constant dense<0.000000e+00> : vector<8x32xf32>
    %123 = tpu.matmul %121, %122, %cst_50 {dimension_numbers = #tpu.dot_dimension_numbers<[1], [0], [0], [1], [0, 0, 1, 1], [], []>} : vector<8x32xbf16>, vector<32x32xbf16>, vector<8x32xf32> -> vector<8x32xf32>
    %c0_51 = arith.constant 0 : index
    %c0_52 = arith.constant 0 : index
    %124 = vector.load %arg13[%c0_51, %c0_52] : memref<1x32xf32, #tpu.memory_space<vmem>>, vector<1x32xf32>
    %125 = vector.broadcast %124 : vector<1x32xf32> to vector<8x32xf32>
    %126 = arith.addf %123, %125 : vector<8x32xf32>
    %127 = arith.addf %35, %126 : vector<8x32xf32>
    %c0_53 = arith.constant 0 : index
    %c0_54 = arith.constant 0 : index
    %128 = vector.load %arg14[%c0_53, %c0_54] : memref<1x32xf32, #tpu.memory_space<vmem>>, vector<1x32xf32>
    %c0_55 = arith.constant 0 : index
    %c0_56 = arith.constant 0 : index
    %129 = vector.load %arg15[%c0_55, %c0_56] : memref<1x32xf32, #tpu.memory_space<vmem>>, vector<1x32xf32>
    %cst_57 = arith.constant dense<0.000000e+00> : vector<8xf32>
    %130 = vector.multi_reduction <add>, %127, %cst_57 [1] : vector<8x32xf32> to vector<8xf32>
    %131 = vector.shape_cast %130 : vector<8xf32> to vector<8x1xf32>
    %cst_58 = arith.constant 3.200000e+01 : f32
    %132 = vector.broadcast %cst_58 : f32 to vector<8x1xf32>
    %133 = arith.divf %131, %132 : vector<8x1xf32>
    %134 = vector.broadcast %133 : vector<8x1xf32> to vector<8x32xf32>
    %135 = arith.subf %127, %134 : vector<8x32xf32>
    %136 = arith.mulf %135, %135 : vector<8x32xf32>
    %cst_59 = arith.constant dense<0.000000e+00> : vector<8xf32>
    %137 = vector.multi_reduction <add>, %136, %cst_59 [1] : vector<8x32xf32> to vector<8xf32>
    %138 = vector.shape_cast %137 : vector<8xf32> to vector<8x1xf32>
    %cst_60 = arith.constant 3.200000e+01 : f32
    %139 = vector.broadcast %cst_60 : f32 to vector<8x1xf32>
    %140 = arith.divf %138, %139 : vector<8x1xf32>
    %141 = vector.broadcast %133 : vector<8x1xf32> to vector<8x32xf32>
    %142 = arith.subf %127, %141 : vector<8x32xf32>
    %cst_61 = arith.constant 9.99999974E-6 : f32
    %143 = vector.broadcast %cst_61 : f32 to vector<8x1xf32>
    %144 = arith.addf %140, %143 : vector<8x1xf32>
    %145 = math.rsqrt %144 : vector<8x1xf32>
    %146 = vector.broadcast %145 : vector<8x1xf32> to vector<8x32xf32>
    %147 = arith.mulf %142, %146 : vector<8x32xf32>
    %148 = vector.broadcast %128 : vector<1x32xf32> to vector<8x32xf32>
    %149 = arith.mulf %147, %148 : vector<8x32xf32>
    %150 = vector.broadcast %129 : vector<1x32xf32> to vector<8x32xf32>
    %151 = arith.addf %149, %150 : vector<8x32xf32>
    %152 = arith.truncf %151 : vector<8x32xf32> to vector<8x32xbf16>
    %c0_62 = arith.constant 0 : index
    %c0_63 = arith.constant 0 : index
    %153 = vector.load %arg16[%c0_62, %c0_63] : memref<32x64xbf16, #tpu.memory_space<vmem>>, vector<32x64xbf16>
    %cst_64 = arith.constant dense<0.000000e+00> : vector<8x64xf32>
    %154 = tpu.matmul %152, %153, %cst_64 {dimension_numbers = #tpu.dot_dimension_numbers<[1], [0], [0], [1], [0, 0, 1, 1], [], []>} : vector<8x32xbf16>, vector<32x64xbf16>, vector<8x64xf32> -> vector<8x64xf32>
    %c0_65 = arith.constant 0 : index
    %c0_66 = arith.constant 0 : index
    %155 = vector.load %arg17[%c0_65, %c0_66] : memref<1x64xf32, #tpu.memory_space<vmem>>, vector<1x64xf32>
    %156 = vector.broadcast %155 : vector<1x64xf32> to vector<8x64xf32>
    %157 = arith.addf %154, %156 : vector<8x64xf32>
    %cst_67 = arith.constant 0.000000e+00 : f32
    %158 = vector.broadcast %cst_67 : f32 to vector<8x64xf32>
    %159 = arith.maximumf %157, %158 : vector<8x64xf32>
    %160 = arith.truncf %159 : vector<8x64xf32> to vector<8x64xbf16>
    %c0_68 = arith.constant 0 : index
    %c0_69 = arith.constant 0 : index
    %161 = vector.load %arg18[%c0_68, %c0_69] : memref<64x32xbf16, #tpu.memory_space<vmem>>, vector<64x32xbf16>
    %cst_70 = arith.constant dense<0.000000e+00> : vector<8x32xf32>
    %162 = tpu.matmul %160, %161, %cst_70 {dimension_numbers = #tpu.dot_dimension_numbers<[1], [0], [0], [1], [0, 0, 1, 1], [], []>} : vector<8x64xbf16>, vector<64x32xbf16>, vector<8x32xf32> -> vector<8x32xf32>
    %c0_71 = arith.constant 0 : index
    %c0_72 = arith.constant 0 : index
    %163 = vector.load %arg19[%c0_71, %c0_72] : memref<1x32xf32, #tpu.memory_space<vmem>>, vector<1x32xf32>
    %164 = vector.broadcast %163 : vector<1x32xf32> to vector<8x32xf32>
    %165 = arith.addf %162, %164 : vector<8x32xf32>
    %166 = arith.addf %151, %165 : vector<8x32xf32>
    %c0_73 = arith.constant 0 : index
    %c0_74 = arith.constant 0 : index
    %167 = vector.load %arg20[%c0_73, %c0_74] : memref<1x32xf32, #tpu.memory_space<vmem>>, vector<1x32xf32>
    %c0_75 = arith.constant 0 : index
    %c0_76 = arith.constant 0 : index
    %168 = vector.load %arg21[%c0_75, %c0_76] : memref<1x32xf32, #tpu.memory_space<vmem>>, vector<1x32xf32>
    %cst_77 = arith.constant dense<0.000000e+00> : vector<8xf32>
    %169 = vector.multi_reduction <add>, %166, %cst_77 [1] : vector<8x32xf32> to vector<8xf32>
    %170 = vector.shape_cast %169 : vector<8xf32> to vector<8x1xf32>
    %cst_78 = arith.constant 3.200000e+01 : f32
    %171 = vector.broadcast %cst_78 : f32 to vector<8x1xf32>
    %172 = arith.divf %170, %171 : vector<8x1xf32>
    %173 = vector.broadcast %172 : vector<8x1xf32> to vector<8x32xf32>
    %174 = arith.subf %166, %173 : vector<8x32xf32>
    %175 = arith.mulf %174, %174 : vector<8x32xf32>
    %cst_79 = arith.constant dense<0.000000e+00> : vector<8xf32>
    %176 = vector.multi_reduction <add>, %175, %cst_79 [1] : vector<8x32xf32> to vector<8xf32>
    %177 = vector.shape_cast %176 : vector<8xf32> to vector<8x1xf32>
    %cst_80 = arith.constant 3.200000e+01 : f32
    %178 = vector.broadcast %cst_80 : f32 to vector<8x1xf32>
    %179 = arith.divf %177, %178 : vector<8x1xf32>
    %180 = vector.broadcast %172 : vector<8x1xf32> to vector<8x32xf32>
    %181 = arith.subf %166, %180 : vector<8x32xf32>
    %cst_81 = arith.constant 9.99999974E-6 : f32
    %182 = vector.broadcast %cst_81 : f32 to vector<8x1xf32>
    %183 = arith.addf %179, %182 : vector<8x1xf32>
    %184 = math.rsqrt %183 : vector<8x1xf32>
    %185 = vector.broadcast %184 : vector<8x1xf32> to vector<8x32xf32>
    %186 = arith.mulf %181, %185 : vector<8x32xf32>
    %187 = vector.broadcast %167 : vector<1x32xf32> to vector<8x32xf32>
    %188 = arith.mulf %186, %187 : vector<8x32xf32>
    %189 = vector.broadcast %168 : vector<1x32xf32> to vector<8x32xf32>
    %190 = arith.addf %188, %189 : vector<8x32xf32>
    %c0_82 = arith.constant 0 : index
    %c0_83 = arith.constant 0 : index
    %c0_84 = arith.constant 0 : index
    %191 = vector.load %arg22[%c0_82, %c0_83, %c0_84] : memref<1x8x32xf32, #tpu.memory_space<vmem>>, vector<1x8x32xf32>
    %192 = vector.shape_cast %191 : vector<1x8x32xf32> to vector<8x32xf32>
    %193 = vector.shape_cast %190 : vector<8x32xf32> to vector<1x8x32xf32>
    tpu.vector_store %arg22[%c0_82, %c0_83, %c0_84], %193 {strides = array<i32>} : memref<1x8x32xf32, #tpu.memory_space<vmem>>, vector<1x8x32xf32>,
    return
  }
  func.func @transform_0(%arg0: i32) -> (i32, i32, i32) {
    %c0_i32 = arith.constant 0 : i32
    %c0_i32_0 = arith.constant 0 : i32
    %c0_i32_1 = arith.constant 0 : i32
    return %arg0, %c0_i32, %c0_i32_0 : i32, i32, i32
  }
  func.func @transform_1(%arg0: i32) -> (i32, i32, i32) {
    %c0_i32 = arith.constant 0 : i32
    %c0_i32_0 = arith.constant 0 : i32
    %c0_i32_1 = arith.constant 0 : i32
    return %arg0, %c0_i32, %c0_i32_0 : i32, i32, i32
  }
  func.func @transform_2(%arg0: i32) -> (i32, i32, i32) {
    %c0_i32 = arith.constant 0 : i32
    %c0_i32_0 = arith.constant 0 : i32
    %c0_i32_1 = arith.constant 0 : i32
    return %arg0, %c0_i32, %c0_i32_0 : i32, i32, i32
  }
  func.func @transform_3(%arg0: i32) -> (i32, i32) {
    %c0_i32 = arith.constant 0 : i32
    %c0_i32_0 = arith.constant 0 : i32
    %c0_i32_1 = arith.constant 0 : i32
    return %c0_i32, %c0_i32_0 : i32, i32
  }
  func.func @transform_4(%arg0: i32) -> (i32, i32) {
    %c0_i32 = arith.constant 0 : i32
    %c0_i32_0 = arith.constant 0 : i32
    %c0_i32_1 = arith.constant 0 : i32
    return %c0_i32, %c0_i32_0 : i32, i32
  }
  func.func @transform_5(%arg0: i32) -> (i32, i32) {
    %c0_i32 = arith.constant 0 : i32
    %c0_i32_0 = arith.constant 0 : i32
    %c0_i32_1 = arith.constant 0 : i32
    return %c0_i32, %c0_i32_0 : i32, i32
  }
  func.func @transform_6(%arg0: i32) -> (i32, i32) {
    %c0_i32 = arith.constant 0 : i32
    %c0_i32_0 = arith.constant 0 : i32
    %c0_i32_1 = arith.constant 0 : i32
    return %c0_i32, %c0_i32_0 : i32, i32
  }
  func.func @transform_7(%arg0: i32) -> (i32, i32) {
    %c0_i32 = arith.constant 0 : i32
    %c0_i32_0 = arith.constant 0 : i32
    %c0_i32_1 = arith.constant 0 : i32
    return %c0_i32, %c0_i32_0 : i32, i32
  }
  func.func @transform_8(%arg0: i32) -> (i32, i32) {
    %c0_i32 = arith.constant 0 : i32
    %c0_i32_0 = arith.constant 0 : i32
    %c0_i32_1 = arith.constant 0 : i32
    return %c0_i32, %c0_i32_0 : i32, i32
  }
  func.func @transform_9(%arg0: i32) -> (i32, i32) {
    %c0_i32 = arith.constant 0 : i32
    %c0_i32_0 = arith.constant 0 : i32
    %c0_i32_1 = arith.constant 0 : i32
    return %c0_i32, %c0_i32_0 : i32, i32
  }
  func.func @transform_10(%arg0: i32) -> (i32, i32) {
    %c0_i32 = arith.constant 0 : i32
    %c0_i32_0 = arith.constant 0 : i32
    %c0_i32_1 = arith.constant 0 : i32
    return %c0_i32, %c0_i32_0 : i32, i32
  }
  func.func @transform_11(%arg0: i32) -> (i32, i32) {
    %c0_i32 = arith.constant 0 : i32
    %c0_i32_0 = arith.constant 0 : i32
    %c0_i32_1 = arith.constant 0 : i32
    return %c0_i32, %c0_i32_0 : i32, i32
  }
  func.func @transform_12(%arg0: i32) -> (i32, i32) {
    %c0_i32 = arith.constant 0 : i32
    %c0_i32_0 = arith.constant 0 : i32
    %c0_i32_1 = arith.constant 0 : i32
    return %c0_i32, %c0_i32_0 : i32, i32
  }
  func.func @transform_13(%arg0: i32) -> (i32, i32) {
    %c0_i32 = arith.constant 0 : i32
    %c0_i32_0 = arith.constant 0 : i32
    %c0_i32_1 = arith.constant 0 : i32
    return %c0_i32, %c0_i32_0 : i32, i32
  }
  func.func @transform_14(%arg0: i32) -> (i32, i32) {
    %c0_i32 = arith.constant 0 : i32
    %c0_i32_0 = arith.constant 0 : i32
    %c0_i32_1 = arith.constant 0 : i32
    return %c0_i32, %c0_i32_0 : i32, i32
  }
  func.func @transform_15(%arg0: i32) -> (i32, i32) {
    %c0_i32 = arith.constant 0 : i32
    %c0_i32_0 = arith.constant 0 : i32
    %c0_i32_1 = arith.constant 0 : i32
    return %c0_i32, %c0_i32_0 : i32, i32
  }
  func.func @transform_16(%arg0: i32) -> (i32, i32) {
    %c0_i32 = arith.constant 0 : i32
    %c0_i32_0 = arith.constant 0 : i32
    %c0_i32_1 = arith.constant 0 : i32
    return %c0_i32, %c0_i32_0 : i32, i32
  }
  func.func @transform_17(%arg0: i32) -> (i32, i32) {
    %c0_i32 = arith.constant 0 : i32
    %c0_i32_0 = arith.constant 0 : i32
    %c0_i32_1 = arith.constant 0 : i32
    return %c0_i32, %c0_i32_0 : i32, i32
  }
  func.func @transform_18(%arg0: i32) -> (i32, i32) {
    %c0_i32 = arith.constant 0 : i32
    %c0_i32_0 = arith.constant 0 : i32
    %c0_i32_1 = arith.constant 0 : i32
    return %c0_i32, %c0_i32_0 : i32, i32
  }
  func.func @transform_19(%arg0: i32) -> (i32, i32) {
    %c0_i32 = arith.constant 0 : i32
    %c0_i32_0 = arith.constant 0 : i32
    %c0_i32_1 = arith.constant 0 : i32
    return %c0_i32, %c0_i32_0 : i32, i32
  }
  func.func @transform_20(%arg0: i32) -> (i32, i32) {
    %c0_i32 = arith.constant 0 : i32
    %c0_i32_0 = arith.constant 0 : i32
    %c0_i32_1 = arith.constant 0 : i32
    return %c0_i32, %c0_i32_0 : i32, i32
  }
  func.func @transform_21(%arg0: i32) -> (i32, i32, i32) {
    %c0_i32 = arith.constant 0 : i32
    %c0_i32_0 = arith.constant 0 : i32
    %c0_i32_1 = arith.constant 0 : i32
    return %arg0, %c0_i32, %c0_i32_0 : i32, i32, i32
  }
}

module attributes {stable_mosaic.version = 11 : i64} {
  func.func @_cross_attn_kernel(%arg0: i32, %arg1: i32, %arg2: memref<1x8x32xf32, #tpu.memory_space<vmem>>, %arg3: memref<1x8x32xf32, #tpu.memory_space<vmem>>, %arg4: memref<32x32xbf16, #tpu.memory_space<vmem>>, %arg5: memref<1x32xf32, #tpu.memory_space<vmem>>, %arg6: memref<1x16x32xbf16, #tpu.memory_space<vmem>>, %arg7: memref<1x16x32xbf16, #tpu.memory_space<vmem>>, %arg8: memref<1x8x16xi8, #tpu.memory_space<vmem>>, %arg9: memref<1x8x32xbf16, #tpu.memory_space<vmem>>, %arg10: memref<4x8x1xf32, #tpu.memory_space<vmem>>, %arg11: memref<4x8x1xf32, #tpu.memory_space<vmem>>, %arg12: memref<4x8x8xf32, #tpu.memory_space<vmem>>) attributes {dimension_semantics = [#tpu.dimension_semantics<parallel>, #tpu.dimension_semantics<arbitrary>], iteration_bounds = array<i64: 2, 1>, scalar_prefetch = 0 : i64, scratch_operands = 3 : i64, tpu.core_type = #tpu.core_type<tc>, window_params = [{transform_indices = @transform_0, window_bounds = array<i64: 1, 8, 32>}, {transform_indices = @transform_1, window_bounds = array<i64: 1, 8, 32>}, {pipeline_mode = #tpu.pipeline_mode<synchronous>, transform_indices = @transform_2, window_bounds = array<i64: 32, 32>}, {pipeline_mode = #tpu.pipeline_mode<synchronous>, transform_indices = @transform_3, window_bounds = array<i64: 1, 32>}, {transform_indices = @transform_4, window_bounds = array<i64: 1, 16, 32>}, {transform_indices = @transform_5, window_bounds = array<i64: 1, 16, 32>}, {transform_indices = @transform_6, window_bounds = array<i64: 1, 8, 16>}, {transform_indices = @transform_7, window_bounds = array<i64: 1, 8, 32>}]} {
    %c0_i32 = arith.constant 0 : i32
    %0 = arith.cmpi eq, %arg1, %c0_i32 : i32
    %1 = arith.extui %0 : i1 to i32
    %c0_i32_0 = arith.constant 0 : i32
    %2 = arith.cmpi ne, %1, %c0_i32_0 : i32
    scf.if %2 {
      %cst_111 = arith.constant -1.000000e+30 : f32
      %180 = vector.broadcast %cst_111 : f32 to vector<4x8x1xf32>
      %c0_112 = arith.constant 0 : index
      %c0_113 = arith.constant 0 : index
      %c0_114 = arith.constant 0 : index
      %181 = vector.load %arg10[%c0_112, %c0_113, %c0_114] : memref<4x8x1xf32, #tpu.memory_space<vmem>>, vector<4x8x1xf32>
      tpu.vector_store %arg10[%c0_112, %c0_113, %c0_114], %180 {strides = array<i32>} : memref<4x8x1xf32, #tpu.memory_space<vmem>>, vector<4x8x1xf32>,
      %cst_115 = arith.constant 0.000000e+00 : f32
      %182 = vector.broadcast %cst_115 : f32 to vector<4x8x1xf32>
      %c0_116 = arith.constant 0 : index
      %c0_117 = arith.constant 0 : index
      %c0_118 = arith.constant 0 : index
      %183 = vector.load %arg11[%c0_116, %c0_117, %c0_118] : memref<4x8x1xf32, #tpu.memory_space<vmem>>, vector<4x8x1xf32>
      tpu.vector_store %arg11[%c0_116, %c0_117, %c0_118], %182 {strides = array<i32>} : memref<4x8x1xf32, #tpu.memory_space<vmem>>, vector<4x8x1xf32>,
      %cst_119 = arith.constant 0.000000e+00 : f32
      %184 = vector.broadcast %cst_119 : f32 to vector<4x8x8xf32>
      %c0_120 = arith.constant 0 : index
      %c0_121 = arith.constant 0 : index
      %c0_122 = arith.constant 0 : index
      %185 = vector.load %arg12[%c0_120, %c0_121, %c0_122] : memref<4x8x8xf32, #tpu.memory_space<vmem>>, vector<4x8x8xf32>
      tpu.vector_store %arg12[%c0_120, %c0_121, %c0_122], %184 {strides = array<i32>} : memref<4x8x8xf32, #tpu.memory_space<vmem>>, vector<4x8x8xf32>,
    } else {
    }
    %c0 = arith.constant 0 : index
    %c0_1 = arith.constant 0 : index
    %c0_2 = arith.constant 0 : index
    %3 = vector.load %arg2[%c0, %c0_1, %c0_2] : memref<1x8x32xf32, #tpu.memory_space<vmem>>, vector<1x8x32xf32>
    %4 = vector.shape_cast %3 : vector<1x8x32xf32> to vector<8x32xf32>
    %c0_3 = arith.constant 0 : index
    %c0_4 = arith.constant 0 : index
    %c0_5 = arith.constant 0 : index
    %5 = vector.load %arg3[%c0_3, %c0_4, %c0_5] : memref<1x8x32xf32, #tpu.memory_space<vmem>>, vector<1x8x32xf32>
    %6 = vector.shape_cast %5 : vector<1x8x32xf32> to vector<8x32xf32>
    %7 = arith.addf %4, %6 : vector<8x32xf32>
    %8 = arith.truncf %7 : vector<8x32xf32> to vector<8x32xbf16>
    %c0_6 = arith.constant 0 : index
    %c0_7 = arith.constant 0 : index
    %9 = vector.load %arg4[%c0_6, %c0_7] : memref<32x32xbf16, #tpu.memory_space<vmem>>, vector<32x32xbf16>
    %cst = arith.constant dense<0.000000e+00> : vector<8x32xf32>
    %10 = tpu.matmul %8, %9, %cst {dimension_numbers = #tpu.dot_dimension_numbers<[1], [0], [0], [1], [0, 0, 1, 1], [], []>} : vector<8x32xbf16>, vector<32x32xbf16>, vector<8x32xf32> -> vector<8x32xf32>
    %c0_8 = arith.constant 0 : index
    %c0_9 = arith.constant 0 : index
    %11 = vector.load %arg5[%c0_8, %c0_9] : memref<1x32xf32, #tpu.memory_space<vmem>>, vector<1x32xf32>
    %12 = vector.broadcast %11 : vector<1x32xf32> to vector<8x32xf32>
    %13 = arith.addf %10, %12 : vector<8x32xf32>
    %cst_10 = arith.constant 0.353553385 : f32
    %14 = vector.broadcast %cst_10 : f32 to vector<8x32xf32>
    %15 = arith.mulf %13, %14 : vector<8x32xf32>
    %16 = arith.truncf %15 : vector<8x32xf32> to vector<8x32xbf16>
    %c0_11 = arith.constant 0 : index
    %c0_12 = arith.constant 0 : index
    %c0_13 = arith.constant 0 : index
    %17 = vector.load %arg6[%c0_11, %c0_12, %c0_13] : memref<1x16x32xbf16, #tpu.memory_space<vmem>>, vector<1x16x32xbf16>
    %18 = vector.shape_cast %17 : vector<1x16x32xbf16> to vector<16x32xbf16>
    %c0_14 = arith.constant 0 : index
    %c0_15 = arith.constant 0 : index
    %c0_16 = arith.constant 0 : index
    %19 = vector.load %arg7[%c0_14, %c0_15, %c0_16] : memref<1x16x32xbf16, #tpu.memory_space<vmem>>, vector<1x16x32xbf16>
    %20 = vector.shape_cast %19 : vector<1x16x32xbf16> to vector<16x32xbf16>
    %c0_17 = arith.constant 0 : index
    %c0_18 = arith.constant 0 : index
    %c0_19 = arith.constant 0 : index
    %21 = vector.load %arg8[%c0_17, %c0_18, %c0_19] : memref<1x8x16xi8, #tpu.memory_space<vmem>>, vector<1x8x16xi8>
    %22 = vector.shape_cast %21 : vector<1x8x16xi8> to vector<8x16xi8>
    %c0_i8 = arith.constant 0 : i8
    %23 = vector.broadcast %c0_i8 : i8 to vector<8x16xi8>
    %24 = arith.cmpi ne, %22, %23 : vector<8x16xi8>
    %25 = vector.extract_strided_slice %16 {offsets = [0, 0], sizes = [8, 8], strides = [1, 1]} : vector<8x32xbf16> to vector<8x8xbf16>
    %26 = vector.extract_strided_slice %18 {offsets = [0, 0], sizes = [16, 8], strides = [1, 1]} : vector<16x32xbf16> to vector<16x8xbf16>
    "tpu.trace_start"() <{level = 10 : i32, message = "qd,sd->qs"}> : () -> ()
    %cst_20 = arith.constant dense<0.000000e+00> : vector<8x16xf32>
    %27 = tpu.matmul %25, %26, %cst_20 {dimension_numbers = #tpu.dot_dimension_numbers<[1], [1], [0], [0], [0, 0, 1, 0], [], []>} : vector<8x8xbf16>, vector<16x8xbf16>, vector<8x16xf32> -> vector<8x16xf32>
    "tpu.trace_stop"() : () -> ()
    %c0_21 = arith.constant 0 : index
    %c0_22 = arith.constant 0 : index
    %c0_23 = arith.constant 0 : index
    %28 = vector.load %arg10[%c0_21, %c0_22, %c0_23] : memref<4x8x1xf32, #tpu.memory_space<vmem>>, vector<1x8x1xf32>
    %29 = vector.shape_cast %28 : vector<1x8x1xf32> to vector<8x1xf32>
    %cst_24 = arith.constant dense<0xFF800000> : vector<8xf32>
    %30 = vector.multi_reduction <maximumf>, %27, %cst_24 [1] : vector<8x16xf32> to vector<8xf32>
    %31 = vector.shape_cast %30 : vector<8xf32> to vector<8x1xf32>
    %32 = arith.maximumf %29, %31 : vector<8x1xf32>
    %33 = arith.subf %29, %32 : vector<8x1xf32>
    %34 = math.exp %33 : vector<8x1xf32>
    %35 = vector.broadcast %32 : vector<8x1xf32> to vector<8x16xf32>
    %36 = arith.subf %27, %35 : vector<8x16xf32>
    %37 = math.exp %36 : vector<8x16xf32>
    %cst_25 = arith.constant 0.000000e+00 : f32
    %38 = vector.broadcast %cst_25 : f32 to vector<8x16xf32>
    %39 = arith.select %24, %38, %37 : vector<8x16xi1>, vector<8x16xf32>
    %c0_26 = arith.constant 0 : index
    %c0_27 = arith.constant 0 : index
    %c0_28 = arith.constant 0 : index
    %40 = vector.load %arg11[%c0_26, %c0_27, %c0_28] : memref<4x8x1xf32, #tpu.memory_space<vmem>>, vector<1x8x1xf32>
    %41 = vector.shape_cast %40 : vector<1x8x1xf32> to vector<8x1xf32>
    %42 = arith.mulf %34, %41 : vector<8x1xf32>
    %cst_29 = arith.constant dense<0.000000e+00> : vector<8xf32>
    %43 = vector.multi_reduction <add>, %39, %cst_29 [1] : vector<8x16xf32> to vector<8xf32>
    %44 = vector.shape_cast %43 : vector<8xf32> to vector<8x1xf32>
    %45 = arith.addf %42, %44 : vector<8x1xf32>
    %c0_30 = arith.constant 0 : index
    %c0_31 = arith.constant 0 : index
    %c0_32 = arith.constant 0 : index
    %46 = vector.load %arg11[%c0_30, %c0_31, %c0_32] : memref<4x8x1xf32, #tpu.memory_space<vmem>>, vector<1x8x1xf32>
    %47 = vector.shape_cast %46 : vector<1x8x1xf32> to vector<8x1xf32>
    %48 = vector.shape_cast %45 : vector<8x1xf32> to vector<1x8x1xf32>
    tpu.vector_store %arg11[%c0_30, %c0_31, %c0_32], %48 {strides = array<i32>} : memref<4x8x1xf32, #tpu.memory_space<vmem>>, vector<1x8x1xf32>,
    %c0_33 = arith.constant 0 : index
    %c0_34 = arith.constant 0 : index
    %c0_35 = arith.constant 0 : index
    %49 = vector.load %arg12[%c0_33, %c0_34, %c0_35] : memref<4x8x8xf32, #tpu.memory_space<vmem>>, vector<1x8x8xf32>
    %50 = vector.shape_cast %49 : vector<1x8x8xf32> to vector<8x8xf32>
    %51 = vector.broadcast %34 : vector<8x1xf32> to vector<8x8xf32>
    %52 = arith.mulf %51, %50 : vector<8x8xf32>
    %53 = arith.truncf %39 : vector<8x16xf32> to vector<8x16xbf16>
    %54 = vector.extract_strided_slice %20 {offsets = [0, 0], sizes = [16, 8], strides = [1, 1]} : vector<16x32xbf16> to vector<16x8xbf16>
    "tpu.trace_start"() <{level = 10 : i32, message = "qs,sd->qd"}> : () -> ()
    %cst_36 = arith.constant dense<0.000000e+00> : vector<8x8xf32>
    %55 = tpu.matmul %53, %54, %cst_36 {dimension_numbers = #tpu.dot_dimension_numbers<[1], [0], [0], [1], [0, 0, 1, 1], [], []>} : vector<8x16xbf16>, vector<16x8xbf16>, vector<8x8xf32> -> vector<8x8xf32>
    "tpu.trace_stop"() : () -> ()
    %56 = arith.addf %52, %55 : vector<8x8xf32>
    %c0_37 = arith.constant 0 : index
    %c0_38 = arith.constant 0 : index
    %c0_39 = arith.constant 0 : index
    %57 = vector.load %arg12[%c0_37, %c0_38, %c0_39] : memref<4x8x8xf32, #tpu.memory_space<vmem>>, vector<1x8x8xf32>
    %58 = vector.shape_cast %57 : vector<1x8x8xf32> to vector<8x8xf32>
    %59 = vector.shape_cast %56 : vector<8x8xf32> to vector<1x8x8xf32>
    tpu.vector_store %arg12[%c0_37, %c0_38, %c0_39], %59 {strides = array<i32>} : memref<4x8x8xf32, #tpu.memory_space<vmem>>, vector<1x8x8xf32>,
    %c0_40 = arith.constant 0 : index
    %c0_41 = arith.constant 0 : index
    %c0_42 = arith.constant 0 : index
    %60 = vector.load %arg10[%c0_40, %c0_41, %c0_42] : memref<4x8x1xf32, #tpu.memory_space<vmem>>, vector<1x8x1xf32>
    %61 = vector.shape_cast %60 : vector<1x8x1xf32> to vector<8x1xf32>
    %62 = vector.shape_cast %32 : vector<8x1xf32> to vector<1x8x1xf32>
    tpu.vector_store %arg10[%c0_40, %c0_41, %c0_42], %62 {strides = array<i32>} : memref<4x8x1xf32, #tpu.memory_space<vmem>>, vector<1x8x1xf32>,
    %63 = vector.extract_strided_slice %16 {offsets = [0, 8], sizes = [8, 8], strides = [1, 1]} : vector<8x32xbf16> to vector<8x8xbf16>
    %64 = vector.extract_strided_slice %18 {offsets = [0, 8], sizes = [16, 8], strides = [1, 1]} : vector<16x32xbf16> to vector<16x8xbf16>
    "tpu.trace_start"() <{level = 10 : i32, message = "qd,sd->qs"}> : () -> ()
    %cst_43 = arith.constant dense<0.000000e+00> : vector<8x16xf32>
    %65 = tpu.matmul %63, %64, %cst_43 {dimension_numbers = #tpu.dot_dimension_numbers<[1], [1], [0], [0], [0, 0, 1, 0], [], []>} : vector<8x8xbf16>, vector<16x8xbf16>, vector<8x16xf32> -> vector<8x16xf32>
    "tpu.trace_stop"() : () -> ()
    %c1 = arith.constant 1 : index
    %c0_44 = arith.constant 0 : index
    %c0_45 = arith.constant 0 : index
    %66 = vector.load %arg10[%c1, %c0_44, %c0_45] : memref<4x8x1xf32, #tpu.memory_space<vmem>>, vector<1x8x1xf32>
    %67 = vector.shape_cast %66 : vector<1x8x1xf32> to vector<8x1xf32>
    %cst_46 = arith.constant dense<0xFF800000> : vector<8xf32>
    %68 = vector.multi_reduction <maximumf>, %65, %cst_46 [1] : vector<8x16xf32> to vector<8xf32>
    %69 = vector.shape_cast %68 : vector<8xf32> to vector<8x1xf32>
    %70 = arith.maximumf %67, %69 : vector<8x1xf32>
    %71 = arith.subf %67, %70 : vector<8x1xf32>
    %72 = math.exp %71 : vector<8x1xf32>
    %73 = vector.broadcast %70 : vector<8x1xf32> to vector<8x16xf32>
    %74 = arith.subf %65, %73 : vector<8x16xf32>
    %75 = math.exp %74 : vector<8x16xf32>
    %cst_47 = arith.constant 0.000000e+00 : f32
    %76 = vector.broadcast %cst_47 : f32 to vector<8x16xf32>
    %77 = arith.select %24, %76, %75 : vector<8x16xi1>, vector<8x16xf32>
    %c1_48 = arith.constant 1 : index
    %c0_49 = arith.constant 0 : index
    %c0_50 = arith.constant 0 : index
    %78 = vector.load %arg11[%c1_48, %c0_49, %c0_50] : memref<4x8x1xf32, #tpu.memory_space<vmem>>, vector<1x8x1xf32>
    %79 = vector.shape_cast %78 : vector<1x8x1xf32> to vector<8x1xf32>
    %80 = arith.mulf %72, %79 : vector<8x1xf32>
    %cst_51 = arith.constant dense<0.000000e+00> : vector<8xf32>
    %81 = vector.multi_reduction <add>, %77, %cst_51 [1] : vector<8x16xf32> to vector<8xf32>
    %82 = vector.shape_cast %81 : vector<8xf32> to vector<8x1xf32>
    %83 = arith.addf %80, %82 : vector<8x1xf32>
    %c1_52 = arith.constant 1 : index
    %c0_53 = arith.constant 0 : index
    %c0_54 = arith.constant 0 : index
    %84 = vector.load %arg11[%c1_52, %c0_53, %c0_54] : memref<4x8x1xf32, #tpu.memory_space<vmem>>, vector<1x8x1xf32>
    %85 = vector.shape_cast %84 : vector<1x8x1xf32> to vector<8x1xf32>
    %86 = vector.shape_cast %83 : vector<8x1xf32> to vector<1x8x1xf32>
    tpu.vector_store %arg11[%c1_52, %c0_53, %c0_54], %86 {strides = array<i32>} : memref<4x8x1xf32, #tpu.memory_space<vmem>>, vector<1x8x1xf32>,
    %c1_55 = arith.constant 1 : index
    %c0_56 = arith.constant 0 : index
    %c0_57 = arith.constant 0 : index
    %87 = vector.load %arg12[%c1_55, %c0_56, %c0_57] : memref<4x8x8xf32, #tpu.memory_space<vmem>>, vector<1x8x8xf32>
    %88 = vector.shape_cast %87 : vector<1x8x8xf32> to vector<8x8xf32>
    %89 = vector.broadcast %72 : vector<8x1xf32> to vector<8x8xf32>
    %90 = arith.mulf %89, %88 : vector<8x8xf32>
    %91 = arith.truncf %77 : vector<8x16xf32> to vector<8x16xbf16>
    %92 = vector.extract_strided_slice %20 {offsets = [0, 8], sizes = [16, 8], strides = [1, 1]} : vector<16x32xbf16> to vector<16x8xbf16>
    "tpu.trace_start"() <{level = 10 : i32, message = "qs,sd->qd"}> : () -> ()
    %cst_58 = arith.constant dense<0.000000e+00> : vector<8x8xf32>
    %93 = tpu.matmul %91, %92, %cst_58 {dimension_numbers = #tpu.dot_dimension_numbers<[1], [0], [0], [1], [0, 0, 1, 1], [], []>} : vector<8x16xbf16>, vector<16x8xbf16>, vector<8x8xf32> -> vector<8x8xf32>
    "tpu.trace_stop"() : () -> ()
    %94 = arith.addf %90, %93 : vector<8x8xf32>
    %c1_59 = arith.constant 1 : index
    %c0_60 = arith.constant 0 : index
    %c0_61 = arith.constant 0 : index
    %95 = vector.load %arg12[%c1_59, %c0_60, %c0_61] : memref<4x8x8xf32, #tpu.memory_space<vmem>>, vector<1x8x8xf32>
    %96 = vector.shape_cast %95 : vector<1x8x8xf32> to vector<8x8xf32>
    %97 = vector.shape_cast %94 : vector<8x8xf32> to vector<1x8x8xf32>
    tpu.vector_store %arg12[%c1_59, %c0_60, %c0_61], %97 {strides = array<i32>} : memref<4x8x8xf32, #tpu.memory_space<vmem>>, vector<1x8x8xf32>,
    %c1_62 = arith.constant 1 : index
    %c0_63 = arith.constant 0 : index
    %c0_64 = arith.constant 0 : index
    %98 = vector.load %arg10[%c1_62, %c0_63, %c0_64] : memref<4x8x1xf32, #tpu.memory_space<vmem>>, vector<1x8x1xf32>
    %99 = vector.shape_cast %98 : vector<1x8x1xf32> to vector<8x1xf32>
    %100 = vector.shape_cast %70 : vector<8x1xf32> to vector<1x8x1xf32>
    tpu.vector_store %arg10[%c1_62, %c0_63, %c0_64], %100 {strides = array<i32>} : memref<4x8x1xf32, #tpu.memory_space<vmem>>, vector<1x8x1xf32>,
    %101 = vector.extract_strided_slice %16 {offsets = [0, 16], sizes = [8, 8], strides = [1, 1]} : vector<8x32xbf16> to vector<8x8xbf16>
    %102 = vector.extract_strided_slice %18 {offsets = [0, 16], sizes = [16, 8], strides = [1, 1]} : vector<16x32xbf16> to vector<16x8xbf16>
    "tpu.trace_start"() <{level = 10 : i32, message = "qd,sd->qs"}> : () -> ()
    %cst_65 = arith.constant dense<0.000000e+00> : vector<8x16xf32>
    %103 = tpu.matmul %101, %102, %cst_65 {dimension_numbers = #tpu.dot_dimension_numbers<[1], [1], [0], [0], [0, 0, 1, 0], [], []>} : vector<8x8xbf16>, vector<16x8xbf16>, vector<8x16xf32> -> vector<8x16xf32>
    "tpu.trace_stop"() : () -> ()
    %c2 = arith.constant 2 : index
    %c0_66 = arith.constant 0 : index
    %c0_67 = arith.constant 0 : index
    %104 = vector.load %arg10[%c2, %c0_66, %c0_67] : memref<4x8x1xf32, #tpu.memory_space<vmem>>, vector<1x8x1xf32>
    %105 = vector.shape_cast %104 : vector<1x8x1xf32> to vector<8x1xf32>
    %cst_68 = arith.constant dense<0xFF800000> : vector<8xf32>
    %106 = vector.multi_reduction <maximumf>, %103, %cst_68 [1] : vector<8x16xf32> to vector<8xf32>
    %107 = vector.shape_cast %106 : vector<8xf32> to vector<8x1xf32>
    %108 = arith.maximumf %105, %107 : vector<8x1xf32>
    %109 = arith.subf %105, %108 : vector<8x1xf32>
    %110 = math.exp %109 : vector<8x1xf32>
    %111 = vector.broadcast %108 : vector<8x1xf32> to vector<8x16xf32>
    %112 = arith.subf %103, %111 : vector<8x16xf32>
    %113 = math.exp %112 : vector<8x16xf32>
    %cst_69 = arith.constant 0.000000e+00 : f32
    %114 = vector.broadcast %cst_69 : f32 to vector<8x16xf32>
    %115 = arith.select %24, %114, %113 : vector<8x16xi1>, vector<8x16xf32>
    %c2_70 = arith.constant 2 : index
    %c0_71 = arith.constant 0 : index
    %c0_72 = arith.constant 0 : index
    %116 = vector.load %arg11[%c2_70, %c0_71, %c0_72] : memref<4x8x1xf32, #tpu.memory_space<vmem>>, vector<1x8x1xf32>
    %117 = vector.shape_cast %116 : vector<1x8x1xf32> to vector<8x1xf32>
    %118 = arith.mulf %110, %117 : vector<8x1xf32>
    %cst_73 = arith.constant dense<0.000000e+00> : vector<8xf32>
    %119 = vector.multi_reduction <add>, %115, %cst_73 [1] : vector<8x16xf32> to vector<8xf32>
    %120 = vector.shape_cast %119 : vector<8xf32> to vector<8x1xf32>
    %121 = arith.addf %118, %120 : vector<8x1xf32>
    %c2_74 = arith.constant 2 : index
    %c0_75 = arith.constant 0 : index
    %c0_76 = arith.constant 0 : index
    %122 = vector.load %arg11[%c2_74, %c0_75, %c0_76] : memref<4x8x1xf32, #tpu.memory_space<vmem>>, vector<1x8x1xf32>
    %123 = vector.shape_cast %122 : vector<1x8x1xf32> to vector<8x1xf32>
    %124 = vector.shape_cast %121 : vector<8x1xf32> to vector<1x8x1xf32>
    tpu.vector_store %arg11[%c2_74, %c0_75, %c0_76], %124 {strides = array<i32>} : memref<4x8x1xf32, #tpu.memory_space<vmem>>, vector<1x8x1xf32>,
    %c2_77 = arith.constant 2 : index
    %c0_78 = arith.constant 0 : index
    %c0_79 = arith.constant 0 : index
    %125 = vector.load %arg12[%c2_77, %c0_78, %c0_79] : memref<4x8x8xf32, #tpu.memory_space<vmem>>, vector<1x8x8xf32>
    %126 = vector.shape_cast %125 : vector<1x8x8xf32> to vector<8x8xf32>
    %127 = vector.broadcast %110 : vector<8x1xf32> to vector<8x8xf32>
    %128 = arith.mulf %127, %126 : vector<8x8xf32>
    %129 = arith.truncf %115 : vector<8x16xf32> to vector<8x16xbf16>
    %130 = vector.extract_strided_slice %20 {offsets = [0, 16], sizes = [16, 8], strides = [1, 1]} : vector<16x32xbf16> to vector<16x8xbf16>
    "tpu.trace_start"() <{level = 10 : i32, message = "qs,sd->qd"}> : () -> ()
    %cst_80 = arith.constant dense<0.000000e+00> : vector<8x8xf32>
    %131 = tpu.matmul %129, %130, %cst_80 {dimension_numbers = #tpu.dot_dimension_numbers<[1], [0], [0], [1], [0, 0, 1, 1], [], []>} : vector<8x16xbf16>, vector<16x8xbf16>, vector<8x8xf32> -> vector<8x8xf32>
    "tpu.trace_stop"() : () -> ()
    %132 = arith.addf %128, %131 : vector<8x8xf32>
    %c2_81 = arith.constant 2 : index
    %c0_82 = arith.constant 0 : index
    %c0_83 = arith.constant 0 : index
    %133 = vector.load %arg12[%c2_81, %c0_82, %c0_83] : memref<4x8x8xf32, #tpu.memory_space<vmem>>, vector<1x8x8xf32>
    %134 = vector.shape_cast %133 : vector<1x8x8xf32> to vector<8x8xf32>
    %135 = vector.shape_cast %132 : vector<8x8xf32> to vector<1x8x8xf32>
    tpu.vector_store %arg12[%c2_81, %c0_82, %c0_83], %135 {strides = array<i32>} : memref<4x8x8xf32, #tpu.memory_space<vmem>>, vector<1x8x8xf32>,
    %c2_84 = arith.constant 2 : index
    %c0_85 = arith.constant 0 : index
    %c0_86 = arith.constant 0 : index
    %136 = vector.load %arg10[%c2_84, %c0_85, %c0_86] : memref<4x8x1xf32, #tpu.memory_space<vmem>>, vector<1x8x1xf32>
    %137 = vector.shape_cast %136 : vector<1x8x1xf32> to vector<8x1xf32>
    %138 = vector.shape_cast %108 : vector<8x1xf32> to vector<1x8x1xf32>
    tpu.vector_store %arg10[%c2_84, %c0_85, %c0_86], %138 {strides = array<i32>} : memref<4x8x1xf32, #tpu.memory_space<vmem>>, vector<1x8x1xf32>,
    %139 = vector.extract_strided_slice %16 {offsets = [0, 24], sizes = [8, 8], strides = [1, 1]} : vector<8x32xbf16> to vector<8x8xbf16>
    %140 = vector.extract_strided_slice %18 {offsets = [0, 24], sizes = [16, 8], strides = [1, 1]} : vector<16x32xbf16> to vector<16x8xbf16>
    "tpu.trace_start"() <{level = 10 : i32, message = "qd,sd->qs"}> : () -> ()
    %cst_87 = arith.constant dense<0.000000e+00> : vector<8x16xf32>
    %141 = tpu.matmul %139, %140, %cst_87 {dimension_numbers = #tpu.dot_dimension_numbers<[1], [1], [0], [0], [0, 0, 1, 0], [], []>} : vector<8x8xbf16>, vector<16x8xbf16>, vector<8x16xf32> -> vector<8x16xf32>
    "tpu.trace_stop"() : () -> ()
    %c3 = arith.constant 3 : index
    %c0_88 = arith.constant 0 : index
    %c0_89 = arith.constant 0 : index
    %142 = vector.load %arg10[%c3, %c0_88, %c0_89] : memref<4x8x1xf32, #tpu.memory_space<vmem>>, vector<1x8x1xf32>
    %143 = vector.shape_cast %142 : vector<1x8x1xf32> to vector<8x1xf32>
    %cst_90 = arith.constant dense<0xFF800000> : vector<8xf32>
    %144 = vector.multi_reduction <maximumf>, %141, %cst_90 [1] : vector<8x16xf32> to vector<8xf32>
    %145 = vector.shape_cast %144 : vector<8xf32> to vector<8x1xf32>
    %146 = arith.maximumf %143, %145 : vector<8x1xf32>
    %147 = arith.subf %143, %146 : vector<8x1xf32>
    %148 = math.exp %147 : vector<8x1xf32>
    %149 = vector.broadcast %146 : vector<8x1xf32> to vector<8x16xf32>
    %150 = arith.subf %141, %149 : vector<8x16xf32>
    %151 = math.exp %150 : vector<8x16xf32>
    %cst_91 = arith.constant 0.000000e+00 : f32
    %152 = vector.broadcast %cst_91 : f32 to vector<8x16xf32>
    %153 = arith.select %24, %152, %151 : vector<8x16xi1>, vector<8x16xf32>
    %c3_92 = arith.constant 3 : index
    %c0_93 = arith.constant 0 : index
    %c0_94 = arith.constant 0 : index
    %154 = vector.load %arg11[%c3_92, %c0_93, %c0_94] : memref<4x8x1xf32, #tpu.memory_space<vmem>>, vector<1x8x1xf32>
    %155 = vector.shape_cast %154 : vector<1x8x1xf32> to vector<8x1xf32>
    %156 = arith.mulf %148, %155 : vector<8x1xf32>
    %cst_95 = arith.constant dense<0.000000e+00> : vector<8xf32>
    %157 = vector.multi_reduction <add>, %153, %cst_95 [1] : vector<8x16xf32> to vector<8xf32>
    %158 = vector.shape_cast %157 : vector<8xf32> to vector<8x1xf32>
    %159 = arith.addf %156, %158 : vector<8x1xf32>
    %c3_96 = arith.constant 3 : index
    %c0_97 = arith.constant 0 : index
    %c0_98 = arith.constant 0 : index
    %160 = vector.load %arg11[%c3_96, %c0_97, %c0_98] : memref<4x8x1xf32, #tpu.memory_space<vmem>>, vector<1x8x1xf32>
    %161 = vector.shape_cast %160 : vector<1x8x1xf32> to vector<8x1xf32>
    %162 = vector.shape_cast %159 : vector<8x1xf32> to vector<1x8x1xf32>
    tpu.vector_store %arg11[%c3_96, %c0_97, %c0_98], %162 {strides = array<i32>} : memref<4x8x1xf32, #tpu.memory_space<vmem>>, vector<1x8x1xf32>,
    %c3_99 = arith.constant 3 : index
    %c0_100 = arith.constant 0 : index
    %c0_101 = arith.constant 0 : index
    %163 = vector.load %arg12[%c3_99, %c0_100, %c0_101] : memref<4x8x8xf32, #tpu.memory_space<vmem>>, vector<1x8x8xf32>
    %164 = vector.shape_cast %163 : vector<1x8x8xf32> to vector<8x8xf32>
    %165 = vector.broadcast %148 : vector<8x1xf32> to vector<8x8xf32>
    %166 = arith.mulf %165, %164 : vector<8x8xf32>
    %167 = arith.truncf %153 : vector<8x16xf32> to vector<8x16xbf16>
    %168 = vector.extract_strided_slice %20 {offsets = [0, 24], sizes = [16, 8], strides = [1, 1]} : vector<16x32xbf16> to vector<16x8xbf16>
    "tpu.trace_start"() <{level = 10 : i32, message = "qs,sd->qd"}> : () -> ()
    %cst_102 = arith.constant dense<0.000000e+00> : vector<8x8xf32>
    %169 = tpu.matmul %167, %168, %cst_102 {dimension_numbers = #tpu.dot_dimension_numbers<[1], [0], [0], [1], [0, 0, 1, 1], [], []>} : vector<8x16xbf16>, vector<16x8xbf16>, vector<8x8xf32> -> vector<8x8xf32>
    "tpu.trace_stop"() : () -> ()
    %170 = arith.addf %166, %169 : vector<8x8xf32>
    %c3_103 = arith.constant 3 : index
    %c0_104 = arith.constant 0 : index
    %c0_105 = arith.constant 0 : index
    %171 = vector.load %arg12[%c3_103, %c0_104, %c0_105] : memref<4x8x8xf32, #tpu.memory_space<vmem>>, vector<1x8x8xf32>
    %172 = vector.shape_cast %171 : vector<1x8x8xf32> to vector<8x8xf32>
    %173 = vector.shape_cast %170 : vector<8x8xf32> to vector<1x8x8xf32>
    tpu.vector_store %arg12[%c3_103, %c0_104, %c0_105], %173 {strides = array<i32>} : memref<4x8x8xf32, #tpu.memory_space<vmem>>, vector<1x8x8xf32>,
    %c3_106 = arith.constant 3 : index
    %c0_107 = arith.constant 0 : index
    %c0_108 = arith.constant 0 : index
    %174 = vector.load %arg10[%c3_106, %c0_107, %c0_108] : memref<4x8x1xf32, #tpu.memory_space<vmem>>, vector<1x8x1xf32>
    %175 = vector.shape_cast %174 : vector<1x8x1xf32> to vector<8x1xf32>
    %176 = vector.shape_cast %146 : vector<8x1xf32> to vector<1x8x1xf32>
    tpu.vector_store %arg10[%c3_106, %c0_107, %c0_108], %176 {strides = array<i32>} : memref<4x8x1xf32, #tpu.memory_space<vmem>>, vector<1x8x1xf32>,
    %c0_i32_109 = arith.constant 0 : i32
    %177 = arith.cmpi eq, %arg1, %c0_i32_109 : i32
    %178 = arith.extui %177 : i1 to i32
    %c0_i32_110 = arith.constant 0 : i32
    %179 = arith.cmpi ne, %178, %c0_i32_110 : i32
    scf.if %179 {
      %c0_111 = arith.constant 0 : index
      %c0_112 = arith.constant 0 : index
      %c0_113 = arith.constant 0 : index
      %180 = vector.load %arg12[%c0_111, %c0_112, %c0_113] : memref<4x8x8xf32, #tpu.memory_space<vmem>>, vector<1x8x8xf32>
      %181 = vector.shape_cast %180 : vector<1x8x8xf32> to vector<8x8xf32>
      %c0_114 = arith.constant 0 : index
      %c0_115 = arith.constant 0 : index
      %c0_116 = arith.constant 0 : index
      %182 = vector.load %arg11[%c0_114, %c0_115, %c0_116] : memref<4x8x1xf32, #tpu.memory_space<vmem>>, vector<1x8x1xf32>
      %183 = vector.shape_cast %182 : vector<1x8x1xf32> to vector<8x1xf32>
      %184 = tpu.reciprocal %183 {approx = true} : vector<8x1xf32> -> vector<8x1xf32>
      %185 = vector.broadcast %184 : vector<8x1xf32> to vector<8x8xf32>
      %186 = arith.mulf %181, %185 : vector<8x8xf32>
      %c1_117 = arith.constant 1 : index
      %c0_118 = arith.constant 0 : index
      %c0_119 = arith.constant 0 : index
      %187 = vector.load %arg12[%c1_117, %c0_118, %c0_119] : memref<4x8x8xf32, #tpu.memory_space<vmem>>, vector<1x8x8xf32>
      %188 = vector.shape_cast %187 : vector<1x8x8xf32> to vector<8x8xf32>
      %c1_120 = arith.constant 1 : index
      %c0_121 = arith.constant 0 : index
      %c0_122 = arith.constant 0 : index
      %189 = vector.load %arg11[%c1_120, %c0_121, %c0_122] : memref<4x8x1xf32, #tpu.memory_space<vmem>>, vector<1x8x1xf32>
      %190 = vector.shape_cast %189 : vector<1x8x1xf32> to vector<8x1xf32>
      %191 = tpu.reciprocal %190 {approx = true} : vector<8x1xf32> -> vector<8x1xf32>
      %192 = vector.broadcast %191 : vector<8x1xf32> to vector<8x8xf32>
      %193 = arith.mulf %188, %192 : vector<8x8xf32>
      %c2_123 = arith.constant 2 : index
      %c0_124 = arith.constant 0 : index
      %c0_125 = arith.constant 0 : index
      %194 = vector.load %arg12[%c2_123, %c0_124, %c0_125] : memref<4x8x8xf32, #tpu.memory_space<vmem>>, vector<1x8x8xf32>
      %195 = vector.shape_cast %194 : vector<1x8x8xf32> to vector<8x8xf32>
      %c2_126 = arith.constant 2 : index
      %c0_127 = arith.constant 0 : index
      %c0_128 = arith.constant 0 : index
      %196 = vector.load %arg11[%c2_126, %c0_127, %c0_128] : memref<4x8x1xf32, #tpu.memory_space<vmem>>, vector<1x8x1xf32>
      %197 = vector.shape_cast %196 : vector<1x8x1xf32> to vector<8x1xf32>
      %198 = tpu.reciprocal %197 {approx = true} : vector<8x1xf32> -> vector<8x1xf32>
      %199 = vector.broadcast %198 : vector<8x1xf32> to vector<8x8xf32>
      %200 = arith.mulf %195, %199 : vector<8x8xf32>
      %c3_129 = arith.constant 3 : index
      %c0_130 = arith.constant 0 : index
      %c0_131 = arith.constant 0 : index
      %201 = vector.load %arg12[%c3_129, %c0_130, %c0_131] : memref<4x8x8xf32, #tpu.memory_space<vmem>>, vector<1x8x8xf32>
      %202 = vector.shape_cast %201 : vector<1x8x8xf32> to vector<8x8xf32>
      %c3_132 = arith.constant 3 : index
      %c0_133 = arith.constant 0 : index
      %c0_134 = arith.constant 0 : index
      %203 = vector.load %arg11[%c3_132, %c0_133, %c0_134] : memref<4x8x1xf32, #tpu.memory_space<vmem>>, vector<1x8x1xf32>
      %204 = vector.shape_cast %203 : vector<1x8x1xf32> to vector<8x1xf32>
      %205 = tpu.reciprocal %204 {approx = true} : vector<8x1xf32> -> vector<8x1xf32>
      %206 = vector.broadcast %205 : vector<8x1xf32> to vector<8x8xf32>
      %207 = arith.mulf %202, %206 : vector<8x8xf32>
      %208 = tpu.concatenate %186, %193, %200, %207 in 1 : vector<8x8xf32>, vector<8x8xf32>, vector<8x8xf32>, vector<8x8xf32> -> vector<8x32xf32>
      %209 = arith.truncf %208 : vector<8x32xf32> to vector<8x32xbf16>
      %c0_135 = arith.constant 0 : index
      %c0_136 = arith.constant 0 : index
      %c0_137 = arith.constant 0 : index
      %210 = vector.load %arg9[%c0_135, %c0_136, %c0_137] : memref<1x8x32xbf16, #tpu.memory_space<vmem>>, vector<1x8x32xbf16>
      %211 = vector.shape_cast %210 : vector<1x8x32xbf16> to vector<8x32xbf16>
      %212 = vector.shape_cast %209 : vector<8x32xbf16> to vector<1x8x32xbf16>
      tpu.vector_store %arg9[%c0_135, %c0_136, %c0_137], %212 {strides = array<i32>} : memref<1x8x32xbf16, #tpu.memory_space<vmem>>, vector<1x8x32xbf16>,
    } else {
    }
    return
  }
  func.func @transform_0(%arg0: i32, %arg1: i32) -> (i32, i32, i32) {
    %c0_i32 = arith.constant 0 : i32
    %c0_i32_0 = arith.constant 0 : i32
    %c0_i32_1 = arith.constant 0 : i32
    return %arg0, %c0_i32, %c0_i32_0 : i32, i32, i32
  }
  func.func @transform_1(%arg0: i32, %arg1: i32) -> (i32, i32, i32) {
    %c0_i32 = arith.constant 0 : i32
    %c0_i32_0 = arith.constant 0 : i32
    %c0_i32_1 = arith.constant 0 : i32
    return %arg0, %c0_i32, %c0_i32_0 : i32, i32, i32
  }
  func.func @transform_2(%arg0: i32, %arg1: i32) -> (i32, i32) {
    %c0_i32 = arith.constant 0 : i32
    %c0_i32_0 = arith.constant 0 : i32
    %c0_i32_1 = arith.constant 0 : i32
    return %c0_i32, %c0_i32_0 : i32, i32
  }
  func.func @transform_3(%arg0: i32, %arg1: i32) -> (i32, i32) {
    %c0_i32 = arith.constant 0 : i32
    %c0_i32_0 = arith.constant 0 : i32
    %c0_i32_1 = arith.constant 0 : i32
    return %c0_i32, %c0_i32_0 : i32, i32
  }
  func.func @transform_4(%arg0: i32, %arg1: i32) -> (i32, i32, i32) {
    %c0_i32 = arith.constant 0 : i32
    %c0_i32_0 = arith.constant 0 : i32
    return %arg0, %arg1, %c0_i32 : i32, i32, i32
  }
  func.func @transform_5(%arg0: i32, %arg1: i32) -> (i32, i32, i32) {
    %c0_i32 = arith.constant 0 : i32
    %c0_i32_0 = arith.constant 0 : i32
    return %arg0, %arg1, %c0_i32 : i32, i32, i32
  }
  func.func @transform_6(%arg0: i32, %arg1: i32) -> (i32, i32, i32) {
    %c0_i32 = arith.constant 0 : i32
    %c0_i32_0 = arith.constant 0 : i32
    return %arg0, %c0_i32, %arg1 : i32, i32, i32
  }
  func.func @transform_7(%arg0: i32, %arg1: i32) -> (i32, i32, i32) {
    %c0_i32 = arith.constant 0 : i32
    %c0_i32_0 = arith.constant 0 : i32
    %c0_i32_1 = arith.constant 0 : i32
    return %arg0, %c0_i32, %c0_i32_0 : i32, i32, i32
  }
}

module attributes {stable_mosaic.version = 11 : i64} {
  func.func @_mask_kernel(%arg0: i32, %arg1: i32, %arg2: memref<1x8x32xbf16, #tpu.memory_space<vmem>>, %arg3: memref<1x32x32xbf16, #tpu.memory_space<vmem>>, %arg4: memref<1x8x32xf32, #tpu.memory_space<vmem>>) attributes {dimension_semantics = [#tpu.dimension_semantics<parallel>, #tpu.dimension_semantics<parallel>], iteration_bounds = array<i64: 2, 1>, scalar_prefetch = 0 : i64, scratch_operands = 0 : i64, tpu.core_type = #tpu.core_type<tc>, window_params = [{transform_indices = @transform_0, window_bounds = array<i64: 1, 8, 32>}, {transform_indices = @transform_1, window_bounds = array<i64: 1, 32, 32>}, {transform_indices = @transform_2, window_bounds = array<i64: 1, 8, 32>}]} {
    %c0 = arith.constant 0 : index
    %c0_0 = arith.constant 0 : index
    %c0_1 = arith.constant 0 : index
    %0 = vector.load %arg2[%c0, %c0_0, %c0_1] : memref<1x8x32xbf16, #tpu.memory_space<vmem>>, vector<1x8x32xbf16>
    %1 = vector.shape_cast %0 : vector<1x8x32xbf16> to vector<8x32xbf16>
    %c0_2 = arith.constant 0 : index
    %c0_3 = arith.constant 0 : index
    %c0_4 = arith.constant 0 : index
    %2 = vector.load %arg3[%c0_2, %c0_3, %c0_4] : memref<1x32x32xbf16, #tpu.memory_space<vmem>>, vector<1x32x32xbf16>
    %3 = vector.shape_cast %2 : vector<1x32x32xbf16> to vector<32x32xbf16>
    "tpu.trace_start"() <{level = 10 : i32, message = "qd,nd->qn"}> : () -> ()
    %cst = arith.constant dense<0.000000e+00> : vector<8x32xf32>
    %4 = tpu.matmul %1, %3, %cst {dimension_numbers = #tpu.dot_dimension_numbers<[1], [1], [0], [0], [0, 0, 1, 0], [], []>} : vector<8x32xbf16>, vector<32x32xbf16>, vector<8x32xf32> -> vector<8x32xf32>
    "tpu.trace_stop"() : () -> ()
    %c0_5 = arith.constant 0 : index
    %c0_6 = arith.constant 0 : index
    %c0_7 = arith.constant 0 : index
    %5 = vector.load %arg4[%c0_5, %c0_6, %c0_7] : memref<1x8x32xf32, #tpu.memory_space<vmem>>, vector<1x8x32xf32>
    %6 = vector.shape_cast %5 : vector<1x8x32xf32> to vector<8x32xf32>
    %7 = vector.shape_cast %4 : vector<8x32xf32> to vector<1x8x32xf32>
    tpu.vector_store %arg4[%c0_5, %c0_6, %c0_7], %7 {strides = array<i32>} : memref<1x8x32xf32, #tpu.memory_space<vmem>>, vector<1x8x32xf32>,
    return
  }
  func.func @transform_0(%arg0: i32, %arg1: i32) -> (i32, i32, i32) {
    %c0_i32 = arith.constant 0 : i32
    %c0_i32_0 = arith.constant 0 : i32
    %c0_i32_1 = arith.constant 0 : i32
    return %arg0, %c0_i32, %c0_i32_0 : i32, i32, i32
  }
  func.func @transform_1(%arg0: i32, %arg1: i32) -> (i32, i32, i32) {
    %c0_i32 = arith.constant 0 : i32
    %c0_i32_0 = arith.constant 0 : i32
    return %arg0, %arg1, %c0_i32 : i32, i32, i32
  }
  func.func @transform_2(%arg0: i32, %arg1: i32) -> (i32, i32, i32) {
    %c0_i32 = arith.constant 0 : i32
    %c0_i32_0 = arith.constant 0 : i32
    return %arg0, %c0_i32, %arg1 : i32, i32, i32
  }
}

module attributes {stable_mosaic.version = 11 : i64} {
  func.func @_kv_kernel(%arg0: i32, %arg1: memref<64x16xf32, #tpu.memory_space<vmem>>, %arg2: memref<64x32xbf16, #tpu.memory_space<vmem>>, %arg3: memref<16x32xbf16, #tpu.memory_space<vmem>>, %arg4: memref<1x32xf32, #tpu.memory_space<vmem>>, %arg5: memref<32x32xbf16, #tpu.memory_space<vmem>>, %arg6: memref<1x32xf32, #tpu.memory_space<vmem>>, %arg7: memref<32x32xbf16, #tpu.memory_space<vmem>>, %arg8: memref<1x32xf32, #tpu.memory_space<vmem>>, %arg9: memref<64x32xbf16, #tpu.memory_space<vmem>>, %arg10: memref<64x32xbf16, #tpu.memory_space<vmem>>) attributes {dimension_semantics = [#tpu.dimension_semantics<parallel>], iteration_bounds = array<i64: 1>, scalar_prefetch = 0 : i64, scratch_operands = 0 : i64, tpu.core_type = #tpu.core_type<tc>, window_params = [{transform_indices = @transform_0, window_bounds = array<i64: 64, 16>}, {transform_indices = @transform_1, window_bounds = array<i64: 64, 32>}, {pipeline_mode = #tpu.pipeline_mode<synchronous>, transform_indices = @transform_2, window_bounds = array<i64: 16, 32>}, {pipeline_mode = #tpu.pipeline_mode<synchronous>, transform_indices = @transform_3, window_bounds = array<i64: 1, 32>}, {pipeline_mode = #tpu.pipeline_mode<synchronous>, transform_indices = @transform_4, window_bounds = array<i64: 32, 32>}, {pipeline_mode = #tpu.pipeline_mode<synchronous>, transform_indices = @transform_5, window_bounds = array<i64: 1, 32>}, {pipeline_mode = #tpu.pipeline_mode<synchronous>, transform_indices = @transform_6, window_bounds = array<i64: 32, 32>}, {pipeline_mode = #tpu.pipeline_mode<synchronous>, transform_indices = @transform_7, window_bounds = array<i64: 1, 32>}, {transform_indices = @transform_8, window_bounds = array<i64: 64, 32>}, {transform_indices = @transform_9, window_bounds = array<i64: 64, 32>}]} {
    %c0 = arith.constant 0 : index
    %c0_0 = arith.constant 0 : index
    %0 = vector.load %arg1[%c0, %c0_0] : memref<64x16xf32, #tpu.memory_space<vmem>>, vector<64x16xf32>
    %1 = arith.truncf %0 : vector<64x16xf32> to vector<64x16xbf16>
    %c0_1 = arith.constant 0 : index
    %c0_2 = arith.constant 0 : index
    %2 = vector.load %arg3[%c0_1, %c0_2] : memref<16x32xbf16, #tpu.memory_space<vmem>>, vector<16x32xbf16>
    %cst = arith.constant dense<0.000000e+00> : vector<64x32xf32>
    %3 = tpu.matmul %1, %2, %cst {dimension_numbers = #tpu.dot_dimension_numbers<[1], [0], [0], [1], [0, 0, 1, 1], [], []>} : vector<64x16xbf16>, vector<16x32xbf16>, vector<64x32xf32> -> vector<64x32xf32>
    %c0_3 = arith.constant 0 : index
    %c0_4 = arith.constant 0 : index
    %4 = vector.load %arg4[%c0_3, %c0_4] : memref<1x32xf32, #tpu.memory_space<vmem>>, vector<1x32xf32>
    %5 = vector.broadcast %4 : vector<1x32xf32> to vector<64x32xf32>
    %6 = arith.addf %3, %5 : vector<64x32xf32>
    %c0_5 = arith.constant 0 : index
    %c0_6 = arith.constant 0 : index
    %7 = vector.load %arg2[%c0_5, %c0_6] : memref<64x32xbf16, #tpu.memory_space<vmem>>, vector<64x32xbf16>
    %8 = arith.extf %7 : vector<64x32xbf16> to vector<64x32xf32>
    %9 = arith.addf %6, %8 : vector<64x32xf32>
    %10 = arith.truncf %9 : vector<64x32xf32> to vector<64x32xbf16>
    %c0_7 = arith.constant 0 : index
    %c0_8 = arith.constant 0 : index
    %11 = vector.load %arg5[%c0_7, %c0_8] : memref<32x32xbf16, #tpu.memory_space<vmem>>, vector<32x32xbf16>
    %cst_9 = arith.constant dense<0.000000e+00> : vector<64x32xf32>
    %12 = tpu.matmul %10, %11, %cst_9 {dimension_numbers = #tpu.dot_dimension_numbers<[1], [0], [0], [1], [0, 0, 1, 1], [], []>} : vector<64x32xbf16>, vector<32x32xbf16>, vector<64x32xf32> -> vector<64x32xf32>
    %c0_10 = arith.constant 0 : index
    %c0_11 = arith.constant 0 : index
    %13 = vector.load %arg6[%c0_10, %c0_11] : memref<1x32xf32, #tpu.memory_space<vmem>>, vector<1x32xf32>
    %14 = vector.broadcast %13 : vector<1x32xf32> to vector<64x32xf32>
    %15 = arith.addf %12, %14 : vector<64x32xf32>
    %16 = arith.truncf %6 : vector<64x32xf32> to vector<64x32xbf16>
    %c0_12 = arith.constant 0 : index
    %c0_13 = arith.constant 0 : index
    %17 = vector.load %arg7[%c0_12, %c0_13] : memref<32x32xbf16, #tpu.memory_space<vmem>>, vector<32x32xbf16>
    %cst_14 = arith.constant dense<0.000000e+00> : vector<64x32xf32>
    %18 = tpu.matmul %16, %17, %cst_14 {dimension_numbers = #tpu.dot_dimension_numbers<[1], [0], [0], [1], [0, 0, 1, 1], [], []>} : vector<64x32xbf16>, vector<32x32xbf16>, vector<64x32xf32> -> vector<64x32xf32>
    %c0_15 = arith.constant 0 : index
    %c0_16 = arith.constant 0 : index
    %19 = vector.load %arg8[%c0_15, %c0_16] : memref<1x32xf32, #tpu.memory_space<vmem>>, vector<1x32xf32>
    %20 = vector.broadcast %19 : vector<1x32xf32> to vector<64x32xf32>
    %21 = arith.addf %18, %20 : vector<64x32xf32>
    %22 = arith.truncf %15 : vector<64x32xf32> to vector<64x32xbf16>
    %c0_17 = arith.constant 0 : index
    %c0_18 = arith.constant 0 : index
    %23 = vector.load %arg9[%c0_17, %c0_18] : memref<64x32xbf16, #tpu.memory_space<vmem>>, vector<64x32xbf16>
    tpu.vector_store %arg9[%c0_17, %c0_18], %22 {strides = array<i32>} : memref<64x32xbf16, #tpu.memory_space<vmem>>, vector<64x32xbf16>,
    %24 = arith.truncf %21 : vector<64x32xf32> to vector<64x32xbf16>
    %c0_19 = arith.constant 0 : index
    %c0_20 = arith.constant 0 : index
    %25 = vector.load %arg10[%c0_19, %c0_20] : memref<64x32xbf16, #tpu.memory_space<vmem>>, vector<64x32xbf16>
    tpu.vector_store %arg10[%c0_19, %c0_20], %24 {strides = array<i32>} : memref<64x32xbf16, #tpu.memory_space<vmem>>, vector<64x32xbf16>,
    return
  }
  func.func @transform_0(%arg0: i32) -> (i32, i32) {
    %c0_i32 = arith.constant 0 : i32
    %c0_i32_0 = arith.constant 0 : i32
    return %arg0, %c0_i32 : i32, i32
  }
  func.func @transform_1(%arg0: i32) -> (i32, i32) {
    %c0_i32 = arith.constant 0 : i32
    %c0_i32_0 = arith.constant 0 : i32
    return %arg0, %c0_i32 : i32, i32
  }
  func.func @transform_2(%arg0: i32) -> (i32, i32) {
    %c0_i32 = arith.constant 0 : i32
    %c0_i32_0 = arith.constant 0 : i32
    %c0_i32_1 = arith.constant 0 : i32
    return %c0_i32, %c0_i32_0 : i32, i32
  }
  func.func @transform_3(%arg0: i32) -> (i32, i32) {
    %c0_i32 = arith.constant 0 : i32
    %c0_i32_0 = arith.constant 0 : i32
    %c0_i32_1 = arith.constant 0 : i32
    return %c0_i32, %c0_i32_0 : i32, i32
  }
  func.func @transform_4(%arg0: i32) -> (i32, i32) {
    %c0_i32 = arith.constant 0 : i32
    %c0_i32_0 = arith.constant 0 : i32
    %c0_i32_1 = arith.constant 0 : i32
    return %c0_i32, %c0_i32_0 : i32, i32
  }
  func.func @transform_5(%arg0: i32) -> (i32, i32) {
    %c0_i32 = arith.constant 0 : i32
    %c0_i32_0 = arith.constant 0 : i32
    %c0_i32_1 = arith.constant 0 : i32
    return %c0_i32, %c0_i32_0 : i32, i32
  }
  func.func @transform_6(%arg0: i32) -> (i32, i32) {
    %c0_i32 = arith.constant 0 : i32
    %c0_i32_0 = arith.constant 0 : i32
    %c0_i32_1 = arith.constant 0 : i32
    return %c0_i32, %c0_i32_0 : i32, i32
  }
  func.func @transform_7(%arg0: i32) -> (i32, i32) {
    %c0_i32 = arith.constant 0 : i32
    %c0_i32_0 = arith.constant 0 : i32
    %c0_i32_1 = arith.constant 0 : i32
    return %c0_i32, %c0_i32_0 : i32, i32
  }
  func.func @transform_8(%arg0: i32) -> (i32, i32) {
    %c0_i32 = arith.constant 0 : i32
    %c0_i32_0 = arith.constant 0 : i32
    return %arg0, %c0_i32 : i32, i32
  }
  func.func @transform_9(%arg0: i32) -> (i32, i32) {
    %c0_i32 = arith.constant 0 : i32
    %c0_i32_0 = arith.constant 0 : i32
    return %arg0, %c0_i32 : i32, i32
  }
}

module attributes {stable_mosaic.version = 11 : i64} {
  func.func @_mask_kernel(%arg0: i32, %arg1: i32, %arg2: memref<1x8x32xbf16, #tpu.memory_space<vmem>>, %arg3: memref<1x64x32xbf16, #tpu.memory_space<vmem>>, %arg4: memref<1x8x64xf32, #tpu.memory_space<vmem>>) attributes {dimension_semantics = [#tpu.dimension_semantics<parallel>, #tpu.dimension_semantics<parallel>], iteration_bounds = array<i64: 2, 1>, scalar_prefetch = 0 : i64, scratch_operands = 0 : i64, tpu.core_type = #tpu.core_type<tc>, window_params = [{transform_indices = @transform_0, window_bounds = array<i64: 1, 8, 32>}, {transform_indices = @transform_1, window_bounds = array<i64: 1, 64, 32>}, {transform_indices = @transform_2, window_bounds = array<i64: 1, 8, 64>}]} {
    %c0 = arith.constant 0 : index
    %c0_0 = arith.constant 0 : index
    %c0_1 = arith.constant 0 : index
    %0 = vector.load %arg2[%c0, %c0_0, %c0_1] : memref<1x8x32xbf16, #tpu.memory_space<vmem>>, vector<1x8x32xbf16>
    %1 = vector.shape_cast %0 : vector<1x8x32xbf16> to vector<8x32xbf16>
    %c0_2 = arith.constant 0 : index
    %c0_3 = arith.constant 0 : index
    %c0_4 = arith.constant 0 : index
    %2 = vector.load %arg3[%c0_2, %c0_3, %c0_4] : memref<1x64x32xbf16, #tpu.memory_space<vmem>>, vector<1x64x32xbf16>
    %3 = vector.shape_cast %2 : vector<1x64x32xbf16> to vector<64x32xbf16>
    "tpu.trace_start"() <{level = 10 : i32, message = "qd,nd->qn"}> : () -> ()
    %cst = arith.constant dense<0.000000e+00> : vector<8x64xf32>
    %4 = tpu.matmul %1, %3, %cst {dimension_numbers = #tpu.dot_dimension_numbers<[1], [1], [0], [0], [0, 0, 1, 0], [], []>} : vector<8x32xbf16>, vector<64x32xbf16>, vector<8x64xf32> -> vector<8x64xf32>
    "tpu.trace_stop"() : () -> ()
    %c0_5 = arith.constant 0 : index
    %c0_6 = arith.constant 0 : index
    %c0_7 = arith.constant 0 : index
    %5 = vector.load %arg4[%c0_5, %c0_6, %c0_7] : memref<1x8x64xf32, #tpu.memory_space<vmem>>, vector<1x8x64xf32>
    %6 = vector.shape_cast %5 : vector<1x8x64xf32> to vector<8x64xf32>
    %7 = vector.shape_cast %4 : vector<8x64xf32> to vector<1x8x64xf32>
    tpu.vector_store %arg4[%c0_5, %c0_6, %c0_7], %7 {strides = array<i32>} : memref<1x8x64xf32, #tpu.memory_space<vmem>>, vector<1x8x64xf32>,
    return
  }
  func.func @transform_0(%arg0: i32, %arg1: i32) -> (i32, i32, i32) {
    %c0_i32 = arith.constant 0 : i32
    %c0_i32_0 = arith.constant 0 : i32
    %c0_i32_1 = arith.constant 0 : i32
    return %arg0, %c0_i32, %c0_i32_0 : i32, i32, i32
  }
  func.func @transform_1(%arg0: i32, %arg1: i32) -> (i32, i32, i32) {
    %c0_i32 = arith.constant 0 : i32
    %c0_i32_0 = arith.constant 0 : i32
    return %arg0, %arg1, %c0_i32 : i32, i32, i32
  }
  func.func @transform_2(%arg0: i32, %arg1: i32) -> (i32, i32, i32) {
    %c0_i32 = arith.constant 0 : i32
    %c0_i32_0 = arith.constant 0 : i32
    return %arg0, %c0_i32, %arg1 : i32, i32, i32
  }
}

module attributes {stable_mosaic.version = 11 : i64} {
  func.func @_cross_attn_kernel(%arg0: i32, %arg1: i32, %arg2: memref<1x8x32xf32, #tpu.memory_space<vmem>>, %arg3: memref<1x8x32xf32, #tpu.memory_space<vmem>>, %arg4: memref<32x32xbf16, #tpu.memory_space<vmem>>, %arg5: memref<1x32xf32, #tpu.memory_space<vmem>>, %arg6: memref<1x32x32xbf16, #tpu.memory_space<vmem>>, %arg7: memref<1x32x32xbf16, #tpu.memory_space<vmem>>, %arg8: memref<1x8x32xi8, #tpu.memory_space<vmem>>, %arg9: memref<1x8x32xbf16, #tpu.memory_space<vmem>>, %arg10: memref<4x8x1xf32, #tpu.memory_space<vmem>>, %arg11: memref<4x8x1xf32, #tpu.memory_space<vmem>>, %arg12: memref<4x8x8xf32, #tpu.memory_space<vmem>>) attributes {dimension_semantics = [#tpu.dimension_semantics<parallel>, #tpu.dimension_semantics<arbitrary>], iteration_bounds = array<i64: 2, 1>, scalar_prefetch = 0 : i64, scratch_operands = 3 : i64, tpu.core_type = #tpu.core_type<tc>, window_params = [{transform_indices = @transform_0, window_bounds = array<i64: 1, 8, 32>}, {transform_indices = @transform_1, window_bounds = array<i64: 1, 8, 32>}, {pipeline_mode = #tpu.pipeline_mode<synchronous>, transform_indices = @transform_2, window_bounds = array<i64: 32, 32>}, {pipeline_mode = #tpu.pipeline_mode<synchronous>, transform_indices = @transform_3, window_bounds = array<i64: 1, 32>}, {transform_indices = @transform_4, window_bounds = array<i64: 1, 32, 32>}, {transform_indices = @transform_5, window_bounds = array<i64: 1, 32, 32>}, {transform_indices = @transform_6, window_bounds = array<i64: 1, 8, 32>}, {transform_indices = @transform_7, window_bounds = array<i64: 1, 8, 32>}]} {
    %c0_i32 = arith.constant 0 : i32
    %0 = arith.cmpi eq, %arg1, %c0_i32 : i32
    %1 = arith.extui %0 : i1 to i32
    %c0_i32_0 = arith.constant 0 : i32
    %2 = arith.cmpi ne, %1, %c0_i32_0 : i32
    scf.if %2 {
      %cst_111 = arith.constant -1.000000e+30 : f32
      %180 = vector.broadcast %cst_111 : f32 to vector<4x8x1xf32>
      %c0_112 = arith.constant 0 : index
      %c0_113 = arith.constant 0 : index
      %c0_114 = arith.constant 0 : index
      %181 = vector.load %arg10[%c0_112, %c0_113, %c0_114] : memref<4x8x1xf32, #tpu.memory_space<vmem>>, vector<4x8x1xf32>
      tpu.vector_store %arg10[%c0_112, %c0_113, %c0_114], %180 {strides = array<i32>} : memref<4x8x1xf32, #tpu.memory_space<vmem>>, vector<4x8x1xf32>,
      %cst_115 = arith.constant 0.000000e+00 : f32
      %182 = vector.broadcast %cst_115 : f32 to vector<4x8x1xf32>
      %c0_116 = arith.constant 0 : index
      %c0_117 = arith.constant 0 : index
      %c0_118 = arith.constant 0 : index
      %183 = vector.load %arg11[%c0_116, %c0_117, %c0_118] : memref<4x8x1xf32, #tpu.memory_space<vmem>>, vector<4x8x1xf32>
      tpu.vector_store %arg11[%c0_116, %c0_117, %c0_118], %182 {strides = array<i32>} : memref<4x8x1xf32, #tpu.memory_space<vmem>>, vector<4x8x1xf32>,
      %cst_119 = arith.constant 0.000000e+00 : f32
      %184 = vector.broadcast %cst_119 : f32 to vector<4x8x8xf32>
      %c0_120 = arith.constant 0 : index
      %c0_121 = arith.constant 0 : index
      %c0_122 = arith.constant 0 : index
      %185 = vector.load %arg12[%c0_120, %c0_121, %c0_122] : memref<4x8x8xf32, #tpu.memory_space<vmem>>, vector<4x8x8xf32>
      tpu.vector_store %arg12[%c0_120, %c0_121, %c0_122], %184 {strides = array<i32>} : memref<4x8x8xf32, #tpu.memory_space<vmem>>, vector<4x8x8xf32>,
    } else {
    }
    %c0 = arith.constant 0 : index
    %c0_1 = arith.constant 0 : index
    %c0_2 = arith.constant 0 : index
    %3 = vector.load %arg2[%c0, %c0_1, %c0_2] : memref<1x8x32xf32, #tpu.memory_space<vmem>>, vector<1x8x32xf32>
    %4 = vector.shape_cast %3 : vector<1x8x32xf32> to vector<8x32xf32>
    %c0_3 = arith.constant 0 : index
    %c0_4 = arith.constant 0 : index
    %c0_5 = arith.constant 0 : index
    %5 = vector.load %arg3[%c0_3, %c0_4, %c0_5] : memref<1x8x32xf32, #tpu.memory_space<vmem>>, vector<1x8x32xf32>
    %6 = vector.shape_cast %5 : vector<1x8x32xf32> to vector<8x32xf32>
    %7 = arith.addf %4, %6 : vector<8x32xf32>
    %8 = arith.truncf %7 : vector<8x32xf32> to vector<8x32xbf16>
    %c0_6 = arith.constant 0 : index
    %c0_7 = arith.constant 0 : index
    %9 = vector.load %arg4[%c0_6, %c0_7] : memref<32x32xbf16, #tpu.memory_space<vmem>>, vector<32x32xbf16>
    %cst = arith.constant dense<0.000000e+00> : vector<8x32xf32>
    %10 = tpu.matmul %8, %9, %cst {dimension_numbers = #tpu.dot_dimension_numbers<[1], [0], [0], [1], [0, 0, 1, 1], [], []>} : vector<8x32xbf16>, vector<32x32xbf16>, vector<8x32xf32> -> vector<8x32xf32>
    %c0_8 = arith.constant 0 : index
    %c0_9 = arith.constant 0 : index
    %11 = vector.load %arg5[%c0_8, %c0_9] : memref<1x32xf32, #tpu.memory_space<vmem>>, vector<1x32xf32>
    %12 = vector.broadcast %11 : vector<1x32xf32> to vector<8x32xf32>
    %13 = arith.addf %10, %12 : vector<8x32xf32>
    %cst_10 = arith.constant 0.353553385 : f32
    %14 = vector.broadcast %cst_10 : f32 to vector<8x32xf32>
    %15 = arith.mulf %13, %14 : vector<8x32xf32>
    %16 = arith.truncf %15 : vector<8x32xf32> to vector<8x32xbf16>
    %c0_11 = arith.constant 0 : index
    %c0_12 = arith.constant 0 : index
    %c0_13 = arith.constant 0 : index
    %17 = vector.load %arg6[%c0_11, %c0_12, %c0_13] : memref<1x32x32xbf16, #tpu.memory_space<vmem>>, vector<1x32x32xbf16>
    %18 = vector.shape_cast %17 : vector<1x32x32xbf16> to vector<32x32xbf16>
    %c0_14 = arith.constant 0 : index
    %c0_15 = arith.constant 0 : index
    %c0_16 = arith.constant 0 : index
    %19 = vector.load %arg7[%c0_14, %c0_15, %c0_16] : memref<1x32x32xbf16, #tpu.memory_space<vmem>>, vector<1x32x32xbf16>
    %20 = vector.shape_cast %19 : vector<1x32x32xbf16> to vector<32x32xbf16>
    %c0_17 = arith.constant 0 : index
    %c0_18 = arith.constant 0 : index
    %c0_19 = arith.constant 0 : index
    %21 = vector.load %arg8[%c0_17, %c0_18, %c0_19] : memref<1x8x32xi8, #tpu.memory_space<vmem>>, vector<1x8x32xi8>
    %22 = vector.shape_cast %21 : vector<1x8x32xi8> to vector<8x32xi8>
    %c0_i8 = arith.constant 0 : i8
    %23 = vector.broadcast %c0_i8 : i8 to vector<8x32xi8>
    %24 = arith.cmpi ne, %22, %23 : vector<8x32xi8>
    %25 = vector.extract_strided_slice %16 {offsets = [0, 0], sizes = [8, 8], strides = [1, 1]} : vector<8x32xbf16> to vector<8x8xbf16>
    %26 = vector.extract_strided_slice %18 {offsets = [0, 0], sizes = [32, 8], strides = [1, 1]} : vector<32x32xbf16> to vector<32x8xbf16>
    "tpu.trace_start"() <{level = 10 : i32, message = "qd,sd->qs"}> : () -> ()
    %cst_20 = arith.constant dense<0.000000e+00> : vector<8x32xf32>
    %27 = tpu.matmul %25, %26, %cst_20 {dimension_numbers = #tpu.dot_dimension_numbers<[1], [1], [0], [0], [0, 0, 1, 0], [], []>} : vector<8x8xbf16>, vector<32x8xbf16>, vector<8x32xf32> -> vector<8x32xf32>
    "tpu.trace_stop"() : () -> ()
    %c0_21 = arith.constant 0 : index
    %c0_22 = arith.constant 0 : index
    %c0_23 = arith.constant 0 : index
    %28 = vector.load %arg10[%c0_21, %c0_22, %c0_23] : memref<4x8x1xf32, #tpu.memory_space<vmem>>, vector<1x8x1xf32>
    %29 = vector.shape_cast %28 : vector<1x8x1xf32> to vector<8x1xf32>
    %cst_24 = arith.constant dense<0xFF800000> : vector<8xf32>
    %30 = vector.multi_reduction <maximumf>, %27, %cst_24 [1] : vector<8x32xf32> to vector<8xf32>
    %31 = vector.shape_cast %30 : vector<8xf32> to vector<8x1xf32>
    %32 = arith.maximumf %29, %31 : vector<8x1xf32>
    %33 = arith.subf %29, %32 : vector<8x1xf32>
    %34 = math.exp %33 : vector<8x1xf32>
    %35 = vector.broadcast %32 : vector<8x1xf32> to vector<8x32xf32>
    %36 = arith.subf %27, %35 : vector<8x32xf32>
    %37 = math.exp %36 : vector<8x32xf32>
    %cst_25 = arith.constant 0.000000e+00 : f32
    %38 = vector.broadcast %cst_25 : f32 to vector<8x32xf32>
    %39 = arith.select %24, %38, %37 : vector<8x32xi1>, vector<8x32xf32>
    %c0_26 = arith.constant 0 : index
    %c0_27 = arith.constant 0 : index
    %c0_28 = arith.constant 0 : index
    %40 = vector.load %arg11[%c0_26, %c0_27, %c0_28] : memref<4x8x1xf32, #tpu.memory_space<vmem>>, vector<1x8x1xf32>
    %41 = vector.shape_cast %40 : vector<1x8x1xf32> to vector<8x1xf32>
    %42 = arith.mulf %34, %41 : vector<8x1xf32>
    %cst_29 = arith.constant dense<0.000000e+00> : vector<8xf32>
    %43 = vector.multi_reduction <add>, %39, %cst_29 [1] : vector<8x32xf32> to vector<8xf32>
    %44 = vector.shape_cast %43 : vector<8xf32> to vector<8x1xf32>
    %45 = arith.addf %42, %44 : vector<8x1xf32>
    %c0_30 = arith.constant 0 : index
    %c0_31 = arith.constant 0 : index
    %c0_32 = arith.constant 0 : index
    %46 = vector.load %arg11[%c0_30, %c0_31, %c0_32] : memref<4x8x1xf32, #tpu.memory_space<vmem>>, vector<1x8x1xf32>
    %47 = vector.shape_cast %46 : vector<1x8x1xf32> to vector<8x1xf32>
    %48 = vector.shape_cast %45 : vector<8x1xf32> to vector<1x8x1xf32>
    tpu.vector_store %arg11[%c0_30, %c0_31, %c0_32], %48 {strides = array<i32>} : memref<4x8x1xf32, #tpu.memory_space<vmem>>, vector<1x8x1xf32>,
    %c0_33 = arith.constant 0 : index
    %c0_34 = arith.constant 0 : index
    %c0_35 = arith.constant 0 : index
    %49 = vector.load %arg12[%c0_33, %c0_34, %c0_35] : memref<4x8x8xf32, #tpu.memory_space<vmem>>, vector<1x8x8xf32>
    %50 = vector.shape_cast %49 : vector<1x8x8xf32> to vector<8x8xf32>
    %51 = vector.broadcast %34 : vector<8x1xf32> to vector<8x8xf32>
    %52 = arith.mulf %51, %50 : vector<8x8xf32>
    %53 = arith.truncf %39 : vector<8x32xf32> to vector<8x32xbf16>
    %54 = vector.extract_strided_slice %20 {offsets = [0, 0], sizes = [32, 8], strides = [1, 1]} : vector<32x32xbf16> to vector<32x8xbf16>
    "tpu.trace_start"() <{level = 10 : i32, message = "qs,sd->qd"}> : () -> ()
    %cst_36 = arith.constant dense<0.000000e+00> : vector<8x8xf32>
    %55 = tpu.matmul %53, %54, %cst_36 {dimension_numbers = #tpu.dot_dimension_numbers<[1], [0], [0], [1], [0, 0, 1, 1], [], []>} : vector<8x32xbf16>, vector<32x8xbf16>, vector<8x8xf32> -> vector<8x8xf32>
    "tpu.trace_stop"() : () -> ()
    %56 = arith.addf %52, %55 : vector<8x8xf32>
    %c0_37 = arith.constant 0 : index
    %c0_38 = arith.constant 0 : index
    %c0_39 = arith.constant 0 : index
    %57 = vector.load %arg12[%c0_37, %c0_38, %c0_39] : memref<4x8x8xf32, #tpu.memory_space<vmem>>, vector<1x8x8xf32>
    %58 = vector.shape_cast %57 : vector<1x8x8xf32> to vector<8x8xf32>
    %59 = vector.shape_cast %56 : vector<8x8xf32> to vector<1x8x8xf32>
    tpu.vector_store %arg12[%c0_37, %c0_38, %c0_39], %59 {strides = array<i32>} : memref<4x8x8xf32, #tpu.memory_space<vmem>>, vector<1x8x8xf32>,
    %c0_40 = arith.constant 0 : index
    %c0_41 = arith.constant 0 : index
    %c0_42 = arith.constant 0 : index
    %60 = vector.load %arg10[%c0_40, %c0_41, %c0_42] : memref<4x8x1xf32, #tpu.memory_space<vmem>>, vector<1x8x1xf32>
    %61 = vector.shape_cast %60 : vector<1x8x1xf32> to vector<8x1xf32>
    %62 = vector.shape_cast %32 : vector<8x1xf32> to vector<1x8x1xf32>
    tpu.vector_store %arg10[%c0_40, %c0_41, %c0_42], %62 {strides = array<i32>} : memref<4x8x1xf32, #tpu.memory_space<vmem>>, vector<1x8x1xf32>,
    %63 = vector.extract_strided_slice %16 {offsets = [0, 8], sizes = [8, 8], strides = [1, 1]} : vector<8x32xbf16> to vector<8x8xbf16>
    %64 = vector.extract_strided_slice %18 {offsets = [0, 8], sizes = [32, 8], strides = [1, 1]} : vector<32x32xbf16> to vector<32x8xbf16>
    "tpu.trace_start"() <{level = 10 : i32, message = "qd,sd->qs"}> : () -> ()
    %cst_43 = arith.constant dense<0.000000e+00> : vector<8x32xf32>
    %65 = tpu.matmul %63, %64, %cst_43 {dimension_numbers = #tpu.dot_dimension_numbers<[1], [1], [0], [0], [0, 0, 1, 0], [], []>} : vector<8x8xbf16>, vector<32x8xbf16>, vector<8x32xf32> -> vector<8x32xf32>
    "tpu.trace_stop"() : () -> ()
    %c1 = arith.constant 1 : index
    %c0_44 = arith.constant 0 : index
    %c0_45 = arith.constant 0 : index
    %66 = vector.load %arg10[%c1, %c0_44, %c0_45] : memref<4x8x1xf32, #tpu.memory_space<vmem>>, vector<1x8x1xf32>
    %67 = vector.shape_cast %66 : vector<1x8x1xf32> to vector<8x1xf32>
    %cst_46 = arith.constant dense<0xFF800000> : vector<8xf32>
    %68 = vector.multi_reduction <maximumf>, %65, %cst_46 [1] : vector<8x32xf32> to vector<8xf32>
    %69 = vector.shape_cast %68 : vector<8xf32> to vector<8x1xf32>
    %70 = arith.maximumf %67, %69 : vector<8x1xf32>
    %71 = arith.subf %67, %70 : vector<8x1xf32>
    %72 = math.exp %71 : vector<8x1xf32>
    %73 = vector.broadcast %70 : vector<8x1xf32> to vector<8x32xf32>
    %74 = arith.subf %65, %73 : vector<8x32xf32>
    %75 = math.exp %74 : vector<8x32xf32>
    %cst_47 = arith.constant 0.000000e+00 : f32
    %76 = vector.broadcast %cst_47 : f32 to vector<8x32xf32>
    %77 = arith.select %24, %76, %75 : vector<8x32xi1>, vector<8x32xf32>
    %c1_48 = arith.constant 1 : index
    %c0_49 = arith.constant 0 : index
    %c0_50 = arith.constant 0 : index
    %78 = vector.load %arg11[%c1_48, %c0_49, %c0_50] : memref<4x8x1xf32, #tpu.memory_space<vmem>>, vector<1x8x1xf32>
    %79 = vector.shape_cast %78 : vector<1x8x1xf32> to vector<8x1xf32>
    %80 = arith.mulf %72, %79 : vector<8x1xf32>
    %cst_51 = arith.constant dense<0.000000e+00> : vector<8xf32>
    %81 = vector.multi_reduction <add>, %77, %cst_51 [1] : vector<8x32xf32> to vector<8xf32>
    %82 = vector.shape_cast %81 : vector<8xf32> to vector<8x1xf32>
    %83 = arith.addf %80, %82 : vector<8x1xf32>
    %c1_52 = arith.constant 1 : index
    %c0_53 = arith.constant 0 : index
    %c0_54 = arith.constant 0 : index
    %84 = vector.load %arg11[%c1_52, %c0_53, %c0_54] : memref<4x8x1xf32, #tpu.memory_space<vmem>>, vector<1x8x1xf32>
    %85 = vector.shape_cast %84 : vector<1x8x1xf32> to vector<8x1xf32>
    %86 = vector.shape_cast %83 : vector<8x1xf32> to vector<1x8x1xf32>
    tpu.vector_store %arg11[%c1_52, %c0_53, %c0_54], %86 {strides = array<i32>} : memref<4x8x1xf32, #tpu.memory_space<vmem>>, vector<1x8x1xf32>,
    %c1_55 = arith.constant 1 : index
    %c0_56 = arith.constant 0 : index
    %c0_57 = arith.constant 0 : index
    %87 = vector.load %arg12[%c1_55, %c0_56, %c0_57] : memref<4x8x8xf32, #tpu.memory_space<vmem>>, vector<1x8x8xf32>
    %88 = vector.shape_cast %87 : vector<1x8x8xf32> to vector<8x8xf32>
    %89 = vector.broadcast %72 : vector<8x1xf32> to vector<8x8xf32>
    %90 = arith.mulf %89, %88 : vector<8x8xf32>
    %91 = arith.truncf %77 : vector<8x32xf32> to vector<8x32xbf16>
    %92 = vector.extract_strided_slice %20 {offsets = [0, 8], sizes = [32, 8], strides = [1, 1]} : vector<32x32xbf16> to vector<32x8xbf16>
    "tpu.trace_start"() <{level = 10 : i32, message = "qs,sd->qd"}> : () -> ()
    %cst_58 = arith.constant dense<0.000000e+00> : vector<8x8xf32>
    %93 = tpu.matmul %91, %92, %cst_58 {dimension_numbers = #tpu.dot_dimension_numbers<[1], [0], [0], [1], [0, 0, 1, 1], [], []>} : vector<8x32xbf16>, vector<32x8xbf16>, vector<8x8xf32> -> vector<8x8xf32>
    "tpu.trace_stop"() : () -> ()
    %94 = arith.addf %90, %93 : vector<8x8xf32>
    %c1_59 = arith.constant 1 : index
    %c0_60 = arith.constant 0 : index
    %c0_61 = arith.constant 0 : index
    %95 = vector.load %arg12[%c1_59, %c0_60, %c0_61] : memref<4x8x8xf32, #tpu.memory_space<vmem>>, vector<1x8x8xf32>
    %96 = vector.shape_cast %95 : vector<1x8x8xf32> to vector<8x8xf32>
    %97 = vector.shape_cast %94 : vector<8x8xf32> to vector<1x8x8xf32>
    tpu.vector_store %arg12[%c1_59, %c0_60, %c0_61], %97 {strides = array<i32>} : memref<4x8x8xf32, #tpu.memory_space<vmem>>, vector<1x8x8xf32>,
    %c1_62 = arith.constant 1 : index
    %c0_63 = arith.constant 0 : index
    %c0_64 = arith.constant 0 : index
    %98 = vector.load %arg10[%c1_62, %c0_63, %c0_64] : memref<4x8x1xf32, #tpu.memory_space<vmem>>, vector<1x8x1xf32>
    %99 = vector.shape_cast %98 : vector<1x8x1xf32> to vector<8x1xf32>
    %100 = vector.shape_cast %70 : vector<8x1xf32> to vector<1x8x1xf32>
    tpu.vector_store %arg10[%c1_62, %c0_63, %c0_64], %100 {strides = array<i32>} : memref<4x8x1xf32, #tpu.memory_space<vmem>>, vector<1x8x1xf32>,
    %101 = vector.extract_strided_slice %16 {offsets = [0, 16], sizes = [8, 8], strides = [1, 1]} : vector<8x32xbf16> to vector<8x8xbf16>
    %102 = vector.extract_strided_slice %18 {offsets = [0, 16], sizes = [32, 8], strides = [1, 1]} : vector<32x32xbf16> to vector<32x8xbf16>
    "tpu.trace_start"() <{level = 10 : i32, message = "qd,sd->qs"}> : () -> ()
    %cst_65 = arith.constant dense<0.000000e+00> : vector<8x32xf32>
    %103 = tpu.matmul %101, %102, %cst_65 {dimension_numbers = #tpu.dot_dimension_numbers<[1], [1], [0], [0], [0, 0, 1, 0], [], []>} : vector<8x8xbf16>, vector<32x8xbf16>, vector<8x32xf32> -> vector<8x32xf32>
    "tpu.trace_stop"() : () -> ()
    %c2 = arith.constant 2 : index
    %c0_66 = arith.constant 0 : index
    %c0_67 = arith.constant 0 : index
    %104 = vector.load %arg10[%c2, %c0_66, %c0_67] : memref<4x8x1xf32, #tpu.memory_space<vmem>>, vector<1x8x1xf32>
    %105 = vector.shape_cast %104 : vector<1x8x1xf32> to vector<8x1xf32>
    %cst_68 = arith.constant dense<0xFF800000> : vector<8xf32>
    %106 = vector.multi_reduction <maximumf>, %103, %cst_68 [1] : vector<8x32xf32> to vector<8xf32>
    %107 = vector.shape_cast %106 : vector<8xf32> to vector<8x1xf32>
    %108 = arith.maximumf %105, %107 : vector<8x1xf32>
    %109 = arith.subf %105, %108 : vector<8x1xf32>
    %110 = math.exp %109 : vector<8x1xf32>
    %111 = vector.broadcast %108 : vector<8x1xf32> to vector<8x32xf32>
    %112 = arith.subf %103, %111 : vector<8x32xf32>
    %113 = math.exp %112 : vector<8x32xf32>
    %cst_69 = arith.constant 0.000000e+00 : f32
    %114 = vector.broadcast %cst_69 : f32 to vector<8x32xf32>
    %115 = arith.select %24, %114, %113 : vector<8x32xi1>, vector<8x32xf32>
    %c2_70 = arith.constant 2 : index
    %c0_71 = arith.constant 0 : index
    %c0_72 = arith.constant 0 : index
    %116 = vector.load %arg11[%c2_70, %c0_71, %c0_72] : memref<4x8x1xf32, #tpu.memory_space<vmem>>, vector<1x8x1xf32>
    %117 = vector.shape_cast %116 : vector<1x8x1xf32> to vector<8x1xf32>
    %118 = arith.mulf %110, %117 : vector<8x1xf32>
    %cst_73 = arith.constant dense<0.000000e+00> : vector<8xf32>
    %119 = vector.multi_reduction <add>, %115, %cst_73 [1] : vector<8x32xf32> to vector<8xf32>
    %120 = vector.shape_cast %119 : vector<8xf32> to vector<8x1xf32>
    %121 = arith.addf %118, %120 : vector<8x1xf32>
    %c2_74 = arith.constant 2 : index
    %c0_75 = arith.constant 0 : index
    %c0_76 = arith.constant 0 : index
    %122 = vector.load %arg11[%c2_74, %c0_75, %c0_76] : memref<4x8x1xf32, #tpu.memory_space<vmem>>, vector<1x8x1xf32>
    %123 = vector.shape_cast %122 : vector<1x8x1xf32> to vector<8x1xf32>
    %124 = vector.shape_cast %121 : vector<8x1xf32> to vector<1x8x1xf32>
    tpu.vector_store %arg11[%c2_74, %c0_75, %c0_76], %124 {strides = array<i32>} : memref<4x8x1xf32, #tpu.memory_space<vmem>>, vector<1x8x1xf32>,
    %c2_77 = arith.constant 2 : index
    %c0_78 = arith.constant 0 : index
    %c0_79 = arith.constant 0 : index
    %125 = vector.load %arg12[%c2_77, %c0_78, %c0_79] : memref<4x8x8xf32, #tpu.memory_space<vmem>>, vector<1x8x8xf32>
    %126 = vector.shape_cast %125 : vector<1x8x8xf32> to vector<8x8xf32>
    %127 = vector.broadcast %110 : vector<8x1xf32> to vector<8x8xf32>
    %128 = arith.mulf %127, %126 : vector<8x8xf32>
    %129 = arith.truncf %115 : vector<8x32xf32> to vector<8x32xbf16>
    %130 = vector.extract_strided_slice %20 {offsets = [0, 16], sizes = [32, 8], strides = [1, 1]} : vector<32x32xbf16> to vector<32x8xbf16>
    "tpu.trace_start"() <{level = 10 : i32, message = "qs,sd->qd"}> : () -> ()
    %cst_80 = arith.constant dense<0.000000e+00> : vector<8x8xf32>
    %131 = tpu.matmul %129, %130, %cst_80 {dimension_numbers = #tpu.dot_dimension_numbers<[1], [0], [0], [1], [0, 0, 1, 1], [], []>} : vector<8x32xbf16>, vector<32x8xbf16>, vector<8x8xf32> -> vector<8x8xf32>
    "tpu.trace_stop"() : () -> ()
    %132 = arith.addf %128, %131 : vector<8x8xf32>
    %c2_81 = arith.constant 2 : index
    %c0_82 = arith.constant 0 : index
    %c0_83 = arith.constant 0 : index
    %133 = vector.load %arg12[%c2_81, %c0_82, %c0_83] : memref<4x8x8xf32, #tpu.memory_space<vmem>>, vector<1x8x8xf32>
    %134 = vector.shape_cast %133 : vector<1x8x8xf32> to vector<8x8xf32>
    %135 = vector.shape_cast %132 : vector<8x8xf32> to vector<1x8x8xf32>
    tpu.vector_store %arg12[%c2_81, %c0_82, %c0_83], %135 {strides = array<i32>} : memref<4x8x8xf32, #tpu.memory_space<vmem>>, vector<1x8x8xf32>,
    %c2_84 = arith.constant 2 : index
    %c0_85 = arith.constant 0 : index
    %c0_86 = arith.constant 0 : index
    %136 = vector.load %arg10[%c2_84, %c0_85, %c0_86] : memref<4x8x1xf32, #tpu.memory_space<vmem>>, vector<1x8x1xf32>
    %137 = vector.shape_cast %136 : vector<1x8x1xf32> to vector<8x1xf32>
    %138 = vector.shape_cast %108 : vector<8x1xf32> to vector<1x8x1xf32>
    tpu.vector_store %arg10[%c2_84, %c0_85, %c0_86], %138 {strides = array<i32>} : memref<4x8x1xf32, #tpu.memory_space<vmem>>, vector<1x8x1xf32>,
    %139 = vector.extract_strided_slice %16 {offsets = [0, 24], sizes = [8, 8], strides = [1, 1]} : vector<8x32xbf16> to vector<8x8xbf16>
    %140 = vector.extract_strided_slice %18 {offsets = [0, 24], sizes = [32, 8], strides = [1, 1]} : vector<32x32xbf16> to vector<32x8xbf16>
    "tpu.trace_start"() <{level = 10 : i32, message = "qd,sd->qs"}> : () -> ()
    %cst_87 = arith.constant dense<0.000000e+00> : vector<8x32xf32>
    %141 = tpu.matmul %139, %140, %cst_87 {dimension_numbers = #tpu.dot_dimension_numbers<[1], [1], [0], [0], [0, 0, 1, 0], [], []>} : vector<8x8xbf16>, vector<32x8xbf16>, vector<8x32xf32> -> vector<8x32xf32>
    "tpu.trace_stop"() : () -> ()
    %c3 = arith.constant 3 : index
    %c0_88 = arith.constant 0 : index
    %c0_89 = arith.constant 0 : index
    %142 = vector.load %arg10[%c3, %c0_88, %c0_89] : memref<4x8x1xf32, #tpu.memory_space<vmem>>, vector<1x8x1xf32>
    %143 = vector.shape_cast %142 : vector<1x8x1xf32> to vector<8x1xf32>
    %cst_90 = arith.constant dense<0xFF800000> : vector<8xf32>
    %144 = vector.multi_reduction <maximumf>, %141, %cst_90 [1] : vector<8x32xf32> to vector<8xf32>
    %145 = vector.shape_cast %144 : vector<8xf32> to vector<8x1xf32>
    %146 = arith.maximumf %143, %145 : vector<8x1xf32>
    %147 = arith.subf %143, %146 : vector<8x1xf32>
    %148 = math.exp %147 : vector<8x1xf32>
    %149 = vector.broadcast %146 : vector<8x1xf32> to vector<8x32xf32>
    %150 = arith.subf %141, %149 : vector<8x32xf32>
    %151 = math.exp %150 : vector<8x32xf32>
    %cst_91 = arith.constant 0.000000e+00 : f32
    %152 = vector.broadcast %cst_91 : f32 to vector<8x32xf32>
    %153 = arith.select %24, %152, %151 : vector<8x32xi1>, vector<8x32xf32>
    %c3_92 = arith.constant 3 : index
    %c0_93 = arith.constant 0 : index
    %c0_94 = arith.constant 0 : index
    %154 = vector.load %arg11[%c3_92, %c0_93, %c0_94] : memref<4x8x1xf32, #tpu.memory_space<vmem>>, vector<1x8x1xf32>
    %155 = vector.shape_cast %154 : vector<1x8x1xf32> to vector<8x1xf32>
    %156 = arith.mulf %148, %155 : vector<8x1xf32>
    %cst_95 = arith.constant dense<0.000000e+00> : vector<8xf32>
    %157 = vector.multi_reduction <add>, %153, %cst_95 [1] : vector<8x32xf32> to vector<8xf32>
    %158 = vector.shape_cast %157 : vector<8xf32> to vector<8x1xf32>
    %159 = arith.addf %156, %158 : vector<8x1xf32>
    %c3_96 = arith.constant 3 : index
    %c0_97 = arith.constant 0 : index
    %c0_98 = arith.constant 0 : index
    %160 = vector.load %arg11[%c3_96, %c0_97, %c0_98] : memref<4x8x1xf32, #tpu.memory_space<vmem>>, vector<1x8x1xf32>
    %161 = vector.shape_cast %160 : vector<1x8x1xf32> to vector<8x1xf32>
    %162 = vector.shape_cast %159 : vector<8x1xf32> to vector<1x8x1xf32>
    tpu.vector_store %arg11[%c3_96, %c0_97, %c0_98], %162 {strides = array<i32>} : memref<4x8x1xf32, #tpu.memory_space<vmem>>, vector<1x8x1xf32>,
    %c3_99 = arith.constant 3 : index
    %c0_100 = arith.constant 0 : index
    %c0_101 = arith.constant 0 : index
    %163 = vector.load %arg12[%c3_99, %c0_100, %c0_101] : memref<4x8x8xf32, #tpu.memory_space<vmem>>, vector<1x8x8xf32>
    %164 = vector.shape_cast %163 : vector<1x8x8xf32> to vector<8x8xf32>
    %165 = vector.broadcast %148 : vector<8x1xf32> to vector<8x8xf32>
    %166 = arith.mulf %165, %164 : vector<8x8xf32>
    %167 = arith.truncf %153 : vector<8x32xf32> to vector<8x32xbf16>
    %168 = vector.extract_strided_slice %20 {offsets = [0, 24], sizes = [32, 8], strides = [1, 1]} : vector<32x32xbf16> to vector<32x8xbf16>
    "tpu.trace_start"() <{level = 10 : i32, message = "qs,sd->qd"}> : () -> ()
    %cst_102 = arith.constant dense<0.000000e+00> : vector<8x8xf32>
    %169 = tpu.matmul %167, %168, %cst_102 {dimension_numbers = #tpu.dot_dimension_numbers<[1], [0], [0], [1], [0, 0, 1, 1], [], []>} : vector<8x32xbf16>, vector<32x8xbf16>, vector<8x8xf32> -> vector<8x8xf32>
    "tpu.trace_stop"() : () -> ()
    %170 = arith.addf %166, %169 : vector<8x8xf32>
    %c3_103 = arith.constant 3 : index
    %c0_104 = arith.constant 0 : index
    %c0_105 = arith.constant 0 : index
    %171 = vector.load %arg12[%c3_103, %c0_104, %c0_105] : memref<4x8x8xf32, #tpu.memory_space<vmem>>, vector<1x8x8xf32>
    %172 = vector.shape_cast %171 : vector<1x8x8xf32> to vector<8x8xf32>
    %173 = vector.shape_cast %170 : vector<8x8xf32> to vector<1x8x8xf32>
    tpu.vector_store %arg12[%c3_103, %c0_104, %c0_105], %173 {strides = array<i32>} : memref<4x8x8xf32, #tpu.memory_space<vmem>>, vector<1x8x8xf32>,
    %c3_106 = arith.constant 3 : index
    %c0_107 = arith.constant 0 : index
    %c0_108 = arith.constant 0 : index
    %174 = vector.load %arg10[%c3_106, %c0_107, %c0_108] : memref<4x8x1xf32, #tpu.memory_space<vmem>>, vector<1x8x1xf32>
    %175 = vector.shape_cast %174 : vector<1x8x1xf32> to vector<8x1xf32>
    %176 = vector.shape_cast %146 : vector<8x1xf32> to vector<1x8x1xf32>
    tpu.vector_store %arg10[%c3_106, %c0_107, %c0_108], %176 {strides = array<i32>} : memref<4x8x1xf32, #tpu.memory_space<vmem>>, vector<1x8x1xf32>,
    %c0_i32_109 = arith.constant 0 : i32
    %177 = arith.cmpi eq, %arg1, %c0_i32_109 : i32
    %178 = arith.extui %177 : i1 to i32
    %c0_i32_110 = arith.constant 0 : i32
    %179 = arith.cmpi ne, %178, %c0_i32_110 : i32
    scf.if %179 {
      %c0_111 = arith.constant 0 : index
      %c0_112 = arith.constant 0 : index
      %c0_113 = arith.constant 0 : index
      %180 = vector.load %arg12[%c0_111, %c0_112, %c0_113] : memref<4x8x8xf32, #tpu.memory_space<vmem>>, vector<1x8x8xf32>
      %181 = vector.shape_cast %180 : vector<1x8x8xf32> to vector<8x8xf32>
      %c0_114 = arith.constant 0 : index
      %c0_115 = arith.constant 0 : index
      %c0_116 = arith.constant 0 : index
      %182 = vector.load %arg11[%c0_114, %c0_115, %c0_116] : memref<4x8x1xf32, #tpu.memory_space<vmem>>, vector<1x8x1xf32>
      %183 = vector.shape_cast %182 : vector<1x8x1xf32> to vector<8x1xf32>
      %184 = tpu.reciprocal %183 {approx = true} : vector<8x1xf32> -> vector<8x1xf32>
      %185 = vector.broadcast %184 : vector<8x1xf32> to vector<8x8xf32>
      %186 = arith.mulf %181, %185 : vector<8x8xf32>
      %c1_117 = arith.constant 1 : index
      %c0_118 = arith.constant 0 : index
      %c0_119 = arith.constant 0 : index
      %187 = vector.load %arg12[%c1_117, %c0_118, %c0_119] : memref<4x8x8xf32, #tpu.memory_space<vmem>>, vector<1x8x8xf32>
      %188 = vector.shape_cast %187 : vector<1x8x8xf32> to vector<8x8xf32>
      %c1_120 = arith.constant 1 : index
      %c0_121 = arith.constant 0 : index
      %c0_122 = arith.constant 0 : index
      %189 = vector.load %arg11[%c1_120, %c0_121, %c0_122] : memref<4x8x1xf32, #tpu.memory_space<vmem>>, vector<1x8x1xf32>
      %190 = vector.shape_cast %189 : vector<1x8x1xf32> to vector<8x1xf32>
      %191 = tpu.reciprocal %190 {approx = true} : vector<8x1xf32> -> vector<8x1xf32>
      %192 = vector.broadcast %191 : vector<8x1xf32> to vector<8x8xf32>
      %193 = arith.mulf %188, %192 : vector<8x8xf32>
      %c2_123 = arith.constant 2 : index
      %c0_124 = arith.constant 0 : index
      %c0_125 = arith.constant 0 : index
      %194 = vector.load %arg12[%c2_123, %c0_124, %c0_125] : memref<4x8x8xf32, #tpu.memory_space<vmem>>, vector<1x8x8xf32>
      %195 = vector.shape_cast %194 : vector<1x8x8xf32> to vector<8x8xf32>
      %c2_126 = arith.constant 2 : index
      %c0_127 = arith.constant 0 : index
      %c0_128 = arith.constant 0 : index
      %196 = vector.load %arg11[%c2_126, %c0_127, %c0_128] : memref<4x8x1xf32, #tpu.memory_space<vmem>>, vector<1x8x1xf32>
      %197 = vector.shape_cast %196 : vector<1x8x1xf32> to vector<8x1xf32>
      %198 = tpu.reciprocal %197 {approx = true} : vector<8x1xf32> -> vector<8x1xf32>
      %199 = vector.broadcast %198 : vector<8x1xf32> to vector<8x8xf32>
      %200 = arith.mulf %195, %199 : vector<8x8xf32>
      %c3_129 = arith.constant 3 : index
      %c0_130 = arith.constant 0 : index
      %c0_131 = arith.constant 0 : index
      %201 = vector.load %arg12[%c3_129, %c0_130, %c0_131] : memref<4x8x8xf32, #tpu.memory_space<vmem>>, vector<1x8x8xf32>
      %202 = vector.shape_cast %201 : vector<1x8x8xf32> to vector<8x8xf32>
      %c3_132 = arith.constant 3 : index
      %c0_133 = arith.constant 0 : index
      %c0_134 = arith.constant 0 : index
      %203 = vector.load %arg11[%c3_132, %c0_133, %c0_134] : memref<4x8x1xf32, #tpu.memory_space<vmem>>, vector<1x8x1xf32>
      %204 = vector.shape_cast %203 : vector<1x8x1xf32> to vector<8x1xf32>
      %205 = tpu.reciprocal %204 {approx = true} : vector<8x1xf32> -> vector<8x1xf32>
      %206 = vector.broadcast %205 : vector<8x1xf32> to vector<8x8xf32>
      %207 = arith.mulf %202, %206 : vector<8x8xf32>
      %208 = tpu.concatenate %186, %193, %200, %207 in 1 : vector<8x8xf32>, vector<8x8xf32>, vector<8x8xf32>, vector<8x8xf32> -> vector<8x32xf32>
      %209 = arith.truncf %208 : vector<8x32xf32> to vector<8x32xbf16>
      %c0_135 = arith.constant 0 : index
      %c0_136 = arith.constant 0 : index
      %c0_137 = arith.constant 0 : index
      %210 = vector.load %arg9[%c0_135, %c0_136, %c0_137] : memref<1x8x32xbf16, #tpu.memory_space<vmem>>, vector<1x8x32xbf16>
      %211 = vector.shape_cast %210 : vector<1x8x32xbf16> to vector<8x32xbf16>
      %212 = vector.shape_cast %209 : vector<8x32xbf16> to vector<1x8x32xbf16>
      tpu.vector_store %arg9[%c0_135, %c0_136, %c0_137], %212 {strides = array<i32>} : memref<1x8x32xbf16, #tpu.memory_space<vmem>>, vector<1x8x32xbf16>,
    } else {
    }
    return
  }
  func.func @transform_0(%arg0: i32, %arg1: i32) -> (i32, i32, i32) {
    %c0_i32 = arith.constant 0 : i32
    %c0_i32_0 = arith.constant 0 : i32
    %c0_i32_1 = arith.constant 0 : i32
    return %arg0, %c0_i32, %c0_i32_0 : i32, i32, i32
  }
  func.func @transform_1(%arg0: i32, %arg1: i32) -> (i32, i32, i32) {
    %c0_i32 = arith.constant 0 : i32
    %c0_i32_0 = arith.constant 0 : i32
    %c0_i32_1 = arith.constant 0 : i32
    return %arg0, %c0_i32, %c0_i32_0 : i32, i32, i32
  }
  func.func @transform_2(%arg0: i32, %arg1: i32) -> (i32, i32) {
    %c0_i32 = arith.constant 0 : i32
    %c0_i32_0 = arith.constant 0 : i32
    %c0_i32_1 = arith.constant 0 : i32
    return %c0_i32, %c0_i32_0 : i32, i32
  }
  func.func @transform_3(%arg0: i32, %arg1: i32) -> (i32, i32) {
    %c0_i32 = arith.constant 0 : i32
    %c0_i32_0 = arith.constant 0 : i32
    %c0_i32_1 = arith.constant 0 : i32
    return %c0_i32, %c0_i32_0 : i32, i32
  }
  func.func @transform_4(%arg0: i32, %arg1: i32) -> (i32, i32, i32) {
    %c0_i32 = arith.constant 0 : i32
    %c0_i32_0 = arith.constant 0 : i32
    return %arg0, %arg1, %c0_i32 : i32, i32, i32
  }
  func.func @transform_5(%arg0: i32, %arg1: i32) -> (i32, i32, i32) {
    %c0_i32 = arith.constant 0 : i32
    %c0_i32_0 = arith.constant 0 : i32
    return %arg0, %arg1, %c0_i32 : i32, i32, i32
  }
  func.func @transform_6(%arg0: i32, %arg1: i32) -> (i32, i32, i32) {
    %c0_i32 = arith.constant 0 : i32
    %c0_i32_0 = arith.constant 0 : i32
    return %arg0, %c0_i32, %arg1 : i32, i32, i32
  }
  func.func @transform_7(%arg0: i32, %arg1: i32) -> (i32, i32, i32) {
    %c0_i32 = arith.constant 0 : i32
    %c0_i32_0 = arith.constant 0 : i32
    %c0_i32_1 = arith.constant 0 : i32
    return %arg0, %c0_i32, %c0_i32_0 : i32, i32, i32
  }
}

module attributes {stable_mosaic.version = 11 : i64} {
  func.func @_mlp_kernel(%arg0: i32, %arg1: memref<16x32xf32, #tpu.memory_space<vmem>>, %arg2: memref<1x32xf32, #tpu.memory_space<vmem>>, %arg3: memref<1x32xf32, #tpu.memory_space<vmem>>, %arg4: memref<32x6xbf16, #tpu.memory_space<vmem>>, %arg5: memref<1x6xf32, #tpu.memory_space<vmem>>, %arg6: memref<16x6xf32, #tpu.memory_space<vmem>>) attributes {dimension_semantics = [#tpu.dimension_semantics<parallel>], iteration_bounds = array<i64: 1>, scalar_prefetch = 0 : i64, scratch_operands = 0 : i64, tpu.core_type = #tpu.core_type<tc>, window_params = [{transform_indices = @transform_0, window_bounds = array<i64: 16, 32>}, {pipeline_mode = #tpu.pipeline_mode<synchronous>, transform_indices = @transform_1, window_bounds = array<i64: 1, 32>}, {pipeline_mode = #tpu.pipeline_mode<synchronous>, transform_indices = @transform_2, window_bounds = array<i64: 1, 32>}, {pipeline_mode = #tpu.pipeline_mode<synchronous>, transform_indices = @transform_3, window_bounds = array<i64: 32, 6>}, {pipeline_mode = #tpu.pipeline_mode<synchronous>, transform_indices = @transform_4, window_bounds = array<i64: 1, 6>}, {transform_indices = @transform_5, window_bounds = array<i64: 16, 6>}]} {
    %c0 = arith.constant 0 : index
    %c0_0 = arith.constant 0 : index
    %0 = vector.load %arg1[%c0, %c0_0] : memref<16x32xf32, #tpu.memory_space<vmem>>, vector<16x32xf32>
    %c0_1 = arith.constant 0 : index
    %c0_2 = arith.constant 0 : index
    %1 = vector.load %arg2[%c0_1, %c0_2] : memref<1x32xf32, #tpu.memory_space<vmem>>, vector<1x32xf32>
    %c0_3 = arith.constant 0 : index
    %c0_4 = arith.constant 0 : index
    %2 = vector.load %arg3[%c0_3, %c0_4] : memref<1x32xf32, #tpu.memory_space<vmem>>, vector<1x32xf32>
    %cst = arith.constant dense<0.000000e+00> : vector<16xf32>
    %3 = vector.multi_reduction <add>, %0, %cst [1] : vector<16x32xf32> to vector<16xf32>
    %4 = vector.shape_cast %3 : vector<16xf32> to vector<16x1xf32>
    %cst_5 = arith.constant 3.200000e+01 : f32
    %5 = vector.broadcast %cst_5 : f32 to vector<16x1xf32>
    %6 = arith.divf %4, %5 : vector<16x1xf32>
    %7 = vector.broadcast %6 : vector<16x1xf32> to vector<16x32xf32>
    %8 = arith.subf %0, %7 : vector<16x32xf32>
    %9 = arith.mulf %8, %8 : vector<16x32xf32>
    %cst_6 = arith.constant dense<0.000000e+00> : vector<16xf32>
    %10 = vector.multi_reduction <add>, %9, %cst_6 [1] : vector<16x32xf32> to vector<16xf32>
    %11 = vector.shape_cast %10 : vector<16xf32> to vector<16x1xf32>
    %cst_7 = arith.constant 3.200000e+01 : f32
    %12 = vector.broadcast %cst_7 : f32 to vector<16x1xf32>
    %13 = arith.divf %11, %12 : vector<16x1xf32>
    %14 = vector.broadcast %6 : vector<16x1xf32> to vector<16x32xf32>
    %15 = arith.subf %0, %14 : vector<16x32xf32>
    %cst_8 = arith.constant 9.99999974E-6 : f32
    %16 = vector.broadcast %cst_8 : f32 to vector<16x1xf32>
    %17 = arith.addf %13, %16 : vector<16x1xf32>
    %18 = math.rsqrt %17 : vector<16x1xf32>
    %19 = vector.broadcast %18 : vector<16x1xf32> to vector<16x32xf32>
    %20 = arith.mulf %15, %19 : vector<16x32xf32>
    %21 = vector.broadcast %1 : vector<1x32xf32> to vector<16x32xf32>
    %22 = arith.mulf %20, %21 : vector<16x32xf32>
    %23 = vector.broadcast %2 : vector<1x32xf32> to vector<16x32xf32>
    %24 = arith.addf %22, %23 : vector<16x32xf32>
    %c0_9 = arith.constant 0 : index
    %c0_10 = arith.constant 0 : index
    %25 = vector.load %arg4[%c0_9, %c0_10] : memref<32x6xbf16, #tpu.memory_space<vmem>>, vector<32x6xbf16>
    %c0_11 = arith.constant 0 : index
    %c0_12 = arith.constant 0 : index
    %26 = vector.load %arg5[%c0_11, %c0_12] : memref<1x6xf32, #tpu.memory_space<vmem>>, vector<1x6xf32>
    %27 = arith.truncf %24 : vector<16x32xf32> to vector<16x32xbf16>
    %cst_13 = arith.constant dense<0.000000e+00> : vector<16x6xf32>
    %28 = tpu.matmul %27, %25, %cst_13 {dimension_numbers = #tpu.dot_dimension_numbers<[1], [0], [0], [1], [0, 0, 1, 1], [], []>} : vector<16x32xbf16>, vector<32x6xbf16>, vector<16x6xf32> -> vector<16x6xf32>
    %29 = vector.broadcast %26 : vector<1x6xf32> to vector<16x6xf32>
    %30 = arith.addf %28, %29 : vector<16x6xf32>
    %c0_14 = arith.constant 0 : index
    %c0_15 = arith.constant 0 : index
    %31 = vector.load %arg6[%c0_14, %c0_15] : memref<16x6xf32, #tpu.memory_space<vmem>>, vector<16x6xf32>
    tpu.vector_store %arg6[%c0_14, %c0_15], %30 {strides = array<i32>} : memref<16x6xf32, #tpu.memory_space<vmem>>, vector<16x6xf32>,
    return
  }
  func.func @transform_0(%arg0: i32) -> (i32, i32) {
    %c0_i32 = arith.constant 0 : i32
    %c0_i32_0 = arith.constant 0 : i32
    return %arg0, %c0_i32 : i32, i32
  }
  func.func @transform_1(%arg0: i32) -> (i32, i32) {
    %c0_i32 = arith.constant 0 : i32
    %c0_i32_0 = arith.constant 0 : i32
    %c0_i32_1 = arith.constant 0 : i32
    return %c0_i32, %c0_i32_0 : i32, i32
  }
  func.func @transform_2(%arg0: i32) -> (i32, i32) {
    %c0_i32 = arith.constant 0 : i32
    %c0_i32_0 = arith.constant 0 : i32
    %c0_i32_1 = arith.constant 0 : i32
    return %c0_i32, %c0_i32_0 : i32, i32
  }
  func.func @transform_3(%arg0: i32) -> (i32, i32) {
    %c0_i32 = arith.constant 0 : i32
    %c0_i32_0 = arith.constant 0 : i32
    %c0_i32_1 = arith.constant 0 : i32
    return %c0_i32, %c0_i32_0 : i32, i32
  }
  func.func @transform_4(%arg0: i32) -> (i32, i32) {
    %c0_i32 = arith.constant 0 : i32
    %c0_i32_0 = arith.constant 0 : i32
    %c0_i32_1 = arith.constant 0 : i32
    return %c0_i32, %c0_i32_0 : i32, i32
  }
  func.func @transform_5(%arg0: i32) -> (i32, i32) {
    %c0_i32 = arith.constant 0 : i32
    %c0_i32_0 = arith.constant 0 : i32
    return %arg0, %c0_i32 : i32, i32
  }
}

module attributes {stable_mosaic.version = 11 : i64} {
  func.func @_mlp_kernel(%arg0: i32, %arg1: memref<16x32xf32, #tpu.memory_space<vmem>>, %arg2: memref<1x32xf32, #tpu.memory_space<vmem>>, %arg3: memref<1x32xf32, #tpu.memory_space<vmem>>, %arg4: memref<32x32xbf16, #tpu.memory_space<vmem>>, %arg5: memref<1x32xf32, #tpu.memory_space<vmem>>, %arg6: memref<32x32xbf16, #tpu.memory_space<vmem>>, %arg7: memref<1x32xf32, #tpu.memory_space<vmem>>, %arg8: memref<32x6xbf16, #tpu.memory_space<vmem>>, %arg9: memref<1x6xf32, #tpu.memory_space<vmem>>, %arg10: memref<16x6xf32, #tpu.memory_space<vmem>>) attributes {dimension_semantics = [#tpu.dimension_semantics<parallel>], iteration_bounds = array<i64: 1>, scalar_prefetch = 0 : i64, scratch_operands = 0 : i64, tpu.core_type = #tpu.core_type<tc>, window_params = [{transform_indices = @transform_0, window_bounds = array<i64: 16, 32>}, {pipeline_mode = #tpu.pipeline_mode<synchronous>, transform_indices = @transform_1, window_bounds = array<i64: 1, 32>}, {pipeline_mode = #tpu.pipeline_mode<synchronous>, transform_indices = @transform_2, window_bounds = array<i64: 1, 32>}, {pipeline_mode = #tpu.pipeline_mode<synchronous>, transform_indices = @transform_3, window_bounds = array<i64: 32, 32>}, {pipeline_mode = #tpu.pipeline_mode<synchronous>, transform_indices = @transform_4, window_bounds = array<i64: 1, 32>}, {pipeline_mode = #tpu.pipeline_mode<synchronous>, transform_indices = @transform_5, window_bounds = array<i64: 32, 32>}, {pipeline_mode = #tpu.pipeline_mode<synchronous>, transform_indices = @transform_6, window_bounds = array<i64: 1, 32>}, {pipeline_mode = #tpu.pipeline_mode<synchronous>, transform_indices = @transform_7, window_bounds = array<i64: 32, 6>}, {pipeline_mode = #tpu.pipeline_mode<synchronous>, transform_indices = @transform_8, window_bounds = array<i64: 1, 6>}, {transform_indices = @transform_9, window_bounds = array<i64: 16, 6>}]} {
    %c0 = arith.constant 0 : index
    %c0_0 = arith.constant 0 : index
    %0 = vector.load %arg1[%c0, %c0_0] : memref<16x32xf32, #tpu.memory_space<vmem>>, vector<16x32xf32>
    %c0_1 = arith.constant 0 : index
    %c0_2 = arith.constant 0 : index
    %1 = vector.load %arg2[%c0_1, %c0_2] : memref<1x32xf32, #tpu.memory_space<vmem>>, vector<1x32xf32>
    %c0_3 = arith.constant 0 : index
    %c0_4 = arith.constant 0 : index
    %2 = vector.load %arg3[%c0_3, %c0_4] : memref<1x32xf32, #tpu.memory_space<vmem>>, vector<1x32xf32>
    %cst = arith.constant dense<0.000000e+00> : vector<16xf32>
    %3 = vector.multi_reduction <add>, %0, %cst [1] : vector<16x32xf32> to vector<16xf32>
    %4 = vector.shape_cast %3 : vector<16xf32> to vector<16x1xf32>
    %cst_5 = arith.constant 3.200000e+01 : f32
    %5 = vector.broadcast %cst_5 : f32 to vector<16x1xf32>
    %6 = arith.divf %4, %5 : vector<16x1xf32>
    %7 = vector.broadcast %6 : vector<16x1xf32> to vector<16x32xf32>
    %8 = arith.subf %0, %7 : vector<16x32xf32>
    %9 = arith.mulf %8, %8 : vector<16x32xf32>
    %cst_6 = arith.constant dense<0.000000e+00> : vector<16xf32>
    %10 = vector.multi_reduction <add>, %9, %cst_6 [1] : vector<16x32xf32> to vector<16xf32>
    %11 = vector.shape_cast %10 : vector<16xf32> to vector<16x1xf32>
    %cst_7 = arith.constant 3.200000e+01 : f32
    %12 = vector.broadcast %cst_7 : f32 to vector<16x1xf32>
    %13 = arith.divf %11, %12 : vector<16x1xf32>
    %14 = vector.broadcast %6 : vector<16x1xf32> to vector<16x32xf32>
    %15 = arith.subf %0, %14 : vector<16x32xf32>
    %cst_8 = arith.constant 9.99999974E-6 : f32
    %16 = vector.broadcast %cst_8 : f32 to vector<16x1xf32>
    %17 = arith.addf %13, %16 : vector<16x1xf32>
    %18 = math.rsqrt %17 : vector<16x1xf32>
    %19 = vector.broadcast %18 : vector<16x1xf32> to vector<16x32xf32>
    %20 = arith.mulf %15, %19 : vector<16x32xf32>
    %21 = vector.broadcast %1 : vector<1x32xf32> to vector<16x32xf32>
    %22 = arith.mulf %20, %21 : vector<16x32xf32>
    %23 = vector.broadcast %2 : vector<1x32xf32> to vector<16x32xf32>
    %24 = arith.addf %22, %23 : vector<16x32xf32>
    %c0_9 = arith.constant 0 : index
    %c0_10 = arith.constant 0 : index
    %25 = vector.load %arg4[%c0_9, %c0_10] : memref<32x32xbf16, #tpu.memory_space<vmem>>, vector<32x32xbf16>
    %c0_11 = arith.constant 0 : index
    %c0_12 = arith.constant 0 : index
    %26 = vector.load %arg5[%c0_11, %c0_12] : memref<1x32xf32, #tpu.memory_space<vmem>>, vector<1x32xf32>
    %27 = arith.truncf %24 : vector<16x32xf32> to vector<16x32xbf16>
    %cst_13 = arith.constant dense<0.000000e+00> : vector<16x32xf32>
    %28 = tpu.matmul %27, %25, %cst_13 {dimension_numbers = #tpu.dot_dimension_numbers<[1], [0], [0], [1], [0, 0, 1, 1], [], []>} : vector<16x32xbf16>, vector<32x32xbf16>, vector<16x32xf32> -> vector<16x32xf32>
    %29 = vector.broadcast %26 : vector<1x32xf32> to vector<16x32xf32>
    %30 = arith.addf %28, %29 : vector<16x32xf32>
    %cst_14 = arith.constant 0.000000e+00 : f32
    %31 = vector.broadcast %cst_14 : f32 to vector<16x32xf32>
    %32 = arith.maximumf %30, %31 : vector<16x32xf32>
    %c0_15 = arith.constant 0 : index
    %c0_16 = arith.constant 0 : index
    %33 = vector.load %arg6[%c0_15, %c0_16] : memref<32x32xbf16, #tpu.memory_space<vmem>>, vector<32x32xbf16>
    %c0_17 = arith.constant 0 : index
    %c0_18 = arith.constant 0 : index
    %34 = vector.load %arg7[%c0_17, %c0_18] : memref<1x32xf32, #tpu.memory_space<vmem>>, vector<1x32xf32>
    %35 = arith.truncf %32 : vector<16x32xf32> to vector<16x32xbf16>
    %cst_19 = arith.constant dense<0.000000e+00> : vector<16x32xf32>
    %36 = tpu.matmul %35, %33, %cst_19 {dimension_numbers = #tpu.dot_dimension_numbers<[1], [0], [0], [1], [0, 0, 1, 1], [], []>} : vector<16x32xbf16>, vector<32x32xbf16>, vector<16x32xf32> -> vector<16x32xf32>
    %37 = vector.broadcast %34 : vector<1x32xf32> to vector<16x32xf32>
    %38 = arith.addf %36, %37 : vector<16x32xf32>
    %cst_20 = arith.constant 0.000000e+00 : f32
    %39 = vector.broadcast %cst_20 : f32 to vector<16x32xf32>
    %40 = arith.maximumf %38, %39 : vector<16x32xf32>
    %c0_21 = arith.constant 0 : index
    %c0_22 = arith.constant 0 : index
    %41 = vector.load %arg8[%c0_21, %c0_22] : memref<32x6xbf16, #tpu.memory_space<vmem>>, vector<32x6xbf16>
    %c0_23 = arith.constant 0 : index
    %c0_24 = arith.constant 0 : index
    %42 = vector.load %arg9[%c0_23, %c0_24] : memref<1x6xf32, #tpu.memory_space<vmem>>, vector<1x6xf32>
    %43 = arith.truncf %40 : vector<16x32xf32> to vector<16x32xbf16>
    %cst_25 = arith.constant dense<0.000000e+00> : vector<16x6xf32>
    %44 = tpu.matmul %43, %41, %cst_25 {dimension_numbers = #tpu.dot_dimension_numbers<[1], [0], [0], [1], [0, 0, 1, 1], [], []>} : vector<16x32xbf16>, vector<32x6xbf16>, vector<16x6xf32> -> vector<16x6xf32>
    %45 = vector.broadcast %42 : vector<1x6xf32> to vector<16x6xf32>
    %46 = arith.addf %44, %45 : vector<16x6xf32>
    %47 = arith.negf %46 : vector<16x6xf32>
    %48 = math.exp %47 : vector<16x6xf32>
    %cst_26 = arith.constant 1.000000e+00 : f32
    %49 = vector.broadcast %cst_26 : f32 to vector<16x6xf32>
    %50 = arith.addf %49, %48 : vector<16x6xf32>
    %51 = arith.divf %49, %50 : vector<16x6xf32>
    %c0_27 = arith.constant 0 : index
    %c0_28 = arith.constant 0 : index
    %52 = vector.load %arg10[%c0_27, %c0_28] : memref<16x6xf32, #tpu.memory_space<vmem>>, vector<16x6xf32>
    tpu.vector_store %arg10[%c0_27, %c0_28], %51 {strides = array<i32>} : memref<16x6xf32, #tpu.memory_space<vmem>>, vector<16x6xf32>,
    return
  }
  func.func @transform_0(%arg0: i32) -> (i32, i32) {
    %c0_i32 = arith.constant 0 : i32
    %c0_i32_0 = arith.constant 0 : i32
    return %arg0, %c0_i32 : i32, i32
  }
  func.func @transform_1(%arg0: i32) -> (i32, i32) {
    %c0_i32 = arith.constant 0 : i32
    %c0_i32_0 = arith.constant 0 : i32
    %c0_i32_1 = arith.constant 0 : i32
    return %c0_i32, %c0_i32_0 : i32, i32
  }
  func.func @transform_2(%arg0: i32) -> (i32, i32) {
    %c0_i32 = arith.constant 0 : i32
    %c0_i32_0 = arith.constant 0 : i32
    %c0_i32_1 = arith.constant 0 : i32
    return %c0_i32, %c0_i32_0 : i32, i32
  }
  func.func @transform_3(%arg0: i32) -> (i32, i32) {
    %c0_i32 = arith.constant 0 : i32
    %c0_i32_0 = arith.constant 0 : i32
    %c0_i32_1 = arith.constant 0 : i32
    return %c0_i32, %c0_i32_0 : i32, i32
  }
  func.func @transform_4(%arg0: i32) -> (i32, i32) {
    %c0_i32 = arith.constant 0 : i32
    %c0_i32_0 = arith.constant 0 : i32
    %c0_i32_1 = arith.constant 0 : i32
    return %c0_i32, %c0_i32_0 : i32, i32
  }
  func.func @transform_5(%arg0: i32) -> (i32, i32) {
    %c0_i32 = arith.constant 0 : i32
    %c0_i32_0 = arith.constant 0 : i32
    %c0_i32_1 = arith.constant 0 : i32
    return %c0_i32, %c0_i32_0 : i32, i32
  }
  func.func @transform_6(%arg0: i32) -> (i32, i32) {
    %c0_i32 = arith.constant 0 : i32
    %c0_i32_0 = arith.constant 0 : i32
    %c0_i32_1 = arith.constant 0 : i32
    return %c0_i32, %c0_i32_0 : i32, i32
  }
  func.func @transform_7(%arg0: i32) -> (i32, i32) {
    %c0_i32 = arith.constant 0 : i32
    %c0_i32_0 = arith.constant 0 : i32
    %c0_i32_1 = arith.constant 0 : i32
    return %c0_i32, %c0_i32_0 : i32, i32
  }
  func.func @transform_8(%arg0: i32) -> (i32, i32) {
    %c0_i32 = arith.constant 0 : i32
    %c0_i32_0 = arith.constant 0 : i32
    %c0_i32_1 = arith.constant 0 : i32
    return %c0_i32, %c0_i32_0 : i32, i32
  }
  func.func @transform_9(%arg0: i32) -> (i32, i32) {
    %c0_i32 = arith.constant 0 : i32
    %c0_i32_0 = arith.constant 0 : i32
    return %arg0, %c0_i32 : i32, i32
  }
}

</mosaic_0001>

<llo_original>
// kernel: mask4former_forward.29
$region0: #{mask4former_forward.29}
  #allocation0 [shape = 'u32[]', space=smem, size = 0x4, offset = 0x4, fixed_abs, tag = 'smem constant byte address 0x4 - core index']
  #allocation1 [shape = 'u32[144,128]{1,0:T(1,128)}', space=vmem, size = 0x12000, scoped, tag = 'internal scratch']
  %s0 = inlined_call_operand.vmem [shape: f32[32,24], index: 0, kind: input, shape index: {}]
  %s1 = inlined_call_operand.vmem [shape: bf16[32,32], index: 1, kind: input, shape index: {}]
  %s2 = inlined_call_operand.vmem [shape: bf16[24,32], index: 2, kind: input, shape index: {}]
  %s3 = inlined_call_operand.vmem [shape: f32[1,32], index: 3, kind: input, shape index: {}]
  %s4 = inlined_call_operand.vmem [shape: bf16[32,32], index: 4, kind: input, shape index: {}]
  %s5 = inlined_call_operand.vmem [shape: f32[1,32], index: 5, kind: input, shape index: {}]
  %s6 = inlined_call_operand.vmem [shape: bf16[32,32], index: 6, kind: input, shape index: {}]
  %s7 = inlined_call_operand.vmem [shape: f32[1,32], index: 7, kind: input, shape index: {}]
  %s8 = inlined_call_operand.vmem [shape: bf16[32,32], index: 8, kind: output, shape index: {0}]
  %s9 = inlined_call_operand.vmem [shape: bf16[32,32], index: 9, kind: output, shape index: {1}]
  %10 = xla_tuple %s8, %s9
  %s11 = sld [smem:[#allocation0]]
  $region50: #{mask4former_forward.29} parent=0
    _
  %s13 = ssub.s32 1, %s11
  %s14 = scalar_select 0, %s13, %s11
  // Predicated region
  $region2: #{mask4former_forward.29} parent=0 // pred_check
    _
  $region3: #{mask4former_forward.29} parent=0 // pred_check_branch
    %16 = sbr.rel (0) target = $region5
  $region4: #{mask4former_forward.29} parent=0 // pred_region
    _
  $region5: #{mask4former_forward.29} parent=0 // pred_fallthru
    _
  // Predicated region
  $region6: #{mask4former_forward.29} parent=0 // pred_check
    _
  $region7: #{mask4former_forward.29} parent=0 // pred_check_branch
    %18 = sbr.rel (0) target = $region9
  $region8: #{mask4former_forward.29} parent=0 // pred_region
    _
  $region9: #{mask4former_forward.29} parent=0 // pred_fallthru
    _
  // Predicated region
  $region10: #{mask4former_forward.29} parent=0 // pred_check
    _
  $region11: #{mask4former_forward.29} parent=0 // pred_check_branch
    %20 = sbr.rel (0) target = $region13
  $region12: #{mask4former_forward.29} parent=0 // pred_region
    _
  $region13: #{mask4former_forward.29} parent=0 // pred_fallthru
    _
  // Predicated region
  $region14: #{mask4former_forward.29} parent=0 // pred_check
    _
  $region15: #{mask4former_forward.29} parent=0 // pred_check_branch
    %22 = sbr.rel (0) target = $region17
  $region16: #{mask4former_forward.29} parent=0 // pred_region
    _
  $region17: #{mask4former_forward.29} parent=0 // pred_fallthru
    _
  // Predicated region
  $region18: #{mask4former_forward.29} parent=0 // pred_check
    _
  $region19: #{mask4former_forward.29} parent=0 // pred_check_branch
    %24 = sbr.rel (0) target = $region21
  $region20: #{mask4former_forward.29} parent=0 // pred_region
    _
  $region21: #{mask4former_forward.29} parent=0 // pred_fallthru
    _
  // Predicated region
  $region22: #{mask4former_forward.29} parent=0 // pred_check
    _
  $region23: #{mask4former_forward.29} parent=0 // pred_check_branch
    %26 = sbr.rel (0) target = $region25
  $region24: #{mask4former_forward.29} parent=0 // pred_region
    _
  $region25: #{mask4former_forward.29} parent=0 // pred_fallthru
    _
  // Predicated region
  $region26: #{mask4former_forward.29} parent=0 // pred_check
    _
  $region27: #{mask4former_forward.29} parent=0 // pred_check_branch
    %28 = sbr.rel (0) target = $region29
  $region28: #{mask4former_forward.29} parent=0 // pred_region
    _
  $region29: #{mask4former_forward.29} parent=0 // pred_fallthru
    _
  // Predicated region
  $region30: #{mask4former_forward.29} parent=0 // pred_check
    _
  $region31: #{mask4former_forward.29} parent=0 // pred_check_branch
    %30 = sbr.rel (0) target = $region33
  $region32: #{mask4former_forward.29} parent=0 // pred_region
    _
  $region33: #{mask4former_forward.29} parent=0 // pred_fallthru
    _
  %v32 = vld [vmem:[%s0] sm:$0xff]
  %v33 = vld [vmem:[%s0 + $0x8] sm:$0xff]
  %v34 = vld [vmem:[%s0 + $0x10] sm:$0xff]
  %v35 = vld [vmem:[%s0 + $0x18] sm:$0xff]
  %v36 = vpack.c.bf16 %v33, %v32
  %v37 = vpack.c.bf16 %v35, %v34
  %v38 = vld [vmem:[%s2] sm:$0xf]
  %v39 = vld [vmem:[%s2 + $0x4] sm:$0xf]
  %v40 = vld [vmem:[%s2 + $0x8] sm:$0xf]
  %v41 = vld [vmem:[%s3] sm:$0x1]
  %v43 = vlaneseq
  %v44 = vshrl.u32 %v43, 7
  %v45 = vsub.s32 0, %v44
  %v46 = vrot.slane %v41, %v45
  %v51 = vunpack.c.l.b16 %v38
  %v52 = vunpack.c.l.b16 %v39
  %v53 = vunpack.c.l.b16 %v40
  %v54 = vpack.c.b16 %v52, %v51
  %v55 = vpack.c.b16 %v53, %v53
  %vm57 = vcmask 195584
  %v59 = vsel %vm57, %v36, 0
  %v62 = vsel %vm57, %v37, 0
  %vm64 = vcmask 1043456
  %v66 = vsel %vm64, %v55, 0
  %68 = vmatprep.subr.bf16.mxu0 0
  %69 = vmatpush1.bf16.msra.mxu0 %v54
  %70 = vmatprep.subr.bf16.mxu0 0
  %71 = vmatpush1.bf16.msra.mxu0 %v66
  %72 = vmatprep.subr.bf16.mxu0 0
  %73 = vmatpush1.bf16.msra.mxu0 0
  %74 = vmatprep.subr.bf16.mxu0 0
  %75 = vmatpush1.bf16.msra.mxu0 0
  %76 = vmatprep.subr.bf16.mxu0 0
  %77 = vmatpush1.bf16.msra.mxu0 0
  %78 = vmatprep.subr.bf16.mxu0 0
  %79 = vmatpush1.bf16.msra.mxu0 0
  %80 = vmatprep.subr.bf16.mxu0 0
  %81 = vmatpush1.bf16.msra.mxu0 0
  %82 = vmatprep.subr.bf16.mxu0 0
  %83 = vmatpush1.bf16.msra.mxu0 0
  %84 = vmatprep.subr.bf16.mxu0 0
  %85 = vmatpush1.bf16.msra.mxu0 0
  %86 = vmatprep.subr.bf16.mxu0 0
  %87 = vmatpush1.bf16.msra.mxu0 0
  %88 = vmatprep.subr.bf16.mxu0 0
  %89 = vmatpush1.bf16.msra.mxu0 0
  %90 = vmatprep.subr.bf16.mxu0 0
  %91 = vmatpush1.bf16.msra.mxu0 0
  %92 = vmatprep.subr.bf16.mxu0 0
  %93 = vmatpush1.bf16.msra.mxu0 0
  %94 = vmatprep.subr.bf16.mxu0 0
  %95 = vmatpush1.bf16.msra.mxu0 0
  %96 = vmatprep.subr.bf16.mxu0 0
  %97 = vmatpush1.bf16.msra.mxu0 0
  %98 = vmatprep.subr.bf16.mxu0 0
  %99 = vmatpush1.bf16.msra.mxu0 0
  %100 = vmatprep.mubr.bf16.mxu0 0
  %101 = vmatmul.mubr.bf16.gmra.mrb[0].mxu0 %v59
  %v102 = vpop.f32.mrb[0].mxu0
  %v103 = vadd.f32 %v46, %v102
  %v104 = vpop.f32.mrb[0].mxu0
  %v105 = vpop.f32.mrb[0].mxu0
  %v106 = vadd.f32 %v46, %v105
  %v107 = vpop.f32.mrb[0].mxu0
  %108 = vmatprep.mubr.bf16.mxu0 0
  %109 = vmatmul.mubr.bf16.gmra.mrb[0].mxu0 %v62
  %v110 = vpop.f32.mrb[0].mxu0
  %v111 = vadd.f32 %v46, %v110
  %v112 = vpop.f32.mrb[0].mxu0
  %v113 = vpop.f32.mrb[0].mxu0
  %v114 = vadd.f32 %v46, %v113
  %v115 = vpop.f32.mrb[0].mxu0
  %116 = vdwg.mxu0
  %v117 = vld [vmem:[%s1] sm:$0xf]
  %v118 = vld [vmem:[%s1 + $0x4] sm:$0xf]
  %v119 = vld [vmem:[%s1 + $0x8] sm:$0xf]
  %v120 = vld [vmem:[%s1 + $0xc] sm:$0xf]
  %v121 = vunpack.c.l.bf16 %v117
  %v122 = vunpack.c.l.bf16 %v118
  %v123 = vunpack.c.l.bf16 %v119
  %v124 = vunpack.c.l.bf16 %v120
  %v125 = vadd.f32 %v103, %v121
  %v126 = vadd.f32 %v106, %v122
  %v127 = vadd.f32 %v111, %v123
  %v128 = vadd.f32 %v114, %v124
  %v129 = vpack.c.bf16 %v126, %v125
  %v130 = vpack.c.bf16 %v128, %v127
  %v131 = vld [vmem:[%s4] sm:$0xf]
  %v132 = vld [vmem:[%s4 + $0x4] sm:$0xf]
  %v133 = vld [vmem:[%s4 + $0x8] sm:$0xf]
  %v134 = vld [vmem:[%s4 + $0xc] sm:$0xf]
  %v135 = vld [vmem:[%s5] sm:$0x1]
  %v137 = vlaneseq
  %v138 = vshrl.u32 %v137, 7
  %v139 = vsub.s32 0, %v138
  %v140 = vrot.slane %v135, %v139
  %v146 = vunpack.c.l.b16 %v131
  %v147 = vunpack.c.l.b16 %v132
  %v148 = vunpack.c.l.b16 %v133
  %v149 = vunpack.c.l.b16 %v134
  %v150 = vpack.c.b16 %v147, %v146
  %v151 = vpack.c.b16 %v149, %v148
  %vm154 = vcmask 261120
  %v156 = vsel %vm154, %v129, 0
  %v159 = vsel %vm154, %v130, 0
  %161 = vmatprep.subr.bf16.mxu0 0
  %162 = vmatpush1.bf16.msra.mxu0 %v150
  %163 = vmatprep.subr.bf16.mxu0 0
  %164 = vmatpush1.bf16.msra.mxu0 %v151
  %165 = vmatprep.subr.bf16.mxu0 0
  %166 = vmatpush1.bf16.msra.mxu0 0
  %167 = vmatprep.subr.bf16.mxu0 0
  %168 = vmatpush1.bf16.msra.mxu0 0
  %169 = vmatprep.subr.bf16.mxu0 0
  %170 = vmatpush1.bf16.msra.mxu0 0
  %171 = vmatprep.subr.bf16.mxu0 0
  %172 = vmatpush1.bf16.msra.mxu0 0
  %173 = vmatprep.subr.bf16.mxu0 0
  %174 = vmatpush1.bf16.msra.mxu0 0
  %175 = vmatprep.subr.bf16.mxu0 0
  %176 = vmatpush1.bf16.msra.mxu0 0
  %177 = vmatprep.subr.bf16.mxu0 0
  %178 = vmatpush1.bf16.msra.mxu0 0
  %179 = vmatprep.subr.bf16.mxu0 0
  %180 = vmatpush1.bf16.msra.mxu0 0
  %181 = vmatprep.subr.bf16.mxu0 0
  %182 = vmatpush1.bf16.msra.mxu0 0
  %183 = vmatprep.subr.bf16.mxu0 0
  %184 = vmatpush1.bf16.msra.mxu0 0
  %185 = vmatprep.subr.bf16.mxu0 0
  %186 = vmatpush1.bf16.msra.mxu0 0
  %187 = vmatprep.subr.bf16.mxu0 0
  %188 = vmatpush1.bf16.msra.mxu0 0
  %189 = vmatprep.subr.bf16.mxu0 0
  %190 = vmatpush1.bf16.msra.mxu0 0
  %191 = vmatprep.subr.bf16.mxu0 0
  %192 = vmatpush1.bf16.msra.mxu0 0
  %193 = vmatprep.mubr.bf16.mxu0 0
  %194 = vmatmul.mubr.bf16.gmra.mrb[0].mxu0 %v156
  %v195 = vpop.f32.mrb[0].mxu0
  %v196 = vadd.f32 %v140, %v195
  %v197 = vpop.f32.mrb[0].mxu0
  %v198 = vpop.f32.mrb[0].mxu0
  %v199 = vadd.f32 %v140, %v198
  %v200 = vpop.f32.mrb[0].mxu0
  %201 = vmatprep.mubr.bf16.mxu0 0
  %202 = vmatmul.mubr.bf16.gmra.mrb[0].mxu0 %v159
  %v203 = vpop.f32.mrb[0].mxu0
  %v204 = vadd.f32 %v140, %v203
  %v205 = vpop.f32.mrb[0].mxu0
  %v206 = vpop.f32.mrb[0].mxu0
  %v207 = vadd.f32 %v140, %v206
  %v208 = vpop.f32.mrb[0].mxu0
  %209 = vdwg.mxu0
  %v210 = vpack.c.bf16 %v106, %v103
  %v211 = vpack.c.bf16 %v114, %v111
  %v212 = vld [vmem:[%s6] sm:$0xf]
  %v213 = vld [vmem:[%s6 + $0x4] sm:$0xf]
  %v214 = vld [vmem:[%s6 + $0x8] sm:$0xf]
  %v215 = vld [vmem:[%s6 + $0xc] sm:$0xf]
  %v216 = vld [vmem:[%s7] sm:$0x1]
  %v218 = vlaneseq
  %v219 = vshrl.u32 %v218, 7
  %v220 = vsub.s32 0, %v219
  %v221 = vrot.slane %v216, %v220
  %v227 = vunpack.c.l.b16 %v212
  %v228 = vunpack.c.l.b16 %v213
  %v229 = vunpack.c.l.b16 %v214
  %v230 = vunpack.c.l.b16 %v215
  %v231 = vpack.c.b16 %v228, %v227
  %v232 = vpack.c.b16 %v230, %v229
  %v236 = vsel %vm154, %v210, 0
  %v239 = vsel %vm154, %v211, 0
  %241 = vmatprep.subr.bf16.mxu0 0
  %242 = vmatpush1.bf16.msra.mxu0 %v231
  %243 = vmatprep.subr.bf16.mxu0 0
  %244 = vmatpush1.bf16.msra.mxu0 %v232
  %245 = vmatprep.subr.bf16.mxu0 0
  %246 = vmatpush1.bf16.msra.mxu0 0
  %247 = vmatprep.subr.bf16.mxu0 0
  %248 = vmatpush1.bf16.msra.mxu0 0
  %249 = vmatprep.subr.bf16.mxu0 0
  %250 = vmatpush1.bf16.msra.mxu0 0
  %251 = vmatprep.subr.bf16.mxu0 0
  %252 = vmatpush1.bf16.msra.mxu0 0
  %253 = vmatprep.subr.bf16.mxu0 0
  %254 = vmatpush1.bf16.msra.mxu0 0
  %255 = vmatprep.subr.bf16.mxu0 0
  %256 = vmatpush1.bf16.msra.mxu0 0
  %257 = vmatprep.subr.bf16.mxu0 0
  %258 = vmatpush1.bf16.msra.mxu0 0
  %259 = vmatprep.subr.bf16.mxu0 0
  %260 = vmatpush1.bf16.msra.mxu0 0
  %261 = vmatprep.subr.bf16.mxu0 0
  %262 = vmatpush1.bf16.msra.mxu0 0
  %263 = vmatprep.subr.bf16.mxu0 0
  %264 = vmatpush1.bf16.msra.mxu0 0
  %265 = vmatprep.subr.bf16.mxu0 0
  %266 = vmatpush1.bf16.msra.mxu0 0
  %267 = vmatprep.subr.bf16.mxu0 0
  %268 = vmatpush1.bf16.msra.mxu0 0
  %269 = vmatprep.subr.bf16.mxu0 0
  %270 = vmatpush1.bf16.msra.mxu0 0
  %271 = vmatprep.subr.bf16.mxu0 0
  %272 = vmatpush1.bf16.msra.mxu0 0
  %273 = vmatprep.mubr.bf16.mxu0 0
  %274 = vmatmul.mubr.bf16.gmra.mrb[0].mxu0 %v236
  %v275 = vpop.f32.mrb[0].mxu0
  %v276 = vadd.f32 %v221, %v275
  %v277 = vpop.f32.mrb[0].mxu0
  %v278 = vpop.f32.mrb[0].mxu0
  %v279 = vadd.f32 %v221, %v278
  %v280 = vpop.f32.mrb[0].mxu0
  %281 = vmatprep.mubr.bf16.mxu0 0
  %282 = vmatmul.mubr.bf16.gmra.mrb[0].mxu0 %v239
  %v283 = vpop.f32.mrb[0].mxu0
  %v284 = vadd.f32 %v221, %v283
  %v285 = vpop.f32.mrb[0].mxu0
  %v286 = vpop.f32.mrb[0].mxu0
  %v287 = vadd.f32 %v221, %v286
  %v288 = vpop.f32.mrb[0].mxu0
  %289 = vdwg.mxu0
  %v290 = vpack.c.bf16 %v199, %v196
  %v291 = vpack.c.bf16 %v207, %v204
  %v294 = vunpack.c.l.b16 %v290
  %v295 = vunpack.c.h.b16 %v290
  %v296 = vunpack.c.l.b16 %v291
  %v297 = vunpack.c.h.b16 %v291
  %v298 = vpack.c.b16 %v294, %v294
  %v299 = vpack.c.b16 %v295, %v295
  %v300 = vpack.c.b16 %v296, %v296
  %v301 = vpack.c.b16 %v297, %v297
  %vm306 = vcmask 257024
  %307 = vst.msk [vmem:[%s8] sm:$0xf] %vm306, %v298
  %308 = vst.msk [vmem:[%s8 + $0x4] sm:$0xf] %vm306, %v299
  %309 = vst.msk [vmem:[%s8 + $0x8] sm:$0xf] %vm306, %v300
  %310 = vst.msk [vmem:[%s8 + $0xc] sm:$0xf] %vm306, %v301
  %v311 = vpack.c.bf16 %v279, %v276
  %v312 = vpack.c.bf16 %v287, %v284
  %v315 = vunpack.c.l.b16 %v311
  %v316 = vunpack.c.h.b16 %v311
  %v317 = vunpack.c.l.b16 %v312
  %v318 = vunpack.c.h.b16 %v312
  %v319 = vpack.c.b16 %v315, %v315
  %v320 = vpack.c.b16 %v316, %v316
  %v321 = vpack.c.b16 %v317, %v317
  %v322 = vpack.c.b16 %v318, %v318
  %327 = vst.msk [vmem:[%s9] sm:$0xf] %vm306, %v319
  %328 = vst.msk [vmem:[%s9 + $0x4] sm:$0xf] %vm306, %v320
  %329 = vst.msk [vmem:[%s9 + $0x8] sm:$0xf] %vm306, %v321
  %330 = vst.msk [vmem:[%s9 + $0xc] sm:$0xf] %vm306, %v322
  // Predicated region
  $region34: #{mask4former_forward.29} parent=0 // pred_check
    _
  $region35: #{mask4former_forward.29} parent=0 // pred_check_branch
    %332 = sbr.rel (0) target = $region37
  $region36: #{mask4former_forward.29} parent=0 // pred_region
    _
  $region37: #{mask4former_forward.29} parent=0 // pred_fallthru
    _
  // Predicated region
  $region38: #{mask4former_forward.29} parent=0 // pred_check
    _
  $region39: #{mask4former_forward.29} parent=0 // pred_check_branch
    %334 = sbr.rel (0) target = $region41
  $region40: #{mask4former_forward.29} parent=0 // pred_region
    _
  $region41: #{mask4former_forward.29} parent=0 // pred_fallthru
    _
  // Predicated region
  $region42: #{mask4former_forward.29} parent=0 // pred_check
    _
  $region43: #{mask4former_forward.29} parent=0 // pred_check_branch
    %336 = sbr.rel (0) target = $region45
  $region44: #{mask4former_forward.29} parent=0 // pred_region
    _
  $region45: #{mask4former_forward.29} parent=0 // pred_fallthru
    _
  // Predicated region
  $region46: #{mask4former_forward.29} parent=0 // pred_check
    _
  $region47: #{mask4former_forward.29} parent=0 // pred_check_branch
    %338 = sbr.rel (0) target = $region49
  $region48: #{mask4former_forward.29} parent=0 // pred_region
    _
  $region49: #{mask4former_forward.29} parent=0 // pred_fallthru
    _

// kernel: mask4former_forward.23
$region0: #{mask4former_forward.23}
  #allocation0 [shape = 'u32[]', space=smem, size = 0x4, offset = 0x4, fixed_abs, tag = 'smem constant byte address 0x4 - core index']
  #allocation1 [shape = 'u32[144,128]{1,0:T(1,128)}', space=vmem, size = 0x12000, scoped, tag = 'internal scratch']
  %s0 = inlined_call_operand.vmem [shape: f32[16,32], index: 0, kind: input, shape index: {}]
  %s1 = inlined_call_operand.vmem [shape: bf16[32,32], index: 1, kind: input, shape index: {}]
  %s2 = inlined_call_operand.vmem [shape: f32[1,32], index: 2, kind: input, shape index: {}]
  %s3 = inlined_call_operand.vmem [shape: bf16[32,32], index: 3, kind: input, shape index: {}]
  %s4 = inlined_call_operand.vmem [shape: f32[1,32], index: 4, kind: input, shape index: {}]
  %s5 = inlined_call_operand.vmem [shape: f32[16,32], index: 5, kind: output, shape index: {}]
  %s6 = sld [smem:[#allocation0]]
  $region30: #{mask4former_forward.23} parent=0
    _
  %s8 = ssub.s32 1, %s6
  %s9 = scalar_select 0, %s8, %s6
  // Predicated region
  $region2: #{mask4former_forward.23} parent=0 // pred_check
    _
  $region3: #{mask4former_forward.23} parent=0 // pred_check_branch
    %11 = sbr.rel (0) target = $region5
  $region4: #{mask4former_forward.23} parent=0 // pred_region
    _
  $region5: #{mask4former_forward.23} parent=0 // pred_fallthru
    _
  // Predicated region
  $region6: #{mask4former_forward.23} parent=0 // pred_check
    _
  $region7: #{mask4former_forward.23} parent=0 // pred_check_branch
    %13 = sbr.rel (0) target = $region9
  $region8: #{mask4former_forward.23} parent=0 // pred_region
    _
  $region9: #{mask4former_forward.23} parent=0 // pred_fallthru
    _
  // Predicated region
  $region10: #{mask4former_forward.23} parent=0 // pred_check
    _
  $region11: #{mask4former_forward.23} parent=0 // pred_check_branch
    %15 = sbr.rel (0) target = $region13
  $region12: #{mask4former_forward.23} parent=0 // pred_region
    _
  $region13: #{mask4former_forward.23} parent=0 // pred_fallthru
    _
  // Predicated region
  $region14: #{mask4former_forward.23} parent=0 // pred_check
    _
  $region15: #{mask4former_forward.23} parent=0 // pred_check_branch
    %17 = sbr.rel (0) target = $region17
  $region16: #{mask4former_forward.23} parent=0 // pred_region
    _
  $region17: #{mask4former_forward.23} parent=0 // pred_fallthru
    _
  // Predicated region
  $region18: #{mask4former_forward.23} parent=0 // pred_check
    _
  $region19: #{mask4former_forward.23} parent=0 // pred_check_branch
    %19 = sbr.rel (0) target = $region21
  $region20: #{mask4former_forward.23} parent=0 // pred_region
    _
  $region21: #{mask4former_forward.23} parent=0 // pred_fallthru
    _
  %v21 = vld [vmem:[%s0] sm:$0xff]
  %v22 = vld [vmem:[%s0 + $0x8] sm:$0xff]
  %v23 = vld [vmem:[%s1] sm:$0xf]
  %v24 = vld [vmem:[%s1 + $0x4] sm:$0xf]
  %v25 = vld [vmem:[%s1 + $0x8] sm:$0xf]
  %v26 = vld [vmem:[%s1 + $0xc] sm:$0xf]
  %v27 = vld [vmem:[%s2] sm:$0x1]
  %v28 = vpack.c.bf16 %v22, %v21
  %v30 = vlaneseq
  %v31 = vshrl.u32 %v30, 7
  %v32 = vsub.s32 0, %v31
  %v33 = vrot.slane %v27, %v32
  %v39 = vunpack.c.l.b16 %v23
  %v40 = vunpack.c.l.b16 %v24
  %v41 = vunpack.c.l.b16 %v25
  %v42 = vunpack.c.l.b16 %v26
  %v43 = vpack.c.b16 %v40, %v39
  %v44 = vpack.c.b16 %v42, %v41
  %vm47 = vcmask 261120
  %v49 = vsel %vm47, %v28, 0
  %51 = vmatprep.subr.bf16.mxu0 0
  %52 = vmatpush1.bf16.msra.mxu0 %v43
  %53 = vmatprep.subr.bf16.mxu0 0
  %54 = vmatpush1.bf16.msra.mxu0 %v44
  %55 = vmatprep.subr.bf16.mxu0 0
  %56 = vmatpush1.bf16.msra.mxu0 0
  %57 = vmatprep.subr.bf16.mxu0 0
  %58 = vmatpush1.bf16.msra.mxu0 0
  %59 = vmatprep.subr.bf16.mxu0 0
  %60 = vmatpush1.bf16.msra.mxu0 0
  %61 = vmatprep.subr.bf16.mxu0 0
  %62 = vmatpush1.bf16.msra.mxu0 0
  %63 = vmatprep.subr.bf16.mxu0 0
  %64 = vmatpush1.bf16.msra.mxu0 0
  %65 = vmatprep.subr.bf16.mxu0 0
  %66 = vmatpush1.bf16.msra.mxu0 0
  %67 = vmatprep.subr.bf16.mxu0 0
  %68 = vmatpush1.bf16.msra.mxu0 0
  %69 = vmatprep.subr.bf16.mxu0 0
  %70 = vmatpush1.bf16.msra.mxu0 0
  %71 = vmatprep.subr.bf16.mxu0 0
  %72 = vmatpush1.bf16.msra.mxu0 0
  %73 = vmatprep.subr.bf16.mxu0 0
  %74 = vmatpush1.bf16.msra.mxu0 0
  %75 = vmatprep.subr.bf16.mxu0 0
  %76 = vmatpush1.bf16.msra.mxu0 0
  %77 = vmatprep.subr.bf16.mxu0 0
  %78 = vmatpush1.bf16.msra.mxu0 0
  %79 = vmatprep.subr.bf16.mxu0 0
  %80 = vmatpush1.bf16.msra.mxu0 0
  %81 = vmatprep.subr.bf16.mxu0 0
  %82 = vmatpush1.bf16.msra.mxu0 0
  %83 = vmatprep.mubr.bf16.mxu0 0
  %84 = vmatmul.mubr.bf16.gmra.mrb[0].mxu0 %v49
  %v85 = vpop.f32.mrb[0].mxu0
  %v86 = vadd.f32 %v33, %v85
  %v87 = vpop.f32.mrb[0].mxu0
  %v88 = vpop.f32.mrb[0].mxu0
  %v89 = vadd.f32 %v33, %v88
  %v90 = vpop.f32.mrb[0].mxu0
  %91 = vdwg.mxu0
  %v92 = vmax.f32 %v86, 0.0
  %v93 = vmax.f32 %v89, 0.0
  %v94 = vld [vmem:[%s3] sm:$0xf]
  %v95 = vld [vmem:[%s3 + $0x4] sm:$0xf]
  %v96 = vld [vmem:[%s3 + $0x8] sm:$0xf]
  %v97 = vld [vmem:[%s3 + $0xc] sm:$0xf]
  %v98 = vld [vmem:[%s4] sm:$0x1]
  %v99 = vpack.c.bf16 %v93, %v92
  %v101 = vlaneseq
  %v102 = vshrl.u32 %v101, 7
  %v103 = vsub.s32 0, %v102
  %v104 = vrot.slane %v98, %v103
  %v110 = vunpack.c.l.b16 %v94
  %v111 = vunpack.c.l.b16 %v95
  %v112 = vunpack.c.l.b16 %v96
  %v113 = vunpack.c.l.b16 %v97
  %v114 = vpack.c.b16 %v111, %v110
  %v115 = vpack.c.b16 %v113, %v112
  %v119 = vsel %vm47, %v99, 0
  %121 = vmatprep.subr.bf16.mxu0 0
  %122 = vmatpush1.bf16.msra.mxu0 %v114
  %123 = vmatprep.subr.bf16.mxu0 0
  %124 = vmatpush1.bf16.msra.mxu0 %v115
  %125 = vmatprep.subr.bf16.mxu0 0
  %126 = vmatpush1.bf16.msra.mxu0 0
  %127 = vmatprep.subr.bf16.mxu0 0
  %128 = vmatpush1.bf16.msra.mxu0 0
  %129 = vmatprep.subr.bf16.mxu0 0
  %130 = vmatpush1.bf16.msra.mxu0 0
  %131 = vmatprep.subr.bf16.mxu0 0
  %132 = vmatpush1.bf16.msra.mxu0 0
  %133 = vmatprep.subr.bf16.mxu0 0
  %134 = vmatpush1.bf16.msra.mxu0 0
  %135 = vmatprep.subr.bf16.mxu0 0
  %136 = vmatpush1.bf16.msra.mxu0 0
  %137 = vmatprep.subr.bf16.mxu0 0
  %138 = vmatpush1.bf16.msra.mxu0 0
  %139 = vmatprep.subr.bf16.mxu0 0
  %140 = vmatpush1.bf16.msra.mxu0 0
  %141 = vmatprep.subr.bf16.mxu0 0
  %142 = vmatpush1.bf16.msra.mxu0 0
  %143 = vmatprep.subr.bf16.mxu0 0
  %144 = vmatpush1.bf16.msra.mxu0 0
  %145 = vmatprep.subr.bf16.mxu0 0
  %146 = vmatpush1.bf16.msra.mxu0 0
  %147 = vmatprep.subr.bf16.mxu0 0
  %148 = vmatpush1.bf16.msra.mxu0 0
  %149 = vmatprep.subr.bf16.mxu0 0
  %150 = vmatpush1.bf16.msra.mxu0 0
  %151 = vmatprep.subr.bf16.mxu0 0
  %152 = vmatpush1.bf16.msra.mxu0 0
  %153 = vmatprep.mubr.bf16.mxu0 0
  %154 = vmatmul.mubr.bf16.gmra.mrb[0].mxu0 %v119
  %v155 = vpop.f32.mrb[0].mxu0
  %v156 = vadd.f32 %v104, %v155
  %v157 = vpop.f32.mrb[0].mxu0
  %v158 = vpop.f32.mrb[0].mxu0
  %v159 = vadd.f32 %v104, %v158
  %v160 = vpop.f32.mrb[0].mxu0
  %161 = vdwg.mxu0
  %v162 = vmax.f32 %v156, 0.0
  %v163 = vmax.f32 %v159, 0.0
  %164 = vst.msk [vmem:[%s5] sm:$0xff] %vm47, %v162
  %165 = vst.msk [vmem:[%s5 + $0x8] sm:$0xff] %vm47, %v163
  // Predicated region
  $region22: #{mask4former_forward.23} parent=0 // pred_check
    _
  $region23: #{mask4former_forward.23} parent=0 // pred_check_branch
    %167 = sbr.rel (0) target = $region25
  $region24: #{mask4former_forward.23} parent=0 // pred_region
    _
  $region25: #{mask4former_forward.23} parent=0 // pred_fallthru
    _
  // Predicated region
  $region26: #{mask4former_forward.23} parent=0 // pred_check
    _
  $region27: #{mask4former_forward.23} parent=0 // pred_check_branch
    %169 = sbr.rel (0) target = $region29
  $region28: #{mask4former_forward.23} parent=0 // pred_region
    _
  $region29: #{mask4former_forward.23} parent=0 // pred_fallthru
    _

// kernel: mask4former_forward.24
$region0: #{mask4former_forward.24}
  #allocation0 [shape = 'u32[]', space=smem, size = 0x4, offset = 0x4, fixed_abs, tag = 'smem constant byte address 0x4 - core index']
  #allocation1 [shape = 'u32[144,128]{1,0:T(1,128)}', space=vmem, size = 0x12000, scoped, tag = 'internal scratch']
  %s0 = inlined_call_operand.vmem [shape: f32[16,32], index: 0, kind: input, shape index: {}]
  %s1 = inlined_call_operand.vmem [shape: f32[1,32], index: 1, kind: input, shape index: {}]
  %s2 = inlined_call_operand.vmem [shape: f32[1,32], index: 2, kind: input, shape index: {}]
  %s3 = inlined_call_operand.vmem [shape: bf16[32,32], index: 3, kind: input, shape index: {}]
  %s4 = inlined_call_operand.vmem [shape: f32[1,32], index: 4, kind: input, shape index: {}]
  %s5 = inlined_call_operand.vmem [shape: bf16[32,32], index: 5, kind: input, shape index: {}]
  %s6 = inlined_call_operand.vmem [shape: f32[1,32], index: 6, kind: input, shape index: {}]
  %s7 = inlined_call_operand.vmem [shape: bf16[16,32], index: 7, kind: output, shape index: {}]
  %s8 = sld [smem:[#allocation0]]
  $region38: #{mask4former_forward.24} parent=0
    _
  %s10 = ssub.s32 1, %s8
  %s11 = scalar_select 0, %s10, %s8
  // Predicated region
  $region2: #{mask4former_forward.24} parent=0 // pred_check
    _
  $region3: #{mask4former_forward.24} parent=0 // pred_check_branch
    %13 = sbr.rel (0) target = $region5
  $region4: #{mask4former_forward.24} parent=0 // pred_region
    _
  $region5: #{mask4former_forward.24} parent=0 // pred_fallthru
    _
  // Predicated region
  $region6: #{mask4former_forward.24} parent=0 // pred_check
    _
  $region7: #{mask4former_forward.24} parent=0 // pred_check_branch
    %15 = sbr.rel (0) target = $region9
  $region8: #{mask4former_forward.24} parent=0 // pred_region
    _
  $region9: #{mask4former_forward.24} parent=0 // pred_fallthru
    _
  // Predicated region
  $region10: #{mask4former_forward.24} parent=0 // pred_check
    _
  $region11: #{mask4former_forward.24} parent=0 // pred_check_branch
    %17 = sbr.rel (0) target = $region13
  $region12: #{mask4former_forward.24} parent=0 // pred_region
    _
  $region13: #{mask4former_forward.24} parent=0 // pred_fallthru
    _
  // Predicated region
  $region14: #{mask4former_forward.24} parent=0 // pred_check
    _
  $region15: #{mask4former_forward.24} parent=0 // pred_check_branch
    %19 = sbr.rel (0) target = $region17
  $region16: #{mask4former_forward.24} parent=0 // pred_region
    _
  $region17: #{mask4former_forward.24} parent=0 // pred_fallthru
    _
  // Predicated region
  $region18: #{mask4former_forward.24} parent=0 // pred_check
    _
  $region19: #{mask4former_forward.24} parent=0 // pred_check_branch
    %21 = sbr.rel (0) target = $region21
  $region20: #{mask4former_forward.24} parent=0 // pred_region
    _
  $region21: #{mask4former_forward.24} parent=0 // pred_fallthru
    _
  // Predicated region
  $region22: #{mask4former_forward.24} parent=0 // pred_check
    _
  $region23: #{mask4former_forward.24} parent=0 // pred_check_branch
    %23 = sbr.rel (0) target = $region25
  $region24: #{mask4former_forward.24} parent=0 // pred_region
    _
  $region25: #{mask4former_forward.24} parent=0 // pred_fallthru
    _
  // Predicated region
  $region26: #{mask4former_forward.24} parent=0 // pred_check
    _
  $region27: #{mask4former_forward.24} parent=0 // pred_check_branch
    %25 = sbr.rel (0) target = $region29
  $region28: #{mask4former_forward.24} parent=0 // pred_region
    _
  $region29: #{mask4former_forward.24} parent=0 // pred_fallthru
    _
  %v27 = vld [vmem:[%s0] sm:$0xff]
  %v28 = vld [vmem:[%s0 + $0x8] sm:$0xff]
  %v29 = vld [vmem:[%s1] sm:$0x1]
  %v30 = vld [vmem:[%s2] sm:$0x1]
  %vm31 = vcmask 261120
  %v32 = vsel %vm31, %v27, 0.0
  %33 = vadd.xlane.f32.xlu0 %v32
  %v34 = vpop.xlane.xlu0 %33
  %v35 = vsel %vm31, %v28, 0.0
  %36 = vadd.xlane.f32.xlu0 %v35
  %v37 = vpop.xlane.xlu0 %36
  %v38 = vrcp.pop 32.0
  %v39 = vmul.f32 %v34, %v38
  %v40 = vmul.f32 %v37, %v38
  %v41 = vsub.f32 %v27, %v39
  %v42 = vsub.f32 %v28, %v40
  %v43 = vmul.f32 %v41, %v41
  %v44 = vmul.f32 %v42, %v42
  %v45 = vsel %vm31, %v43, 0.0
  %46 = vadd.xlane.f32.xlu0 %v45
  %v47 = vpop.xlane.xlu0 %46
  %v48 = vsel %vm31, %v44, 0.0
  %49 = vadd.xlane.f32.xlu0 %v48
  %v50 = vpop.xlane.xlu0 %49
  %v51 = vmul.f32 %v47, %v38
  %v52 = vmul.f32 %v50, %v38
  %v53 = vadd.f32 %v51, 1e-05
  %v54 = vadd.f32 %v52, 1e-05
  %v55 = vrsqrt.pop %v53
  %v56 = vrsqrt.pop %v54
  %v57 = vmul.f32 %v41, %v55
  %v58 = vmul.f32 %v42, %v56
  %v60 = vlaneseq
  %v61 = vshrl.u32 %v60, 7
  %v62 = vsub.s32 0, %v61
  %v63 = vrot.slane %v29, %v62
  %v65 = vmul.f32 %v57, %v63
  %v66 = vmul.f32 %v58, %v63
  %v68 = vlaneseq
  %v69 = vshrl.u32 %v68, 7
  %v70 = vsub.s32 0, %v69
  %v71 = vrot.slane %v30, %v70
  %v73 = vadd.f32 %v65, %v71
  %v74 = vadd.f32 %v66, %v71
  %v75 = vld [vmem:[%s3] sm:$0xf]
  %v76 = vld [vmem:[%s3 + $0x4] sm:$0xf]
  %v77 = vld [vmem:[%s3 + $0x8] sm:$0xf]
  %v78 = vld [vmem:[%s3 + $0xc] sm:$0xf]
  %v79 = vld [vmem:[%s4] sm:$0x1]
  %v80 = vpack.c.bf16 %v74, %v73
  %v82 = vlaneseq
  %v83 = vshrl.u32 %v82, 7
  %v84 = vsub.s32 0, %v83
  %v85 = vrot.slane %v79, %v84
  %v91 = vunpack.c.l.b16 %v75
  %v92 = vunpack.c.l.b16 %v76
  %v93 = vunpack.c.l.b16 %v77
  %v94 = vunpack.c.l.b16 %v78
  %v95 = vpack.c.b16 %v92, %v91
  %v96 = vpack.c.b16 %v94, %v93
  %v100 = vsel %vm31, %v80, 0
  %102 = vmatprep.subr.bf16.mxu0 0
  %103 = vmatpush1.bf16.msra.mxu0 %v95
  %104 = vmatprep.subr.bf16.mxu0 0
  %105 = vmatpush1.bf16.msra.mxu0 %v96
  %106 = vmatprep.subr.bf16.mxu0 0
  %107 = vmatpush1.bf16.msra.mxu0 0
  %108 = vmatprep.subr.bf16.mxu0 0
  %109 = vmatpush1.bf16.msra.mxu0 0
  %110 = vmatprep.subr.bf16.mxu0 0
  %111 = vmatpush1.bf16.msra.mxu0 0
  %112 = vmatprep.subr.bf16.mxu0 0
  %113 = vmatpush1.bf16.msra.mxu0 0
  %114 = vmatprep.subr.bf16.mxu0 0
  %115 = vmatpush1.bf16.msra.mxu0 0
  %116 = vmatprep.subr.bf16.mxu0 0
  %117 = vmatpush1.bf16.msra.mxu0 0
  %118 = vmatprep.subr.bf16.mxu0 0
  %119 = vmatpush1.bf16.msra.mxu0 0
  %120 = vmatprep.subr.bf16.mxu0 0
  %121 = vmatpush1.bf16.msra.mxu0 0
  %122 = vmatprep.subr.bf16.mxu0 0
  %123 = vmatpush1.bf16.msra.mxu0 0
  %124 = vmatprep.subr.bf16.mxu0 0
  %125 = vmatpush1.bf16.msra.mxu0 0
  %126 = vmatprep.subr.bf16.mxu0 0
  %127 = vmatpush1.bf16.msra.mxu0 0
  %128 = vmatprep.subr.bf16.mxu0 0
  %129 = vmatpush1.bf16.msra.mxu0 0
  %130 = vmatprep.subr.bf16.mxu0 0
  %131 = vmatpush1.bf16.msra.mxu0 0
  %132 = vmatprep.subr.bf16.mxu0 0
  %133 = vmatpush1.bf16.msra.mxu0 0
  %134 = vmatprep.mubr.bf16.mxu0 0
  %135 = vmatmul.mubr.bf16.gmra.mrb[0].mxu0 %v100
  %v136 = vpop.f32.mrb[0].mxu0
  %v137 = vadd.f32 %v85, %v136
  %v138 = vpop.f32.mrb[0].mxu0
  %v139 = vpop.f32.mrb[0].mxu0
  %v140 = vadd.f32 %v85, %v139
  %v141 = vpop.f32.mrb[0].mxu0
  %142 = vdwg.mxu0
  %v143 = vmax.f32 %v137, 0.0
  %v144 = vmax.f32 %v140, 0.0
  %v145 = vld [vmem:[%s5] sm:$0xf]
  %v146 = vld [vmem:[%s5 + $0x4] sm:$0xf]
  %v147 = vld [vmem:[%s5 + $0x8] sm:$0xf]
  %v148 = vld [vmem:[%s5 + $0xc] sm:$0xf]
  %v149 = vld [vmem:[%s6] sm:$0x1]
  %v150 = vpack.c.bf16 %v144, %v143
  %v152 = vlaneseq
  %v153 = vshrl.u32 %v152, 7
  %v154 = vsub.s32 0, %v153
  %v155 = vrot.slane %v149, %v154
  %v161 = vunpack.c.l.b16 %v145
  %v162 = vunpack.c.l.b16 %v146
  %v163 = vunpack.c.l.b16 %v147
  %v164 = vunpack.c.l.b16 %v148
  %v165 = vpack.c.b16 %v162, %v161
  %v166 = vpack.c.b16 %v164, %v163
  %v170 = vsel %vm31, %v150, 0
  %172 = vmatprep.subr.bf16.mxu0 0
  %173 = vmatpush1.bf16.msra.mxu0 %v165
  %174 = vmatprep.subr.bf16.mxu0 0
  %175 = vmatpush1.bf16.msra.mxu0 %v166
  %176 = vmatprep.subr.bf16.mxu0 0
  %177 = vmatpush1.bf16.msra.mxu0 0
  %178 = vmatprep.subr.bf16.mxu0 0
  %179 = vmatpush1.bf16.msra.mxu0 0
  %180 = vmatprep.subr.bf16.mxu0 0
  %181 = vmatpush1.bf16.msra.mxu0 0
  %182 = vmatprep.subr.bf16.mxu0 0
  %183 = vmatpush1.bf16.msra.mxu0 0
  %184 = vmatprep.subr.bf16.mxu0 0
  %185 = vmatpush1.bf16.msra.mxu0 0
  %186 = vmatprep.subr.bf16.mxu0 0
  %187 = vmatpush1.bf16.msra.mxu0 0
  %188 = vmatprep.subr.bf16.mxu0 0
  %189 = vmatpush1.bf16.msra.mxu0 0
  %190 = vmatprep.subr.bf16.mxu0 0
  %191 = vmatpush1.bf16.msra.mxu0 0
  %192 = vmatprep.subr.bf16.mxu0 0
  %193 = vmatpush1.bf16.msra.mxu0 0
  %194 = vmatprep.subr.bf16.mxu0 0
  %195 = vmatpush1.bf16.msra.mxu0 0
  %196 = vmatprep.subr.bf16.mxu0 0
  %197 = vmatpush1.bf16.msra.mxu0 0
  %198 = vmatprep.subr.bf16.mxu0 0
  %199 = vmatpush1.bf16.msra.mxu0 0
  %200 = vmatprep.subr.bf16.mxu0 0
  %201 = vmatpush1.bf16.msra.mxu0 0
  %202 = vmatprep.subr.bf16.mxu0 0
  %203 = vmatpush1.bf16.msra.mxu0 0
  %204 = vmatprep.mubr.bf16.mxu0 0
  %205 = vmatmul.mubr.bf16.gmra.mrb[0].mxu0 %v170
  %v206 = vpop.f32.mrb[0].mxu0
  %v207 = vadd.f32 %v155, %v206
  %v208 = vpop.f32.mrb[0].mxu0
  %v209 = vpop.f32.mrb[0].mxu0
  %v210 = vadd.f32 %v155, %v209
  %v211 = vpop.f32.mrb[0].mxu0
  %212 = vdwg.mxu0
  %v213 = vpack.c.bf16 %v210, %v207
  %v215 = vunpack.c.l.b16 %v213
  %v216 = vunpack.c.h.b16 %v213
  %v217 = vpack.c.b16 %v215, %v215
  %v218 = vpack.c.b16 %v216, %v216
  %vm221 = vcmask 257024
  %222 = vst.msk [vmem:[%s7] sm:$0xf] %vm221, %v217
  %223 = vst.msk [vmem:[%s7 + $0x4] sm:$0xf] %vm221, %v218
  // Predicated region
  $region30: #{mask4former_forward.24} parent=0 // pred_check
    _
  $region31: #{mask4former_forward.24} parent=0 // pred_check_branch
    %225 = sbr.rel (0) target = $region33
  $region32: #{mask4former_forward.24} parent=0 // pred_region
    _
  $region33: #{mask4former_forward.24} parent=0 // pred_fallthru
    _
  // Predicated region
  $region34: #{mask4former_forward.24} parent=0 // pred_check
    _
  $region35: #{mask4former_forward.24} parent=0 // pred_check_branch
    %227 = sbr.rel (0) target = $region37
  $region36: #{mask4former_forward.24} parent=0 // pred_region
    _
  $region37: #{mask4former_forward.24} parent=0 // pred_fallthru
    _

// kernel: mask4former_forward.22
$region0: #{mask4former_forward.22}
  #allocation0 [shape = 'u32[]', space=smem, size = 0x4, offset = 0x4, fixed_abs, tag = 'smem constant byte address 0x4 - core index']
  #allocation1 [shape = 'u32[144,128]{1,0:T(1,128)}', space=vmem, size = 0x12000, scoped, tag = 'internal scratch']
  %s0 = inlined_call_operand.vmem [shape: f32[128,16], index: 0, kind: input, shape index: {}]
  %s1 = inlined_call_operand.vmem [shape: bf16[16,32], index: 1, kind: input, shape index: {}]
  %s2 = inlined_call_operand.vmem [shape: f32[1,32], index: 2, kind: input, shape index: {}]
  %s3 = inlined_call_operand.vmem [shape: bf16[128,32], index: 3, kind: output, shape index: {}]
  %s4 = sld [smem:[#allocation0]]
  $region22: #{mask4former_forward.22} parent=0
    _
  %s6 = ssub.s32 1, %s4
  %s7 = scalar_select 0, %s6, %s4
  // Predicated region
  $region2: #{mask4former_forward.22} parent=0 // pred_check
    _
  $region3: #{mask4former_forward.22} parent=0 // pred_check_branch
    %9 = sbr.rel (0) target = $region5
  $region4: #{mask4former_forward.22} parent=0 // pred_region
    _
  $region5: #{mask4former_forward.22} parent=0 // pred_fallthru
    _
  // Predicated region
  $region6: #{mask4former_forward.22} parent=0 // pred_check
    _
  $region7: #{mask4former_forward.22} parent=0 // pred_check_branch
    %11 = sbr.rel (0) target = $region9
  $region8: #{mask4former_forward.22} parent=0 // pred_region
    _
  $region9: #{mask4former_forward.22} parent=0 // pred_fallthru
    _
  // Predicated region
  $region10: #{mask4former_forward.22} parent=0 // pred_check
    _
  $region11: #{mask4former_forward.22} parent=0 // pred_check_branch
    %13 = sbr.rel (0) target = $region13
  $region12: #{mask4former_forward.22} parent=0 // pred_region
    _
  $region13: #{mask4former_forward.22} parent=0 // pred_fallthru
    _
  %v15 = vld [vmem:[%s0] sm:$0xff]
  %v16 = vld [vmem:[%s0 + $0x8] sm:$0xff]
  %v17 = vld [vmem:[%s0 + $0x10] sm:$0xff]
  %v18 = vld [vmem:[%s0 + $0x18] sm:$0xff]
  %v19 = vld [vmem:[%s0 + $0x20] sm:$0xff]
  %v20 = vld [vmem:[%s0 + $0x28] sm:$0xff]
  %v21 = vld [vmem:[%s0 + $0x30] sm:$0xff]
  %v22 = vld [vmem:[%s0 + $0x38] sm:$0xff]
  %v23 = vld [vmem:[%s0 + $0x40] sm:$0xff]
  %v24 = vld [vmem:[%s0 + $0x48] sm:$0xff]
  %v25 = vld [vmem:[%s0 + $0x50] sm:$0xff]
  %v26 = vld [vmem:[%s0 + $0x58] sm:$0xff]
  %v27 = vld [vmem:[%s0 + $0x60] sm:$0xff]
  %v28 = vld [vmem:[%s0 + $0x68] sm:$0xff]
  %v29 = vld [vmem:[%s0 + $0x70] sm:$0xff]
  %v30 = vld [vmem:[%s0 + $0x78] sm:$0xff]
  %v31 = vld [vmem:[%s1] sm:$0xf]
  %v32 = vld [vmem:[%s1 + $0x4] sm:$0xf]
  %v33 = vld [vmem:[%s2] sm:$0x1]
  %v34 = vpack.c.bf16 %v16, %v15
  %v35 = vpack.c.bf16 %v18, %v17
  %v36 = vpack.c.bf16 %v20, %v19
  %v37 = vpack.c.bf16 %v22, %v21
  %v38 = vpack.c.bf16 %v24, %v23
  %v39 = vpack.c.bf16 %v26, %v25
  %v40 = vpack.c.bf16 %v28, %v27
  %v41 = vpack.c.bf16 %v30, %v29
  %v43 = vlaneseq
  %v44 = vshrl.u32 %v43, 7
  %v45 = vsub.s32 0, %v44
  %v46 = vrot.slane %v33, %v45
  %v50 = vunpack.c.l.b16 %v31
  %v51 = vunpack.c.l.b16 %v32
  %v52 = vpack.c.b16 %v51, %v50
  %vm54 = vcmask 130048
  %v56 = vsel %vm54, %v34, 0
  %v59 = vsel %vm54, %v35, 0
  %v62 = vsel %vm54, %v36, 0
  %v65 = vsel %vm54, %v37, 0
  %v68 = vsel %vm54, %v38, 0
  %v71 = vsel %vm54, %v39, 0
  %v74 = vsel %vm54, %v40, 0
  %v77 = vsel %vm54, %v41, 0
  %79 = vmatprep.subr.bf16.mxu0 0
  %80 = vmatpush1.bf16.msra.mxu0 %v52
  %81 = vmatprep.subr.bf16.mxu0 0
  %82 = vmatpush1.bf16.msra.mxu0 0
  %83 = vmatprep.subr.bf16.mxu0 0
  %84 = vmatpush1.bf16.msra.mxu0 0
  %85 = vmatprep.subr.bf16.mxu0 0
  %86 = vmatpush1.bf16.msra.mxu0 0
  %87 = vmatprep.subr.bf16.mxu0 0
  %88 = vmatpush1.bf16.msra.mxu0 0
  %89 = vmatprep.subr.bf16.mxu0 0
  %90 = vmatpush1.bf16.msra.mxu0 0
  %91 = vmatprep.subr.bf16.mxu0 0
  %92 = vmatpush1.bf16.msra.mxu0 0
  %93 = vmatprep.subr.bf16.mxu0 0
  %94 = vmatpush1.bf16.msra.mxu0 0
  %95 = vmatprep.subr.bf16.mxu0 0
  %96 = vmatpush1.bf16.msra.mxu0 0
  %97 = vmatprep.subr.bf16.mxu0 0
  %98 = vmatpush1.bf16.msra.mxu0 0
  %99 = vmatprep.subr.bf16.mxu0 0
  %100 = vmatpush1.bf16.msra.mxu0 0
  %101 = vmatprep.subr.bf16.mxu0 0
  %102 = vmatpush1.bf16.msra.mxu0 0
  %103 = vmatprep.subr.bf16.mxu0 0
  %104 = vmatpush1.bf16.msra.mxu0 0
  %105 = vmatprep.subr.bf16.mxu0 0
  %106 = vmatpush1.bf16.msra.mxu0 0
  %107 = vmatprep.subr.bf16.mxu0 0
  %108 = vmatpush1.bf16.msra.mxu0 0
  %109 = vmatprep.subr.bf16.mxu0 0
  %110 = vmatpush1.bf16.msra.mxu0 0
  %111 = vmatprep.mubr.bf16.mxu0 0
  %112 = vmatmul.mubr.bf16.gmra.mrb[0].mxu0 %v56
  %v113 = vpop.f32.mrb[0].mxu0
  %v114 = vadd.f32 %v46, %v113
  %v115 = vpop.f32.mrb[0].mxu0
  %v116 = vpop.f32.mrb[0].mxu0
  %v117 = vadd.f32 %v46, %v116
  %v118 = vpop.f32.mrb[0].mxu0
  %119 = vmatprep.mubr.bf16.mxu0 0
  %120 = vmatmul.mubr.bf16.gmra.mrb[0].mxu0 %v59
  %v121 = vpop.f32.mrb[0].mxu0
  %v122 = vadd.f32 %v46, %v121
  %v123 = vpop.f32.mrb[0].mxu0
  %v124 = vpop.f32.mrb[0].mxu0
  %v125 = vadd.f32 %v46, %v124
  %v126 = vpop.f32.mrb[0].mxu0
  %127 = vmatprep.mubr.bf16.mxu0 0
  %128 = vmatmul.mubr.bf16.gmra.mrb[0].mxu0 %v62
  %v129 = vpop.f32.mrb[0].mxu0
  %v130 = vadd.f32 %v46, %v129
  %v131 = vpop.f32.mrb[0].mxu0
  %v132 = vpop.f32.mrb[0].mxu0
  %v133 = vadd.f32 %v46, %v132
  %v134 = vpop.f32.mrb[0].mxu0
  %135 = vmatprep.mubr.bf16.mxu0 0
  %136 = vmatmul.mubr.bf16.gmra.mrb[0].mxu0 %v65
  %v137 = vpop.f32.mrb[0].mxu0
  %v138 = vadd.f32 %v46, %v137
  %v139 = vpop.f32.mrb[0].mxu0
  %v140 = vpop.f32.mrb[0].mxu0
  %v141 = vadd.f32 %v46, %v140
  %v142 = vpop.f32.mrb[0].mxu0
  %143 = vmatprep.mubr.bf16.mxu0 0
  %144 = vmatmul.mubr.bf16.gmra.mrb[0].mxu0 %v68
  %v145 = vpop.f32.mrb[0].mxu0
  %v146 = vadd.f32 %v46, %v145
  %v147 = vpop.f32.mrb[0].mxu0
  %v148 = vpop.f32.mrb[0].mxu0
  %v149 = vadd.f32 %v46, %v148
  %v150 = vpop.f32.mrb[0].mxu0
  %151 = vmatprep.mubr.bf16.mxu0 0
  %152 = vmatmul.mubr.bf16.gmra.mrb[0].mxu0 %v71
  %v153 = vpop.f32.mrb[0].mxu0
  %v154 = vadd.f32 %v46, %v153
  %v155 = vpop.f32.mrb[0].mxu0
  %v156 = vpop.f32.mrb[0].mxu0
  %v157 = vadd.f32 %v46, %v156
  %v158 = vpop.f32.mrb[0].mxu0
  %159 = vmatprep.mubr.bf16.mxu0 0
  %160 = vmatmul.mubr.bf16.gmra.mrb[0].mxu0 %v74
  %v161 = vpop.f32.mrb[0].mxu0
  %v162 = vadd.f32 %v46, %v161
  %v163 = vpop.f32.mrb[0].mxu0
  %v164 = vpop.f32.mrb[0].mxu0
  %v165 = vadd.f32 %v46, %v164
  %v166 = vpop.f32.mrb[0].mxu0
  %167 = vmatprep.mubr.bf16.mxu0 0
  %168 = vmatmul.mubr.bf16.gmra.mrb[0].mxu0 %v77
  %v169 = vpop.f32.mrb[0].mxu0
  %v170 = vadd.f32 %v46, %v169
  %v171 = vpop.f32.mrb[0].mxu0
  %v172 = vpop.f32.mrb[0].mxu0
  %v173 = vadd.f32 %v46, %v172
  %v174 = vpop.f32.mrb[0].mxu0
  %175 = vdwg.mxu0
  %v176 = vpack.c.bf16 %v117, %v114
  %v177 = vpack.c.bf16 %v125, %v122
  %v178 = vpack.c.bf16 %v133, %v130
  %v179 = vpack.c.bf16 %v141, %v138
  %v180 = vpack.c.bf16 %v149, %v146
  %v181 = vpack.c.bf16 %v157, %v154
  %v182 = vpack.c.bf16 %v165, %v162
  %v183 = vpack.c.bf16 %v173, %v170
  %v192 = vunpack.c.l.b16 %v176
  %v193 = vunpack.c.h.b16 %v176
  %v194 = vunpack.c.l.b16 %v177
  %v195 = vunpack.c.h.b16 %v177
  %v196 = vunpack.c.l.b16 %v178
  %v197 = vunpack.c.h.b16 %v178
  %v198 = vunpack.c.l.b16 %v179
  %v199 = vunpack.c.h.b16 %v179
  %v200 = vunpack.c.l.b16 %v180
  %v201 = vunpack.c.h.b16 %v180
  %v202 = vunpack.c.l.b16 %v181
  %v203 = vunpack.c.h.b16 %v181
  %v204 = vunpack.c.l.b16 %v182
  %v205 = vunpack.c.h.b16 %v182
  %v206 = vunpack.c.l.b16 %v183
  %v207 = vunpack.c.h.b16 %v183
  %v208 = vpack.c.b16 %v192, %v192
  %v209 = vpack.c.b16 %v193, %v193
  %v210 = vpack.c.b16 %v194, %v194
  %v211 = vpack.c.b16 %v195, %v195
  %v212 = vpack.c.b16 %v196, %v196
  %v213 = vpack.c.b16 %v197, %v197
  %v214 = vpack.c.b16 %v198, %v198
  %v215 = vpack.c.b16 %v199, %v199
  %v216 = vpack.c.b16 %v200, %v200
  %v217 = vpack.c.b16 %v201, %v201
  %v218 = vpack.c.b16 %v202, %v202
  %v219 = vpack.c.b16 %v203, %v203
  %v220 = vpack.c.b16 %v204, %v204
  %v221 = vpack.c.b16 %v205, %v205
  %v222 = vpack.c.b16 %v206, %v206
  %v223 = vpack.c.b16 %v207, %v207
  %vm240 = vcmask 257024
  %241 = vst.msk [vmem:[%s3] sm:$0xf] %vm240, %v208
  %242 = vst.msk [vmem:[%s3 + $0x4] sm:$0xf] %vm240, %v209
  %243 = vst.msk [vmem:[%s3 + $0x8] sm:$0xf] %vm240, %v210
  %244 = vst.msk [vmem:[%s3 + $0xc] sm:$0xf] %vm240, %v211
  %245 = vst.msk [vmem:[%s3 + $0x10] sm:$0xf] %vm240, %v212
  %246 = vst.msk [vmem:[%s3 + $0x14] sm:$0xf] %vm240, %v213
  %247 = vst.msk [vmem:[%s3 + $0x18] sm:$0xf] %vm240, %v214
  %248 = vst.msk [vmem:[%s3 + $0x1c] sm:$0xf] %vm240, %v215
  %249 = vst.msk [vmem:[%s3 + $0x20] sm:$0xf] %vm240, %v216
  %250 = vst.msk [vmem:[%s3 + $0x24] sm:$0xf] %vm240, %v217
  %251 = vst.msk [vmem:[%s3 + $0x28] sm:$0xf] %vm240, %v218
  %252 = vst.msk [vmem:[%s3 + $0x2c] sm:$0xf] %vm240, %v219
  %253 = vst.msk [vmem:[%s3 + $0x30] sm:$0xf] %vm240, %v220
  %254 = vst.msk [vmem:[%s3 + $0x34] sm:$0xf] %vm240, %v221
  %255 = vst.msk [vmem:[%s3 + $0x38] sm:$0xf] %vm240, %v222
  %256 = vst.msk [vmem:[%s3 + $0x3c] sm:$0xf] %vm240, %v223
  // Predicated region
  $region14: #{mask4former_forward.22} parent=0 // pred_check
    _
  $region15: #{mask4former_forward.22} parent=0 // pred_check_branch
    %258 = sbr.rel (0) target = $region17
  $region16: #{mask4former_forward.22} parent=0 // pred_region
    _
  $region17: #{mask4former_forward.22} parent=0 // pred_fallthru
    _
  // Predicated region
  $region18: #{mask4former_forward.22} parent=0 // pred_check
    _
  $region19: #{mask4former_forward.22} parent=0 // pred_check_branch
    %260 = sbr.rel (0) target = $region21
  $region20: #{mask4former_forward.22} parent=0 // pred_region
    _
  $region21: #{mask4former_forward.22} parent=0 // pred_fallthru
    _

// kernel: mask4former_forward.28
$region0: #{mask4former_forward.28}
  #allocation0 [shape = 'u32[]', space=smem, size = 0x4, offset = 0x4, fixed_abs, tag = 'smem constant byte address 0x4 - core index']
  #allocation1 [shape = 'u32[144,128]{1,0:T(1,128)}', space=vmem, size = 0x12000, scoped, tag = 'internal scratch']
  %s0 = inlined_call_operand.vmem [shape: bf16[2,8,32], index: 0, kind: input, shape index: {}]
  %s1 = inlined_call_operand.vmem [shape: bf16[2,16,32], index: 1, kind: input, shape index: {}]
  %s2 = inlined_call_operand.vmem [shape: f32[2,8,16], index: 2, kind: output, shape index: {}]
  %s3 = sld [smem:[#allocation0]]
  $region41: #{mask4former_forward.28} parent=0
    _
  %s5 = ssub.s32 1, %s3
  %s6 = scalar_select 0, %s5, %s3
  loop: start=0, step=1, limit=4
  $region2: #{mask4former_forward.28} parent=0 // loop_pre_header
    _
  $region3: #{mask4former_forward.28} parent=0 // loop_header
    %s8 = sphi 0, %s12
    %p9 = scmp.ge.s32.totalorder %s8, 4
    %s15 = sphi 0, %s27
    %s16 = sphi 0, %s23
    %s17 = sphi 0, %s15
    %s18 = sphi 0, %s16
    %s19 = sphi 0, %s17
    %s20 = sphi 0, %s18
    %s30 = sphi 0, %s32
    %s33 = sphi 0, %s30
    %s34 = sphi 0, %s33
    %s50 = sphi 0, %s34
    %s58 = sphi 0, %s60
    %s61 = sphi 0, %s58
    %s62 = sphi 0, %s61
    %s78 = sphi 0, %s62
    %s86 = sphi 0, %s88
    %s89 = sphi 0, %s86
    %s90 = sphi 0, %s89
    %s106 = sphi 0, %s90
  $region4: #{mask4former_forward.28} parent=0 // loop_header_branch
    %11 = sbr.rel (%p9) target = $region8
  $region5: #{mask4former_forward.28} parent=0 // loop_body
    %s13 = ssub.s32 %s8, 1
    %s14 = ssub.s32 %s8, 2
    %s21 = sadd.s32 1, %s16
    %p22 = scmp.ge.s32.totalorder %s21, 1
    %s23 = scalar_select %p22, 0, %s21
    %s24 = sadd.s32 1, %s15
    %s25 = scalar_select %p22, %s24, %s15
    %p26 = scmp.ge.s32.totalorder %s25, 2
    %s27 = scalar_select %p26, 0, %s25
    %s28 = ssub.s32 %s15, %s27
    %p29 = scmp.eq.s32.totalorder %s28, 0
    %s31 = sadd.s32 %s30, 1
    %s32 = scalar_select %p29, %s30, %s31
    %p35 = pneg %p29
    %p36 = scmp.eq.s32.totalorder %s8, 1
    %p37 = por %p35, %p36
    %p38 = scmp.ne.s32.totalorder %s30, %s33
    %p39 = scmp.eq.s32.totalorder %s8, 0
    %p40 = por %p38, %p39
    %p41 = scmp.ne.s32.totalorder %s30, %s33
    %p42 = scmp.eq.s32.totalorder %s13, 1
    %p43 = por %p41, %p42
    %p44 = scmp.ne.s32.totalorder %s33, %s34
    %p45 = scmp.eq.s32.totalorder %s13, 0
    %p46 = por %p44, %p45
    %p47 = scmp.ne.s32.totalorder %s33, %s34
    %p48 = scmp.eq.s32.totalorder %s14, 1
    %p49 = por %p47, %p48
    %p51 = scmp.ne.s32.totalorder %s34, %s50
    %p52 = scmp.eq.s32.totalorder %s14, 0
    %p53 = por %p51, %p52
    %s54 = ssub.s32 %s15, %s27
    %s55 = ssub.s32 %s16, %s23
    %s56 = sor.u32 %s54, %s55
    %p57 = scmp.eq.s32.totalorder %s56, 0
    %s59 = sadd.s32 %s58, 1
    %s60 = scalar_select %p57, %s58, %s59
    %p63 = pneg %p57
    %p64 = scmp.eq.s32.totalorder %s8, 1
    %p65 = por %p63, %p64
    %p66 = scmp.ne.s32.totalorder %s58, %s61
    %p67 = scmp.eq.s32.totalorder %s8, 0
    %p68 = por %p66, %p67
    %p69 = scmp.ne.s32.totalorder %s58, %s61
    %p70 = scmp.eq.s32.totalorder %s13, 1
    %p71 = por %p69, %p70
    %p72 = scmp.ne.s32.totalorder %s61, %s62
    %p73 = scmp.eq.s32.totalorder %s13, 0
    %p74 = por %p72, %p73
    %p75 = scmp.ne.s32.totalorder %s61, %s62
    %p76 = scmp.eq.s32.totalorder %s14, 1
    %p77 = por %p75, %p76
    %p79 = scmp.ne.s32.totalorder %s62, %s78
    %p80 = scmp.eq.s32.totalorder %s14, 0
    %p81 = por %p79, %p80
    %s82 = ssub.s32 %s15, %s27
    %s83 = ssub.s32 %s16, %s23
    %s84 = sor.u32 %s82, %s83
    %p85 = scmp.eq.s32.totalorder %s84, 0
    %s87 = sadd.s32 %s86, 1
    %s88 = scalar_select %p85, %s86, %s87
    %p91 = pneg %p85
    %p92 = scmp.eq.s32.totalorder %s8, 1
    %p93 = por %p91, %p92
    %p94 = scmp.ne.s32.totalorder %s86, %s89
    %p95 = scmp.eq.s32.totalorder %s8, 0
    %p96 = por %p94, %p95
    %p97 = scmp.ne.s32.totalorder %s86, %s89
    %p98 = scmp.eq.s32.totalorder %s13, 1
    %p99 = por %p97, %p98
    %p100 = scmp.ne.s32.totalorder %s89, %s90
    %p101 = scmp.eq.s32.totalorder %s13, 0
    %p102 = por %p100, %p101
    %p103 = scmp.ne.s32.totalorder %s89, %s90
    %p104 = scmp.eq.s32.totalorder %s14, 1
    %p105 = por %p103, %p104
    %p107 = scmp.ne.s32.totalorder %s90, %s106
    %p108 = scmp.eq.s32.totalorder %s14, 0
    %p109 = por %p107, %p108
    %p110 = scmp.le.s32.totalorder 1, %s8
    %p111 = scmp.lt.s32.totalorder %s8, 3
    %p112 = pnand %p110, %p111
    %p113 = pneg %p112
    // Predicated region
    $region9: #{mask4former_forward.28} parent=5 // pred_check
      _
    $region10: #{mask4former_forward.28} parent=5 // pred_check_branch
      %115 = sbr.rel (%p112) target = $region12
    $region11: #{mask4former_forward.28} parent=5 // pred_region
      %s116 = ssub.s32 %s8, 1
    $region12: #{mask4former_forward.28} parent=5 // pred_fallthru
      _
    %p117 = scmp.lt.s32.totalorder %s8, 2
    // Predicated region
    $region13: #{mask4former_forward.28} parent=5 // pred_check
      %p118 = pneg %p117
    $region14: #{mask4former_forward.28} parent=5 // pred_check_branch
      %120 = sbr.rel (%p118) target = $region16
    $region15: #{mask4former_forward.28} parent=5 // pred_region
      // Predicated region
      $region17: #{mask4former_forward.28} parent=15 // pred_check
        %p121 = pneg %p40
      $region18: #{mask4former_forward.28} parent=15 // pred_check_branch
        %123 = sbr.rel (%p121) target = $region20
      $region19: #{mask4former_forward.28} parent=15 // pred_region
        %p124 = scmp.lt.s32.totalorder %s15, 1
        %s125 = scalar_select %p124, %s15, 1
        %s126 = smul.addr %s125, 4
        %s127 = scalar_lea.vmem %s0, %s126
      $region20: #{mask4former_forward.28} parent=15 // pred_fallthru
        _
      // Predicated region
      $region21: #{mask4former_forward.28} parent=15 // pred_check
        %p128 = pneg %p68
      $region22: #{mask4former_forward.28} parent=15 // pred_check_branch
        %130 = sbr.rel (%p128) target = $region24
      $region23: #{mask4former_forward.28} parent=15 // pred_region
        %s131 = smul.u32 2, %s16
        %p132 = scmp.lt.s32.totalorder %s15, 1
        %s133 = scalar_select %p132, %s15, 1
        %p134 = scmp.lt.s32.totalorder %s131, 1
        %s135 = scalar_select %p134, %s131, 1
        %s136 = smul.addr %s133, 2
        %s137 = sadd.s32 %s135, %s136
        %s138 = smul.addr %s137, 4
        %s139 = scalar_lea.vmem %s1, %s138
        %s140 = smul.u32 2, %s16
      $region24: #{mask4former_forward.28} parent=15 // pred_fallthru
        _
    $region16: #{mask4former_forward.28} parent=5 // pred_fallthru
      _
    %p141 = scmp.le.s32.totalorder 1, %s8
    %p142 = scmp.lt.s32.totalorder %s8, 3
    %p143 = pnand %p141, %p142
    %p144 = pneg %p143
    // Predicated region
    $region25: #{mask4former_forward.28} parent=5 // pred_check
      _
    $region26: #{mask4former_forward.28} parent=5 // pred_check_branch
      %146 = sbr.rel (%p143) target = $region28
    $region27: #{mask4former_forward.28} parent=5 // pred_region
      %s147 = ssub.s32 %s8, 1
      %p148 = scmp.lt.s32.totalorder %s17, 1
      %s149 = scalar_select %p148, %s17, 1
      %s150 = smul.addr %s149, 4
      %s151 = scalar_lea.vmem %s0, %s150
      %p152 = pneg %p46
      %p153 = pneg %p43
      %s154 = smul.u32 2, %s18
      %p155 = scmp.lt.s32.totalorder %s17, 1
      %s156 = scalar_select %p155, %s17, 1
      %p157 = scmp.lt.s32.totalorder %s154, 1
      %s158 = scalar_select %p157, %s154, 1
      %s159 = smul.addr %s156, 2
      %s160 = sadd.s32 %s158, %s159
      %s161 = smul.addr %s160, 4
      %s162 = scalar_lea.vmem %s1, %s161
      %p163 = pneg %p74
      %p164 = pneg %p71
      %p165 = pneg %p102
      %p166 = pneg %p99
      %p167 = scmp.lt.s32.totalorder %s17, 1
      %s168 = scalar_select %p167, %s17, 1
      %p169 = scmp.lt.s32.totalorder %s18, 0
      %s170 = scalar_select %p169, %s18, 0
      %s171 = sadd.s32 %s170, %s168
      %s172 = smul.addr %s171, 8
      %s173 = scalar_lea.vmem %s2, %s172
      %p174 = scmp.lt.s32.totalorder %s17, 1
      %s175 = scalar_select %p174, %s17, 1
      %s176 = smul.addr %s175, 4
      %s177 = scalar_lea.vmem %s0, %s176
      %s178 = smul.u32 2, %s18
      %p179 = scmp.lt.s32.totalorder %s17, 1
      %s180 = scalar_select %p179, %s17, 1
      %p181 = scmp.lt.s32.totalorder %s178, 1
      %s182 = scalar_select %p181, %s178, 1
      %s183 = smul.addr %s180, 2
      %s184 = sadd.s32 %s182, %s183
      %s185 = smul.addr %s184, 4
      %s186 = scalar_lea.vmem %s1, %s185
      %s187 = smul.u32 2, %s18
      %p188 = scmp.lt.s32.totalorder %s17, 1
      %s189 = scalar_select %p188, %s17, 1
      %p190 = scmp.lt.s32.totalorder %s18, 0
      %s191 = scalar_select %p190, %s18, 0
      %s192 = sadd.s32 %s191, %s189
      %s193 = smul.addr %s192, 8
      %s194 = scalar_lea.vmem %s2, %s193
      %v196 = vld [vmem:[%s177] sm:$0xf]
      %v197 = vld [vmem:[%s186] sm:$0xf]
      %v198 = vld [vmem:[%s186 + $0x4] sm:$0xf]
      %v201 = vunpack.c.l.b16 %v197
      %v202 = vunpack.c.l.b16 %v198
      %v203 = vpack.c.b16 %v202, %v201
      %vm204 = vcmask 261120
      %v206 = vsel %vm204, %v196, 0
      %v209 = vsel %vm204, %v203, 0
      %211 = vmatprep.subr.bf16.mxu0 0
      %212 = vmatpush1.bf16.xpose.msra.mxu0 %v209
      %213 = vmatprep.subr.bf16.mxu0 0
      %214 = vmatpush1.bf16.xpose.msra.mxu0 0
      %215 = vmatprep.subr.bf16.mxu0 0
      %216 = vmatpush1.bf16.xpose.msra.mxu0 0
      %217 = vmatprep.subr.bf16.mxu0 0
      %218 = vmatpush1.bf16.xpose.msra.mxu0 0
      %219 = vmatprep.subr.bf16.mxu0 0
      %220 = vmatpush1.bf16.xpose.msra.mxu0 0
      %221 = vmatprep.subr.bf16.mxu0 0
      %222 = vmatpush1.bf16.xpose.msra.mxu0 0
      %223 = vmatprep.subr.bf16.mxu0 0
      %224 = vmatpush1.bf16.xpose.msra.mxu0 0
      %225 = vmatprep.subr.bf16.mxu0 0
      %226 = vmatpush1.bf16.xpose.msra.mxu0 0
      %227 = vmatprep.subr.bf16.mxu0 0
      %228 = vmatpush1.bf16.xpose.msra.mxu0 0
      %229 = vmatprep.subr.bf16.mxu0 0
      %230 = vmatpush1.bf16.xpose.msra.mxu0 0
      %231 = vmatprep.subr.bf16.mxu0 0
      %232 = vmatpush1.bf16.xpose.msra.mxu0 0
      %233 = vmatprep.subr.bf16.mxu0 0
      %234 = vmatpush1.bf16.xpose.msra.mxu0 0
      %235 = vmatprep.subr.bf16.mxu0 0
      %236 = vmatpush1.bf16.xpose.msra.mxu0 0
      %237 = vmatprep.subr.bf16.mxu0 0
      %238 = vmatpush1.bf16.xpose.msra.mxu0 0
      %239 = vmatprep.subr.bf16.mxu0 0
      %240 = vmatpush1.bf16.xpose.msra.mxu0 0
      %241 = vmatprep.subr.bf16.mxu0 0
      %242 = vmatpush1.bf16.xpose.msra.mxu0 0
      %243 = vmatprep.mubr.bf16.mxu0 0
      %244 = vmatmul.mubr.bf16.gmra.mrb[0].mxu0 %v206
      %v245 = vpop.f32.mrb[0].mxu0
      %v246 = vadd.f32 0.0, %v245
      %v247 = vpop.f32.mrb[0].mxu0
      %v248 = vpop.f32.mrb[0].mxu0
      %v249 = vpop.f32.mrb[0].mxu0
      %250 = vdwg.mxu0
      %vm251 = vcmask 130048
      %252 = vst.msk [vmem:[%s194] sm:$0xff] %vm251, %v246
      %p253 = scmp.lt.s32.totalorder %s17, 1
      %s254 = scalar_select %p253, %s17, 1
      %p255 = scmp.lt.s32.totalorder %s18, 0
      %s256 = scalar_select %p255, %s18, 0
      %s257 = sadd.s32 %s256, %s254
      %s258 = smul.addr %s257, 8
      %s259 = scalar_lea.vmem %s2, %s258
      // Predicated region
      $region29: #{mask4former_forward.28} parent=27 // pred_check
        %p260 = pneg %p99
      $region30: #{mask4former_forward.28} parent=27 // pred_check_branch
        %262 = sbr.rel (%p260) target = $region32
      $region31: #{mask4former_forward.28} parent=27 // pred_region
        _
      $region32: #{mask4former_forward.28} parent=27 // pred_fallthru
        _
    $region28: #{mask4former_forward.28} parent=5 // pred_fallthru
      _
    %p263 = scmp.le.s32.totalorder 2, %s8
    // Predicated region
    $region33: #{mask4former_forward.28} parent=5 // pred_check
      %p264 = pneg %p263
    $region34: #{mask4former_forward.28} parent=5 // pred_check_branch
      %266 = sbr.rel (%p264) target = $region36
    $region35: #{mask4former_forward.28} parent=5 // pred_region
      %s267 = ssub.s32 %s8, 2
      // Predicated region
      $region37: #{mask4former_forward.28} parent=35 // pred_check
        %p268 = pneg %p105
      $region38: #{mask4former_forward.28} parent=35 // pred_check_branch
        %270 = sbr.rel (%p268) target = $region40
      $region39: #{mask4former_forward.28} parent=35 // pred_region
        %p271 = scmp.lt.s32.totalorder %s19, 1
        %s272 = scalar_select %p271, %s19, 1
        %p273 = scmp.lt.s32.totalorder %s20, 0
        %s274 = scalar_select %p273, %s20, 0
        %s275 = sadd.s32 %s274, %s272
        %s276 = smul.addr %s275, 8
        %s277 = scalar_lea.vmem %s2, %s276
      $region40: #{mask4former_forward.28} parent=35 // pred_fallthru
        _
    $region36: #{mask4former_forward.28} parent=5 // pred_fallthru
      _
  $region6: #{mask4former_forward.28} parent=0 // loop_footer
    %s12 = sadd.s32 1, %s8
  $region7: #{mask4former_forward.28} parent=0 // loop_footer_branch
    %7 = sbr.rel target = $region3
  $region8: #{mask4former_forward.28} parent=0 // loop_exit
    _

// kernel: mask4former_forward.36
$region0: #{mask4former_forward.36}
  #allocation0 [shape = 'u32[]', space=smem, size = 0x4, offset = 0x4, fixed_abs, tag = 'smem constant byte address 0x4 - core index']
  #allocation1 [shape = 'u32[144,128]{1,0:T(1,128)}', space=vmem, size = 0x12000, scoped, tag = 'internal scratch']
  %s0 = inlined_call_operand.vmem [shape: bf16[2,8,32], index: 0, kind: input, shape index: {}]
  %s1 = inlined_call_operand.vmem [shape: bf16[2,32,32], index: 1, kind: input, shape index: {}]
  %s2 = inlined_call_operand.vmem [shape: f32[2,8,32], index: 2, kind: output, shape index: {}]
  %s3 = sld [smem:[#allocation0]]
  $region41: #{mask4former_forward.36} parent=0
    _
  %s5 = ssub.s32 1, %s3
  %s6 = scalar_select 0, %s5, %s3
  loop: start=0, step=1, limit=4
  $region2: #{mask4former_forward.36} parent=0 // loop_pre_header
    _
  $region3: #{mask4former_forward.36} parent=0 // loop_header
    %s8 = sphi 0, %s12
    %p9 = scmp.ge.s32.totalorder %s8, 4
    %s15 = sphi 0, %s27
    %s16 = sphi 0, %s23
    %s17 = sphi 0, %s15
    %s18 = sphi 0, %s16
    %s19 = sphi 0, %s17
    %s20 = sphi 0, %s18
    %s30 = sphi 0, %s32
    %s33 = sphi 0, %s30
    %s34 = sphi 0, %s33
    %s50 = sphi 0, %s34
    %s58 = sphi 0, %s60
    %s61 = sphi 0, %s58
    %s62 = sphi 0, %s61
    %s78 = sphi 0, %s62
    %s86 = sphi 0, %s88
    %s89 = sphi 0, %s86
    %s90 = sphi 0, %s89
    %s106 = sphi 0, %s90
  $region4: #{mask4former_forward.36} parent=0 // loop_header_branch
    %11 = sbr.rel (%p9) target = $region8
  $region5: #{mask4former_forward.36} parent=0 // loop_body
    %s13 = ssub.s32 %s8, 1
    %s14 = ssub.s32 %s8, 2
    %s21 = sadd.s32 1, %s16
    %p22 = scmp.ge.s32.totalorder %s21, 1
    %s23 = scalar_select %p22, 0, %s21
    %s24 = sadd.s32 1, %s15
    %s25 = scalar_select %p22, %s24, %s15
    %p26 = scmp.ge.s32.totalorder %s25, 2
    %s27 = scalar_select %p26, 0, %s25
    %s28 = ssub.s32 %s15, %s27
    %p29 = scmp.eq.s32.totalorder %s28, 0
    %s31 = sadd.s32 %s30, 1
    %s32 = scalar_select %p29, %s30, %s31
    %p35 = pneg %p29
    %p36 = scmp.eq.s32.totalorder %s8, 1
    %p37 = por %p35, %p36
    %p38 = scmp.ne.s32.totalorder %s30, %s33
    %p39 = scmp.eq.s32.totalorder %s8, 0
    %p40 = por %p38, %p39
    %p41 = scmp.ne.s32.totalorder %s30, %s33
    %p42 = scmp.eq.s32.totalorder %s13, 1
    %p43 = por %p41, %p42
    %p44 = scmp.ne.s32.totalorder %s33, %s34
    %p45 = scmp.eq.s32.totalorder %s13, 0
    %p46 = por %p44, %p45
    %p47 = scmp.ne.s32.totalorder %s33, %s34
    %p48 = scmp.eq.s32.totalorder %s14, 1
    %p49 = por %p47, %p48
    %p51 = scmp.ne.s32.totalorder %s34, %s50
    %p52 = scmp.eq.s32.totalorder %s14, 0
    %p53 = por %p51, %p52
    %s54 = ssub.s32 %s15, %s27
    %s55 = ssub.s32 %s16, %s23
    %s56 = sor.u32 %s54, %s55
    %p57 = scmp.eq.s32.totalorder %s56, 0
    %s59 = sadd.s32 %s58, 1
    %s60 = scalar_select %p57, %s58, %s59
    %p63 = pneg %p57
    %p64 = scmp.eq.s32.totalorder %s8, 1
    %p65 = por %p63, %p64
    %p66 = scmp.ne.s32.totalorder %s58, %s61
    %p67 = scmp.eq.s32.totalorder %s8, 0
    %p68 = por %p66, %p67
    %p69 = scmp.ne.s32.totalorder %s58, %s61
    %p70 = scmp.eq.s32.totalorder %s13, 1
    %p71 = por %p69, %p70
    %p72 = scmp.ne.s32.totalorder %s61, %s62
    %p73 = scmp.eq.s32.totalorder %s13, 0
    %p74 = por %p72, %p73
    %p75 = scmp.ne.s32.totalorder %s61, %s62
    %p76 = scmp.eq.s32.totalorder %s14, 1
    %p77 = por %p75, %p76
    %p79 = scmp.ne.s32.totalorder %s62, %s78
    %p80 = scmp.eq.s32.totalorder %s14, 0
    %p81 = por %p79, %p80
    %s82 = ssub.s32 %s15, %s27
    %s83 = ssub.s32 %s16, %s23
    %s84 = sor.u32 %s82, %s83
    %p85 = scmp.eq.s32.totalorder %s84, 0
    %s87 = sadd.s32 %s86, 1
    %s88 = scalar_select %p85, %s86, %s87
    %p91 = pneg %p85
    %p92 = scmp.eq.s32.totalorder %s8, 1
    %p93 = por %p91, %p92
    %p94 = scmp.ne.s32.totalorder %s86, %s89
    %p95 = scmp.eq.s32.totalorder %s8, 0
    %p96 = por %p94, %p95
    %p97 = scmp.ne.s32.totalorder %s86, %s89
    %p98 = scmp.eq.s32.totalorder %s13, 1
    %p99 = por %p97, %p98
    %p100 = scmp.ne.s32.totalorder %s89, %s90
    %p101 = scmp.eq.s32.totalorder %s13, 0
    %p102 = por %p100, %p101
    %p103 = scmp.ne.s32.totalorder %s89, %s90
    %p104 = scmp.eq.s32.totalorder %s14, 1
    %p105 = por %p103, %p104
    %p107 = scmp.ne.s32.totalorder %s90, %s106
    %p108 = scmp.eq.s32.totalorder %s14, 0
    %p109 = por %p107, %p108
    %p110 = scmp.le.s32.totalorder 1, %s8
    %p111 = scmp.lt.s32.totalorder %s8, 3
    %p112 = pnand %p110, %p111
    %p113 = pneg %p112
    // Predicated region
    $region9: #{mask4former_forward.36} parent=5 // pred_check
      _
    $region10: #{mask4former_forward.36} parent=5 // pred_check_branch
      %115 = sbr.rel (%p112) target = $region12
    $region11: #{mask4former_forward.36} parent=5 // pred_region
      %s116 = ssub.s32 %s8, 1
    $region12: #{mask4former_forward.36} parent=5 // pred_fallthru
      _
    %p117 = scmp.lt.s32.totalorder %s8, 2
    // Predicated region
    $region13: #{mask4former_forward.36} parent=5 // pred_check
      %p118 = pneg %p117
    $region14: #{mask4former_forward.36} parent=5 // pred_check_branch
      %120 = sbr.rel (%p118) target = $region16
    $region15: #{mask4former_forward.36} parent=5 // pred_region
      // Predicated region
      $region17: #{mask4former_forward.36} parent=15 // pred_check
        %p121 = pneg %p40
      $region18: #{mask4former_forward.36} parent=15 // pred_check_branch
        %123 = sbr.rel (%p121) target = $region20
      $region19: #{mask4former_forward.36} parent=15 // pred_region
        %p124 = scmp.lt.s32.totalorder %s15, 1
        %s125 = scalar_select %p124, %s15, 1
        %s126 = smul.addr %s125, 4
        %s127 = scalar_lea.vmem %s0, %s126
      $region20: #{mask4former_forward.36} parent=15 // pred_fallthru
        _
      // Predicated region
      $region21: #{mask4former_forward.36} parent=15 // pred_check
        %p128 = pneg %p68
      $region22: #{mask4former_forward.36} parent=15 // pred_check_branch
        %130 = sbr.rel (%p128) target = $region24
      $region23: #{mask4former_forward.36} parent=15 // pred_region
        %s131 = smul.u32 4, %s16
        %p132 = scmp.lt.s32.totalorder %s15, 1
        %s133 = scalar_select %p132, %s15, 1
        %p134 = scmp.lt.s32.totalorder %s131, 3
        %s135 = scalar_select %p134, %s131, 3
        %s136 = smul.addr %s133, 4
        %s137 = sadd.s32 %s135, %s136
        %s138 = smul.addr %s137, 4
        %s139 = scalar_lea.vmem %s1, %s138
        %s140 = smul.u32 4, %s16
      $region24: #{mask4former_forward.36} parent=15 // pred_fallthru
        _
    $region16: #{mask4former_forward.36} parent=5 // pred_fallthru
      _
    %p141 = scmp.le.s32.totalorder 1, %s8
    %p142 = scmp.lt.s32.totalorder %s8, 3
    %p143 = pnand %p141, %p142
    %p144 = pneg %p143
    // Predicated region
    $region25: #{mask4former_forward.36} parent=5 // pred_check
      _
    $region26: #{mask4former_forward.36} parent=5 // pred_check_branch
      %146 = sbr.rel (%p143) target = $region28
    $region27: #{mask4former_forward.36} parent=5 // pred_region
      %s147 = ssub.s32 %s8, 1
      %p148 = scmp.lt.s32.totalorder %s17, 1
      %s149 = scalar_select %p148, %s17, 1
      %s150 = smul.addr %s149, 4
      %s151 = scalar_lea.vmem %s0, %s150
      %p152 = pneg %p46
      %p153 = pneg %p43
      %s154 = smul.u32 4, %s18
      %p155 = scmp.lt.s32.totalorder %s17, 1
      %s156 = scalar_select %p155, %s17, 1
      %p157 = scmp.lt.s32.totalorder %s154, 3
      %s158 = scalar_select %p157, %s154, 3
      %s159 = smul.addr %s156, 4
      %s160 = sadd.s32 %s158, %s159
      %s161 = smul.addr %s160, 4
      %s162 = scalar_lea.vmem %s1, %s161
      %p163 = pneg %p74
      %p164 = pneg %p71
      %p165 = pneg %p102
      %p166 = pneg %p99
      %p167 = scmp.lt.s32.totalorder %s17, 1
      %s168 = scalar_select %p167, %s17, 1
      %p169 = scmp.lt.s32.totalorder %s18, 0
      %s170 = scalar_select %p169, %s18, 0
      %s171 = sadd.s32 %s170, %s168
      %s172 = smul.addr %s171, 8
      %s173 = scalar_lea.vmem %s2, %s172
      %p174 = scmp.lt.s32.totalorder %s17, 1
      %s175 = scalar_select %p174, %s17, 1
      %s176 = smul.addr %s175, 4
      %s177 = scalar_lea.vmem %s0, %s176
      %s178 = smul.u32 4, %s18
      %p179 = scmp.lt.s32.totalorder %s17, 1
      %s180 = scalar_select %p179, %s17, 1
      %p181 = scmp.lt.s32.totalorder %s178, 3
      %s182 = scalar_select %p181, %s178, 3
      %s183 = smul.addr %s180, 4
      %s184 = sadd.s32 %s182, %s183
      %s185 = smul.addr %s184, 4
      %s186 = scalar_lea.vmem %s1, %s185
      %s187 = smul.u32 4, %s18
      %p188 = scmp.lt.s32.totalorder %s17, 1
      %s189 = scalar_select %p188, %s17, 1
      %p190 = scmp.lt.s32.totalorder %s18, 0
      %s191 = scalar_select %p190, %s18, 0
      %s192 = sadd.s32 %s191, %s189
      %s193 = smul.addr %s192, 8
      %s194 = scalar_lea.vmem %s2, %s193
      %v196 = vld [vmem:[%s177] sm:$0xf]
      %v197 = vld [vmem:[%s186] sm:$0xf]
      %v198 = vld [vmem:[%s186 + $0x4] sm:$0xf]
      %v199 = vld [vmem:[%s186 + $0x8] sm:$0xf]
      %v200 = vld [vmem:[%s186 + $0xc] sm:$0xf]
      %v205 = vunpack.c.l.b16 %v197
      %v206 = vunpack.c.l.b16 %v198
      %v207 = vunpack.c.l.b16 %v199
      %v208 = vunpack.c.l.b16 %v200
      %v209 = vpack.c.b16 %v206, %v205
      %v210 = vpack.c.b16 %v208, %v207
      %vm211 = vcmask 261120
      %v213 = vsel %vm211, %v196, 0
      %v216 = vsel %vm211, %v209, 0
      %v219 = vsel %vm211, %v210, 0
      %221 = vmatprep.subr.bf16.mxu0 0
      %222 = vmatpush1.bf16.xpose.msra.mxu0 %v216
      %223 = vmatprep.subr.bf16.mxu0 0
      %224 = vmatpush1.bf16.xpose.msra.mxu0 %v219
      %225 = vmatprep.subr.bf16.mxu0 0
      %226 = vmatpush1.bf16.xpose.msra.mxu0 0
      %227 = vmatprep.subr.bf16.mxu0 0
      %228 = vmatpush1.bf16.xpose.msra.mxu0 0
      %229 = vmatprep.subr.bf16.mxu0 0
      %230 = vmatpush1.bf16.xpose.msra.mxu0 0
      %231 = vmatprep.subr.bf16.mxu0 0
      %232 = vmatpush1.bf16.xpose.msra.mxu0 0
      %233 = vmatprep.subr.bf16.mxu0 0
      %234 = vmatpush1.bf16.xpose.msra.mxu0 0
      %235 = vmatprep.subr.bf16.mxu0 0
      %236 = vmatpush1.bf16.xpose.msra.mxu0 0
      %237 = vmatprep.subr.bf16.mxu0 0
      %238 = vmatpush1.bf16.xpose.msra.mxu0 0
      %239 = vmatprep.subr.bf16.mxu0 0
      %240 = vmatpush1.bf16.xpose.msra.mxu0 0
      %241 = vmatprep.subr.bf16.mxu0 0
      %242 = vmatpush1.bf16.xpose.msra.mxu0 0
      %243 = vmatprep.subr.bf16.mxu0 0
      %244 = vmatpush1.bf16.xpose.msra.mxu0 0
      %245 = vmatprep.subr.bf16.mxu0 0
      %246 = vmatpush1.bf16.xpose.msra.mxu0 0
      %247 = vmatprep.subr.bf16.mxu0 0
      %248 = vmatpush1.bf16.xpose.msra.mxu0 0
      %249 = vmatprep.subr.bf16.mxu0 0
      %250 = vmatpush1.bf16.xpose.msra.mxu0 0
      %251 = vmatprep.subr.bf16.mxu0 0
      %252 = vmatpush1.bf16.xpose.msra.mxu0 0
      %253 = vmatprep.mubr.bf16.mxu0 0
      %254 = vmatmul.mubr.bf16.gmra.mrb[0].mxu0 %v213
      %v255 = vpop.f32.mrb[0].mxu0
      %v256 = vadd.f32 0.0, %v255
      %v257 = vpop.f32.mrb[0].mxu0
      %v258 = vpop.f32.mrb[0].mxu0
      %v259 = vpop.f32.mrb[0].mxu0
      %260 = vdwg.mxu0
      %261 = vst.msk [vmem:[%s194] sm:$0xff] %vm211, %v256
      %p262 = scmp.lt.s32.totalorder %s17, 1
      %s263 = scalar_select %p262, %s17, 1
      %p264 = scmp.lt.s32.totalorder %s18, 0
      %s265 = scalar_select %p264, %s18, 0
      %s266 = sadd.s32 %s265, %s263
      %s267 = smul.addr %s266, 8
      %s268 = scalar_lea.vmem %s2, %s267
      // Predicated region
      $region29: #{mask4former_forward.36} parent=27 // pred_check
        %p269 = pneg %p99
      $region30: #{mask4former_forward.36} parent=27 // pred_check_branch
        %271 = sbr.rel (%p269) target = $region32
      $region31: #{mask4former_forward.36} parent=27 // pred_region
        _
      $region32: #{mask4former_forward.36} parent=27 // pred_fallthru
        _
    $region28: #{mask4former_forward.36} parent=5 // pred_fallthru
      _
    %p272 = scmp.le.s32.totalorder 2, %s8
    // Predicated region
    $region33: #{mask4former_forward.36} parent=5 // pred_check
      %p273 = pneg %p272
    $region34: #{mask4former_forward.36} parent=5 // pred_check_branch
      %275 = sbr.rel (%p273) target = $region36
    $region35: #{mask4former_forward.36} parent=5 // pred_region
      %s276 = ssub.s32 %s8, 2
      // Predicated region
      $region37: #{mask4former_forward.36} parent=35 // pred_check
        %p277 = pneg %p105
      $region38: #{mask4former_forward.36} parent=35 // pred_check_branch
        %279 = sbr.rel (%p277) target = $region40
      $region39: #{mask4former_forward.36} parent=35 // pred_region
        %p280 = scmp.lt.s32.totalorder %s19, 1
        %s281 = scalar_select %p280, %s19, 1
        %p282 = scmp.lt.s32.totalorder %s20, 0
        %s283 = scalar_select %p282, %s20, 0
        %s284 = sadd.s32 %s283, %s281
        %s285 = smul.addr %s284, 8
        %s286 = scalar_lea.vmem %s2, %s285
      $region40: #{mask4former_forward.36} parent=35 // pred_fallthru
        _
    $region36: #{mask4former_forward.36} parent=5 // pred_fallthru
      _
  $region6: #{mask4former_forward.36} parent=0 // loop_footer
    %s12 = sadd.s32 1, %s8
  $region7: #{mask4former_forward.36} parent=0 // loop_footer_branch
    %7 = sbr.rel target = $region3
  $region8: #{mask4former_forward.36} parent=0 // loop_exit
    _

// kernel: mask4former_forward.31
$region0: #{mask4former_forward.31}
  #allocation0 [shape = 'u32[]', space=smem, size = 0x4, offset = 0x4, fixed_abs, tag = 'smem constant byte address 0x4 - core index']
  #allocation1 [shape = 'u32[144,128]{1,0:T(1,128)}', space=vmem, size = 0x12000, scoped, tag = 'internal scratch']
  %s0 = inlined_call_operand.vmem [shape: bf16[2,8,32], index: 0, kind: input, shape index: {}]
  %s1 = inlined_call_operand.vmem [shape: f32[2,8,32], index: 1, kind: input, shape index: {}]
  %s2 = inlined_call_operand.vmem [shape: f32[2,8,32], index: 2, kind: input, shape index: {}]
  %s3 = inlined_call_operand.vmem [shape: bf16[32,32], index: 3, kind: input, shape index: {}]
  %s4 = inlined_call_operand.vmem [shape: f32[1,32], index: 4, kind: input, shape index: {}]
  %s5 = inlined_call_operand.vmem [shape: f32[1,32], index: 5, kind: input, shape index: {}]
  %s6 = inlined_call_operand.vmem [shape: f32[1,32], index: 6, kind: input, shape index: {}]
  %s7 = inlined_call_operand.vmem [shape: bf16[32,64], index: 7, kind: input, shape index: {}]
  %s8 = inlined_call_operand.vmem [shape: f32[1,64], index: 8, kind: input, shape index: {}]
  %s9 = inlined_call_operand.vmem [shape: bf16[32,32], index: 9, kind: input, shape index: {}]
  %s10 = inlined_call_operand.vmem [shape: f32[1,32], index: 10, kind: input, shape index: {}]
  %s11 = inlined_call_operand.vmem [shape: bf16[32,32], index: 11, kind: input, shape index: {}]
  %s12 = inlined_call_operand.vmem [shape: f32[1,32], index: 12, kind: input, shape index: {}]
  %s13 = inlined_call_operand.vmem [shape: f32[1,32], index: 13, kind: input, shape index: {}]
  %s14 = inlined_call_operand.vmem [shape: f32[1,32], index: 14, kind: input, shape index: {}]
  %s15 = inlined_call_operand.vmem [shape: bf16[32,64], index: 15, kind: input, shape index: {}]
  %s16 = inlined_call_operand.vmem [shape: f32[1,64], index: 16, kind: input, shape index: {}]
  %s17 = inlined_call_operand.vmem [shape: bf16[64,32], index: 17, kind: input, shape index: {}]
  %s18 = inlined_call_operand.vmem [shape: f32[1,32], index: 18, kind: input, shape index: {}]
  %s19 = inlined_call_operand.vmem [shape: f32[1,32], index: 19, kind: input, shape index: {}]
  %s20 = inlined_call_operand.vmem [shape: f32[1,32], index: 20, kind: input, shape index: {}]
  %s21 = inlined_call_operand.vmem [shape: f32[2,8,32], index: 21, kind: output, shape index: {}]
  %s22 = sld [smem:[#allocation0]]
  $region117: #{mask4former_forward.31} parent=0
    _
  %s24 = ssub.s32 1, %s22
  %s25 = scalar_select 0, %s24, %s22
  loop: start=0, step=1, limit=4
  $region2: #{mask4former_forward.31} parent=0 // loop_pre_header
    _
  $region3: #{mask4former_forward.31} parent=0 // loop_header
    %s27 = sphi 0, %s31
    %p28 = scmp.ge.s32.totalorder %s27, 4
    %s37 = sphi 0, %s39
    %s40 = sphi 0, %s37
    %s41 = sphi 0, %s40
    %s57 = sphi 0, %s41
    %s63 = sphi 0, %s65
    %s66 = sphi 0, %s63
    %s67 = sphi 0, %s66
    %s83 = sphi 0, %s67
    %s89 = sphi 0, %s91
    %s92 = sphi 0, %s89
    %s93 = sphi 0, %s92
    %s109 = sphi 0, %s93
    %s113 = sphi 0, %s113
    %s115 = sphi 0, %s113
    %s116 = sphi 0, %s115
    %s130 = sphi 0, %s116
    %s134 = sphi 0, %s134
    %s136 = sphi 0, %s134
    %s137 = sphi 0, %s136
    %s151 = sphi 0, %s137
    %s155 = sphi 0, %s155
    %s157 = sphi 0, %s155
    %s158 = sphi 0, %s157
    %s172 = sphi 0, %s158
    %s176 = sphi 0, %s176
    %s178 = sphi 0, %s176
    %s179 = sphi 0, %s178
    %s193 = sphi 0, %s179
    %s197 = sphi 0, %s197
    %s199 = sphi 0, %s197
    %s200 = sphi 0, %s199
    %s214 = sphi 0, %s200
    %s218 = sphi 0, %s218
    %s220 = sphi 0, %s218
    %s221 = sphi 0, %s220
    %s235 = sphi 0, %s221
    %s239 = sphi 0, %s239
    %s241 = sphi 0, %s239
    %s242 = sphi 0, %s241
    %s256 = sphi 0, %s242
    %s260 = sphi 0, %s260
    %s262 = sphi 0, %s260
    %s263 = sphi 0, %s262
    %s277 = sphi 0, %s263
    %s281 = sphi 0, %s281
    %s283 = sphi 0, %s281
    %s284 = sphi 0, %s283
    %s298 = sphi 0, %s284
    %s302 = sphi 0, %s302
    %s304 = sphi 0, %s302
    %s305 = sphi 0, %s304
    %s319 = sphi 0, %s305
    %s323 = sphi 0, %s323
    %s325 = sphi 0, %s323
    %s326 = sphi 0, %s325
    %s340 = sphi 0, %s326
    %s344 = sphi 0, %s344
    %s346 = sphi 0, %s344
    %s347 = sphi 0, %s346
    %s361 = sphi 0, %s347
    %s365 = sphi 0, %s365
    %s367 = sphi 0, %s365
    %s368 = sphi 0, %s367
    %s382 = sphi 0, %s368
    %s386 = sphi 0, %s386
    %s388 = sphi 0, %s386
    %s389 = sphi 0, %s388
    %s403 = sphi 0, %s389
    %s407 = sphi 0, %s407
    %s409 = sphi 0, %s407
    %s410 = sphi 0, %s409
    %s424 = sphi 0, %s410
    %s428 = sphi 0, %s428
    %s430 = sphi 0, %s428
    %s431 = sphi 0, %s430
    %s445 = sphi 0, %s431
    %s449 = sphi 0, %s449
    %s451 = sphi 0, %s449
    %s452 = sphi 0, %s451
    %s466 = sphi 0, %s452
    %s470 = sphi 0, %s470
    %s472 = sphi 0, %s470
    %s473 = sphi 0, %s472
    %s487 = sphi 0, %s473
    %s493 = sphi 0, %s495
    %s496 = sphi 0, %s493
    %s497 = sphi 0, %s496
    %s513 = sphi 0, %s497
  $region4: #{mask4former_forward.31} parent=0 // loop_header_branch
    %30 = sbr.rel (%p28) target = $region8
  $region5: #{mask4former_forward.31} parent=0 // loop_body
    %s32 = ssub.s32 %s27, 1
    %s33 = ssub.s32 %s27, 2
    %s34 = sadd.s32 %s27, 1
    %s35 = ssub.s32 %s27, %s34
    %p36 = scmp.eq.s32.totalorder %s35, 0
    %s38 = sadd.s32 %s37, 1
    %s39 = scalar_select %p36, %s37, %s38
    %p42 = pneg %p36
    %p43 = scmp.eq.s32.totalorder %s27, 1
    %p44 = por %p42, %p43
    %p45 = scmp.ne.s32.totalorder %s37, %s40
    %p46 = scmp.eq.s32.totalorder %s27, 0
    %p47 = por %p45, %p46
    %p48 = scmp.ne.s32.totalorder %s37, %s40
    %p49 = scmp.eq.s32.totalorder %s32, 1
    %p50 = por %p48, %p49
    %p51 = scmp.ne.s32.totalorder %s40, %s41
    %p52 = scmp.eq.s32.totalorder %s32, 0
    %p53 = por %p51, %p52
    %p54 = scmp.ne.s32.totalorder %s40, %s41
    %p55 = scmp.eq.s32.totalorder %s33, 1
    %p56 = por %p54, %p55
    %p58 = scmp.ne.s32.totalorder %s41, %s57
    %p59 = scmp.eq.s32.totalorder %s33, 0
    %p60 = por %p58, %p59
    %s61 = ssub.s32 %s27, %s34
    %p62 = scmp.eq.s32.totalorder %s61, 0
    %s64 = sadd.s32 %s63, 1
    %s65 = scalar_select %p62, %s63, %s64
    %p68 = pneg %p62
    %p69 = scmp.eq.s32.totalorder %s27, 1
    %p70 = por %p68, %p69
    %p71 = scmp.ne.s32.totalorder %s63, %s66
    %p72 = scmp.eq.s32.totalorder %s27, 0
    %p73 = por %p71, %p72
    %p74 = scmp.ne.s32.totalorder %s63, %s66
    %p75 = scmp.eq.s32.totalorder %s32, 1
    %p76 = por %p74, %p75
    %p77 = scmp.ne.s32.totalorder %s66, %s67
    %p78 = scmp.eq.s32.totalorder %s32, 0
    %p79 = por %p77, %p78
    %p80 = scmp.ne.s32.totalorder %s66, %s67
    %p81 = scmp.eq.s32.totalorder %s33, 1
    %p82 = por %p80, %p81
    %p84 = scmp.ne.s32.totalorder %s67, %s83
    %p85 = scmp.eq.s32.totalorder %s33, 0
    %p86 = por %p84, %p85
    %s87 = ssub.s32 %s27, %s34
    %p88 = scmp.eq.s32.totalorder %s87, 0
    %s90 = sadd.s32 %s89, 1
    %s91 = scalar_select %p88, %s89, %s90
    %p94 = pneg %p88
    %p95 = scmp.eq.s32.totalorder %s27, 1
    %p96 = por %p94, %p95
    %p97 = scmp.ne.s32.totalorder %s89, %s92
    %p98 = scmp.eq.s32.totalorder %s27, 0
    %p99 = por %p97, %p98
    %p100 = scmp.ne.s32.totalorder %s89, %s92
    %p101 = scmp.eq.s32.totalorder %s32, 1
    %p102 = por %p100, %p101
    %p103 = scmp.ne.s32.totalorder %s92, %s93
    %p104 = scmp.eq.s32.totalorder %s32, 0
    %p105 = por %p103, %p104
    %p106 = scmp.ne.s32.totalorder %s92, %s93
    %p107 = scmp.eq.s32.totalorder %s33, 1
    %p108 = por %p106, %p107
    %p110 = scmp.ne.s32.totalorder %s93, %s109
    %p111 = scmp.eq.s32.totalorder %s33, 0
    %p112 = por %p110, %p111
    %s114 = sadd.s32 %s113, 1
    %p117 = scmp.eq.s32.totalorder %s27, 1
    %p118 = scmp.ne.s32.totalorder %s113, %s115
    %p119 = scmp.eq.s32.totalorder %s27, 0
    %p120 = por %p118, %p119
    %p121 = scmp.ne.s32.totalorder %s113, %s115
    %p122 = scmp.eq.s32.totalorder %s32, 1
    %p123 = por %p121, %p122
    %p124 = scmp.ne.s32.totalorder %s115, %s116
    %p125 = scmp.eq.s32.totalorder %s32, 0
    %p126 = por %p124, %p125
    %p127 = scmp.ne.s32.totalorder %s115, %s116
    %p128 = scmp.eq.s32.totalorder %s33, 1
    %p129 = por %p127, %p128
    %p131 = scmp.ne.s32.totalorder %s116, %s130
    %p132 = scmp.eq.s32.totalorder %s33, 0
    %p133 = por %p131, %p132
    %s135 = sadd.s32 %s134, 1
    %p138 = scmp.eq.s32.totalorder %s27, 1
    %p139 = scmp.ne.s32.totalorder %s134, %s136
    %p140 = scmp.eq.s32.totalorder %s27, 0
    %p141 = por %p139, %p140
    %p142 = scmp.ne.s32.totalorder %s134, %s136
    %p143 = scmp.eq.s32.totalorder %s32, 1
    %p144 = por %p142, %p143
    %p145 = scmp.ne.s32.totalorder %s136, %s137
    %p146 = scmp.eq.s32.totalorder %s32, 0
    %p147 = por %p145, %p146
    %p148 = scmp.ne.s32.totalorder %s136, %s137
    %p149 = scmp.eq.s32.totalorder %s33, 1
    %p150 = por %p148, %p149
    %p152 = scmp.ne.s32.totalorder %s137, %s151
    %p153 = scmp.eq.s32.totalorder %s33, 0
    %p154 = por %p152, %p153
    %s156 = sadd.s32 %s155, 1
    %p159 = scmp.eq.s32.totalorder %s27, 1
    %p160 = scmp.ne.s32.totalorder %s155, %s157
    %p161 = scmp.eq.s32.totalorder %s27, 0
    %p162 = por %p160, %p161
    %p163 = scmp.ne.s32.totalorder %s155, %s157
    %p164 = scmp.eq.s32.totalorder %s32, 1
    %p165 = por %p163, %p164
    %p166 = scmp.ne.s32.totalorder %s157, %s158
    %p167 = scmp.eq.s32.totalorder %s32, 0
    %p168 = por %p166, %p167
    %p169 = scmp.ne.s32.totalorder %s157, %s158
    %p170 = scmp.eq.s32.totalorder %s33, 1
    %p171 = por %p169, %p170
    %p173 = scmp.ne.s32.totalorder %s158, %s172
    %p174 = scmp.eq.s32.totalorder %s33, 0
    %p175 = por %p173, %p174
    %s177 = sadd.s32 %s176, 1
    %p180 = scmp.eq.s32.totalorder %s27, 1
    %p181 = scmp.ne.s32.totalorder %s176, %s178
    %p182 = scmp.eq.s32.totalorder %s27, 0
    %p183 = por %p181, %p182
    %p184 = scmp.ne.s32.totalorder %s176, %s178
    %p185 = scmp.eq.s32.totalorder %s32, 1
    %p186 = por %p184, %p185
    %p187 = scmp.ne.s32.totalorder %s178, %s179
    %p188 = scmp.eq.s32.totalorder %s32, 0
    %p189 = por %p187, %p188
    %p190 = scmp.ne.s32.totalorder %s178, %s179
    %p191 = scmp.eq.s32.totalorder %s33, 1
    %p192 = por %p190, %p191
    %p194 = scmp.ne.s32.totalorder %s179, %s193
    %p195 = scmp.eq.s32.totalorder %s33, 0
    %p196 = por %p194, %p195
    %s198 = sadd.s32 %s197, 1
    %p201 = scmp.eq.s32.totalorder %s27, 1
    %p202 = scmp.ne.s32.totalorder %s197, %s199
    %p203 = scmp.eq.s32.totalorder %s27, 0
    %p204 = por %p202, %p203
    %p205 = scmp.ne.s32.totalorder %s197, %s199
    %p206 = scmp.eq.s32.totalorder %s32, 1
    %p207 = por %p205, %p206
    %p208 = scmp.ne.s32.totalorder %s199, %s200
    %p209 = scmp.eq.s32.totalorder %s32, 0
    %p210 = por %p208, %p209
    %p211 = scmp.ne.s32.totalorder %s199, %s200
    %p212 = scmp.eq.s32.totalorder %s33, 1
    %p213 = por %p211, %p212
    %p215 = scmp.ne.s32.totalorder %s200, %s214
    %p216 = scmp.eq.s32.totalorder %s33, 0
    %p217 = por %p215, %p216
    %s219 = sadd.s32 %s218, 1
    %p222 = scmp.eq.s32.totalorder %s27, 1
    %p223 = scmp.ne.s32.totalorder %s218, %s220
    %p224 = scmp.eq.s32.totalorder %s27, 0
    %p225 = por %p223, %p224
    %p226 = scmp.ne.s32.totalorder %s218, %s220
    %p227 = scmp.eq.s32.totalorder %s32, 1
    %p228 = por %p226, %p227
    %p229 = scmp.ne.s32.totalorder %s220, %s221
    %p230 = scmp.eq.s32.totalorder %s32, 0
    %p231 = por %p229, %p230
    %p232 = scmp.ne.s32.totalorder %s220, %s221
    %p233 = scmp.eq.s32.totalorder %s33, 1
    %p234 = por %p232, %p233
    %p236 = scmp.ne.s32.totalorder %s221, %s235
    %p237 = scmp.eq.s32.totalorder %s33, 0
    %p238 = por %p236, %p237
    %s240 = sadd.s32 %s239, 1
    %p243 = scmp.eq.s32.totalorder %s27, 1
    %p244 = scmp.ne.s32.totalorder %s239, %s241
    %p245 = scmp.eq.s32.totalorder %s27, 0
    %p246 = por %p244, %p245
    %p247 = scmp.ne.s32.totalorder %s239, %s241
    %p248 = scmp.eq.s32.totalorder %s32, 1
    %p249 = por %p247, %p248
    %p250 = scmp.ne.s32.totalorder %s241, %s242
    %p251 = scmp.eq.s32.totalorder %s32, 0
    %p252 = por %p250, %p251
    %p253 = scmp.ne.s32.totalorder %s241, %s242
    %p254 = scmp.eq.s32.totalorder %s33, 1
    %p255 = por %p253, %p254
    %p257 = scmp.ne.s32.totalorder %s242, %s256
    %p258 = scmp.eq.s32.totalorder %s33, 0
    %p259 = por %p257, %p258
    %s261 = sadd.s32 %s260, 1
    %p264 = scmp.eq.s32.totalorder %s27, 1
    %p265 = scmp.ne.s32.totalorder %s260, %s262
    %p266 = scmp.eq.s32.totalorder %s27, 0
    %p267 = por %p265, %p266
    %p268 = scmp.ne.s32.totalorder %s260, %s262
    %p269 = scmp.eq.s32.totalorder %s32, 1
    %p270 = por %p268, %p269
    %p271 = scmp.ne.s32.totalorder %s262, %s263
    %p272 = scmp.eq.s32.totalorder %s32, 0
    %p273 = por %p271, %p272
    %p274 = scmp.ne.s32.totalorder %s262, %s263
    %p275 = scmp.eq.s32.totalorder %s33, 1
    %p276 = por %p274, %p275
    %p278 = scmp.ne.s32.totalorder %s263, %s277
    %p279 = scmp.eq.s32.totalorder %s33, 0
    %p280 = por %p278, %p279
    %s282 = sadd.s32 %s281, 1
    %p285 = scmp.eq.s32.totalorder %s27, 1
    %p286 = scmp.ne.s32.totalorder %s281, %s283
    %p287 = scmp.eq.s32.totalorder %s27, 0
    %p288 = por %p286, %p287
    %p289 = scmp.ne.s32.totalorder %s281, %s283
    %p290 = scmp.eq.s32.totalorder %s32, 1
    %p291 = por %p289, %p290
    %p292 = scmp.ne.s32.totalorder %s283, %s284
    %p293 = scmp.eq.s32.totalorder %s32, 0
    %p294 = por %p292, %p293
    %p295 = scmp.ne.s32.totalorder %s283, %s284
    %p296 = scmp.eq.s32.totalorder %s33, 1
    %p297 = por %p295, %p296
    %p299 = scmp.ne.s32.totalorder %s284, %s298
    %p300 = scmp.eq.s32.totalorder %s33, 0
    %p301 = por %p299, %p300
    %s303 = sadd.s32 %s302, 1
    %p306 = scmp.eq.s32.totalorder %s27, 1
    %p307 = scmp.ne.s32.totalorder %s302, %s304
    %p308 = scmp.eq.s32.totalorder %s27, 0
    %p309 = por %p307, %p308
    %p310 = scmp.ne.s32.totalorder %s302, %s304
    %p311 = scmp.eq.s32.totalorder %s32, 1
    %p312 = por %p310, %p311
    %p313 = scmp.ne.s32.totalorder %s304, %s305
    %p314 = scmp.eq.s32.totalorder %s32, 0
    %p315 = por %p313, %p314
    %p316 = scmp.ne.s32.totalorder %s304, %s305
    %p317 = scmp.eq.s32.totalorder %s33, 1
    %p318 = por %p316, %p317
    %p320 = scmp.ne.s32.totalorder %s305, %s319
    %p321 = scmp.eq.s32.totalorder %s33, 0
    %p322 = por %p320, %p321
    %s324 = sadd.s32 %s323, 1
    %p327 = scmp.eq.s32.totalorder %s27, 1
    %p328 = scmp.ne.s32.totalorder %s323, %s325
    %p329 = scmp.eq.s32.totalorder %s27, 0
    %p330 = por %p328, %p329
    %p331 = scmp.ne.s32.totalorder %s323, %s325
    %p332 = scmp.eq.s32.totalorder %s32, 1
    %p333 = por %p331, %p332
    %p334 = scmp.ne.s32.totalorder %s325, %s326
    %p335 = scmp.eq.s32.totalorder %s32, 0
    %p336 = por %p334, %p335
    %p337 = scmp.ne.s32.totalorder %s325, %s326
    %p338 = scmp.eq.s32.totalorder %s33, 1
    %p339 = por %p337, %p338
    %p341 = scmp.ne.s32.totalorder %s326, %s340
    %p342 = scmp.eq.s32.totalorder %s33, 0
    %p343 = por %p341, %p342
    %s345 = sadd.s32 %s344, 1
    %p348 = scmp.eq.s32.totalorder %s27, 1
    %p349 = scmp.ne.s32.totalorder %s344, %s346
    %p350 = scmp.eq.s32.totalorder %s27, 0
    %p351 = por %p349, %p350
    %p352 = scmp.ne.s32.totalorder %s344, %s346
    %p353 = scmp.eq.s32.totalorder %s32, 1
    %p354 = por %p352, %p353
    %p355 = scmp.ne.s32.totalorder %s346, %s347
    %p356 = scmp.eq.s32.totalorder %s32, 0
    %p357 = por %p355, %p356
    %p358 = scmp.ne.s32.totalorder %s346, %s347
    %p359 = scmp.eq.s32.totalorder %s33, 1
    %p360 = por %p358, %p359
    %p362 = scmp.ne.s32.totalorder %s347, %s361
    %p363 = scmp.eq.s32.totalorder %s33, 0
    %p364 = por %p362, %p363
    %s366 = sadd.s32 %s365, 1
    %p369 = scmp.eq.s32.totalorder %s27, 1
    %p370 = scmp.ne.s32.totalorder %s365, %s367
    %p371 = scmp.eq.s32.totalorder %s27, 0
    %p372 = por %p370, %p371
    %p373 = scmp.ne.s32.totalorder %s365, %s367
    %p374 = scmp.eq.s32.totalorder %s32, 1
    %p375 = por %p373, %p374
    %p376 = scmp.ne.s32.totalorder %s367, %s368
    %p377 = scmp.eq.s32.totalorder %s32, 0
    %p378 = por %p376, %p377
    %p379 = scmp.ne.s32.totalorder %s367, %s368
    %p380 = scmp.eq.s32.totalorder %s33, 1
    %p381 = por %p379, %p380
    %p383 = scmp.ne.s32.totalorder %s368, %s382
    %p384 = scmp.eq.s32.totalorder %s33, 0
    %p385 = por %p383, %p384
    %s387 = sadd.s32 %s386, 1
    %p390 = scmp.eq.s32.totalorder %s27, 1
    %p391 = scmp.ne.s32.totalorder %s386, %s388
    %p392 = scmp.eq.s32.totalorder %s27, 0
    %p393 = por %p391, %p392
    %p394 = scmp.ne.s32.totalorder %s386, %s388
    %p395 = scmp.eq.s32.totalorder %s32, 1
    %p396 = por %p394, %p395
    %p397 = scmp.ne.s32.totalorder %s388, %s389
    %p398 = scmp.eq.s32.totalorder %s32, 0
    %p399 = por %p397, %p398
    %p400 = scmp.ne.s32.totalorder %s388, %s389
    %p401 = scmp.eq.s32.totalorder %s33, 1
    %p402 = por %p400, %p401
    %p404 = scmp.ne.s32.totalorder %s389, %s403
    %p405 = scmp.eq.s32.totalorder %s33, 0
    %p406 = por %p404, %p405
    %s408 = sadd.s32 %s407, 1
    %p411 = scmp.eq.s32.totalorder %s27, 1
    %p412 = scmp.ne.s32.totalorder %s407, %s409
    %p413 = scmp.eq.s32.totalorder %s27, 0
    %p414 = por %p412, %p413
    %p415 = scmp.ne.s32.totalorder %s407, %s409
    %p416 = scmp.eq.s32.totalorder %s32, 1
    %p417 = por %p415, %p416
    %p418 = scmp.ne.s32.totalorder %s409, %s410
    %p419 = scmp.eq.s32.totalorder %s32, 0
    %p420 = por %p418, %p419
    %p421 = scmp.ne.s32.totalorder %s409, %s410
    %p422 = scmp.eq.s32.totalorder %s33, 1
    %p423 = por %p421, %p422
    %p425 = scmp.ne.s32.totalorder %s410, %s424
    %p426 = scmp.eq.s32.totalorder %s33, 0
    %p427 = por %p425, %p426
    %s429 = sadd.s32 %s428, 1
    %p432 = scmp.eq.s32.totalorder %s27, 1
    %p433 = scmp.ne.s32.totalorder %s428, %s430
    %p434 = scmp.eq.s32.totalorder %s27, 0
    %p435 = por %p433, %p434
    %p436 = scmp.ne.s32.totalorder %s428, %s430
    %p437 = scmp.eq.s32.totalorder %s32, 1
    %p438 = por %p436, %p437
    %p439 = scmp.ne.s32.totalorder %s430, %s431
    %p440 = scmp.eq.s32.totalorder %s32, 0
    %p441 = por %p439, %p440
    %p442 = scmp.ne.s32.totalorder %s430, %s431
    %p443 = scmp.eq.s32.totalorder %s33, 1
    %p444 = por %p442, %p443
    %p446 = scmp.ne.s32.totalorder %s431, %s445
    %p447 = scmp.eq.s32.totalorder %s33, 0
    %p448 = por %p446, %p447
    %s450 = sadd.s32 %s449, 1
    %p453 = scmp.eq.s32.totalorder %s27, 1
    %p454 = scmp.ne.s32.totalorder %s449, %s451
    %p455 = scmp.eq.s32.totalorder %s27, 0
    %p456 = por %p454, %p455
    %p457 = scmp.ne.s32.totalorder %s449, %s451
    %p458 = scmp.eq.s32.totalorder %s32, 1
    %p459 = por %p457, %p458
    %p460 = scmp.ne.s32.totalorder %s451, %s452
    %p461 = scmp.eq.s32.totalorder %s32, 0
    %p462 = por %p460, %p461
    %p463 = scmp.ne.s32.totalorder %s451, %s452
    %p464 = scmp.eq.s32.totalorder %s33, 1
    %p465 = por %p463, %p464
    %p467 = scmp.ne.s32.totalorder %s452, %s466
    %p468 = scmp.eq.s32.totalorder %s33, 0
    %p469 = por %p467, %p468
    %s471 = sadd.s32 %s470, 1
    %p474 = scmp.eq.s32.totalorder %s27, 1
    %p475 = scmp.ne.s32.totalorder %s470, %s472
    %p476 = scmp.eq.s32.totalorder %s27, 0
    %p477 = por %p475, %p476
    %p478 = scmp.ne.s32.totalorder %s470, %s472
    %p479 = scmp.eq.s32.totalorder %s32, 1
    %p480 = por %p478, %p479
    %p481 = scmp.ne.s32.totalorder %s472, %s473
    %p482 = scmp.eq.s32.totalorder %s32, 0
    %p483 = por %p481, %p482
    %p484 = scmp.ne.s32.totalorder %s472, %s473
    %p485 = scmp.eq.s32.totalorder %s33, 1
    %p486 = por %p484, %p485
    %p488 = scmp.ne.s32.totalorder %s473, %s487
    %p489 = scmp.eq.s32.totalorder %s33, 0
    %p490 = por %p488, %p489
    %s491 = ssub.s32 %s27, %s34
    %p492 = scmp.eq.s32.totalorder %s491, 0
    %s494 = sadd.s32 %s493, 1
    %s495 = scalar_select %p492, %s493, %s494
    %p498 = pneg %p492
    %p499 = scmp.eq.s32.totalorder %s27, 1
    %p500 = por %p498, %p499
    %p501 = scmp.ne.s32.totalorder %s493, %s496
    %p502 = scmp.eq.s32.totalorder %s27, 0
    %p503 = por %p501, %p502
    %p504 = scmp.ne.s32.totalorder %s493, %s496
    %p505 = scmp.eq.s32.totalorder %s32, 1
    %p506 = por %p504, %p505
    %p507 = scmp.ne.s32.totalorder %s496, %s497
    %p508 = scmp.eq.s32.totalorder %s32, 0
    %p509 = por %p507, %p508
    %p510 = scmp.ne.s32.totalorder %s496, %s497
    %p511 = scmp.eq.s32.totalorder %s33, 1
    %p512 = por %p510, %p511
    %p514 = scmp.ne.s32.totalorder %s497, %s513
    %p515 = scmp.eq.s32.totalorder %s33, 0
    %p516 = por %p514, %p515
    %p517 = scmp.le.s32.totalorder 1, %s27
    %p518 = scmp.lt.s32.totalorder %s27, 3
    %p519 = pnand %p517, %p518
    %p520 = pneg %p519
    // Predicated region
    $region9: #{mask4former_forward.31} parent=5 // pred_check
      _
    $region10: #{mask4former_forward.31} parent=5 // pred_check_branch
      %522 = sbr.rel (%p519) target = $region12
    $region11: #{mask4former_forward.31} parent=5 // pred_region
      %s523 = ssub.s32 %s27, 1
      // Predicated region
      $region13: #{mask4former_forward.31} parent=11 // pred_check
        %p524 = pneg %p126
      $region14: #{mask4former_forward.31} parent=11 // pred_check_branch
        %526 = sbr.rel (%p524) target = $region16
      $region15: #{mask4former_forward.31} parent=11 // pred_region
        _
      $region16: #{mask4former_forward.31} parent=11 // pred_fallthru
        _
      // Predicated region
      $region17: #{mask4former_forward.31} parent=11 // pred_check
        %p527 = pneg %p147
      $region18: #{mask4former_forward.31} parent=11 // pred_check_branch
        %529 = sbr.rel (%p527) target = $region20
      $region19: #{mask4former_forward.31} parent=11 // pred_region
        _
      $region20: #{mask4former_forward.31} parent=11 // pred_fallthru
        _
      // Predicated region
      $region21: #{mask4former_forward.31} parent=11 // pred_check
        %p530 = pneg %p168
      $region22: #{mask4former_forward.31} parent=11 // pred_check_branch
        %532 = sbr.rel (%p530) target = $region24
      $region23: #{mask4former_forward.31} parent=11 // pred_region
        _
      $region24: #{mask4former_forward.31} parent=11 // pred_fallthru
        _
      // Predicated region
      $region25: #{mask4former_forward.31} parent=11 // pred_check
        %p533 = pneg %p189
      $region26: #{mask4former_forward.31} parent=11 // pred_check_branch
        %535 = sbr.rel (%p533) target = $region28
      $region27: #{mask4former_forward.31} parent=11 // pred_region
        _
      $region28: #{mask4former_forward.31} parent=11 // pred_fallthru
        _
      // Predicated region
      $region29: #{mask4former_forward.31} parent=11 // pred_check
        %p536 = pneg %p210
      $region30: #{mask4former_forward.31} parent=11 // pred_check_branch
        %538 = sbr.rel (%p536) target = $region32
      $region31: #{mask4former_forward.31} parent=11 // pred_region
        _
      $region32: #{mask4former_forward.31} parent=11 // pred_fallthru
        _
      // Predicated region
      $region33: #{mask4former_forward.31} parent=11 // pred_check
        %p539 = pneg %p231
      $region34: #{mask4former_forward.31} parent=11 // pred_check_branch
        %541 = sbr.rel (%p539) target = $region36
      $region35: #{mask4former_forward.31} parent=11 // pred_region
        _
      $region36: #{mask4former_forward.31} parent=11 // pred_fallthru
        _
      // Predicated region
      $region37: #{mask4former_forward.31} parent=11 // pred_check
        %p542 = pneg %p252
      $region38: #{mask4former_forward.31} parent=11 // pred_check_branch
        %544 = sbr.rel (%p542) target = $region40
      $region39: #{mask4former_forward.31} parent=11 // pred_region
        _
      $region40: #{mask4former_forward.31} parent=11 // pred_fallthru
        _
      // Predicated region
      $region41: #{mask4former_forward.31} parent=11 // pred_check
        %p545 = pneg %p273
      $region42: #{mask4former_forward.31} parent=11 // pred_check_branch
        %547 = sbr.rel (%p545) target = $region44
      $region43: #{mask4former_forward.31} parent=11 // pred_region
        _
      $region44: #{mask4former_forward.31} parent=11 // pred_fallthru
        _
      // Predicated region
      $region45: #{mask4former_forward.31} parent=11 // pred_check
        %p548 = pneg %p294
      $region46: #{mask4former_forward.31} parent=11 // pred_check_branch
        %550 = sbr.rel (%p548) target = $region48
      $region47: #{mask4former_forward.31} parent=11 // pred_region
        _
      $region48: #{mask4former_forward.31} parent=11 // pred_fallthru
        _
      // Predicated region
      $region49: #{mask4former_forward.31} parent=11 // pred_check
        %p551 = pneg %p315
      $region50: #{mask4former_forward.31} parent=11 // pred_check_branch
        %553 = sbr.rel (%p551) target = $region52
      $region51: #{mask4former_forward.31} parent=11 // pred_region
        _
      $region52: #{mask4former_forward.31} parent=11 // pred_fallthru
        _
      // Predicated region
      $region53: #{mask4former_forward.31} parent=11 // pred_check
        %p554 = pneg %p336
      $region54: #{mask4former_forward.31} parent=11 // pred_check_branch
        %556 = sbr.rel (%p554) target = $region56
      $region55: #{mask4former_forward.31} parent=11 // pred_region
        _
      $region56: #{mask4former_forward.31} parent=11 // pred_fallthru
        _
      // Predicated region
      $region57: #{mask4former_forward.31} parent=11 // pred_check
        %p557 = pneg %p357
      $region58: #{mask4former_forward.31} parent=11 // pred_check_branch
        %559 = sbr.rel (%p557) target = $region60
      $region59: #{mask4former_forward.31} parent=11 // pred_region
        _
      $region60: #{mask4former_forward.31} parent=11 // pred_fallthru
        _
      // Predicated region
      $region61: #{mask4former_forward.31} parent=11 // pred_check
        %p560 = pneg %p378
      $region62: #{mask4former_forward.31} parent=11 // pred_check_branch
        %562 = sbr.rel (%p560) target = $region64
      $region63: #{mask4former_forward.31} parent=11 // pred_region
        _
      $region64: #{mask4former_forward.31} parent=11 // pred_fallthru
        _
      // Predicated region
      $region65: #{mask4former_forward.31} parent=11 // pred_check
        %p563 = pneg %p399
      $region66: #{mask4former_forward.31} parent=11 // pred_check_branch
        %565 = sbr.rel (%p563) target = $region68
      $region67: #{mask4former_forward.31} parent=11 // pred_region
        _
      $region68: #{mask4former_forward.31} parent=11 // pred_fallthru
        _
      // Predicated region
      $region69: #{mask4former_forward.31} parent=11 // pred_check
        %p566 = pneg %p420
      $region70: #{mask4former_forward.31} parent=11 // pred_check_branch
        %568 = sbr.rel (%p566) target = $region72
      $region71: #{mask4former_forward.31} parent=11 // pred_region
        _
      $region72: #{mask4former_forward.31} parent=11 // pred_fallthru
        _
      // Predicated region
      $region73: #{mask4former_forward.31} parent=11 // pred_check
        %p569 = pneg %p441
      $region74: #{mask4former_forward.31} parent=11 // pred_check_branch
        %571 = sbr.rel (%p569) target = $region76
      $region75: #{mask4former_forward.31} parent=11 // pred_region
        _
      $region76: #{mask4former_forward.31} parent=11 // pred_fallthru
        _
      // Predicated region
      $region77: #{mask4former_forward.31} parent=11 // pred_check
        %p572 = pneg %p462
      $region78: #{mask4former_forward.31} parent=11 // pred_check_branch
        %574 = sbr.rel (%p572) target = $region80
      $region79: #{mask4former_forward.31} parent=11 // pred_region
        _
      $region80: #{mask4former_forward.31} parent=11 // pred_fallthru
        _
      // Predicated region
      $region81: #{mask4former_forward.31} parent=11 // pred_check
        %p575 = pneg %p483
      $region82: #{mask4former_forward.31} parent=11 // pred_check_branch
        %577 = sbr.rel (%p575) target = $region84
      $region83: #{mask4former_forward.31} parent=11 // pred_region
        _
      $region84: #{mask4former_forward.31} parent=11 // pred_fallthru
        _
    $region12: #{mask4former_forward.31} parent=5 // pred_fallthru
      _
    %p578 = scmp.lt.s32.totalorder %s27, 2
    // Predicated region
    $region85: #{mask4former_forward.31} parent=5 // pred_check
      %p579 = pneg %p578
    $region86: #{mask4former_forward.31} parent=5 // pred_check_branch
      %581 = sbr.rel (%p579) target = $region88
    $region87: #{mask4former_forward.31} parent=5 // pred_region
      // Predicated region
      $region89: #{mask4former_forward.31} parent=87 // pred_check
        %p582 = pneg %p47
      $region90: #{mask4former_forward.31} parent=87 // pred_check_branch
        %584 = sbr.rel (%p582) target = $region92
      $region91: #{mask4former_forward.31} parent=87 // pred_region
        %p585 = scmp.lt.s32.totalorder %s27, 1
        %s586 = scalar_select %p585, %s27, 1
        %s587 = smul.addr %s586, 4
        %s588 = scalar_lea.vmem %s0, %s587
      $region92: #{mask4former_forward.31} parent=87 // pred_fallthru
        _
      // Predicated region
      $region93: #{mask4former_forward.31} parent=87 // pred_check
        %p589 = pneg %p73
      $region94: #{mask4former_forward.31} parent=87 // pred_check_branch
        %591 = sbr.rel (%p589) target = $region96
      $region95: #{mask4former_forward.31} parent=87 // pred_region
        %p592 = scmp.lt.s32.totalorder %s27, 1
        %s593 = scalar_select %p592, %s27, 1
        %s594 = smul.addr %s593, 8
        %s595 = scalar_lea.vmem %s1, %s594
      $region96: #{mask4former_forward.31} parent=87 // pred_fallthru
        _
      // Predicated region
      $region97: #{mask4former_forward.31} parent=87 // pred_check
        %p596 = pneg %p99
      $region98: #{mask4former_forward.31} parent=87 // pred_check_branch
        %598 = sbr.rel (%p596) target = $region100
      $region99: #{mask4former_forward.31} parent=87 // pred_region
        %p599 = scmp.lt.s32.totalorder %s27, 1
        %s600 = scalar_select %p599, %s27, 1
        %s601 = smul.addr %s600, 8
        %s602 = scalar_lea.vmem %s2, %s601
      $region100: #{mask4former_forward.31} parent=87 // pred_fallthru
        _
    $region88: #{mask4former_forward.31} parent=5 // pred_fallthru
      _
    %p603 = scmp.le.s32.totalorder 1, %s27
    %p604 = scmp.lt.s32.totalorder %s27, 3
    %p605 = pnand %p603, %p604
    %p606 = pneg %p605
    // Predicated region
    $region101: #{mask4former_forward.31} parent=5 // pred_check
      _
    $region102: #{mask4former_forward.31} parent=5 // pred_check_branch
      %608 = sbr.rel (%p605) target = $region104
    $region103: #{mask4former_forward.31} parent=5 // pred_region
      %s609 = ssub.s32 %s27, 1
      %p610 = scmp.lt.s32.totalorder %s32, 1
      %s611 = scalar_select %p610, %s32, 1
      %s612 = smul.addr %s611, 4
      %s613 = scalar_lea.vmem %s0, %s612
      %p614 = pneg %p53
      %p615 = pneg %p50
      %p616 = scmp.lt.s32.totalorder %s32, 1
      %s617 = scalar_select %p616, %s32, 1
      %s618 = smul.addr %s617, 8
      %s619 = scalar_lea.vmem %s1, %s618
      %p620 = pneg %p79
      %p621 = pneg %p76
      %p622 = scmp.lt.s32.totalorder %s32, 1
      %s623 = scalar_select %p622, %s32, 1
      %s624 = smul.addr %s623, 8
      %s625 = scalar_lea.vmem %s2, %s624
      %p626 = pneg %p105
      %p627 = pneg %p102
      %p628 = pneg %p126
      %p629 = pneg %p123
      %p630 = pneg %p147
      %p631 = pneg %p144
      %p632 = pneg %p168
      %p633 = pneg %p165
      %p634 = pneg %p189
      %p635 = pneg %p186
      %p636 = pneg %p210
      %p637 = pneg %p207
      %p638 = pneg %p231
      %p639 = pneg %p228
      %p640 = pneg %p252
      %p641 = pneg %p249
      %p642 = pneg %p273
      %p643 = pneg %p270
      %p644 = pneg %p294
      %p645 = pneg %p291
      %p646 = pneg %p315
      %p647 = pneg %p312
      %p648 = pneg %p336
      %p649 = pneg %p333
      %p650 = pneg %p357
      %p651 = pneg %p354
      %p652 = pneg %p378
      %p653 = pneg %p375
      %p654 = pneg %p399
      %p655 = pneg %p396
      %p656 = pneg %p420
      %p657 = pneg %p417
      %p658 = pneg %p441
      %p659 = pneg %p438
      %p660 = pneg %p462
      %p661 = pneg %p459
      %p662 = pneg %p483
      %p663 = pneg %p480
      %p664 = pneg %p509
      %p665 = pneg %p506
      %p666 = scmp.lt.s32.totalorder %s32, 1
      %s667 = scalar_select %p666, %s32, 1
      %s668 = smul.addr %s667, 8
      %s669 = scalar_lea.vmem %s21, %s668
      %p670 = scmp.lt.s32.totalorder %s32, 1
      %s671 = scalar_select %p670, %s32, 1
      %s672 = smul.addr %s671, 4
      %s673 = scalar_lea.vmem %s0, %s672
      %p674 = scmp.lt.s32.totalorder %s32, 1
      %s675 = scalar_select %p674, %s32, 1
      %s676 = smul.addr %s675, 8
      %s677 = scalar_lea.vmem %s1, %s676
      %p678 = scmp.lt.s32.totalorder %s32, 1
      %s679 = scalar_select %p678, %s32, 1
      %s680 = smul.addr %s679, 8
      %s681 = scalar_lea.vmem %s2, %s680
      %p682 = scmp.lt.s32.totalorder %s32, 1
      %s683 = scalar_select %p682, %s32, 1
      %s684 = smul.addr %s683, 8
      %s685 = scalar_lea.vmem %s21, %s684
      %v687 = vld [vmem:[%s673] sm:$0xf]
      %v688 = vld [vmem:[%s677] sm:$0xff]
      %v689 = vld [vmem:[%s681] sm:$0xff]
      %v690 = vld [vmem:[%s3] sm:$0xf]
      %v691 = vld [vmem:[%s3 + $0x4] sm:$0xf]
      %v692 = vld [vmem:[%s3 + $0x8] sm:$0xf]
      %v693 = vld [vmem:[%s3 + $0xc] sm:$0xf]
      %v694 = vld [vmem:[%s4] sm:$0x1]
      %v696 = vlaneseq
      %v697 = vshrl.u32 %v696, 7
      %v698 = vsub.s32 0, %v697
      %v699 = vrot.slane %v694, %v698
      %v705 = vunpack.c.l.b16 %v690
      %v706 = vunpack.c.l.b16 %v691
      %v707 = vunpack.c.l.b16 %v692
      %v708 = vunpack.c.l.b16 %v693
      %v709 = vpack.c.b16 %v706, %v705
      %v710 = vpack.c.b16 %v708, %v707
      %vm713 = vcmask 261120
      %v715 = vsel %vm713, %v687, 0
      %717 = vmatprep.subr.bf16.mxu0 0
      %718 = vmatpush1.bf16.msra.mxu0 %v709
      %719 = vmatprep.subr.bf16.mxu0 0
      %720 = vmatpush1.bf16.msra.mxu0 %v710
      %721 = vmatprep.subr.bf16.mxu0 0
      %722 = vmatpush1.bf16.msra.mxu0 0
      %723 = vmatprep.subr.bf16.mxu0 0
      %724 = vmatpush1.bf16.msra.mxu0 0
      %725 = vmatprep.subr.bf16.mxu0 0
      %726 = vmatpush1.bf16.msra.mxu0 0
      %727 = vmatprep.subr.bf16.mxu0 0
      %728 = vmatpush1.bf16.msra.mxu0 0
      %729 = vmatprep.subr.bf16.mxu0 0
      %730 = vmatpush1.bf16.msra.mxu0 0
      %731 = vmatprep.subr.bf16.mxu0 0
      %732 = vmatpush1.bf16.msra.mxu0 0
      %733 = vmatprep.subr.bf16.mxu0 0
      %734 = vmatpush1.bf16.msra.mxu0 0
      %735 = vmatprep.subr.bf16.mxu0 0
      %736 = vmatpush1.bf16.msra.mxu0 0
      %737 = vmatprep.subr.bf16.mxu0 0
      %738 = vmatpush1.bf16.msra.mxu0 0
      %739 = vmatprep.subr.bf16.mxu0 0
      %740 = vmatpush1.bf16.msra.mxu0 0
      %741 = vmatprep.subr.bf16.mxu0 0
      %742 = vmatpush1.bf16.msra.mxu0 0
      %743 = vmatprep.subr.bf16.mxu0 0
      %744 = vmatpush1.bf16.msra.mxu0 0
      %745 = vmatprep.subr.bf16.mxu0 0
      %746 = vmatpush1.bf16.msra.mxu0 0
      %747 = vmatprep.subr.bf16.mxu0 0
      %748 = vmatpush1.bf16.msra.mxu0 0
      %749 = vmatprep.mubr.bf16.mxu0 0
      %750 = vmatmul.mubr.bf16.gmra.mrb[0].mxu0 %v715
      %v751 = vpop.f32.mrb[0].mxu0
      %v752 = vadd.f32 %v699, %v751
      %v753 = vpop.f32.mrb[0].mxu0
      %v754 = vpop.f32.mrb[0].mxu0
      %v755 = vpop.f32.mrb[0].mxu0
      %756 = vdwg.mxu0
      %v757 = vadd.f32 %v688, %v752
      %v758 = vld [vmem:[%s5] sm:$0x1]
      %v759 = vld [vmem:[%s6] sm:$0x1]
      %v760 = vsel %vm713, %v757, 0.0
      %761 = vadd.xlane.f32.xlu0 %v760
      %v762 = vpop.xlane.xlu0 %761
      %v763 = vrcp.pop 32.0
      %v764 = vmul.f32 %v762, %v763
      %v765 = vsub.f32 %v757, %v764
      %v766 = vmul.f32 %v765, %v765
      %v767 = vsel %vm713, %v766, 0.0
      %768 = vadd.xlane.f32.xlu0 %v767
      %v769 = vpop.xlane.xlu0 %768
      %v770 = vmul.f32 %v769, %v763
      %v771 = vadd.f32 %v770, 1e-05
      %v772 = vrsqrt.pop %v771
      %v773 = vmul.f32 %v765, %v772
      %v775 = vlaneseq
      %v776 = vshrl.u32 %v775, 7
      %v777 = vsub.s32 0, %v776
      %v778 = vrot.slane %v758, %v777
      %v780 = vmul.f32 %v773, %v778
      %v782 = vlaneseq
      %v783 = vshrl.u32 %v782, 7
      %v784 = vsub.s32 0, %v783
      %v785 = vrot.slane %v759, %v784
      %v787 = vadd.f32 %v780, %v785
      %v788 = vadd.f32 %v787, %v689
      %v789 = vpack.c.bf16 %v788, %v788
      %v790 = vld [vmem:[%s7] sm:$0xf]
      %v791 = vld [vmem:[%s7 + $0x4] sm:$0xf]
      %v792 = vld [vmem:[%s7 + $0x8] sm:$0xf]
      %v793 = vld [vmem:[%s7 + $0xc] sm:$0xf]
      %v794 = vld [vmem:[%s8] sm:$0x1]
      %v796 = vlaneseq
      %v797 = vshrl.u32 %v796, 7
      %v798 = vsub.s32 0, %v797
      %v799 = vrot.slane %v794, %v798
      %v805 = vunpack.c.l.b16 %v790
      %v806 = vunpack.c.l.b16 %v791
      %v807 = vunpack.c.l.b16 %v792
      %v808 = vunpack.c.l.b16 %v793
      %v809 = vpack.c.b16 %v806, %v805
      %v810 = vpack.c.b16 %v808, %v807
      %v814 = vsel %vm713, %v789, 0
      %816 = vmatprep.subr.bf16.mxu0 0
      %817 = vmatpush1.bf16.msra.mxu0 %v809
      %818 = vmatprep.subr.bf16.mxu0 0
      %819 = vmatpush1.bf16.msra.mxu0 %v810
      %820 = vmatprep.subr.bf16.mxu0 0
      %821 = vmatpush1.bf16.msra.mxu0 0
      %822 = vmatprep.subr.bf16.mxu0 0
      %823 = vmatpush1.bf16.msra.mxu0 0
      %824 = vmatprep.subr.bf16.mxu0 0
      %825 = vmatpush1.bf16.msra.mxu0 0
      %826 = vmatprep.subr.bf16.mxu0 0
      %827 = vmatpush1.bf16.msra.mxu0 0
      %828 = vmatprep.subr.bf16.mxu0 0
      %829 = vmatpush1.bf16.msra.mxu0 0
      %830 = vmatprep.subr.bf16.mxu0 0
      %831 = vmatpush1.bf16.msra.mxu0 0
      %832 = vmatprep.subr.bf16.mxu0 0
      %833 = vmatpush1.bf16.msra.mxu0 0
      %834 = vmatprep.subr.bf16.mxu0 0
      %835 = vmatpush1.bf16.msra.mxu0 0
      %836 = vmatprep.subr.bf16.mxu0 0
      %837 = vmatpush1.bf16.msra.mxu0 0
      %838 = vmatprep.subr.bf16.mxu0 0
      %839 = vmatpush1.bf16.msra.mxu0 0
      %840 = vmatprep.subr.bf16.mxu0 0
      %841 = vmatpush1.bf16.msra.mxu0 0
      %842 = vmatprep.subr.bf16.mxu0 0
      %843 = vmatpush1.bf16.msra.mxu0 0
      %844 = vmatprep.subr.bf16.mxu0 0
      %845 = vmatpush1.bf16.msra.mxu0 0
      %846 = vmatprep.subr.bf16.mxu0 0
      %847 = vmatpush1.bf16.msra.mxu0 0
      %848 = vmatprep.mubr.bf16.mxu0 0
      %849 = vmatmul.mubr.bf16.gmra.mrb[0].mxu0 %v814
      %v850 = vpop.f32.mrb[0].mxu0
      %v851 = vadd.f32 %v799, %v850
      %v852 = vpop.f32.mrb[0].mxu0
      %v853 = vpop.f32.mrb[0].mxu0
      %v854 = vpop.f32.mrb[0].mxu0
      %855 = vdwg.mxu0
      %v856 = vpack.c.bf16 %v787, %v787
      %v857 = vld [vmem:[%s9] sm:$0xf]
      %v858 = vld [vmem:[%s9 + $0x4] sm:$0xf]
      %v859 = vld [vmem:[%s9 + $0x8] sm:$0xf]
      %v860 = vld [vmem:[%s9 + $0xc] sm:$0xf]
      %v861 = vld [vmem:[%s10] sm:$0x1]
      %v863 = vlaneseq
      %v864 = vshrl.u32 %v863, 7
      %v865 = vsub.s32 0, %v864
      %v866 = vrot.slane %v861, %v865
      %v872 = vunpack.c.l.b16 %v857
      %v873 = vunpack.c.l.b16 %v858
      %v874 = vunpack.c.l.b16 %v859
      %v875 = vunpack.c.l.b16 %v860
      %v876 = vpack.c.b16 %v873, %v872
      %v877 = vpack.c.b16 %v875, %v874
      %v881 = vsel %vm713, %v856, 0
      %883 = vmatprep.subr.bf16.mxu0 0
      %884 = vmatpush1.bf16.msra.mxu0 %v876
      %885 = vmatprep.subr.bf16.mxu0 0
      %886 = vmatpush1.bf16.msra.mxu0 %v877
      %887 = vmatprep.subr.bf16.mxu0 0
      %888 = vmatpush1.bf16.msra.mxu0 0
      %889 = vmatprep.subr.bf16.mxu0 0
      %890 = vmatpush1.bf16.msra.mxu0 0
      %891 = vmatprep.subr.bf16.mxu0 0
      %892 = vmatpush1.bf16.msra.mxu0 0
      %893 = vmatprep.subr.bf16.mxu0 0
      %894 = vmatpush1.bf16.msra.mxu0 0
      %895 = vmatprep.subr.bf16.mxu0 0
      %896 = vmatpush1.bf16.msra.mxu0 0
      %897 = vmatprep.subr.bf16.mxu0 0
      %898 = vmatpush1.bf16.msra.mxu0 0
      %899 = vmatprep.subr.bf16.mxu0 0
      %900 = vmatpush1.bf16.msra.mxu0 0
      %901 = vmatprep.subr.bf16.mxu0 0
      %902 = vmatpush1.bf16.msra.mxu0 0
      %903 = vmatprep.subr.bf16.mxu0 0
      %904 = vmatpush1.bf16.msra.mxu0 0
      %905 = vmatprep.subr.bf16.mxu0 0
      %906 = vmatpush1.bf16.msra.mxu0 0
      %907 = vmatprep.subr.bf16.mxu0 0
      %908 = vmatpush1.bf16.msra.mxu0 0
      %909 = vmatprep.subr.bf16.mxu0 0
      %910 = vmatpush1.bf16.msra.mxu0 0
      %911 = vmatprep.subr.bf16.mxu0 0
      %912 = vmatpush1.bf16.msra.mxu0 0
      %913 = vmatprep.subr.bf16.mxu0 0
      %914 = vmatpush1.bf16.msra.mxu0 0
      %915 = vmatprep.mubr.bf16.mxu0 0
      %916 = vmatmul.mubr.bf16.gmra.mrb[0].mxu0 %v881
      %v917 = vpop.f32.mrb[0].mxu0
      %v918 = vadd.f32 %v866, %v917
      %v919 = vpop.f32.mrb[0].mxu0
      %v920 = vpop.f32.mrb[0].mxu0
      %v921 = vpop.f32.mrb[0].mxu0
      %922 = vdwg.mxu0
      %v923 = vmul.f32 %v851, 0.35355338
      %v924 = vpack.c.bf16 %v923, %v923
      %v925 = vpack.c.bf16 %v851, %v851
      %v926 = vpack.c.bf16 %v918, %v918
      %928 = vrot.lane.b32.xlu0 %v925, 96
      %v929 = vpop.permute.xlu0 %928
      %vm930 = vcmask 64512
      %v932 = vsel %vm930, %v924, 0
      %v935 = vsel %vm930, %v929, 0
      %937 = vmatprep.subr.bf16.mxu0 0
      %938 = vmatpush1.bf16.xpose.msra.mxu0 %v935
      %939 = vmatprep.subr.bf16.mxu0 0
      %940 = vmatpush1.bf16.xpose.msra.mxu0 0
      %941 = vmatprep.subr.bf16.mxu0 0
      %942 = vmatpush1.bf16.xpose.msra.mxu0 0
      %943 = vmatprep.subr.bf16.mxu0 0
      %944 = vmatpush1.bf16.xpose.msra.mxu0 0
      %945 = vmatprep.subr.bf16.mxu0 0
      %946 = vmatpush1.bf16.xpose.msra.mxu0 0
      %947 = vmatprep.subr.bf16.mxu0 0
      %948 = vmatpush1.bf16.xpose.msra.mxu0 0
      %949 = vmatprep.subr.bf16.mxu0 0
      %950 = vmatpush1.bf16.xpose.msra.mxu0 0
      %951 = vmatprep.subr.bf16.mxu0 0
      %952 = vmatpush1.bf16.xpose.msra.mxu0 0
      %953 = vmatprep.subr.bf16.mxu0 0
      %954 = vmatpush1.bf16.xpose.msra.mxu0 0
      %955 = vmatprep.subr.bf16.mxu0 0
      %956 = vmatpush1.bf16.xpose.msra.mxu0 0
      %957 = vmatprep.subr.bf16.mxu0 0
      %958 = vmatpush1.bf16.xpose.msra.mxu0 0
      %959 = vmatprep.subr.bf16.mxu0 0
      %960 = vmatpush1.bf16.xpose.msra.mxu0 0
      %961 = vmatprep.subr.bf16.mxu0 0
      %962 = vmatpush1.bf16.xpose.msra.mxu0 0
      %963 = vmatprep.subr.bf16.mxu0 0
      %964 = vmatpush1.bf16.xpose.msra.mxu0 0
      %965 = vmatprep.subr.bf16.mxu0 0
      %966 = vmatpush1.bf16.xpose.msra.mxu0 0
      %967 = vmatprep.subr.bf16.mxu0 0
      %968 = vmatpush1.bf16.xpose.msra.mxu0 0
      %969 = vmatprep.mubr.bf16.mxu0 0
      %970 = vmatmul.mubr.bf16.gmra.mrb[0].mxu0 %v932
      %v971 = vpop.f32.mrb[0].mxu0
      %v972 = vadd.f32 0.0, %v971
      %v973 = vpop.f32.mrb[0].mxu0
      %v974 = vpop.f32.mrb[0].mxu0
      %v975 = vpop.f32.mrb[0].mxu0
      %976 = vdwg.mxu0
      %v977 = vsel %vm930, %v972, -inf
      %978 = vmax.xlane.f32.xlu0 %v977
      %v979 = vpop.xlane.xlu0 %978
      %v980 = vsub.f32 %v972, %v979
      %v981 = vmul.f32 %v980, 1.442695
      %v982 = vpow.pop %v981
      %v983 = vsel %vm930, %v982, 0.0
      %984 = vadd.xlane.f32.xlu0 %v983
      %v985 = vpop.xlane.xlu0 %984
      %v986 = vrcp.pop %v985
      %v987 = vmul.f32 %v982, %v986
      %v988 = vpack.c.bf16 %v987, %v987
      %v990 = vsel %vm930, %v988, 0
      %vm992 = vcmask 1043456
      %v994 = vsel %vm992, %v926, 0
      %996 = vmatprep.subr.bf16.mxu0 0
      %997 = vmatpush1.bf16.msra.mxu0 %v994
      %998 = vmatprep.subr.bf16.mxu0 0
      %999 = vmatpush1.bf16.msra.mxu0 0
      %1000 = vmatprep.subr.bf16.mxu0 0
      %1001 = vmatpush1.bf16.msra.mxu0 0
      %1002 = vmatprep.subr.bf16.mxu0 0
      %1003 = vmatpush1.bf16.msra.mxu0 0
      %1004 = vmatprep.subr.bf16.mxu0 0
      %1005 = vmatpush1.bf16.msra.mxu0 0
      %1006 = vmatprep.subr.bf16.mxu0 0
      %1007 = vmatpush1.bf16.msra.mxu0 0
      %1008 = vmatprep.subr.bf16.mxu0 0
      %1009 = vmatpush1.bf16.msra.mxu0 0
      %1010 = vmatprep.subr.bf16.mxu0 0
      %1011 = vmatpush1.bf16.msra.mxu0 0
      %1012 = vmatprep.subr.bf16.mxu0 0
      %1013 = vmatpush1.bf16.msra.mxu0 0
      %1014 = vmatprep.subr.bf16.mxu0 0
      %1015 = vmatpush1.bf16.msra.mxu0 0
      %1016 = vmatprep.subr.bf16.mxu0 0
      %1017 = vmatpush1.bf16.msra.mxu0 0
      %1018 = vmatprep.subr.bf16.mxu0 0
      %1019 = vmatpush1.bf16.msra.mxu0 0
      %1020 = vmatprep.subr.bf16.mxu0 0
      %1021 = vmatpush1.bf16.msra.mxu0 0
      %1022 = vmatprep.subr.bf16.mxu0 0
      %1023 = vmatpush1.bf16.msra.mxu0 0
      %1024 = vmatprep.subr.bf16.mxu0 0
      %1025 = vmatpush1.bf16.msra.mxu0 0
      %1026 = vmatprep.subr.bf16.mxu0 0
      %1027 = vmatpush1.bf16.msra.mxu0 0
      %1028 = vmatprep.mubr.bf16.mxu0 0
      %1029 = vmatmul.mubr.bf16.gmra.mrb[0].mxu0 %v990
      %v1030 = vpop.f32.mrb[0].mxu0
      %v1031 = vadd.f32 0.0, %v1030
      %v1032 = vpop.f32.mrb[0].mxu0
      %v1033 = vpop.f32.mrb[0].mxu0
      %v1034 = vpop.f32.mrb[0].mxu0
      %1035 = vdwg.mxu0
      %1037 = vrot.lane.b32.xlu0 %v924, 120
      %v1038 = vpop.permute.xlu0 %1037
      %1039 = vrot.lane.b32.xlu0 %v925, 88
      %v1040 = vpop.permute.xlu0 %1039
      %v1042 = vsel %vm930, %v1038, 0
      %v1045 = vsel %vm930, %v1040, 0
      %1047 = vmatprep.subr.bf16.mxu0 0
      %1048 = vmatpush1.bf16.xpose.msra.mxu0 %v1045
      %1049 = vmatprep.subr.bf16.mxu0 0
      %1050 = vmatpush1.bf16.xpose.msra.mxu0 0
      %1051 = vmatprep.subr.bf16.mxu0 0
      %1052 = vmatpush1.bf16.xpose.msra.mxu0 0
      %1053 = vmatprep.subr.bf16.mxu0 0
      %1054 = vmatpush1.bf16.xpose.msra.mxu0 0
      %1055 = vmatprep.subr.bf16.mxu0 0
      %1056 = vmatpush1.bf16.xpose.msra.mxu0 0
      %1057 = vmatprep.subr.bf16.mxu0 0
      %1058 = vmatpush1.bf16.xpose.msra.mxu0 0
      %1059 = vmatprep.subr.bf16.mxu0 0
      %1060 = vmatpush1.bf16.xpose.msra.mxu0 0
      %1061 = vmatprep.subr.bf16.mxu0 0
      %1062 = vmatpush1.bf16.xpose.msra.mxu0 0
      %1063 = vmatprep.subr.bf16.mxu0 0
      %1064 = vmatpush1.bf16.xpose.msra.mxu0 0
      %1065 = vmatprep.subr.bf16.mxu0 0
      %1066 = vmatpush1.bf16.xpose.msra.mxu0 0
      %1067 = vmatprep.subr.bf16.mxu0 0
      %1068 = vmatpush1.bf16.xpose.msra.mxu0 0
      %1069 = vmatprep.subr.bf16.mxu0 0
      %1070 = vmatpush1.bf16.xpose.msra.mxu0 0
      %1071 = vmatprep.subr.bf16.mxu0 0
      %1072 = vmatpush1.bf16.xpose.msra.mxu0 0
      %1073 = vmatprep.subr.bf16.mxu0 0
      %1074 = vmatpush1.bf16.xpose.msra.mxu0 0
      %1075 = vmatprep.subr.bf16.mxu0 0
      %1076 = vmatpush1.bf16.xpose.msra.mxu0 0
      %1077 = vmatprep.subr.bf16.mxu0 0
      %1078 = vmatpush1.bf16.xpose.msra.mxu0 0
      %1079 = vmatprep.mubr.bf16.mxu0 0
      %1080 = vmatmul.mubr.bf16.gmra.mrb[0].mxu0 %v1042
      %v1081 = vpop.f32.mrb[0].mxu0
      %v1082 = vadd.f32 0.0, %v1081
      %v1083 = vpop.f32.mrb[0].mxu0
      %v1084 = vpop.f32.mrb[0].mxu0
      %v1085 = vpop.f32.mrb[0].mxu0
      %1086 = vdwg.mxu0
      %v1087 = vsel %vm930, %v1082, -inf
      %1088 = vmax.xlane.f32.xlu0 %v1087
      %v1089 = vpop.xlane.xlu0 %1088
      %v1090 = vsub.f32 %v1082, %v1089
      %v1091 = vmul.f32 %v1090, 1.442695
      %v1092 = vpow.pop %v1091
      %v1093 = vsel %vm930, %v1092, 0.0
      %1094 = vadd.xlane.f32.xlu0 %v1093
      %v1095 = vpop.xlane.xlu0 %1094
      %v1096 = vrcp.pop %v1095
      %v1097 = vmul.f32 %v1092, %v1096
      %v1098 = vpack.c.bf16 %v1097, %v1097
      %1100 = vrot.lane.b32.xlu0 %v926, 120
      %v1101 = vpop.permute.xlu0 %1100
      %v1103 = vsel %vm930, %v1098, 0
      %v1106 = vsel %vm992, %v1101, 0
      %1108 = vmatprep.subr.bf16.mxu0 0
      %1109 = vmatpush1.bf16.msra.mxu0 %v1106
      %1110 = vmatprep.subr.bf16.mxu0 0
      %1111 = vmatpush1.bf16.msra.mxu0 0
      %1112 = vmatprep.subr.bf16.mxu0 0
      %1113 = vmatpush1.bf16.msra.mxu0 0
      %1114 = vmatprep.subr.bf16.mxu0 0
      %1115 = vmatpush1.bf16.msra.mxu0 0
      %1116 = vmatprep.subr.bf16.mxu0 0
      %1117 = vmatpush1.bf16.msra.mxu0 0
      %1118 = vmatprep.subr.bf16.mxu0 0
      %1119 = vmatpush1.bf16.msra.mxu0 0
      %1120 = vmatprep.subr.bf16.mxu0 0
      %1121 = vmatpush1.bf16.msra.mxu0 0
      %1122 = vmatprep.subr.bf16.mxu0 0
      %1123 = vmatpush1.bf16.msra.mxu0 0
      %1124 = vmatprep.subr.bf16.mxu0 0
      %1125 = vmatpush1.bf16.msra.mxu0 0
      %1126 = vmatprep.subr.bf16.mxu0 0
      %1127 = vmatpush1.bf16.msra.mxu0 0
      %1128 = vmatprep.subr.bf16.mxu0 0
      %1129 = vmatpush1.bf16.msra.mxu0 0
      %1130 = vmatprep.subr.bf16.mxu0 0
      %1131 = vmatpush1.bf16.msra.mxu0 0
      %1132 = vmatprep.subr.bf16.mxu0 0
      %1133 = vmatpush1.bf16.msra.mxu0 0
      %1134 = vmatprep.subr.bf16.mxu0 0
      %1135 = vmatpush1.bf16.msra.mxu0 0
      %1136 = vmatprep.subr.bf16.mxu0 0
      %1137 = vmatpush1.bf16.msra.mxu0 0
      %1138 = vmatprep.subr.bf16.mxu0 0
      %1139 = vmatpush1.bf16.msra.mxu0 0
      %1140 = vmatprep.mubr.bf16.mxu0 0
      %1141 = vmatmul.mubr.bf16.gmra.mrb[0].mxu0 %v1103
      %v1142 = vpop.f32.mrb[0].mxu0
      %v1143 = vadd.f32 0.0, %v1142
      %v1144 = vpop.f32.mrb[0].mxu0
      %v1145 = vpop.f32.mrb[0].mxu0
      %v1146 = vpop.f32.mrb[0].mxu0
      %1147 = vdwg.mxu0
      %1148 = vrot.lane.b32.xlu0 %v924, 112
      %v1149 = vpop.permute.xlu0 %1148
      %1150 = vrot.lane.b32.xlu0 %v925, 80
      %v1151 = vpop.permute.xlu0 %1150
      %v1153 = vsel %vm930, %v1149, 0
      %v1156 = vsel %vm930, %v1151, 0
      %1158 = vmatprep.subr.bf16.mxu0 0
      %1159 = vmatpush1.bf16.xpose.msra.mxu0 %v1156
      %1160 = vmatprep.subr.bf16.mxu0 0
      %1161 = vmatpush1.bf16.xpose.msra.mxu0 0
      %1162 = vmatprep.subr.bf16.mxu0 0
      %1163 = vmatpush1.bf16.xpose.msra.mxu0 0
      %1164 = vmatprep.subr.bf16.mxu0 0
      %1165 = vmatpush1.bf16.xpose.msra.mxu0 0
      %1166 = vmatprep.subr.bf16.mxu0 0
      %1167 = vmatpush1.bf16.xpose.msra.mxu0 0
      %1168 = vmatprep.subr.bf16.mxu0 0
      %1169 = vmatpush1.bf16.xpose.msra.mxu0 0
      %1170 = vmatprep.subr.bf16.mxu0 0
      %1171 = vmatpush1.bf16.xpose.msra.mxu0 0
      %1172 = vmatprep.subr.bf16.mxu0 0
      %1173 = vmatpush1.bf16.xpose.msra.mxu0 0
      %1174 = vmatprep.subr.bf16.mxu0 0
      %1175 = vmatpush1.bf16.xpose.msra.mxu0 0
      %1176 = vmatprep.subr.bf16.mxu0 0
      %1177 = vmatpush1.bf16.xpose.msra.mxu0 0
      %1178 = vmatprep.subr.bf16.mxu0 0
      %1179 = vmatpush1.bf16.xpose.msra.mxu0 0
      %1180 = vmatprep.subr.bf16.mxu0 0
      %1181 = vmatpush1.bf16.xpose.msra.mxu0 0
      %1182 = vmatprep.subr.bf16.mxu0 0
      %1183 = vmatpush1.bf16.xpose.msra.mxu0 0
      %1184 = vmatprep.subr.bf16.mxu0 0
      %1185 = vmatpush1.bf16.xpose.msra.mxu0 0
      %1186 = vmatprep.subr.bf16.mxu0 0
      %1187 = vmatpush1.bf16.xpose.msra.mxu0 0
      %1188 = vmatprep.subr.bf16.mxu0 0
      %1189 = vmatpush1.bf16.xpose.msra.mxu0 0
      %1190 = vmatprep.mubr.bf16.mxu0 0
      %1191 = vmatmul.mubr.bf16.gmra.mrb[0].mxu0 %v1153
      %v1192 = vpop.f32.mrb[0].mxu0
      %v1193 = vadd.f32 0.0, %v1192
      %v1194 = vpop.f32.mrb[0].mxu0
      %v1195 = vpop.f32.mrb[0].mxu0
      %v1196 = vpop.f32.mrb[0].mxu0
      %1197 = vdwg.mxu0
      %v1198 = vsel %vm930, %v1193, -inf
      %1199 = vmax.xlane.f32.xlu0 %v1198
      %v1200 = vpop.xlane.xlu0 %1199
      %v1201 = vsub.f32 %v1193, %v1200
      %v1202 = vmul.f32 %v1201, 1.442695
      %v1203 = vpow.pop %v1202
      %v1204 = vsel %vm930, %v1203, 0.0
      %1205 = vadd.xlane.f32.xlu0 %v1204
      %v1206 = vpop.xlane.xlu0 %1205
      %v1207 = vrcp.pop %v1206
      %v1208 = vmul.f32 %v1203, %v1207
      %v1209 = vpack.c.bf16 %v1208, %v1208
      %1210 = vrot.lane.b32.xlu0 %v926, 112
      %v1211 = vpop.permute.xlu0 %1210
      %v1213 = vsel %vm930, %v1209, 0
      %v1216 = vsel %vm992, %v1211, 0
      %1218 = vmatprep.subr.bf16.mxu0 0
      %1219 = vmatpush1.bf16.msra.mxu0 %v1216
      %1220 = vmatprep.subr.bf16.mxu0 0
      %1221 = vmatpush1.bf16.msra.mxu0 0
      %1222 = vmatprep.subr.bf16.mxu0 0
      %1223 = vmatpush1.bf16.msra.mxu0 0
      %1224 = vmatprep.subr.bf16.mxu0 0
      %1225 = vmatpush1.bf16.msra.mxu0 0
      %1226 = vmatprep.subr.bf16.mxu0 0
      %1227 = vmatpush1.bf16.msra.mxu0 0
      %1228 = vmatprep.subr.bf16.mxu0 0
      %1229 = vmatpush1.bf16.msra.mxu0 0
      %1230 = vmatprep.subr.bf16.mxu0 0
      %1231 = vmatpush1.bf16.msra.mxu0 0
      %1232 = vmatprep.subr.bf16.mxu0 0
      %1233 = vmatpush1.bf16.msra.mxu0 0
      %1234 = vmatprep.subr.bf16.mxu0 0
      %1235 = vmatpush1.bf16.msra.mxu0 0
      %1236 = vmatprep.subr.bf16.mxu0 0
      %1237 = vmatpush1.bf16.msra.mxu0 0
      %1238 = vmatprep.subr.bf16.mxu0 0
      %1239 = vmatpush1.bf16.msra.mxu0 0
      %1240 = vmatprep.subr.bf16.mxu0 0
      %1241 = vmatpush1.bf16.msra.mxu0 0
      %1242 = vmatprep.subr.bf16.mxu0 0
      %1243 = vmatpush1.bf16.msra.mxu0 0
      %1244 = vmatprep.subr.bf16.mxu0 0
      %1245 = vmatpush1.bf16.msra.mxu0 0
      %1246 = vmatprep.subr.bf16.mxu0 0
      %1247 = vmatpush1.bf16.msra.mxu0 0
      %1248 = vmatprep.subr.bf16.mxu0 0
      %1249 = vmatpush1.bf16.msra.mxu0 0
      %1250 = vmatprep.mubr.bf16.mxu0 0
      %1251 = vmatmul.mubr.bf16.gmra.mrb[0].mxu0 %v1213
      %v1252 = vpop.f32.mrb[0].mxu0
      %v1253 = vadd.f32 0.0, %v1252
      %v1254 = vpop.f32.mrb[0].mxu0
      %v1255 = vpop.f32.mrb[0].mxu0
      %v1256 = vpop.f32.mrb[0].mxu0
      %1257 = vdwg.mxu0
      %1258 = vrot.lane.b32.xlu0 %v924, 104
      %v1259 = vpop.permute.xlu0 %1258
      %1260 = vrot.lane.b32.xlu0 %v925, 72
      %v1261 = vpop.permute.xlu0 %1260
      %v1263 = vsel %vm930, %v1259, 0
      %v1266 = vsel %vm930, %v1261, 0
      %1268 = vmatprep.subr.bf16.mxu0 0
      %1269 = vmatpush1.bf16.xpose.msra.mxu0 %v1266
      %1270 = vmatprep.subr.bf16.mxu0 0
      %1271 = vmatpush1.bf16.xpose.msra.mxu0 0
      %1272 = vmatprep.subr.bf16.mxu0 0
      %1273 = vmatpush1.bf16.xpose.msra.mxu0 0
      %1274 = vmatprep.subr.bf16.mxu0 0
      %1275 = vmatpush1.bf16.xpose.msra.mxu0 0
      %1276 = vmatprep.subr.bf16.mxu0 0
      %1277 = vmatpush1.bf16.xpose.msra.mxu0 0
      %1278 = vmatprep.subr.bf16.mxu0 0
      %1279 = vmatpush1.bf16.xpose.msra.mxu0 0
      %1280 = vmatprep.subr.bf16.mxu0 0
      %1281 = vmatpush1.bf16.xpose.msra.mxu0 0
      %1282 = vmatprep.subr.bf16.mxu0 0
      %1283 = vmatpush1.bf16.xpose.msra.mxu0 0
      %1284 = vmatprep.subr.bf16.mxu0 0
      %1285 = vmatpush1.bf16.xpose.msra.mxu0 0
      %1286 = vmatprep.subr.bf16.mxu0 0
      %1287 = vmatpush1.bf16.xpose.msra.mxu0 0
      %1288 = vmatprep.subr.bf16.mxu0 0
      %1289 = vmatpush1.bf16.xpose.msra.mxu0 0
      %1290 = vmatprep.subr.bf16.mxu0 0
      %1291 = vmatpush1.bf16.xpose.msra.mxu0 0
      %1292 = vmatprep.subr.bf16.mxu0 0
      %1293 = vmatpush1.bf16.xpose.msra.mxu0 0
      %1294 = vmatprep.subr.bf16.mxu0 0
      %1295 = vmatpush1.bf16.xpose.msra.mxu0 0
      %1296 = vmatprep.subr.bf16.mxu0 0
      %1297 = vmatpush1.bf16.xpose.msra.mxu0 0
      %1298 = vmatprep.subr.bf16.mxu0 0
      %1299 = vmatpush1.bf16.xpose.msra.mxu0 0
      %1300 = vmatprep.mubr.bf16.mxu0 0
      %1301 = vmatmul.mubr.bf16.gmra.mrb[0].mxu0 %v1263
      %v1302 = vpop.f32.mrb[0].mxu0
      %v1303 = vadd.f32 0.0, %v1302
      %v1304 = vpop.f32.mrb[0].mxu0
      %v1305 = vpop.f32.mrb[0].mxu0
      %v1306 = vpop.f32.mrb[0].mxu0
      %1307 = vdwg.mxu0
      %v1308 = vsel %vm930, %v1303, -inf
      %1309 = vmax.xlane.f32.xlu0 %v1308
      %v1310 = vpop.xlane.xlu0 %1309
      %v1311 = vsub.f32 %v1303, %v1310
      %v1312 = vmul.f32 %v1311, 1.442695
      %v1313 = vpow.pop %v1312
      %v1314 = vsel %vm930, %v1313, 0.0
      %1315 = vadd.xlane.f32.xlu0 %v1314
      %v1316 = vpop.xlane.xlu0 %1315
      %v1317 = vrcp.pop %v1316
      %v1318 = vmul.f32 %v1313, %v1317
      %v1319 = vpack.c.bf16 %v1318, %v1318
      %1320 = vrot.lane.b32.xlu0 %v926, 104
      %v1321 = vpop.permute.xlu0 %1320
      %v1323 = vsel %vm930, %v1319, 0
      %v1326 = vsel %vm992, %v1321, 0
      %1328 = vmatprep.subr.bf16.mxu0 0
      %1329 = vmatpush1.bf16.msra.mxu0 %v1326
      %1330 = vmatprep.subr.bf16.mxu0 0
      %1331 = vmatpush1.bf16.msra.mxu0 0
      %1332 = vmatprep.subr.bf16.mxu0 0
      %1333 = vmatpush1.bf16.msra.mxu0 0
      %1334 = vmatprep.subr.bf16.mxu0 0
      %1335 = vmatpush1.bf16.msra.mxu0 0
      %1336 = vmatprep.subr.bf16.mxu0 0
      %1337 = vmatpush1.bf16.msra.mxu0 0
      %1338 = vmatprep.subr.bf16.mxu0 0
      %1339 = vmatpush1.bf16.msra.mxu0 0
      %1340 = vmatprep.subr.bf16.mxu0 0
      %1341 = vmatpush1.bf16.msra.mxu0 0
      %1342 = vmatprep.subr.bf16.mxu0 0
      %1343 = vmatpush1.bf16.msra.mxu0 0
      %1344 = vmatprep.subr.bf16.mxu0 0
      %1345 = vmatpush1.bf16.msra.mxu0 0
      %1346 = vmatprep.subr.bf16.mxu0 0
      %1347 = vmatpush1.bf16.msra.mxu0 0
      %1348 = vmatprep.subr.bf16.mxu0 0
      %1349 = vmatpush1.bf16.msra.mxu0 0
      %1350 = vmatprep.subr.bf16.mxu0 0
      %1351 = vmatpush1.bf16.msra.mxu0 0
      %1352 = vmatprep.subr.bf16.mxu0 0
      %1353 = vmatpush1.bf16.msra.mxu0 0
      %1354 = vmatprep.subr.bf16.mxu0 0
      %1355 = vmatpush1.bf16.msra.mxu0 0
      %1356 = vmatprep.subr.bf16.mxu0 0
      %1357 = vmatpush1.bf16.msra.mxu0 0
      %1358 = vmatprep.subr.bf16.mxu0 0
      %1359 = vmatpush1.bf16.msra.mxu0 0
      %1360 = vmatprep.mubr.bf16.mxu0 0
      %1361 = vmatmul.mubr.bf16.gmra.mrb[0].mxu0 %v1323
      %v1362 = vpop.f32.mrb[0].mxu0
      %v1363 = vadd.f32 0.0, %v1362
      %v1364 = vpop.f32.mrb[0].mxu0
      %v1365 = vpop.f32.mrb[0].mxu0
      %v1366 = vpop.f32.mrb[0].mxu0
      %1367 = vdwg.mxu0
      %1369 = vrot.lane.b32.xlu0 %v1143, 8
      %v1370 = vpop.permute.xlu0 %1369
      %1373 = vrot.lane.b32.xlu0 %v1253, 16
      %v1374 = vpop.permute.xlu0 %1373
      %1377 = vrot.lane.b32.xlu0 %v1363, 24
      %v1378 = vpop.permute.xlu0 %1377
      %v1380 = vsel %vm930, %v1031, %v1370
      %vm1381 = vcmask 130048
      %v1382 = vsel %vm1381, %v1380, %v1374
      %vm1383 = vcmask 195584
      %v1384 = vsel %vm1383, %v1382, %v1378
      %v1385 = vpack.c.bf16 %v1384, %v1384
      %v1386 = vld [vmem:[%s11] sm:$0xf]
      %v1387 = vld [vmem:[%s11 + $0x4] sm:$0xf]
      %v1388 = vld [vmem:[%s11 + $0x8] sm:$0xf]
      %v1389 = vld [vmem:[%s11 + $0xc] sm:$0xf]
      %v1390 = vld [vmem:[%s12] sm:$0x1]
      %v1392 = vlaneseq
      %v1393 = vshrl.u32 %v1392, 7
      %v1394 = vsub.s32 0, %v1393
      %v1395 = vrot.slane %v1390, %v1394
      %v1401 = vunpack.c.l.b16 %v1386
      %v1402 = vunpack.c.l.b16 %v1387
      %v1403 = vunpack.c.l.b16 %v1388
      %v1404 = vunpack.c.l.b16 %v1389
      %v1405 = vpack.c.b16 %v1402, %v1401
      %v1406 = vpack.c.b16 %v1404, %v1403
      %v1410 = vsel %vm713, %v1385, 0
      %1412 = vmatprep.subr.bf16.mxu0 0
      %1413 = vmatpush1.bf16.msra.mxu0 %v1405
      %1414 = vmatprep.subr.bf16.mxu0 0
      %1415 = vmatpush1.bf16.msra.mxu0 %v1406
      %1416 = vmatprep.subr.bf16.mxu0 0
      %1417 = vmatpush1.bf16.msra.mxu0 0
      %1418 = vmatprep.subr.bf16.mxu0 0
      %1419 = vmatpush1.bf16.msra.mxu0 0
      %1420 = vmatprep.subr.bf16.mxu0 0
      %1421 = vmatpush1.bf16.msra.mxu0 0
      %1422 = vmatprep.subr.bf16.mxu0 0
      %1423 = vmatpush1.bf16.msra.mxu0 0
      %1424 = vmatprep.subr.bf16.mxu0 0
      %1425 = vmatpush1.bf16.msra.mxu0 0
      %1426 = vmatprep.subr.bf16.mxu0 0
      %1427 = vmatpush1.bf16.msra.mxu0 0
      %1428 = vmatprep.subr.bf16.mxu0 0
      %1429 = vmatpush1.bf16.msra.mxu0 0
      %1430 = vmatprep.subr.bf16.mxu0 0
      %1431 = vmatpush1.bf16.msra.mxu0 0
      %1432 = vmatprep.subr.bf16.mxu0 0
      %1433 = vmatpush1.bf16.msra.mxu0 0
      %1434 = vmatprep.subr.bf16.mxu0 0
      %1435 = vmatpush1.bf16.msra.mxu0 0
      %1436 = vmatprep.subr.bf16.mxu0 0
      %1437 = vmatpush1.bf16.msra.mxu0 0
      %1438 = vmatprep.subr.bf16.mxu0 0
      %1439 = vmatpush1.bf16.msra.mxu0 0
      %1440 = vmatprep.subr.bf16.mxu0 0
      %1441 = vmatpush1.bf16.msra.mxu0 0
      %1442 = vmatprep.subr.bf16.mxu0 0
      %1443 = vmatpush1.bf16.msra.mxu0 0
      %1444 = vmatprep.mubr.bf16.mxu0 0
      %1445 = vmatmul.mubr.bf16.gmra.mrb[0].mxu0 %v1410
      %v1446 = vpop.f32.mrb[0].mxu0
      %v1447 = vadd.f32 %v1395, %v1446
      %v1448 = vpop.f32.mrb[0].mxu0
      %v1449 = vpop.f32.mrb[0].mxu0
      %v1450 = vpop.f32.mrb[0].mxu0
      %1451 = vdwg.mxu0
      %v1452 = vadd.f32 %v787, %v1447
      %v1453 = vld [vmem:[%s13] sm:$0x1]
      %v1454 = vld [vmem:[%s14] sm:$0x1]
      %v1455 = vsel %vm713, %v1452, 0.0
      %1456 = vadd.xlane.f32.xlu0 %v1455
      %v1457 = vpop.xlane.xlu0 %1456
      %v1458 = vmul.f32 %v1457, %v763
      %v1459 = vsub.f32 %v1452, %v1458
      %v1460 = vmul.f32 %v1459, %v1459
      %v1461 = vsel %vm713, %v1460, 0.0
      %1462 = vadd.xlane.f32.xlu0 %v1461
      %v1463 = vpop.xlane.xlu0 %1462
      %v1464 = vmul.f32 %v1463, %v763
      %v1465 = vadd.f32 %v1464, 1e-05
      %v1466 = vrsqrt.pop %v1465
      %v1467 = vmul.f32 %v1459, %v1466
      %v1469 = vlaneseq
      %v1470 = vshrl.u32 %v1469, 7
      %v1471 = vsub.s32 0, %v1470
      %v1472 = vrot.slane %v1453, %v1471
      %v1474 = vmul.f32 %v1467, %v1472
      %v1476 = vlaneseq
      %v1477 = vshrl.u32 %v1476, 7
      %v1478 = vsub.s32 0, %v1477
      %v1479 = vrot.slane %v1454, %v1478
      %v1481 = vadd.f32 %v1474, %v1479
      %v1482 = vpack.c.bf16 %v1481, %v1481
      %v1483 = vld [vmem:[%s15] sm:$0xf]
      %v1484 = vld [vmem:[%s15 + $0x4] sm:$0xf]
      %v1485 = vld [vmem:[%s15 + $0x8] sm:$0xf]
      %v1486 = vld [vmem:[%s15 + $0xc] sm:$0xf]
      %v1487 = vld [vmem:[%s16] sm:$0x1]
      %v1489 = vlaneseq
      %v1490 = vshrl.u32 %v1489, 7
      %v1491 = vsub.s32 0, %v1490
      %v1492 = vrot.slane %v1487, %v1491
      %v1498 = vunpack.c.l.b16 %v1483
      %v1499 = vunpack.c.l.b16 %v1484
      %v1500 = vunpack.c.l.b16 %v1485
      %v1501 = vunpack.c.l.b16 %v1486
      %v1502 = vpack.c.b16 %v1499, %v1498
      %v1503 = vpack.c.b16 %v1501, %v1500
      %v1507 = vsel %vm713, %v1482, 0
      %1509 = vmatprep.subr.bf16.mxu0 0
      %1510 = vmatpush1.bf16.msra.mxu0 %v1502
      %1511 = vmatprep.subr.bf16.mxu0 0
      %1512 = vmatpush1.bf16.msra.mxu0 %v1503
      %1513 = vmatprep.subr.bf16.mxu0 0
      %1514 = vmatpush1.bf16.msra.mxu0 0
      %1515 = vmatprep.subr.bf16.mxu0 0
      %1516 = vmatpush1.bf16.msra.mxu0 0
      %1517 = vmatprep.subr.bf16.mxu0 0
      %1518 = vmatpush1.bf16.msra.mxu0 0
      %1519 = vmatprep.subr.bf16.mxu0 0
      %1520 = vmatpush1.bf16.msra.mxu0 0
      %1521 = vmatprep.subr.bf16.mxu0 0
      %1522 = vmatpush1.bf16.msra.mxu0 0
      %1523 = vmatprep.subr.bf16.mxu0 0
      %1524 = vmatpush1.bf16.msra.mxu0 0
      %1525 = vmatprep.subr.bf16.mxu0 0
      %1526 = vmatpush1.bf16.msra.mxu0 0
      %1527 = vmatprep.subr.bf16.mxu0 0
      %1528 = vmatpush1.bf16.msra.mxu0 0
      %1529 = vmatprep.subr.bf16.mxu0 0
      %1530 = vmatpush1.bf16.msra.mxu0 0
      %1531 = vmatprep.subr.bf16.mxu0 0
      %1532 = vmatpush1.bf16.msra.mxu0 0
      %1533 = vmatprep.subr.bf16.mxu0 0
      %1534 = vmatpush1.bf16.msra.mxu0 0
      %1535 = vmatprep.subr.bf16.mxu0 0
      %1536 = vmatpush1.bf16.msra.mxu0 0
      %1537 = vmatprep.subr.bf16.mxu0 0
      %1538 = vmatpush1.bf16.msra.mxu0 0
      %1539 = vmatprep.subr.bf16.mxu0 0
      %1540 = vmatpush1.bf16.msra.mxu0 0
      %1541 = vmatprep.mubr.bf16.mxu0 0
      %1542 = vmatmul.mubr.bf16.gmra.mrb[0].mxu0 %v1507
      %v1543 = vpop.f32.mrb[0].mxu0
      %v1544 = vadd.f32 %v1492, %v1543
      %v1545 = vpop.f32.mrb[0].mxu0
      %v1546 = vpop.f32.mrb[0].mxu0
      %v1547 = vpop.f32.mrb[0].mxu0
      %1548 = vdwg.mxu0
      %v1549 = vmax.f32 %v1544, 0.0
      %v1550 = vpack.c.bf16 %v1549, %v1549
      %v1551 = vld [vmem:[%s17] sm:$0xf]
      %v1552 = vld [vmem:[%s17 + $0x4] sm:$0xf]
      %v1553 = vld [vmem:[%s17 + $0x8] sm:$0xf]
      %v1554 = vld [vmem:[%s17 + $0xc] sm:$0xf]
      %v1555 = vld [vmem:[%s17 + $0x10] sm:$0xf]
      %v1556 = vld [vmem:[%s17 + $0x14] sm:$0xf]
      %v1557 = vld [vmem:[%s17 + $0x18] sm:$0xf]
      %v1558 = vld [vmem:[%s17 + $0x1c] sm:$0xf]
      %v1559 = vld [vmem:[%s18] sm:$0x1]
      %v1561 = vlaneseq
      %v1562 = vshrl.u32 %v1561, 7
      %v1563 = vsub.s32 0, %v1562
      %v1564 = vrot.slane %v1559, %v1563
      %v1574 = vunpack.c.l.b16 %v1551
      %v1575 = vunpack.c.l.b16 %v1552
      %v1576 = vunpack.c.l.b16 %v1553
      %v1577 = vunpack.c.l.b16 %v1554
      %v1578 = vunpack.c.l.b16 %v1555
      %v1579 = vunpack.c.l.b16 %v1556
      %v1580 = vunpack.c.l.b16 %v1557
      %v1581 = vunpack.c.l.b16 %v1558
      %v1582 = vpack.c.b16 %v1575, %v1574
      %v1583 = vpack.c.b16 %v1577, %v1576
      %v1584 = vpack.c.b16 %v1579, %v1578
      %v1585 = vpack.c.b16 %v1581, %v1580
      %vm1590 = vcmask 523264
      %v1592 = vsel %vm1590, %v1550, 0
      %1594 = vmatprep.subr.bf16.mxu0 0
      %1595 = vmatpush1.bf16.msra.mxu0 %v1582
      %1596 = vmatprep.subr.bf16.mxu0 0
      %1597 = vmatpush1.bf16.msra.mxu0 %v1583
      %1598 = vmatprep.subr.bf16.mxu0 0
      %1599 = vmatpush1.bf16.msra.mxu0 %v1584
      %1600 = vmatprep.subr.bf16.mxu0 0
      %1601 = vmatpush1.bf16.msra.mxu0 %v1585
      %1602 = vmatprep.subr.bf16.mxu0 0
      %1603 = vmatpush1.bf16.msra.mxu0 0
      %1604 = vmatprep.subr.bf16.mxu0 0
      %1605 = vmatpush1.bf16.msra.mxu0 0
      %1606 = vmatprep.subr.bf16.mxu0 0
      %1607 = vmatpush1.bf16.msra.mxu0 0
      %1608 = vmatprep.subr.bf16.mxu0 0
      %1609 = vmatpush1.bf16.msra.mxu0 0
      %1610 = vmatprep.subr.bf16.mxu0 0
      %1611 = vmatpush1.bf16.msra.mxu0 0
      %1612 = vmatprep.subr.bf16.mxu0 0
      %1613 = vmatpush1.bf16.msra.mxu0 0
      %1614 = vmatprep.subr.bf16.mxu0 0
      %1615 = vmatpush1.bf16.msra.mxu0 0
      %1616 = vmatprep.subr.bf16.mxu0 0
      %1617 = vmatpush1.bf16.msra.mxu0 0
      %1618 = vmatprep.subr.bf16.mxu0 0
      %1619 = vmatpush1.bf16.msra.mxu0 0
      %1620 = vmatprep.subr.bf16.mxu0 0
      %1621 = vmatpush1.bf16.msra.mxu0 0
      %1622 = vmatprep.subr.bf16.mxu0 0
      %1623 = vmatpush1.bf16.msra.mxu0 0
      %1624 = vmatprep.subr.bf16.mxu0 0
      %1625 = vmatpush1.bf16.msra.mxu0 0
      %1626 = vmatprep.mubr.bf16.mxu0 0
      %1627 = vmatmul.mubr.bf16.gmra.mrb[0].mxu0 %v1592
      %v1628 = vpop.f32.mrb[0].mxu0
      %v1629 = vadd.f32 %v1564, %v1628
      %v1630 = vpop.f32.mrb[0].mxu0
      %v1631 = vpop.f32.mrb[0].mxu0
      %v1632 = vpop.f32.mrb[0].mxu0
      %1633 = vdwg.mxu0
      %v1634 = vadd.f32 %v1481, %v1629
      %v1635 = vld [vmem:[%s19] sm:$0x1]
      %v1636 = vld [vmem:[%s20] sm:$0x1]
      %v1637 = vsel %vm713, %v1634, 0.0
      %1638 = vadd.xlane.f32.xlu0 %v1637
      %v1639 = vpop.xlane.xlu0 %1638
      %v1640 = vmul.f32 %v1639, %v763
      %v1641 = vsub.f32 %v1634, %v1640
      %v1642 = vmul.f32 %v1641, %v1641
      %v1643 = vsel %vm713, %v1642, 0.0
      %1644 = vadd.xlane.f32.xlu0 %v1643
      %v1645 = vpop.xlane.xlu0 %1644
      %v1646 = vmul.f32 %v1645, %v763
      %v1647 = vadd.f32 %v1646, 1e-05
      %v1648 = vrsqrt.pop %v1647
      %v1649 = vmul.f32 %v1641, %v1648
      %v1651 = vlaneseq
      %v1652 = vshrl.u32 %v1651, 7
      %v1653 = vsub.s32 0, %v1652
      %v1654 = vrot.slane %v1635, %v1653
      %v1656 = vmul.f32 %v1649, %v1654
      %v1658 = vlaneseq
      %v1659 = vshrl.u32 %v1658, 7
      %v1660 = vsub.s32 0, %v1659
      %v1661 = vrot.slane %v1636, %v1660
      %v1663 = vadd.f32 %v1656, %v1661
      %1664 = vst.msk [vmem:[%s685] sm:$0xff] %vm713, %v1663
      %p1665 = scmp.lt.s32.totalorder %s32, 1
      %s1666 = scalar_select %p1665, %s32, 1
      %s1667 = smul.addr %s1666, 8
      %s1668 = scalar_lea.vmem %s21, %s1667
      // Predicated region
      $region105: #{mask4former_forward.31} parent=103 // pred_check
        %p1669 = pneg %p506
      $region106: #{mask4former_forward.31} parent=103 // pred_check_branch
        %1671 = sbr.rel (%p1669) target = $region108
      $region107: #{mask4former_forward.31} parent=103 // pred_region
        _
      $region108: #{mask4former_forward.31} parent=103 // pred_fallthru
        _
    $region104: #{mask4former_forward.31} parent=5 // pred_fallthru
      _
    %p1672 = scmp.le.s32.totalorder 2, %s27
    // Predicated region
    $region109: #{mask4former_forward.31} parent=5 // pred_check
      %p1673 = pneg %p1672
    $region110: #{mask4former_forward.31} parent=5 // pred_check_branch
      %1675 = sbr.rel (%p1673) target = $region112
    $region111: #{mask4former_forward.31} parent=5 // pred_region
      %s1676 = ssub.s32 %s27, 2
      // Predicated region
      $region113: #{mask4former_forward.31} parent=111 // pred_check
        %p1677 = pneg %p512
      $region114: #{mask4former_forward.31} parent=111 // pred_check_branch
        %1679 = sbr.rel (%p1677) target = $region116
      $region115: #{mask4former_forward.31} parent=111 // pred_region
        %p1680 = scmp.lt.s32.totalorder %s33, 1
        %s1681 = scalar_select %p1680, %s33, 1
        %s1682 = smul.addr %s1681, 8
        %s1683 = scalar_lea.vmem %s21, %s1682
      $region116: #{mask4former_forward.31} parent=111 // pred_fallthru
        _
    $region112: #{mask4former_forward.31} parent=5 // pred_fallthru
      _
  $region6: #{mask4former_forward.31} parent=0 // loop_footer
    %s31 = sadd.s32 1, %s27
  $region7: #{mask4former_forward.31} parent=0 // loop_footer_branch
    %26 = sbr.rel target = $region3
  $region8: #{mask4former_forward.31} parent=0 // loop_exit
    _

// kernel: mask4former_forward.30
$region0: #{mask4former_forward.30}
  #allocation0 [shape = 'u32[]', space=smem, size = 0x4, offset = 0x4, fixed_abs, tag = 'smem constant byte address 0x4 - core index']
  #allocation1 [shape = 'u32[144,128]{1,0:T(1,128)}', space=vmem, size = 0x12000, scoped, tag = 'internal scratch']
  #allocation2 [shape = 'f32[4,8,1]{2,1,0:T(8,128)}', space=vmem, size = 0x4000, scoped, tag = 'scratch operand']
  #allocation3 [shape = 'f32[4,8,1]{2,1,0:T(8,128)}', space=vmem, size = 0x4000, scoped, tag = 'scratch operand']
  #allocation4 [shape = 'f32[4,8,8]{2,1,0:T(8,128)}', space=vmem, size = 0x4000, scoped, tag = 'scratch operand']
  %s0 = inlined_call_operand.vmem [shape: f32[2,8,32], index: 0, kind: input, shape index: {}]
  %s1 = inlined_call_operand.vmem [shape: f32[2,8,32], index: 1, kind: input, shape index: {}]
  %s2 = inlined_call_operand.vmem [shape: bf16[32,32], index: 2, kind: input, shape index: {}]
  %s3 = inlined_call_operand.vmem [shape: f32[1,32], index: 3, kind: input, shape index: {}]
  %s4 = inlined_call_operand.vmem [shape: bf16[2,16,32], index: 4, kind: input, shape index: {}]
  %s5 = inlined_call_operand.vmem [shape: bf16[2,16,32], index: 5, kind: input, shape index: {}]
  %s6 = inlined_call_operand.vmem [shape: s8[2,8,16], index: 6, kind: input, shape index: {}]
  %s7 = inlined_call_operand.vmem [shape: bf16[2,8,32], index: 7, kind: output, shape index: {}]
  %s8 = sld [smem:[#allocation0]]
  $region69: #{mask4former_forward.30} parent=0
    _
  %s10 = ssub.s32 1, %s8
  %s11 = scalar_select 0, %s10, %s8
  loop: start=0, step=1, limit=4
  $region2: #{mask4former_forward.30} parent=0 // loop_pre_header
    _
  $region3: #{mask4former_forward.30} parent=0 // loop_header
    %s13 = sphi 0, %s17
    %p14 = scmp.ge.s32.totalorder %s13, 4
    %s20 = sphi 0, %s32
    %s21 = sphi 0, %s28
    %s22 = sphi 0, %s20
    %s23 = sphi 0, %s21
    %s24 = sphi 0, %s22
    %s25 = sphi 0, %s23
    %s35 = sphi 0, %s37
    %s38 = sphi 0, %s35
    %s39 = sphi 0, %s38
    %s55 = sphi 0, %s39
    %s61 = sphi 0, %s63
    %s64 = sphi 0, %s61
    %s65 = sphi 0, %s64
    %s81 = sphi 0, %s65
    %s85 = sphi 0, %s85
    %s87 = sphi 0, %s85
    %s88 = sphi 0, %s87
    %s102 = sphi 0, %s88
    %s106 = sphi 0, %s106
    %s108 = sphi 0, %s106
    %s109 = sphi 0, %s108
    %s123 = sphi 0, %s109
    %s131 = sphi 0, %s133
    %s134 = sphi 0, %s131
    %s135 = sphi 0, %s134
    %s151 = sphi 0, %s135
    %s159 = sphi 0, %s161
    %s162 = sphi 0, %s159
    %s163 = sphi 0, %s162
    %s179 = sphi 0, %s163
    %s187 = sphi 0, %s189
    %s190 = sphi 0, %s187
    %s191 = sphi 0, %s190
    %s207 = sphi 0, %s191
    %s213 = sphi 0, %s215
    %s216 = sphi 0, %s213
    %s217 = sphi 0, %s216
    %s233 = sphi 0, %s217
  $region4: #{mask4former_forward.30} parent=0 // loop_header_branch
    %16 = sbr.rel (%p14) target = $region8
  $region5: #{mask4former_forward.30} parent=0 // loop_body
    %s18 = ssub.s32 %s13, 1
    %s19 = ssub.s32 %s13, 2
    %s26 = sadd.s32 1, %s21
    %p27 = scmp.ge.s32.totalorder %s26, 1
    %s28 = scalar_select %p27, 0, %s26
    %s29 = sadd.s32 1, %s20
    %s30 = scalar_select %p27, %s29, %s20
    %p31 = scmp.ge.s32.totalorder %s30, 2
    %s32 = scalar_select %p31, 0, %s30
    %s33 = ssub.s32 %s20, %s32
    %p34 = scmp.eq.s32.totalorder %s33, 0
    %s36 = sadd.s32 %s35, 1
    %s37 = scalar_select %p34, %s35, %s36
    %p40 = pneg %p34
    %p41 = scmp.eq.s32.totalorder %s13, 1
    %p42 = por %p40, %p41
    %p43 = scmp.ne.s32.totalorder %s35, %s38
    %p44 = scmp.eq.s32.totalorder %s13, 0
    %p45 = por %p43, %p44
    %p46 = scmp.ne.s32.totalorder %s35, %s38
    %p47 = scmp.eq.s32.totalorder %s18, 1
    %p48 = por %p46, %p47
    %p49 = scmp.ne.s32.totalorder %s38, %s39
    %p50 = scmp.eq.s32.totalorder %s18, 0
    %p51 = por %p49, %p50
    %p52 = scmp.ne.s32.totalorder %s38, %s39
    %p53 = scmp.eq.s32.totalorder %s19, 1
    %p54 = por %p52, %p53
    %p56 = scmp.ne.s32.totalorder %s39, %s55
    %p57 = scmp.eq.s32.totalorder %s19, 0
    %p58 = por %p56, %p57
    %s59 = ssub.s32 %s20, %s32
    %p60 = scmp.eq.s32.totalorder %s59, 0
    %s62 = sadd.s32 %s61, 1
    %s63 = scalar_select %p60, %s61, %s62
    %p66 = pneg %p60
    %p67 = scmp.eq.s32.totalorder %s13, 1
    %p68 = por %p66, %p67
    %p69 = scmp.ne.s32.totalorder %s61, %s64
    %p70 = scmp.eq.s32.totalorder %s13, 0
    %p71 = por %p69, %p70
    %p72 = scmp.ne.s32.totalorder %s61, %s64
    %p73 = scmp.eq.s32.totalorder %s18, 1
    %p74 = por %p72, %p73
    %p75 = scmp.ne.s32.totalorder %s64, %s65
    %p76 = scmp.eq.s32.totalorder %s18, 0
    %p77 = por %p75, %p76
    %p78 = scmp.ne.s32.totalorder %s64, %s65
    %p79 = scmp.eq.s32.totalorder %s19, 1
    %p80 = por %p78, %p79
    %p82 = scmp.ne.s32.totalorder %s65, %s81
    %p83 = scmp.eq.s32.totalorder %s19, 0
    %p84 = por %p82, %p83
    %s86 = sadd.s32 %s85, 1
    %p89 = scmp.eq.s32.totalorder %s13, 1
    %p90 = scmp.ne.s32.totalorder %s85, %s87
    %p91 = scmp.eq.s32.totalorder %s13, 0
    %p92 = por %p90, %p91
    %p93 = scmp.ne.s32.totalorder %s85, %s87
    %p94 = scmp.eq.s32.totalorder %s18, 1
    %p95 = por %p93, %p94
    %p96 = scmp.ne.s32.totalorder %s87, %s88
    %p97 = scmp.eq.s32.totalorder %s18, 0
    %p98 = por %p96, %p97
    %p99 = scmp.ne.s32.totalorder %s87, %s88
    %p100 = scmp.eq.s32.totalorder %s19, 1
    %p101 = por %p99, %p100
    %p103 = scmp.ne.s32.totalorder %s88, %s102
    %p104 = scmp.eq.s32.totalorder %s19, 0
    %p105 = por %p103, %p104
    %s107 = sadd.s32 %s106, 1
    %p110 = scmp.eq.s32.totalorder %s13, 1
    %p111 = scmp.ne.s32.totalorder %s106, %s108
    %p112 = scmp.eq.s32.totalorder %s13, 0
    %p113 = por %p111, %p112
    %p114 = scmp.ne.s32.totalorder %s106, %s108
    %p115 = scmp.eq.s32.totalorder %s18, 1
    %p116 = por %p114, %p115
    %p117 = scmp.ne.s32.totalorder %s108, %s109
    %p118 = scmp.eq.s32.totalorder %s18, 0
    %p119 = por %p117, %p118
    %p120 = scmp.ne.s32.totalorder %s108, %s109
    %p121 = scmp.eq.s32.totalorder %s19, 1
    %p122 = por %p120, %p121
    %p124 = scmp.ne.s32.totalorder %s109, %s123
    %p125 = scmp.eq.s32.totalorder %s19, 0
    %p126 = por %p124, %p125
    %s127 = ssub.s32 %s20, %s32
    %s128 = ssub.s32 %s21, %s28
    %s129 = sor.u32 %s127, %s128
    %p130 = scmp.eq.s32.totalorder %s129, 0
    %s132 = sadd.s32 %s131, 1
    %s133 = scalar_select %p130, %s131, %s132
    %p136 = pneg %p130
    %p137 = scmp.eq.s32.totalorder %s13, 1
    %p138 = por %p136, %p137
    %p139 = scmp.ne.s32.totalorder %s131, %s134
    %p140 = scmp.eq.s32.totalorder %s13, 0
    %p141 = por %p139, %p140
    %p142 = scmp.ne.s32.totalorder %s131, %s134
    %p143 = scmp.eq.s32.totalorder %s18, 1
    %p144 = por %p142, %p143
    %p145 = scmp.ne.s32.totalorder %s134, %s135
    %p146 = scmp.eq.s32.totalorder %s18, 0
    %p147 = por %p145, %p146
    %p148 = scmp.ne.s32.totalorder %s134, %s135
    %p149 = scmp.eq.s32.totalorder %s19, 1
    %p150 = por %p148, %p149
    %p152 = scmp.ne.s32.totalorder %s135, %s151
    %p153 = scmp.eq.s32.totalorder %s19, 0
    %p154 = por %p152, %p153
    %s155 = ssub.s32 %s20, %s32
    %s156 = ssub.s32 %s21, %s28
    %s157 = sor.u32 %s155, %s156
    %p158 = scmp.eq.s32.totalorder %s157, 0
    %s160 = sadd.s32 %s159, 1
    %s161 = scalar_select %p158, %s159, %s160
    %p164 = pneg %p158
    %p165 = scmp.eq.s32.totalorder %s13, 1
    %p166 = por %p164, %p165
    %p167 = scmp.ne.s32.totalorder %s159, %s162
    %p168 = scmp.eq.s32.totalorder %s13, 0
    %p169 = por %p167, %p168
    %p170 = scmp.ne.s32.totalorder %s159, %s162
    %p171 = scmp.eq.s32.totalorder %s18, 1
    %p172 = por %p170, %p171
    %p173 = scmp.ne.s32.totalorder %s162, %s163
    %p174 = scmp.eq.s32.totalorder %s18, 0
    %p175 = por %p173, %p174
    %p176 = scmp.ne.s32.totalorder %s162, %s163
    %p177 = scmp.eq.s32.totalorder %s19, 1
    %p178 = por %p176, %p177
    %p180 = scmp.ne.s32.totalorder %s163, %s179
    %p181 = scmp.eq.s32.totalorder %s19, 0
    %p182 = por %p180, %p181
    %s183 = ssub.s32 %s20, %s32
    %s184 = ssub.s32 %s21, %s28
    %s185 = sor.u32 %s183, %s184
    %p186 = scmp.eq.s32.totalorder %s185, 0
    %s188 = sadd.s32 %s187, 1
    %s189 = scalar_select %p186, %s187, %s188
    %p192 = pneg %p186
    %p193 = scmp.eq.s32.totalorder %s13, 1
    %p194 = por %p192, %p193
    %p195 = scmp.ne.s32.totalorder %s187, %s190
    %p196 = scmp.eq.s32.totalorder %s13, 0
    %p197 = por %p195, %p196
    %p198 = scmp.ne.s32.totalorder %s187, %s190
    %p199 = scmp.eq.s32.totalorder %s18, 1
    %p200 = por %p198, %p199
    %p201 = scmp.ne.s32.totalorder %s190, %s191
    %p202 = scmp.eq.s32.totalorder %s18, 0
    %p203 = por %p201, %p202
    %p204 = scmp.ne.s32.totalorder %s190, %s191
    %p205 = scmp.eq.s32.totalorder %s19, 1
    %p206 = por %p204, %p205
    %p208 = scmp.ne.s32.totalorder %s191, %s207
    %p209 = scmp.eq.s32.totalorder %s19, 0
    %p210 = por %p208, %p209
    %s211 = ssub.s32 %s20, %s32
    %p212 = scmp.eq.s32.totalorder %s211, 0
    %s214 = sadd.s32 %s213, 1
    %s215 = scalar_select %p212, %s213, %s214
    %p218 = pneg %p212
    %p219 = scmp.eq.s32.totalorder %s13, 1
    %p220 = por %p218, %p219
    %p221 = scmp.ne.s32.totalorder %s213, %s216
    %p222 = scmp.eq.s32.totalorder %s13, 0
    %p223 = por %p221, %p222
    %p224 = scmp.ne.s32.totalorder %s213, %s216
    %p225 = scmp.eq.s32.totalorder %s18, 1
    %p226 = por %p224, %p225
    %p227 = scmp.ne.s32.totalorder %s216, %s217
    %p228 = scmp.eq.s32.totalorder %s18, 0
    %p229 = por %p227, %p228
    %p230 = scmp.ne.s32.totalorder %s216, %s217
    %p231 = scmp.eq.s32.totalorder %s19, 1
    %p232 = por %p230, %p231
    %p234 = scmp.ne.s32.totalorder %s217, %s233
    %p235 = scmp.eq.s32.totalorder %s19, 0
    %p236 = por %p234, %p235
    %p237 = scmp.le.s32.totalorder 1, %s13
    %p238 = scmp.lt.s32.totalorder %s13, 3
    %p239 = pnand %p237, %p238
    %p240 = pneg %p239
    // Predicated region
    $region9: #{mask4former_forward.30} parent=5 // pred_check
      _
    $region10: #{mask4former_forward.30} parent=5 // pred_check_branch
      %242 = sbr.rel (%p239) target = $region12
    $region11: #{mask4former_forward.30} parent=5 // pred_region
      %s243 = ssub.s32 %s13, 1
      // Predicated region
      $region13: #{mask4former_forward.30} parent=11 // pred_check
        %p244 = pneg %p98
      $region14: #{mask4former_forward.30} parent=11 // pred_check_branch
        %246 = sbr.rel (%p244) target = $region16
      $region15: #{mask4former_forward.30} parent=11 // pred_region
        _
      $region16: #{mask4former_forward.30} parent=11 // pred_fallthru
        _
      // Predicated region
      $region17: #{mask4former_forward.30} parent=11 // pred_check
        %p247 = pneg %p119
      $region18: #{mask4former_forward.30} parent=11 // pred_check_branch
        %249 = sbr.rel (%p247) target = $region20
      $region19: #{mask4former_forward.30} parent=11 // pred_region
        _
      $region20: #{mask4former_forward.30} parent=11 // pred_fallthru
        _
    $region12: #{mask4former_forward.30} parent=5 // pred_fallthru
      _
    %p250 = scmp.lt.s32.totalorder %s13, 2
    // Predicated region
    $region21: #{mask4former_forward.30} parent=5 // pred_check
      %p251 = pneg %p250
    $region22: #{mask4former_forward.30} parent=5 // pred_check_branch
      %253 = sbr.rel (%p251) target = $region24
    $region23: #{mask4former_forward.30} parent=5 // pred_region
      // Predicated region
      $region25: #{mask4former_forward.30} parent=23 // pred_check
        %p254 = pneg %p45
      $region26: #{mask4former_forward.30} parent=23 // pred_check_branch
        %256 = sbr.rel (%p254) target = $region28
      $region27: #{mask4former_forward.30} parent=23 // pred_region
        %p257 = scmp.lt.s32.totalorder %s20, 1
        %s258 = scalar_select %p257, %s20, 1
        %s259 = smul.addr %s258, 8
        %s260 = scalar_lea.vmem %s0, %s259
      $region28: #{mask4former_forward.30} parent=23 // pred_fallthru
        _
      // Predicated region
      $region29: #{mask4former_forward.30} parent=23 // pred_check
        %p261 = pneg %p71
      $region30: #{mask4former_forward.30} parent=23 // pred_check_branch
        %263 = sbr.rel (%p261) target = $region32
      $region31: #{mask4former_forward.30} parent=23 // pred_region
        %p264 = scmp.lt.s32.totalorder %s20, 1
        %s265 = scalar_select %p264, %s20, 1
        %s266 = smul.addr %s265, 8
        %s267 = scalar_lea.vmem %s1, %s266
      $region32: #{mask4former_forward.30} parent=23 // pred_fallthru
        _
      // Predicated region
      $region33: #{mask4former_forward.30} parent=23 // pred_check
        %p268 = pneg %p141
      $region34: #{mask4former_forward.30} parent=23 // pred_check_branch
        %270 = sbr.rel (%p268) target = $region36
      $region35: #{mask4former_forward.30} parent=23 // pred_region
        %s271 = smul.u32 2, %s21
        %p272 = scmp.lt.s32.totalorder %s20, 1
        %s273 = scalar_select %p272, %s20, 1
        %p274 = scmp.lt.s32.totalorder %s271, 1
        %s275 = scalar_select %p274, %s271, 1
        %s276 = smul.addr %s273, 2
        %s277 = sadd.s32 %s275, %s276
        %s278 = smul.addr %s277, 4
        %s279 = scalar_lea.vmem %s4, %s278
        %s280 = smul.u32 2, %s21
      $region36: #{mask4former_forward.30} parent=23 // pred_fallthru
        _
      // Predicated region
      $region37: #{mask4former_forward.30} parent=23 // pred_check
        %p281 = pneg %p169
      $region38: #{mask4former_forward.30} parent=23 // pred_check_branch
        %283 = sbr.rel (%p281) target = $region40
      $region39: #{mask4former_forward.30} parent=23 // pred_region
        %s284 = smul.u32 2, %s21
        %p285 = scmp.lt.s32.totalorder %s20, 1
        %s286 = scalar_select %p285, %s20, 1
        %p287 = scmp.lt.s32.totalorder %s284, 1
        %s288 = scalar_select %p287, %s284, 1
        %s289 = smul.addr %s286, 2
        %s290 = sadd.s32 %s288, %s289
        %s291 = smul.addr %s290, 4
        %s292 = scalar_lea.vmem %s5, %s291
        %s293 = smul.u32 2, %s21
      $region40: #{mask4former_forward.30} parent=23 // pred_fallthru
        _
      // Predicated region
      $region41: #{mask4former_forward.30} parent=23 // pred_check
        %p294 = pneg %p197
      $region42: #{mask4former_forward.30} parent=23 // pred_check_branch
        %296 = sbr.rel (%p294) target = $region44
      $region43: #{mask4former_forward.30} parent=23 // pred_region
        %p297 = scmp.lt.s32.totalorder %s20, 1
        %s298 = scalar_select %p297, %s20, 1
        %p299 = scmp.lt.s32.totalorder %s21, 0
        %s300 = scalar_select %p299, %s21, 0
        %s301 = sadd.s32 %s300, %s298
        %s302 = smul.addr %s301, 2
        %s303 = scalar_lea.vmem %s6, %s302
      $region44: #{mask4former_forward.30} parent=23 // pred_fallthru
        _
    $region24: #{mask4former_forward.30} parent=5 // pred_fallthru
      _
    %p304 = scmp.le.s32.totalorder 1, %s13
    %p305 = scmp.lt.s32.totalorder %s13, 3
    %p306 = pnand %p304, %p305
    %p307 = pneg %p306
    // Predicated region
    $region45: #{mask4former_forward.30} parent=5 // pred_check
      _
    $region46: #{mask4former_forward.30} parent=5 // pred_check_branch
      %309 = sbr.rel (%p306) target = $region48
    $region47: #{mask4former_forward.30} parent=5 // pred_region
      %s310 = ssub.s32 %s13, 1
      %p311 = scmp.lt.s32.totalorder %s22, 1
      %s312 = scalar_select %p311, %s22, 1
      %s313 = smul.addr %s312, 8
      %s314 = scalar_lea.vmem %s0, %s313
      %p315 = pneg %p51
      %p316 = pneg %p48
      %p317 = scmp.lt.s32.totalorder %s22, 1
      %s318 = scalar_select %p317, %s22, 1
      %s319 = smul.addr %s318, 8
      %s320 = scalar_lea.vmem %s1, %s319
      %p321 = pneg %p77
      %p322 = pneg %p74
      %p323 = pneg %p98
      %p324 = pneg %p95
      %p325 = pneg %p119
      %p326 = pneg %p116
      %s327 = smul.u32 2, %s23
      %p328 = scmp.lt.s32.totalorder %s22, 1
      %s329 = scalar_select %p328, %s22, 1
      %p330 = scmp.lt.s32.totalorder %s327, 1
      %s331 = scalar_select %p330, %s327, 1
      %s332 = smul.addr %s329, 2
      %s333 = sadd.s32 %s331, %s332
      %s334 = smul.addr %s333, 4
      %s335 = scalar_lea.vmem %s4, %s334
      %p336 = pneg %p147
      %p337 = pneg %p144
      %s338 = smul.u32 2, %s23
      %p339 = scmp.lt.s32.totalorder %s22, 1
      %s340 = scalar_select %p339, %s22, 1
      %p341 = scmp.lt.s32.totalorder %s338, 1
      %s342 = scalar_select %p341, %s338, 1
      %s343 = smul.addr %s340, 2
      %s344 = sadd.s32 %s342, %s343
      %s345 = smul.addr %s344, 4
      %s346 = scalar_lea.vmem %s5, %s345
      %p347 = pneg %p175
      %p348 = pneg %p172
      %p349 = scmp.lt.s32.totalorder %s22, 1
      %s350 = scalar_select %p349, %s22, 1
      %p351 = scmp.lt.s32.totalorder %s23, 0
      %s352 = scalar_select %p351, %s23, 0
      %s353 = sadd.s32 %s352, %s350
      %s354 = smul.addr %s353, 2
      %s355 = scalar_lea.vmem %s6, %s354
      %p356 = pneg %p203
      %p357 = pneg %p200
      %p358 = pneg %p229
      %p359 = pneg %p226
      %p360 = scmp.lt.s32.totalorder %s22, 1
      %s361 = scalar_select %p360, %s22, 1
      %s362 = smul.addr %s361, 4
      %s363 = scalar_lea.vmem %s7, %s362
      %p364 = scmp.lt.s32.totalorder %s22, 1
      %s365 = scalar_select %p364, %s22, 1
      %s366 = smul.addr %s365, 8
      %s367 = scalar_lea.vmem %s0, %s366
      %p368 = scmp.lt.s32.totalorder %s22, 1
      %s369 = scalar_select %p368, %s22, 1
      %s370 = smul.addr %s369, 8
      %s371 = scalar_lea.vmem %s1, %s370
      %s372 = smul.u32 2, %s23
      %p373 = scmp.lt.s32.totalorder %s22, 1
      %s374 = scalar_select %p373, %s22, 1
      %p375 = scmp.lt.s32.totalorder %s372, 1
      %s376 = scalar_select %p375, %s372, 1
      %s377 = smul.addr %s374, 2
      %s378 = sadd.s32 %s376, %s377
      %s379 = smul.addr %s378, 4
      %s380 = scalar_lea.vmem %s4, %s379
      %s381 = smul.u32 2, %s23
      %s382 = smul.u32 2, %s23
      %p383 = scmp.lt.s32.totalorder %s22, 1
      %s384 = scalar_select %p383, %s22, 1
      %p385 = scmp.lt.s32.totalorder %s382, 1
      %s386 = scalar_select %p385, %s382, 1
      %s387 = smul.addr %s384, 2
      %s388 = sadd.s32 %s386, %s387
      %s389 = smul.addr %s388, 4
      %s390 = scalar_lea.vmem %s5, %s389
      %s391 = smul.u32 2, %s23
      %p392 = scmp.lt.s32.totalorder %s22, 1
      %s393 = scalar_select %p392, %s22, 1
      %p394 = scmp.lt.s32.totalorder %s23, 0
      %s395 = scalar_select %p394, %s23, 0
      %s396 = sadd.s32 %s395, %s393
      %s397 = smul.addr %s396, 2
      %s398 = scalar_lea.vmem %s6, %s397
      %p399 = scmp.lt.s32.totalorder %s22, 1
      %s400 = scalar_select %p399, %s22, 1
      %s401 = smul.addr %s400, 4
      %s402 = scalar_lea.vmem %s7, %s401
      %p406 = scmp.eq.s32.totalorder %s23, 0
      // Predicated region
      $region49: #{mask4former_forward.30} parent=47 // pred_check
        %p407 = pneg %p406
      $region50: #{mask4former_forward.30} parent=47 // pred_check_branch
        %409 = sbr.rel (%p407) target = $region52
      $region51: #{mask4former_forward.30} parent=47 // pred_region
        %vm410 = vcmask 7168
        %411 = vst.msk [vmem:[#allocation2] sm:$0xff] %vm410, -1e+30
        %412 = vst.msk [vmem:[#allocation2 + $0x8] sm:$0xff] %vm410, -1e+30
        %413 = vst.msk [vmem:[#allocation2 + $0x10] sm:$0xff] %vm410, -1e+30
        %414 = vst.msk [vmem:[#allocation2 + $0x18] sm:$0xff] %vm410, -1e+30
        %415 = vst.msk [vmem:[#allocation3] sm:$0xff] %vm410, 0.0
        %416 = vst.msk [vmem:[#allocation3 + $0x8] sm:$0xff] %vm410, 0.0
        %417 = vst.msk [vmem:[#allocation3 + $0x10] sm:$0xff] %vm410, 0.0
        %418 = vst.msk [vmem:[#allocation3 + $0x18] sm:$0xff] %vm410, 0.0
        %vm419 = vcmask 64512
        %420 = vst.msk [vmem:[#allocation4] sm:$0xff] %vm419, 0.0
        %421 = vst.msk [vmem:[#allocation4 + $0x8] sm:$0xff] %vm419, 0.0
        %422 = vst.msk [vmem:[#allocation4 + $0x10] sm:$0xff] %vm419, 0.0
        %423 = vst.msk [vmem:[#allocation4 + $0x18] sm:$0xff] %vm419, 0.0
      $region52: #{mask4former_forward.30} parent=47 // pred_fallthru
        _
      %v424 = vld [vmem:[%s367] sm:$0xff]
      %v425 = vld [vmem:[%s371] sm:$0xff]
      %v426 = vadd.f32 %v424, %v425
      %v427 = vpack.c.bf16 %v426, %v426
      %v428 = vld [vmem:[%s2] sm:$0xf]
      %v429 = vld [vmem:[%s2 + $0x4] sm:$0xf]
      %v430 = vld [vmem:[%s2 + $0x8] sm:$0xf]
      %v431 = vld [vmem:[%s2 + $0xc] sm:$0xf]
      %v432 = vld [vmem:[%s3] sm:$0x1]
      %v434 = vlaneseq
      %v435 = vshrl.u32 %v434, 7
      %v436 = vsub.s32 0, %v435
      %v437 = vrot.slane %v432, %v436
      %v443 = vunpack.c.l.b16 %v428
      %v444 = vunpack.c.l.b16 %v429
      %v445 = vunpack.c.l.b16 %v430
      %v446 = vunpack.c.l.b16 %v431
      %v447 = vpack.c.b16 %v444, %v443
      %v448 = vpack.c.b16 %v446, %v445
      %vm451 = vcmask 261120
      %v453 = vsel %vm451, %v427, 0
      %455 = vmatprep.subr.bf16.mxu0 0
      %456 = vmatpush1.bf16.msra.mxu0 %v447
      %457 = vmatprep.subr.bf16.mxu0 0
      %458 = vmatpush1.bf16.msra.mxu0 %v448
      %459 = vmatprep.subr.bf16.mxu0 0
      %460 = vmatpush1.bf16.msra.mxu0 0
      %461 = vmatprep.subr.bf16.mxu0 0
      %462 = vmatpush1.bf16.msra.mxu0 0
      %463 = vmatprep.subr.bf16.mxu0 0
      %464 = vmatpush1.bf16.msra.mxu0 0
      %465 = vmatprep.subr.bf16.mxu0 0
      %466 = vmatpush1.bf16.msra.mxu0 0
      %467 = vmatprep.subr.bf16.mxu0 0
      %468 = vmatpush1.bf16.msra.mxu0 0
      %469 = vmatprep.subr.bf16.mxu0 0
      %470 = vmatpush1.bf16.msra.mxu0 0
      %471 = vmatprep.subr.bf16.mxu0 0
      %472 = vmatpush1.bf16.msra.mxu0 0
      %473 = vmatprep.subr.bf16.mxu0 0
      %474 = vmatpush1.bf16.msra.mxu0 0
      %475 = vmatprep.subr.bf16.mxu0 0
      %476 = vmatpush1.bf16.msra.mxu0 0
      %477 = vmatprep.subr.bf16.mxu0 0
      %478 = vmatpush1.bf16.msra.mxu0 0
      %479 = vmatprep.subr.bf16.mxu0 0
      %480 = vmatpush1.bf16.msra.mxu0 0
      %481 = vmatprep.subr.bf16.mxu0 0
      %482 = vmatpush1.bf16.msra.mxu0 0
      %483 = vmatprep.subr.bf16.mxu0 0
      %484 = vmatpush1.bf16.msra.mxu0 0
      %485 = vmatprep.subr.bf16.mxu0 0
      %486 = vmatpush1.bf16.msra.mxu0 0
      %487 = vmatprep.mubr.bf16.mxu0 0
      %488 = vmatmul.mubr.bf16.gmra.mrb[0].mxu0 %v453
      %v489 = vpop.f32.mrb[0].mxu0
      %v490 = vadd.f32 %v437, %v489
      %v491 = vpop.f32.mrb[0].mxu0
      %v492 = vpop.f32.mrb[0].mxu0
      %v493 = vpop.f32.mrb[0].mxu0
      %494 = vdwg.mxu0
      %v495 = vmul.f32 %v490, 0.35355338
      %v496 = vpack.c.bf16 %v495, %v495
      %v497 = vld [vmem:[%s380] sm:$0xf]
      %v498 = vld [vmem:[%s380 + $0x4] sm:$0xf]
      %v499 = vld [vmem:[%s390] sm:$0xf]
      %v500 = vld [vmem:[%s390 + $0x4] sm:$0xf]
      %v501 = vld [vmem:[%s398] sm:$0x3]
      %vm502 = vnez %v501
      %v505 = vunpack.c.l.b16 %v497
      %v506 = vunpack.c.l.b16 %v498
      %v507 = vpack.c.b16 %v506, %v505
      %vm508 = vcmask 64512
      %v510 = vsel %vm508, %v496, 0
      %v513 = vsel %vm508, %v507, 0
      %515 = vmatprep.subr.bf16.mxu0 0
      %516 = vmatpush1.bf16.xpose.msra.mxu0 %v513
      %517 = vmatprep.subr.bf16.mxu0 0
      %518 = vmatpush1.bf16.xpose.msra.mxu0 0
      %519 = vmatprep.subr.bf16.mxu0 0
      %520 = vmatpush1.bf16.xpose.msra.mxu0 0
      %521 = vmatprep.subr.bf16.mxu0 0
      %522 = vmatpush1.bf16.xpose.msra.mxu0 0
      %523 = vmatprep.subr.bf16.mxu0 0
      %524 = vmatpush1.bf16.xpose.msra.mxu0 0
      %525 = vmatprep.subr.bf16.mxu0 0
      %526 = vmatpush1.bf16.xpose.msra.mxu0 0
      %527 = vmatprep.subr.bf16.mxu0 0
      %528 = vmatpush1.bf16.xpose.msra.mxu0 0
      %529 = vmatprep.subr.bf16.mxu0 0
      %530 = vmatpush1.bf16.xpose.msra.mxu0 0
      %531 = vmatprep.subr.bf16.mxu0 0
      %532 = vmatpush1.bf16.xpose.msra.mxu0 0
      %533 = vmatprep.subr.bf16.mxu0 0
      %534 = vmatpush1.bf16.xpose.msra.mxu0 0
      %535 = vmatprep.subr.bf16.mxu0 0
      %536 = vmatpush1.bf16.xpose.msra.mxu0 0
      %537 = vmatprep.subr.bf16.mxu0 0
      %538 = vmatpush1.bf16.xpose.msra.mxu0 0
      %539 = vmatprep.subr.bf16.mxu0 0
      %540 = vmatpush1.bf16.xpose.msra.mxu0 0
      %541 = vmatprep.subr.bf16.mxu0 0
      %542 = vmatpush1.bf16.xpose.msra.mxu0 0
      %543 = vmatprep.subr.bf16.mxu0 0
      %544 = vmatpush1.bf16.xpose.msra.mxu0 0
      %545 = vmatprep.subr.bf16.mxu0 0
      %546 = vmatpush1.bf16.xpose.msra.mxu0 0
      %547 = vmatprep.mubr.bf16.mxu0 0
      %548 = vmatmul.mubr.bf16.gmra.mrb[0].mxu0 %v510
      %v549 = vpop.f32.mrb[0].mxu0
      %v550 = vadd.f32 0.0, %v549
      %v551 = vpop.f32.mrb[0].mxu0
      %v552 = vpop.f32.mrb[0].mxu0
      %v553 = vpop.f32.mrb[0].mxu0
      %554 = vdwg.mxu0
      %v555 = vld [vmem:[#allocation2] sm:$0xff]
      %vm556 = vcmask 130048
      %v557 = vsel %vm556, %v550, -inf
      %558 = vmax.xlane.f32.xlu0 %v557
      %v559 = vpop.xlane.xlu0 %558
      %v560 = vmax.f32 %v555, %v559
      %v561 = vsub.f32 %v555, %v560
      %v562 = vmul.f32 %v561, 1.442695
      %v563 = vpow.pop %v562
      %565 = vset.pattern.permute.xlu0 0
      %566 = vperm.xlu0 %565, %v560
      %v567 = vpop.permute.xlu0 %566
      %v569 = vsub.f32 %v550, %v567
      %v570 = vmul.f32 %v569, 1.442695
      %v571 = vpow.pop %v570
      %v572 = vsel %vm502, 16843009, 0
      %v573 = vunpack.c.0.s8 %v572
      %vm574 = vcmp.ne.s32.totalorder %v573, 0
      %v575 = vsel %vm574, 0.0, %v571
      %v576 = vld [vmem:[#allocation3] sm:$0xff]
      %v577 = vmul.f32 %v563, %v576
      %v578 = vsel %vm556, %v575, 0.0
      %579 = vadd.xlane.f32.xlu0 %v578
      %v580 = vpop.xlane.xlu0 %579
      %v581 = vadd.f32 %v577, %v580
      %vm582 = vcmask 7168
      %583 = vst.msk [vmem:[#allocation3] sm:$0xff] %vm582, %v581
      %v584 = vld [vmem:[#allocation4] sm:$0xff]
      %586 = vset.pattern.permute.xlu0 0
      %587 = vperm.xlu0 %586, %v563
      %v588 = vpop.permute.xlu0 %587
      %v590 = vmul.f32 %v588, %v584
      %v591 = vpack.c.bf16 %v575, %v575
      %v594 = vunpack.c.l.b16 %v499
      %v595 = vunpack.c.l.b16 %v500
      %v596 = vpack.c.b16 %v595, %v594
      %v599 = vsel %vm556, %v591, 0
      %601 = vmatprep.subr.bf16.mxu0 0
      %602 = vmatpush1.bf16.msra.mxu0 %v596
      %603 = vmatprep.subr.bf16.mxu0 0
      %604 = vmatpush1.bf16.msra.mxu0 0
      %605 = vmatprep.subr.bf16.mxu0 0
      %606 = vmatpush1.bf16.msra.mxu0 0
      %607 = vmatprep.subr.bf16.mxu0 0
      %608 = vmatpush1.bf16.msra.mxu0 0
      %609 = vmatprep.subr.bf16.mxu0 0
      %610 = vmatpush1.bf16.msra.mxu0 0
      %611 = vmatprep.subr.bf16.mxu0 0
      %612 = vmatpush1.bf16.msra.mxu0 0
      %613 = vmatprep.subr.bf16.mxu0 0
      %614 = vmatpush1.bf16.msra.mxu0 0
      %615 = vmatprep.subr.bf16.mxu0 0
      %616 = vmatpush1.bf16.msra.mxu0 0
      %617 = vmatprep.subr.bf16.mxu0 0
      %618 = vmatpush1.bf16.msra.mxu0 0
      %619 = vmatprep.subr.bf16.mxu0 0
      %620 = vmatpush1.bf16.msra.mxu0 0
      %621 = vmatprep.subr.bf16.mxu0 0
      %622 = vmatpush1.bf16.msra.mxu0 0
      %623 = vmatprep.subr.bf16.mxu0 0
      %624 = vmatpush1.bf16.msra.mxu0 0
      %625 = vmatprep.subr.bf16.mxu0 0
      %626 = vmatpush1.bf16.msra.mxu0 0
      %627 = vmatprep.subr.bf16.mxu0 0
      %628 = vmatpush1.bf16.msra.mxu0 0
      %629 = vmatprep.subr.bf16.mxu0 0
      %630 = vmatpush1.bf16.msra.mxu0 0
      %631 = vmatprep.subr.bf16.mxu0 0
      %632 = vmatpush1.bf16.msra.mxu0 0
      %633 = vmatprep.mubr.bf16.mxu0 0
      %634 = vmatmul.mubr.bf16.gmra.mrb[0].mxu0 %v599
      %v635 = vpop.f32.mrb[0].mxu0
      %v636 = vadd.f32 0.0, %v635
      %v637 = vpop.f32.mrb[0].mxu0
      %v638 = vpop.f32.mrb[0].mxu0
      %v639 = vpop.f32.mrb[0].mxu0
      %640 = vdwg.mxu0
      %v641 = vadd.f32 %v590, %v636
      %642 = vst.msk [vmem:[#allocation4] sm:$0xff] %vm508, %v641
      %643 = vst.msk [vmem:[#allocation2] sm:$0xff] %vm582, %v560
      %645 = vrot.lane.b32.xlu0 %v496, 120
      %v646 = vpop.permute.xlu0 %645
      %647 = vrot.lane.b32.xlu0 %v507, 120
      %v648 = vpop.permute.xlu0 %647
      %v650 = vsel %vm508, %v646, 0
      %v653 = vsel %vm508, %v648, 0
      %655 = vmatprep.subr.bf16.mxu0 0
      %656 = vmatpush1.bf16.xpose.msra.mxu0 %v653
      %657 = vmatprep.subr.bf16.mxu0 0
      %658 = vmatpush1.bf16.xpose.msra.mxu0 0
      %659 = vmatprep.subr.bf16.mxu0 0
      %660 = vmatpush1.bf16.xpose.msra.mxu0 0
      %661 = vmatprep.subr.bf16.mxu0 0
      %662 = vmatpush1.bf16.xpose.msra.mxu0 0
      %663 = vmatprep.subr.bf16.mxu0 0
      %664 = vmatpush1.bf16.xpose.msra.mxu0 0
      %665 = vmatprep.subr.bf16.mxu0 0
      %666 = vmatpush1.bf16.xpose.msra.mxu0 0
      %667 = vmatprep.subr.bf16.mxu0 0
      %668 = vmatpush1.bf16.xpose.msra.mxu0 0
      %669 = vmatprep.subr.bf16.mxu0 0
      %670 = vmatpush1.bf16.xpose.msra.mxu0 0
      %671 = vmatprep.subr.bf16.mxu0 0
      %672 = vmatpush1.bf16.xpose.msra.mxu0 0
      %673 = vmatprep.subr.bf16.mxu0 0
      %674 = vmatpush1.bf16.xpose.msra.mxu0 0
      %675 = vmatprep.subr.bf16.mxu0 0
      %676 = vmatpush1.bf16.xpose.msra.mxu0 0
      %677 = vmatprep.subr.bf16.mxu0 0
      %678 = vmatpush1.bf16.xpose.msra.mxu0 0
      %679 = vmatprep.subr.bf16.mxu0 0
      %680 = vmatpush1.bf16.xpose.msra.mxu0 0
      %681 = vmatprep.subr.bf16.mxu0 0
      %682 = vmatpush1.bf16.xpose.msra.mxu0 0
      %683 = vmatprep.subr.bf16.mxu0 0
      %684 = vmatpush1.bf16.xpose.msra.mxu0 0
      %685 = vmatprep.subr.bf16.mxu0 0
      %686 = vmatpush1.bf16.xpose.msra.mxu0 0
      %687 = vmatprep.mubr.bf16.mxu0 0
      %688 = vmatmul.mubr.bf16.gmra.mrb[0].mxu0 %v650
      %v689 = vpop.f32.mrb[0].mxu0
      %v690 = vadd.f32 0.0, %v689
      %v691 = vpop.f32.mrb[0].mxu0
      %v692 = vpop.f32.mrb[0].mxu0
      %v693 = vpop.f32.mrb[0].mxu0
      %694 = vdwg.mxu0
      %s695 = scalar_lea.vmem [#allocation2], 8
      %v696 = vld [vmem:[%s695] sm:$0xff]
      %v697 = vsel %vm556, %v690, -inf
      %698 = vmax.xlane.f32.xlu0 %v697
      %v699 = vpop.xlane.xlu0 %698
      %v700 = vmax.f32 %v696, %v699
      %v701 = vsub.f32 %v696, %v700
      %v702 = vmul.f32 %v701, 1.442695
      %v703 = vpow.pop %v702
      %705 = vset.pattern.permute.xlu0 0
      %706 = vperm.xlu0 %705, %v700
      %v707 = vpop.permute.xlu0 %706
      %v709 = vsub.f32 %v690, %v707
      %v710 = vmul.f32 %v709, 1.442695
      %v711 = vpow.pop %v710
      %v712 = vsel %vm574, 0.0, %v711
      %s713 = scalar_lea.vmem [#allocation3], 8
      %v714 = vld [vmem:[%s713] sm:$0xff]
      %v715 = vmul.f32 %v703, %v714
      %v716 = vsel %vm556, %v712, 0.0
      %717 = vadd.xlane.f32.xlu0 %v716
      %v718 = vpop.xlane.xlu0 %717
      %v719 = vadd.f32 %v715, %v718
      %720 = vst.msk [vmem:[%s713] sm:$0xff] %vm582, %v719
      %s721 = scalar_lea.vmem [#allocation4], 8
      %v722 = vld [vmem:[%s721] sm:$0xff]
      %724 = vset.pattern.permute.xlu0 0
      %725 = vperm.xlu0 %724, %v703
      %v726 = vpop.permute.xlu0 %725
      %v728 = vmul.f32 %v726, %v722
      %v729 = vpack.c.bf16 %v712, %v712
      %730 = vrot.lane.b32.xlu0 %v596, 120
      %v731 = vpop.permute.xlu0 %730
      %v734 = vsel %vm556, %v729, 0
      %736 = vmatprep.subr.bf16.mxu0 0
      %737 = vmatpush1.bf16.msra.mxu0 %v731
      %738 = vmatprep.subr.bf16.mxu0 0
      %739 = vmatpush1.bf16.msra.mxu0 0
      %740 = vmatprep.subr.bf16.mxu0 0
      %741 = vmatpush1.bf16.msra.mxu0 0
      %742 = vmatprep.subr.bf16.mxu0 0
      %743 = vmatpush1.bf16.msra.mxu0 0
      %744 = vmatprep.subr.bf16.mxu0 0
      %745 = vmatpush1.bf16.msra.mxu0 0
      %746 = vmatprep.subr.bf16.mxu0 0
      %747 = vmatpush1.bf16.msra.mxu0 0
      %748 = vmatprep.subr.bf16.mxu0 0
      %749 = vmatpush1.bf16.msra.mxu0 0
      %750 = vmatprep.subr.bf16.mxu0 0
      %751 = vmatpush1.bf16.msra.mxu0 0
      %752 = vmatprep.subr.bf16.mxu0 0
      %753 = vmatpush1.bf16.msra.mxu0 0
      %754 = vmatprep.subr.bf16.mxu0 0
      %755 = vmatpush1.bf16.msra.mxu0 0
      %756 = vmatprep.subr.bf16.mxu0 0
      %757 = vmatpush1.bf16.msra.mxu0 0
      %758 = vmatprep.subr.bf16.mxu0 0
      %759 = vmatpush1.bf16.msra.mxu0 0
      %760 = vmatprep.subr.bf16.mxu0 0
      %761 = vmatpush1.bf16.msra.mxu0 0
      %762 = vmatprep.subr.bf16.mxu0 0
      %763 = vmatpush1.bf16.msra.mxu0 0
      %764 = vmatprep.subr.bf16.mxu0 0
      %765 = vmatpush1.bf16.msra.mxu0 0
      %766 = vmatprep.subr.bf16.mxu0 0
      %767 = vmatpush1.bf16.msra.mxu0 0
      %768 = vmatprep.mubr.bf16.mxu0 0
      %769 = vmatmul.mubr.bf16.gmra.mrb[0].mxu0 %v734
      %v770 = vpop.f32.mrb[0].mxu0
      %v771 = vadd.f32 0.0, %v770
      %v772 = vpop.f32.mrb[0].mxu0
      %v773 = vpop.f32.mrb[0].mxu0
      %v774 = vpop.f32.mrb[0].mxu0
      %775 = vdwg.mxu0
      %v776 = vadd.f32 %v728, %v771
      %777 = vst.msk [vmem:[%s721] sm:$0xff] %vm508, %v776
      %778 = vst.msk [vmem:[%s695] sm:$0xff] %vm582, %v700
      %779 = vrot.lane.b32.xlu0 %v496, 112
      %v780 = vpop.permute.xlu0 %779
      %781 = vrot.lane.b32.xlu0 %v507, 112
      %v782 = vpop.permute.xlu0 %781
      %v784 = vsel %vm508, %v780, 0
      %v787 = vsel %vm508, %v782, 0
      %789 = vmatprep.subr.bf16.mxu0 0
      %790 = vmatpush1.bf16.xpose.msra.mxu0 %v787
      %791 = vmatprep.subr.bf16.mxu0 0
      %792 = vmatpush1.bf16.xpose.msra.mxu0 0
      %793 = vmatprep.subr.bf16.mxu0 0
      %794 = vmatpush1.bf16.xpose.msra.mxu0 0
      %795 = vmatprep.subr.bf16.mxu0 0
      %796 = vmatpush1.bf16.xpose.msra.mxu0 0
      %797 = vmatprep.subr.bf16.mxu0 0
      %798 = vmatpush1.bf16.xpose.msra.mxu0 0
      %799 = vmatprep.subr.bf16.mxu0 0
      %800 = vmatpush1.bf16.xpose.msra.mxu0 0
      %801 = vmatprep.subr.bf16.mxu0 0
      %802 = vmatpush1.bf16.xpose.msra.mxu0 0
      %803 = vmatprep.subr.bf16.mxu0 0
      %804 = vmatpush1.bf16.xpose.msra.mxu0 0
      %805 = vmatprep.subr.bf16.mxu0 0
      %806 = vmatpush1.bf16.xpose.msra.mxu0 0
      %807 = vmatprep.subr.bf16.mxu0 0
      %808 = vmatpush1.bf16.xpose.msra.mxu0 0
      %809 = vmatprep.subr.bf16.mxu0 0
      %810 = vmatpush1.bf16.xpose.msra.mxu0 0
      %811 = vmatprep.subr.bf16.mxu0 0
      %812 = vmatpush1.bf16.xpose.msra.mxu0 0
      %813 = vmatprep.subr.bf16.mxu0 0
      %814 = vmatpush1.bf16.xpose.msra.mxu0 0
      %815 = vmatprep.subr.bf16.mxu0 0
      %816 = vmatpush1.bf16.xpose.msra.mxu0 0
      %817 = vmatprep.subr.bf16.mxu0 0
      %818 = vmatpush1.bf16.xpose.msra.mxu0 0
      %819 = vmatprep.subr.bf16.mxu0 0
      %820 = vmatpush1.bf16.xpose.msra.mxu0 0
      %821 = vmatprep.mubr.bf16.mxu0 0
      %822 = vmatmul.mubr.bf16.gmra.mrb[0].mxu0 %v784
      %v823 = vpop.f32.mrb[0].mxu0
      %v824 = vadd.f32 0.0, %v823
      %v825 = vpop.f32.mrb[0].mxu0
      %v826 = vpop.f32.mrb[0].mxu0
      %v827 = vpop.f32.mrb[0].mxu0
      %828 = vdwg.mxu0
      %s829 = scalar_lea.vmem [#allocation2], 16
      %v830 = vld [vmem:[%s829] sm:$0xff]
      %v831 = vsel %vm556, %v824, -inf
      %832 = vmax.xlane.f32.xlu0 %v831
      %v833 = vpop.xlane.xlu0 %832
      %v834 = vmax.f32 %v830, %v833
      %v835 = vsub.f32 %v830, %v834
      %v836 = vmul.f32 %v835, 1.442695
      %v837 = vpow.pop %v836
      %839 = vset.pattern.permute.xlu0 0
      %840 = vperm.xlu0 %839, %v834
      %v841 = vpop.permute.xlu0 %840
      %v843 = vsub.f32 %v824, %v841
      %v844 = vmul.f32 %v843, 1.442695
      %v845 = vpow.pop %v844
      %v846 = vsel %vm574, 0.0, %v845
      %s847 = scalar_lea.vmem [#allocation3], 16
      %v848 = vld [vmem:[%s847] sm:$0xff]
      %v849 = vmul.f32 %v837, %v848
      %v850 = vsel %vm556, %v846, 0.0
      %851 = vadd.xlane.f32.xlu0 %v850
      %v852 = vpop.xlane.xlu0 %851
      %v853 = vadd.f32 %v849, %v852
      %854 = vst.msk [vmem:[%s847] sm:$0xff] %vm582, %v853
      %s855 = scalar_lea.vmem [#allocation4], 16
      %v856 = vld [vmem:[%s855] sm:$0xff]
      %858 = vset.pattern.permute.xlu0 0
      %859 = vperm.xlu0 %858, %v837
      %v860 = vpop.permute.xlu0 %859
      %v862 = vmul.f32 %v860, %v856
      %v863 = vpack.c.bf16 %v846, %v846
      %864 = vrot.lane.b32.xlu0 %v596, 112
      %v865 = vpop.permute.xlu0 %864
      %v868 = vsel %vm556, %v863, 0
      %870 = vmatprep.subr.bf16.mxu0 0
      %871 = vmatpush1.bf16.msra.mxu0 %v865
      %872 = vmatprep.subr.bf16.mxu0 0
      %873 = vmatpush1.bf16.msra.mxu0 0
      %874 = vmatprep.subr.bf16.mxu0 0
      %875 = vmatpush1.bf16.msra.mxu0 0
      %876 = vmatprep.subr.bf16.mxu0 0
      %877 = vmatpush1.bf16.msra.mxu0 0
      %878 = vmatprep.subr.bf16.mxu0 0
      %879 = vmatpush1.bf16.msra.mxu0 0
      %880 = vmatprep.subr.bf16.mxu0 0
      %881 = vmatpush1.bf16.msra.mxu0 0
      %882 = vmatprep.subr.bf16.mxu0 0
      %883 = vmatpush1.bf16.msra.mxu0 0
      %884 = vmatprep.subr.bf16.mxu0 0
      %885 = vmatpush1.bf16.msra.mxu0 0
      %886 = vmatprep.subr.bf16.mxu0 0
      %887 = vmatpush1.bf16.msra.mxu0 0
      %888 = vmatprep.subr.bf16.mxu0 0
      %889 = vmatpush1.bf16.msra.mxu0 0
      %890 = vmatprep.subr.bf16.mxu0 0
      %891 = vmatpush1.bf16.msra.mxu0 0
      %892 = vmatprep.subr.bf16.mxu0 0
      %893 = vmatpush1.bf16.msra.mxu0 0
      %894 = vmatprep.subr.bf16.mxu0 0
      %895 = vmatpush1.bf16.msra.mxu0 0
      %896 = vmatprep.subr.bf16.mxu0 0
      %897 = vmatpush1.bf16.msra.mxu0 0
      %898 = vmatprep.subr.bf16.mxu0 0
      %899 = vmatpush1.bf16.msra.mxu0 0
      %900 = vmatprep.subr.bf16.mxu0 0
      %901 = vmatpush1.bf16.msra.mxu0 0
      %902 = vmatprep.mubr.bf16.mxu0 0
      %903 = vmatmul.mubr.bf16.gmra.mrb[0].mxu0 %v868
      %v904 = vpop.f32.mrb[0].mxu0
      %v905 = vadd.f32 0.0, %v904
      %v906 = vpop.f32.mrb[0].mxu0
      %v907 = vpop.f32.mrb[0].mxu0
      %v908 = vpop.f32.mrb[0].mxu0
      %909 = vdwg.mxu0
      %v910 = vadd.f32 %v862, %v905
      %911 = vst.msk [vmem:[%s855] sm:$0xff] %vm508, %v910
      %912 = vst.msk [vmem:[%s829] sm:$0xff] %vm582, %v834
      %913 = vrot.lane.b32.xlu0 %v496, 104
      %v914 = vpop.permute.xlu0 %913
      %915 = vrot.lane.b32.xlu0 %v507, 104
      %v916 = vpop.permute.xlu0 %915
      %v918 = vsel %vm508, %v914, 0
      %v921 = vsel %vm508, %v916, 0
      %923 = vmatprep.subr.bf16.mxu0 0
      %924 = vmatpush1.bf16.xpose.msra.mxu0 %v921
      %925 = vmatprep.subr.bf16.mxu0 0
      %926 = vmatpush1.bf16.xpose.msra.mxu0 0
      %927 = vmatprep.subr.bf16.mxu0 0
      %928 = vmatpush1.bf16.xpose.msra.mxu0 0
      %929 = vmatprep.subr.bf16.mxu0 0
      %930 = vmatpush1.bf16.xpose.msra.mxu0 0
      %931 = vmatprep.subr.bf16.mxu0 0
      %932 = vmatpush1.bf16.xpose.msra.mxu0 0
      %933 = vmatprep.subr.bf16.mxu0 0
      %934 = vmatpush1.bf16.xpose.msra.mxu0 0
      %935 = vmatprep.subr.bf16.mxu0 0
      %936 = vmatpush1.bf16.xpose.msra.mxu0 0
      %937 = vmatprep.subr.bf16.mxu0 0
      %938 = vmatpush1.bf16.xpose.msra.mxu0 0
      %939 = vmatprep.subr.bf16.mxu0 0
      %940 = vmatpush1.bf16.xpose.msra.mxu0 0
      %941 = vmatprep.subr.bf16.mxu0 0
      %942 = vmatpush1.bf16.xpose.msra.mxu0 0
      %943 = vmatprep.subr.bf16.mxu0 0
      %944 = vmatpush1.bf16.xpose.msra.mxu0 0
      %945 = vmatprep.subr.bf16.mxu0 0
      %946 = vmatpush1.bf16.xpose.msra.mxu0 0
      %947 = vmatprep.subr.bf16.mxu0 0
      %948 = vmatpush1.bf16.xpose.msra.mxu0 0
      %949 = vmatprep.subr.bf16.mxu0 0
      %950 = vmatpush1.bf16.xpose.msra.mxu0 0
      %951 = vmatprep.subr.bf16.mxu0 0
      %952 = vmatpush1.bf16.xpose.msra.mxu0 0
      %953 = vmatprep.subr.bf16.mxu0 0
      %954 = vmatpush1.bf16.xpose.msra.mxu0 0
      %955 = vmatprep.mubr.bf16.mxu0 0
      %956 = vmatmul.mubr.bf16.gmra.mrb[0].mxu0 %v918
      %v957 = vpop.f32.mrb[0].mxu0
      %v958 = vadd.f32 0.0, %v957
      %v959 = vpop.f32.mrb[0].mxu0
      %v960 = vpop.f32.mrb[0].mxu0
      %v961 = vpop.f32.mrb[0].mxu0
      %962 = vdwg.mxu0
      %s963 = scalar_lea.vmem [#allocation2], 24
      %v964 = vld [vmem:[%s963] sm:$0xff]
      %v965 = vsel %vm556, %v958, -inf
      %966 = vmax.xlane.f32.xlu0 %v965
      %v967 = vpop.xlane.xlu0 %966
      %v968 = vmax.f32 %v964, %v967
      %v969 = vsub.f32 %v964, %v968
      %v970 = vmul.f32 %v969, 1.442695
      %v971 = vpow.pop %v970
      %973 = vset.pattern.permute.xlu0 0
      %974 = vperm.xlu0 %973, %v968
      %v975 = vpop.permute.xlu0 %974
      %v977 = vsub.f32 %v958, %v975
      %v978 = vmul.f32 %v977, 1.442695
      %v979 = vpow.pop %v978
      %v980 = vsel %vm574, 0.0, %v979
      %s981 = scalar_lea.vmem [#allocation3], 24
      %v982 = vld [vmem:[%s981] sm:$0xff]
      %v983 = vmul.f32 %v971, %v982
      %v984 = vsel %vm556, %v980, 0.0
      %985 = vadd.xlane.f32.xlu0 %v984
      %v986 = vpop.xlane.xlu0 %985
      %v987 = vadd.f32 %v983, %v986
      %988 = vst.msk [vmem:[%s981] sm:$0xff] %vm582, %v987
      %s989 = scalar_lea.vmem [#allocation4], 24
      %v990 = vld [vmem:[%s989] sm:$0xff]
      %992 = vset.pattern.permute.xlu0 0
      %993 = vperm.xlu0 %992, %v971
      %v994 = vpop.permute.xlu0 %993
      %v996 = vmul.f32 %v994, %v990
      %v997 = vpack.c.bf16 %v980, %v980
      %998 = vrot.lane.b32.xlu0 %v596, 104
      %v999 = vpop.permute.xlu0 %998
      %v1002 = vsel %vm556, %v997, 0
      %1004 = vmatprep.subr.bf16.mxu0 0
      %1005 = vmatpush1.bf16.msra.mxu0 %v999
      %1006 = vmatprep.subr.bf16.mxu0 0
      %1007 = vmatpush1.bf16.msra.mxu0 0
      %1008 = vmatprep.subr.bf16.mxu0 0
      %1009 = vmatpush1.bf16.msra.mxu0 0
      %1010 = vmatprep.subr.bf16.mxu0 0
      %1011 = vmatpush1.bf16.msra.mxu0 0
      %1012 = vmatprep.subr.bf16.mxu0 0
      %1013 = vmatpush1.bf16.msra.mxu0 0
      %1014 = vmatprep.subr.bf16.mxu0 0
      %1015 = vmatpush1.bf16.msra.mxu0 0
      %1016 = vmatprep.subr.bf16.mxu0 0
      %1017 = vmatpush1.bf16.msra.mxu0 0
      %1018 = vmatprep.subr.bf16.mxu0 0
      %1019 = vmatpush1.bf16.msra.mxu0 0
      %1020 = vmatprep.subr.bf16.mxu0 0
      %1021 = vmatpush1.bf16.msra.mxu0 0
      %1022 = vmatprep.subr.bf16.mxu0 0
      %1023 = vmatpush1.bf16.msra.mxu0 0
      %1024 = vmatprep.subr.bf16.mxu0 0
      %1025 = vmatpush1.bf16.msra.mxu0 0
      %1026 = vmatprep.subr.bf16.mxu0 0
      %1027 = vmatpush1.bf16.msra.mxu0 0
      %1028 = vmatprep.subr.bf16.mxu0 0
      %1029 = vmatpush1.bf16.msra.mxu0 0
      %1030 = vmatprep.subr.bf16.mxu0 0
      %1031 = vmatpush1.bf16.msra.mxu0 0
      %1032 = vmatprep.subr.bf16.mxu0 0
      %1033 = vmatpush1.bf16.msra.mxu0 0
      %1034 = vmatprep.subr.bf16.mxu0 0
      %1035 = vmatpush1.bf16.msra.mxu0 0
      %1036 = vmatprep.mubr.bf16.mxu0 0
      %1037 = vmatmul.mubr.bf16.gmra.mrb[0].mxu0 %v1002
      %v1038 = vpop.f32.mrb[0].mxu0
      %v1039 = vadd.f32 0.0, %v1038
      %v1040 = vpop.f32.mrb[0].mxu0
      %v1041 = vpop.f32.mrb[0].mxu0
      %v1042 = vpop.f32.mrb[0].mxu0
      %1043 = vdwg.mxu0
      %v1044 = vadd.f32 %v996, %v1039
      %1045 = vst.msk [vmem:[%s989] sm:$0xff] %vm508, %v1044
      %1046 = vst.msk [vmem:[%s963] sm:$0xff] %vm582, %v968
      // Predicated region
      $region53: #{mask4former_forward.30} parent=47 // pred_check
        %p1047 = pneg %p406
      $region54: #{mask4former_forward.30} parent=47 // pred_check_branch
        %1049 = sbr.rel (%p1047) target = $region56
      $region55: #{mask4former_forward.30} parent=47 // pred_region
        %v1050 = vld [vmem:[#allocation4] sm:$0xff]
        %v1051 = vld [vmem:[#allocation3] sm:$0xff]
        %v1052 = vrcp.pop %v1051
        %1054 = vset.pattern.permute.xlu0 0
        %1055 = vperm.xlu0 %1054, %v1052
        %v1056 = vpop.permute.xlu0 %1055
        %v1058 = vmul.f32 %v1050, %v1056
        %v1059 = vld [vmem:[%s721] sm:$0xff]
        %v1060 = vld [vmem:[%s713] sm:$0xff]
        %v1061 = vrcp.pop %v1060
        %1063 = vset.pattern.permute.xlu0 0
        %1064 = vperm.xlu0 %1063, %v1061
        %v1065 = vpop.permute.xlu0 %1064
        %v1067 = vmul.f32 %v1059, %v1065
        %v1068 = vld [vmem:[%s855] sm:$0xff]
        %v1069 = vld [vmem:[%s847] sm:$0xff]
        %v1070 = vrcp.pop %v1069
        %1072 = vset.pattern.permute.xlu0 0
        %1073 = vperm.xlu0 %1072, %v1070
        %v1074 = vpop.permute.xlu0 %1073
        %v1076 = vmul.f32 %v1068, %v1074
        %v1077 = vld [vmem:[%s989] sm:$0xff]
        %v1078 = vld [vmem:[%s981] sm:$0xff]
        %v1079 = vrcp.pop %v1078
        %1081 = vset.pattern.permute.xlu0 0
        %1082 = vperm.xlu0 %1081, %v1079
        %v1083 = vpop.permute.xlu0 %1082
        %v1085 = vmul.f32 %v1077, %v1083
        %1087 = vrot.lane.b32.xlu0 %v1067, 8
        %v1088 = vpop.permute.xlu0 %1087
        %1091 = vrot.lane.b32.xlu0 %v1076, 16
        %v1092 = vpop.permute.xlu0 %1091
        %1095 = vrot.lane.b32.xlu0 %v1085, 24
        %v1096 = vpop.permute.xlu0 %1095
        %v1098 = vsel %vm508, %v1058, %v1088
        %v1099 = vsel %vm556, %v1098, %v1092
        %vm1100 = vcmask 195584
        %v1101 = vsel %vm1100, %v1099, %v1096
        %v1102 = vpack.c.bf16 %v1101, %v1101
        %vm1103 = vcmask 257024
        %1104 = vst.msk [vmem:[%s402] sm:$0xf] %vm1103, %v1102
      $region56: #{mask4former_forward.30} parent=47 // pred_fallthru
        _
      %p1105 = scmp.lt.s32.totalorder %s22, 1
      %s1106 = scalar_select %p1105, %s22, 1
      %s1107 = smul.addr %s1106, 4
      %s1108 = scalar_lea.vmem %s7, %s1107
      // Predicated region
      $region57: #{mask4former_forward.30} parent=47 // pred_check
        %p1109 = pneg %p226
      $region58: #{mask4former_forward.30} parent=47 // pred_check_branch
        %1111 = sbr.rel (%p1109) target = $region60
      $region59: #{mask4former_forward.30} parent=47 // pred_region
        _
      $region60: #{mask4former_forward.30} parent=47 // pred_fallthru
        _
    $region48: #{mask4former_forward.30} parent=5 // pred_fallthru
      _
    %p1112 = scmp.le.s32.totalorder 2, %s13
    // Predicated region
    $region61: #{mask4former_forward.30} parent=5 // pred_check
      %p1113 = pneg %p1112
    $region62: #{mask4former_forward.30} parent=5 // pred_check_branch
      %1115 = sbr.rel (%p1113) target = $region64
    $region63: #{mask4former_forward.30} parent=5 // pred_region
      %s1116 = ssub.s32 %s13, 2
      // Predicated region
      $region65: #{mask4former_forward.30} parent=63 // pred_check
        %p1117 = pneg %p232
      $region66: #{mask4former_forward.30} parent=63 // pred_check_branch
        %1119 = sbr.rel (%p1117) target = $region68
      $region67: #{mask4former_forward.30} parent=63 // pred_region
        %p1120 = scmp.lt.s32.totalorder %s24, 1
        %s1121 = scalar_select %p1120, %s24, 1
        %s1122 = smul.addr %s1121, 4
        %s1123 = scalar_lea.vmem %s7, %s1122
      $region68: #{mask4former_forward.30} parent=63 // pred_fallthru
        _
    $region64: #{mask4former_forward.30} parent=5 // pred_fallthru
      _
  $region6: #{mask4former_forward.30} parent=0 // loop_footer
    %s17 = sadd.s32 1, %s13
  $region7: #{mask4former_forward.30} parent=0 // loop_footer_branch
    %12 = sbr.rel target = $region3
  $region8: #{mask4former_forward.30} parent=0 // loop_exit
    _

// kernel: mask4former_forward.43
$region0: #{mask4former_forward.43}
  #allocation0 [shape = 'u32[]', space=smem, size = 0x4, offset = 0x4, fixed_abs, tag = 'smem constant byte address 0x4 - core index']
  #allocation1 [shape = 'u32[144,128]{1,0:T(1,128)}', space=vmem, size = 0x12000, scoped, tag = 'internal scratch']
  %s0 = inlined_call_operand.vmem [shape: bf16[2,8,32], index: 0, kind: input, shape index: {}]
  %s1 = inlined_call_operand.vmem [shape: bf16[2,64,32], index: 1, kind: input, shape index: {}]
  %s2 = inlined_call_operand.hbm [shape: f32[2,8,64], index: 2, kind: output, shape index: {}]
  %s3 = sld [smem:[#allocation0]]
  $region41: #{mask4former_forward.43} parent=0
    _
  %s5 = ssub.s32 1, %s3
  %s6 = scalar_select 0, %s5, %s3
  $region1: #{mask4former_forward.43} parent=0
    #allocation2 [shape = 'u8[8192]{0}', space=vmem, size = 0x2000, scoped, tag = 'output window, operand 0']
    #allocation3 [shape = 's32[2]{0}', space=sflag, size = 0x8, scoped, tag = 'scoped memory for mask4former_forward.43']
    %7 = vsyncpa [#allocation3], 0
    %s8 = scalar_lea.sflag [#allocation3], 1
    %9 = vsyncpa %s8, 0
    loop: start=0, step=1, limit=4
    $region2: #{mask4former_forward.43} parent=1 // loop_pre_header
      _
    $region3: #{mask4former_forward.43} parent=1 // loop_header
      %s11 = sphi 0, %s15
      %p12 = scmp.ge.s32.totalorder %s11, 4
      %s18 = sphi 0, %s30
      %s19 = sphi 0, %s26
      %s20 = sphi 0, %s18
      %s21 = sphi 0, %s19
      %s22 = sphi 0, %s20
      %s23 = sphi 0, %s21
      %s33 = sphi 0, %s35
      %s36 = sphi 0, %s33
      %s37 = sphi 0, %s36
      %s53 = sphi 0, %s37
      %s61 = sphi 0, %s63
      %s64 = sphi 0, %s61
      %s65 = sphi 0, %s64
      %s81 = sphi 0, %s65
      %s89 = sphi 0, %s91
      %s92 = sphi 0, %s89
      %s93 = sphi 0, %s92
      %s109 = sphi 0, %s93
    $region4: #{mask4former_forward.43} parent=1 // loop_header_branch
      %14 = sbr.rel (%p12) target = $region8
    $region5: #{mask4former_forward.43} parent=1 // loop_body
      %s16 = ssub.s32 %s11, 1
      %s17 = ssub.s32 %s11, 2
      %s24 = sadd.s32 1, %s19
      %p25 = scmp.ge.s32.totalorder %s24, 1
      %s26 = scalar_select %p25, 0, %s24
      %s27 = sadd.s32 1, %s18
      %s28 = scalar_select %p25, %s27, %s18
      %p29 = scmp.ge.s32.totalorder %s28, 2
      %s30 = scalar_select %p29, 0, %s28
      %s31 = ssub.s32 %s18, %s30
      %p32 = scmp.eq.s32.totalorder %s31, 0
      %s34 = sadd.s32 %s33, 1
      %s35 = scalar_select %p32, %s33, %s34
      %p38 = pneg %p32
      %p39 = scmp.eq.s32.totalorder %s11, 1
      %p40 = por %p38, %p39
      %p41 = scmp.ne.s32.totalorder %s33, %s36
      %p42 = scmp.eq.s32.totalorder %s11, 0
      %p43 = por %p41, %p42
      %p44 = scmp.ne.s32.totalorder %s33, %s36
      %p45 = scmp.eq.s32.totalorder %s16, 1
      %p46 = por %p44, %p45
      %p47 = scmp.ne.s32.totalorder %s36, %s37
      %p48 = scmp.eq.s32.totalorder %s16, 0
      %p49 = por %p47, %p48
      %p50 = scmp.ne.s32.totalorder %s36, %s37
      %p51 = scmp.eq.s32.totalorder %s17, 1
      %p52 = por %p50, %p51
      %p54 = scmp.ne.s32.totalorder %s37, %s53
      %p55 = scmp.eq.s32.totalorder %s17, 0
      %p56 = por %p54, %p55
      %s57 = ssub.s32 %s18, %s30
      %s58 = ssub.s32 %s19, %s26
      %s59 = sor.u32 %s57, %s58
      %p60 = scmp.eq.s32.totalorder %s59, 0
      %s62 = sadd.s32 %s61, 1
      %s63 = scalar_select %p60, %s61, %s62
      %p66 = pneg %p60
      %p67 = scmp.eq.s32.totalorder %s11, 1
      %p68 = por %p66, %p67
      %p69 = scmp.ne.s32.totalorder %s61, %s64
      %p70 = scmp.eq.s32.totalorder %s11, 0
      %p71 = por %p69, %p70
      %p72 = scmp.ne.s32.totalorder %s61, %s64
      %p73 = scmp.eq.s32.totalorder %s16, 1
      %p74 = por %p72, %p73
      %p75 = scmp.ne.s32.totalorder %s64, %s65
      %p76 = scmp.eq.s32.totalorder %s16, 0
      %p77 = por %p75, %p76
      %p78 = scmp.ne.s32.totalorder %s64, %s65
      %p79 = scmp.eq.s32.totalorder %s17, 1
      %p80 = por %p78, %p79
      %p82 = scmp.ne.s32.totalorder %s65, %s81
      %p83 = scmp.eq.s32.totalorder %s17, 0
      %p84 = por %p82, %p83
      %s85 = ssub.s32 %s18, %s30
      %s86 = ssub.s32 %s19, %s26
      %s87 = sor.u32 %s85, %s86
      %p88 = scmp.eq.s32.totalorder %s87, 0
      %s90 = sadd.s32 %s89, 1
      %s91 = scalar_select %p88, %s89, %s90
      %p94 = pneg %p88
      %p95 = scmp.eq.s32.totalorder %s11, 1
      %p96 = por %p94, %p95
      %p97 = scmp.ne.s32.totalorder %s89, %s92
      %p98 = scmp.eq.s32.totalorder %s11, 0
      %p99 = por %p97, %p98
      %p100 = scmp.ne.s32.totalorder %s89, %s92
      %p101 = scmp.eq.s32.totalorder %s16, 1
      %p102 = por %p100, %p101
      %p103 = scmp.ne.s32.totalorder %s92, %s93
      %p104 = scmp.eq.s32.totalorder %s16, 0
      %p105 = por %p103, %p104
      %p106 = scmp.ne.s32.totalorder %s92, %s93
      %p107 = scmp.eq.s32.totalorder %s17, 1
      %p108 = por %p106, %p107
      %p110 = scmp.ne.s32.totalorder %s93, %s109
      %p111 = scmp.eq.s32.totalorder %s17, 0
      %p112 = por %p110, %p111
      %p113 = scmp.le.s32.totalorder 1, %s11
      %p114 = scmp.lt.s32.totalorder %s11, 3
      %p115 = pnand %p113, %p114
      %p116 = pneg %p115
      // Predicated region
      $region9: #{mask4former_forward.43} parent=5 // pred_check
        _
      $region10: #{mask4former_forward.43} parent=5 // pred_check_branch
        %118 = sbr.rel (%p115) target = $region12
      $region11: #{mask4former_forward.43} parent=5 // pred_region
        %s119 = ssub.s32 %s11, 1
      $region12: #{mask4former_forward.43} parent=5 // pred_fallthru
        _
      %p120 = scmp.lt.s32.totalorder %s11, 2
      // Predicated region
      $region13: #{mask4former_forward.43} parent=5 // pred_check
        %p121 = pneg %p120
      $region14: #{mask4former_forward.43} parent=5 // pred_check_branch
        %123 = sbr.rel (%p121) target = $region16
      $region15: #{mask4former_forward.43} parent=5 // pred_region
        // Predicated region
        $region17: #{mask4former_forward.43} parent=15 // pred_check
          %p124 = pneg %p43
        $region18: #{mask4former_forward.43} parent=15 // pred_check_branch
          %126 = sbr.rel (%p124) target = $region20
        $region19: #{mask4former_forward.43} parent=15 // pred_region
          %p127 = scmp.lt.s32.totalorder %s18, 1
          %s128 = scalar_select %p127, %s18, 1
          %s129 = smul.addr %s128, 4
          %s130 = scalar_lea.vmem %s0, %s129
        $region20: #{mask4former_forward.43} parent=15 // pred_fallthru
          _
        // Predicated region
        $region21: #{mask4former_forward.43} parent=15 // pred_check
          %p131 = pneg %p71
        $region22: #{mask4former_forward.43} parent=15 // pred_check_branch
          %133 = sbr.rel (%p131) target = $region24
        $region23: #{mask4former_forward.43} parent=15 // pred_region
          %s134 = smul.u32 8, %s19
          %p135 = scmp.lt.s32.totalorder %s18, 1
          %s136 = scalar_select %p135, %s18, 1
          %p137 = scmp.lt.s32.totalorder %s134, 7
          %s138 = scalar_select %p137, %s134, 7
          %s139 = smul.addr %s136, 8
          %s140 = sadd.s32 %s138, %s139
          %s141 = smul.addr %s140, 4
          %s142 = scalar_lea.vmem %s1, %s141
          %s143 = smul.u32 8, %s19
        $region24: #{mask4former_forward.43} parent=15 // pred_fallthru
          _
      $region16: #{mask4former_forward.43} parent=5 // pred_fallthru
        _
      %p144 = scmp.le.s32.totalorder 1, %s11
      %p145 = scmp.lt.s32.totalorder %s11, 3
      %p146 = pnand %p144, %p145
      %p147 = pneg %p146
      // Predicated region
      $region25: #{mask4former_forward.43} parent=5 // pred_check
        _
      $region26: #{mask4former_forward.43} parent=5 // pred_check_branch
        %149 = sbr.rel (%p146) target = $region28
      $region27: #{mask4former_forward.43} parent=5 // pred_region
        %s150 = ssub.s32 %s11, 1
        %p151 = scmp.lt.s32.totalorder %s20, 1
        %s152 = scalar_select %p151, %s20, 1
        %s153 = smul.addr %s152, 4
        %s154 = scalar_lea.vmem %s0, %s153
        %p155 = pneg %p49
        %p156 = pneg %p46
        %s157 = smul.u32 8, %s21
        %p158 = scmp.lt.s32.totalorder %s20, 1
        %s159 = scalar_select %p158, %s20, 1
        %p160 = scmp.lt.s32.totalorder %s157, 7
        %s161 = scalar_select %p160, %s157, 7
        %s162 = smul.addr %s159, 8
        %s163 = sadd.s32 %s161, %s162
        %s164 = smul.addr %s163, 4
        %s165 = scalar_lea.vmem %s1, %s164
        %p166 = pneg %p77
        %p167 = pneg %p74
        %p168 = pneg %p105
        %p169 = pneg %p102
        %s170 = sand.u32 %s92, 1
        %s171 = scalar_lea.sflag [#allocation3], %s170
        %s172 = sand.u32 %s92, 1
        %s173 = smul.addr %s172, 8
        %s174 = scalar_lea.vmem [#allocation2], %s173
        %p175 = scmp.lt.s32.totalorder %s20, 1
        %s176 = scalar_select %p175, %s20, 1
        %s177 = smul.addr %s176, 4
        %s178 = scalar_lea.vmem %s0, %s177
        %s179 = smul.u32 8, %s21
        %p180 = scmp.lt.s32.totalorder %s20, 1
        %s181 = scalar_select %p180, %s20, 1
        %p182 = scmp.lt.s32.totalorder %s179, 7
        %s183 = scalar_select %p182, %s179, 7
        %s184 = smul.addr %s181, 8
        %s185 = sadd.s32 %s183, %s184
        %s186 = smul.addr %s185, 4
        %s187 = scalar_lea.vmem %s1, %s186
        %s188 = smul.u32 8, %s21
        %v190 = vld [vmem:[%s178] sm:$0xf]
        %v191 = vld [vmem:[%s187] sm:$0xf]
        %v192 = vld [vmem:[%s187 + $0x4] sm:$0xf]
        %v193 = vld [vmem:[%s187 + $0x8] sm:$0xf]
        %v194 = vld [vmem:[%s187 + $0xc] sm:$0xf]
        %v195 = vld [vmem:[%s187 + $0x10] sm:$0xf]
        %v196 = vld [vmem:[%s187 + $0x14] sm:$0xf]
        %v197 = vld [vmem:[%s187 + $0x18] sm:$0xf]
        %v198 = vld [vmem:[%s187 + $0x1c] sm:$0xf]
        %v207 = vunpack.c.l.b16 %v191
        %v208 = vunpack.c.l.b16 %v192
        %v209 = vunpack.c.l.b16 %v193
        %v210 = vunpack.c.l.b16 %v194
        %v211 = vunpack.c.l.b16 %v195
        %v212 = vunpack.c.l.b16 %v196
        %v213 = vunpack.c.l.b16 %v197
        %v214 = vunpack.c.l.b16 %v198
        %v215 = vpack.c.b16 %v208, %v207
        %v216 = vpack.c.b16 %v210, %v209
        %v217 = vpack.c.b16 %v212, %v211
        %v218 = vpack.c.b16 %v214, %v213
        %vm219 = vcmask 261120
        %v221 = vsel %vm219, %v190, 0
        %v224 = vsel %vm219, %v215, 0
        %v227 = vsel %vm219, %v216, 0
        %v230 = vsel %vm219, %v217, 0
        %v233 = vsel %vm219, %v218, 0
        %235 = vmatprep.subr.bf16.mxu0 0
        %236 = vmatpush1.bf16.xpose.msra.mxu0 %v224
        %237 = vmatprep.subr.bf16.mxu0 0
        %238 = vmatpush1.bf16.xpose.msra.mxu0 %v227
        %239 = vmatprep.subr.bf16.mxu0 0
        %240 = vmatpush1.bf16.xpose.msra.mxu0 %v230
        %241 = vmatprep.subr.bf16.mxu0 0
        %242 = vmatpush1.bf16.xpose.msra.mxu0 %v233
        %243 = vmatprep.subr.bf16.mxu0 0
        %244 = vmatpush1.bf16.xpose.msra.mxu0 0
        %245 = vmatprep.subr.bf16.mxu0 0
        %246 = vmatpush1.bf16.xpose.msra.mxu0 0
        %247 = vmatprep.subr.bf16.mxu0 0
        %248 = vmatpush1.bf16.xpose.msra.mxu0 0
        %249 = vmatprep.subr.bf16.mxu0 0
        %250 = vmatpush1.bf16.xpose.msra.mxu0 0
        %251 = vmatprep.subr.bf16.mxu0 0
        %252 = vmatpush1.bf16.xpose.msra.mxu0 0
        %253 = vmatprep.subr.bf16.mxu0 0
        %254 = vmatpush1.bf16.xpose.msra.mxu0 0
        %255 = vmatprep.subr.bf16.mxu0 0
        %256 = vmatpush1.bf16.xpose.msra.mxu0 0
        %257 = vmatprep.subr.bf16.mxu0 0
        %258 = vmatpush1.bf16.xpose.msra.mxu0 0
        %259 = vmatprep.subr.bf16.mxu0 0
        %260 = vmatpush1.bf16.xpose.msra.mxu0 0
        %261 = vmatprep.subr.bf16.mxu0 0
        %262 = vmatpush1.bf16.xpose.msra.mxu0 0
        %263 = vmatprep.subr.bf16.mxu0 0
        %264 = vmatpush1.bf16.xpose.msra.mxu0 0
        %265 = vmatprep.subr.bf16.mxu0 0
        %266 = vmatpush1.bf16.xpose.msra.mxu0 0
        %267 = vmatprep.mubr.bf16.mxu0 0
        %268 = vmatmul.mubr.bf16.gmra.mrb[0].mxu0 %v221
        %v269 = vpop.f32.mrb[0].mxu0
        %v270 = vadd.f32 0.0, %v269
        %v271 = vpop.f32.mrb[0].mxu0
        %v272 = vpop.f32.mrb[0].mxu0
        %v273 = vpop.f32.mrb[0].mxu0
        %274 = vdwg.mxu0
        %vm275 = vcmask 523264
        %276 = vst.msk [vmem:[%s174] sm:$0xff] %vm275, %v270
        %s277 = sand.u32 %s92, 1
        %s278 = scalar_lea.sflag [#allocation3], %s277
        %s279 = sand.u32 %s92, 1
        %s280 = smul.addr %s279, 8
        %s281 = scalar_lea.vmem [#allocation2], %s280
        // Predicated region
        $region29: #{mask4former_forward.43} parent=27 // pred_check
          %p282 = pneg %p102
        $region30: #{mask4former_forward.43} parent=27 // pred_check_branch
          %284 = sbr.rel (%p282) target = $region32
        $region31: #{mask4former_forward.43} parent=27 // pred_region
          %s286 = ssub.s32 128, 128
          %287 = vsyncadd %s278, %s286
          %s288 = sadd.s32 %s21, %s20
          %s289 = smul.addr %s288, 128
          %s290 = scalar_lea.hbm %s2, %s289
          %s292 = sshll.u32 %s281, 4
          %s293 = int_to_ptr.vmem [resolvable:$true] %s292
          %295 = dma.vmem_to_hbm [thread:$0]  %s293, 128, %s290, %s278
        $region32: #{mask4former_forward.43} parent=27 // pred_fallthru
          _
      $region28: #{mask4former_forward.43} parent=5 // pred_fallthru
        _
      %p296 = scmp.le.s32.totalorder 2, %s11
      // Predicated region
      $region33: #{mask4former_forward.43} parent=5 // pred_check
        %p297 = pneg %p296
      $region34: #{mask4former_forward.43} parent=5 // pred_check_branch
        %299 = sbr.rel (%p297) target = $region36
      $region35: #{mask4former_forward.43} parent=5 // pred_region
        %s300 = ssub.s32 %s11, 2
        // Predicated region
        $region37: #{mask4former_forward.43} parent=35 // pred_check
          %p301 = pneg %p108
        $region38: #{mask4former_forward.43} parent=35 // pred_check_branch
          %303 = sbr.rel (%p301) target = $region40
        $region39: #{mask4former_forward.43} parent=35 // pred_region
          %s304 = sand.u32 %s93, 1
          %s305 = scalar_lea.sflag [#allocation3], %s304
          %s306 = sand.u32 %s93, 1
          %s307 = smul.addr %s306, 8
          %s308 = scalar_lea.vmem [#allocation2], %s307
          %309 = dma.done %s305, 128
        $region40: #{mask4former_forward.43} parent=35 // pred_fallthru
          _
      $region36: #{mask4former_forward.43} parent=5 // pred_fallthru
        _
    $region6: #{mask4former_forward.43} parent=1 // loop_footer
      %s15 = sadd.s32 1, %s11
    $region7: #{mask4former_forward.43} parent=1 // loop_footer_branch
      %10 = sbr.rel target = $region3
    $region8: #{mask4former_forward.43} parent=1 // loop_exit
      _
    %310 = vsyncpa [#allocation3], 1
    %s311 = scalar_lea.sflag [#allocation3], 1
    %312 = vsyncpa %s311, 1

// kernel: mask4former_forward.37
$region0: #{mask4former_forward.37}
  #allocation0 [shape = 'u32[]', space=smem, size = 0x4, offset = 0x4, fixed_abs, tag = 'smem constant byte address 0x4 - core index']
  #allocation1 [shape = 'u32[144,128]{1,0:T(1,128)}', space=vmem, size = 0x12000, scoped, tag = 'internal scratch']
  %s0 = inlined_call_operand.vmem [shape: f32[64,16], index: 0, kind: input, shape index: {}]
  %s1 = inlined_call_operand.vmem [shape: bf16[64,32], index: 1, kind: input, shape index: {}]
  %s2 = inlined_call_operand.vmem [shape: bf16[16,32], index: 2, kind: input, shape index: {}]
  %s3 = inlined_call_operand.vmem [shape: f32[1,32], index: 3, kind: input, shape index: {}]
  %s4 = inlined_call_operand.vmem [shape: bf16[32,32], index: 4, kind: input, shape index: {}]
  %s5 = inlined_call_operand.vmem [shape: f32[1,32], index: 5, kind: input, shape index: {}]
  %s6 = inlined_call_operand.vmem [shape: bf16[32,32], index: 6, kind: input, shape index: {}]
  %s7 = inlined_call_operand.vmem [shape: f32[1,32], index: 7, kind: input, shape index: {}]
  %s8 = inlined_call_operand.vmem [shape: bf16[64,32], index: 8, kind: output, shape index: {0}]
  %s9 = inlined_call_operand.vmem [shape: bf16[64,32], index: 9, kind: output, shape index: {1}]
  %10 = xla_tuple %s8, %s9
  %s11 = sld [smem:[#allocation0]]
  $region50: #{mask4former_forward.37} parent=0
    _
  %s13 = ssub.s32 1, %s11
  %s14 = scalar_select 0, %s13, %s11
  // Predicated region
  $region2: #{mask4former_forward.37} parent=0 // pred_check
    _
  $region3: #{mask4former_forward.37} parent=0 // pred_check_branch
    %16 = sbr.rel (0) target = $region5
  $region4: #{mask4former_forward.37} parent=0 // pred_region
    _
  $region5: #{mask4former_forward.37} parent=0 // pred_fallthru
    _
  // Predicated region
  $region6: #{mask4former_forward.37} parent=0 // pred_check
    _
  $region7: #{mask4former_forward.37} parent=0 // pred_check_branch
    %18 = sbr.rel (0) target = $region9
  $region8: #{mask4former_forward.37} parent=0 // pred_region
    _
  $region9: #{mask4former_forward.37} parent=0 // pred_fallthru
    _
  // Predicated region
  $region10: #{mask4former_forward.37} parent=0 // pred_check
    _
  $region11: #{mask4former_forward.37} parent=0 // pred_check_branch
    %20 = sbr.rel (0) target = $region13
  $region12: #{mask4former_forward.37} parent=0 // pred_region
    _
  $region13: #{mask4former_forward.37} parent=0 // pred_fallthru
    _
  // Predicated region
  $region14: #{mask4former_forward.37} parent=0 // pred_check
    _
  $region15: #{mask4former_forward.37} parent=0 // pred_check_branch
    %22 = sbr.rel (0) target = $region17
  $region16: #{mask4former_forward.37} parent=0 // pred_region
    _
  $region17: #{mask4former_forward.37} parent=0 // pred_fallthru
    _
  // Predicated region
  $region18: #{mask4former_forward.37} parent=0 // pred_check
    _
  $region19: #{mask4former_forward.37} parent=0 // pred_check_branch
    %24 = sbr.rel (0) target = $region21
  $region20: #{mask4former_forward.37} parent=0 // pred_region
    _
  $region21: #{mask4former_forward.37} parent=0 // pred_fallthru
    _
  // Predicated region
  $region22: #{mask4former_forward.37} parent=0 // pred_check
    _
  $region23: #{mask4former_forward.37} parent=0 // pred_check_branch
    %26 = sbr.rel (0) target = $region25
  $region24: #{mask4former_forward.37} parent=0 // pred_region
    _
  $region25: #{mask4former_forward.37} parent=0 // pred_fallthru
    _
  // Predicated region
  $region26: #{mask4former_forward.37} parent=0 // pred_check
    _
  $region27: #{mask4former_forward.37} parent=0 // pred_check_branch
    %28 = sbr.rel (0) target = $region29
  $region28: #{mask4former_forward.37} parent=0 // pred_region
    _
  $region29: #{mask4former_forward.37} parent=0 // pred_fallthru
    _
  // Predicated region
  $region30: #{mask4former_forward.37} parent=0 // pred_check
    _
  $region31: #{mask4former_forward.37} parent=0 // pred_check_branch
    %30 = sbr.rel (0) target = $region33
  $region32: #{mask4former_forward.37} parent=0 // pred_region
    _
  $region33: #{mask4former_forward.37} parent=0 // pred_fallthru
    _
  %v32 = vld [vmem:[%s0] sm:$0xff]
  %v33 = vld [vmem:[%s0 + $0x8] sm:$0xff]
  %v34 = vld [vmem:[%s0 + $0x10] sm:$0xff]
  %v35 = vld [vmem:[%s0 + $0x18] sm:$0xff]
  %v36 = vld [vmem:[%s0 + $0x20] sm:$0xff]
  %v37 = vld [vmem:[%s0 + $0x28] sm:$0xff]
  %v38 = vld [vmem:[%s0 + $0x30] sm:$0xff]
  %v39 = vld [vmem:[%s0 + $0x38] sm:$0xff]
  %v40 = vpack.c.bf16 %v33, %v32
  %v41 = vpack.c.bf16 %v35, %v34
  %v42 = vpack.c.bf16 %v37, %v36
  %v43 = vpack.c.bf16 %v39, %v38
  %v44 = vld [vmem:[%s2] sm:$0xf]
  %v45 = vld [vmem:[%s2 + $0x4] sm:$0xf]
  %v46 = vld [vmem:[%s3] sm:$0x1]
  %v48 = vlaneseq
  %v49 = vshrl.u32 %v48, 7
  %v50 = vsub.s32 0, %v49
  %v51 = vrot.slane %v46, %v50
  %v55 = vunpack.c.l.b16 %v44
  %v56 = vunpack.c.l.b16 %v45
  %v57 = vpack.c.b16 %v56, %v55
  %vm59 = vcmask 130048
  %v61 = vsel %vm59, %v40, 0
  %v64 = vsel %vm59, %v41, 0
  %v67 = vsel %vm59, %v42, 0
  %v70 = vsel %vm59, %v43, 0
  %72 = vmatprep.subr.bf16.mxu0 0
  %73 = vmatpush1.bf16.msra.mxu0 %v57
  %74 = vmatprep.subr.bf16.mxu0 0
  %75 = vmatpush1.bf16.msra.mxu0 0
  %76 = vmatprep.subr.bf16.mxu0 0
  %77 = vmatpush1.bf16.msra.mxu0 0
  %78 = vmatprep.subr.bf16.mxu0 0
  %79 = vmatpush1.bf16.msra.mxu0 0
  %80 = vmatprep.subr.bf16.mxu0 0
  %81 = vmatpush1.bf16.msra.mxu0 0
  %82 = vmatprep.subr.bf16.mxu0 0
  %83 = vmatpush1.bf16.msra.mxu0 0
  %84 = vmatprep.subr.bf16.mxu0 0
  %85 = vmatpush1.bf16.msra.mxu0 0
  %86 = vmatprep.subr.bf16.mxu0 0
  %87 = vmatpush1.bf16.msra.mxu0 0
  %88 = vmatprep.subr.bf16.mxu0 0
  %89 = vmatpush1.bf16.msra.mxu0 0
  %90 = vmatprep.subr.bf16.mxu0 0
  %91 = vmatpush1.bf16.msra.mxu0 0
  %92 = vmatprep.subr.bf16.mxu0 0
  %93 = vmatpush1.bf16.msra.mxu0 0
  %94 = vmatprep.subr.bf16.mxu0 0
  %95 = vmatpush1.bf16.msra.mxu0 0
  %96 = vmatprep.subr.bf16.mxu0 0
  %97 = vmatpush1.bf16.msra.mxu0 0
  %98 = vmatprep.subr.bf16.mxu0 0
  %99 = vmatpush1.bf16.msra.mxu0 0
  %100 = vmatprep.subr.bf16.mxu0 0
  %101 = vmatpush1.bf16.msra.mxu0 0
  %102 = vmatprep.subr.bf16.mxu0 0
  %103 = vmatpush1.bf16.msra.mxu0 0
  %104 = vmatprep.mubr.bf16.mxu0 0
  %105 = vmatmul.mubr.bf16.gmra.mrb[0].mxu0 %v61
  %v106 = vpop.f32.mrb[0].mxu0
  %v107 = vadd.f32 %v51, %v106
  %v108 = vpop.f32.mrb[0].mxu0
  %v109 = vpop.f32.mrb[0].mxu0
  %v110 = vadd.f32 %v51, %v109
  %v111 = vpop.f32.mrb[0].mxu0
  %112 = vmatprep.mubr.bf16.mxu0 0
  %113 = vmatmul.mubr.bf16.gmra.mrb[0].mxu0 %v64
  %v114 = vpop.f32.mrb[0].mxu0
  %v115 = vadd.f32 %v51, %v114
  %v116 = vpop.f32.mrb[0].mxu0
  %v117 = vpop.f32.mrb[0].mxu0
  %v118 = vadd.f32 %v51, %v117
  %v119 = vpop.f32.mrb[0].mxu0
  %120 = vmatprep.mubr.bf16.mxu0 0
  %121 = vmatmul.mubr.bf16.gmra.mrb[0].mxu0 %v67
  %v122 = vpop.f32.mrb[0].mxu0
  %v123 = vadd.f32 %v51, %v122
  %v124 = vpop.f32.mrb[0].mxu0
  %v125 = vpop.f32.mrb[0].mxu0
  %v126 = vadd.f32 %v51, %v125
  %v127 = vpop.f32.mrb[0].mxu0
  %128 = vmatprep.mubr.bf16.mxu0 0
  %129 = vmatmul.mubr.bf16.gmra.mrb[0].mxu0 %v70
  %v130 = vpop.f32.mrb[0].mxu0
  %v131 = vadd.f32 %v51, %v130
  %v132 = vpop.f32.mrb[0].mxu0
  %v133 = vpop.f32.mrb[0].mxu0
  %v134 = vadd.f32 %v51, %v133
  %v135 = vpop.f32.mrb[0].mxu0
  %136 = vdwg.mxu0
  %v137 = vld [vmem:[%s1] sm:$0xf]
  %v138 = vld [vmem:[%s1 + $0x4] sm:$0xf]
  %v139 = vld [vmem:[%s1 + $0x8] sm:$0xf]
  %v140 = vld [vmem:[%s1 + $0xc] sm:$0xf]
  %v141 = vld [vmem:[%s1 + $0x10] sm:$0xf]
  %v142 = vld [vmem:[%s1 + $0x14] sm:$0xf]
  %v143 = vld [vmem:[%s1 + $0x18] sm:$0xf]
  %v144 = vld [vmem:[%s1 + $0x1c] sm:$0xf]
  %v145 = vunpack.c.l.bf16 %v137
  %v146 = vunpack.c.l.bf16 %v138
  %v147 = vunpack.c.l.bf16 %v139
  %v148 = vunpack.c.l.bf16 %v140
  %v149 = vunpack.c.l.bf16 %v141
  %v150 = vunpack.c.l.bf16 %v142
  %v151 = vunpack.c.l.bf16 %v143
  %v152 = vunpack.c.l.bf16 %v144
  %v153 = vadd.f32 %v107, %v145
  %v154 = vadd.f32 %v110, %v146
  %v155 = vadd.f32 %v115, %v147
  %v156 = vadd.f32 %v118, %v148
  %v157 = vadd.f32 %v123, %v149
  %v158 = vadd.f32 %v126, %v150
  %v159 = vadd.f32 %v131, %v151
  %v160 = vadd.f32 %v134, %v152
  %v161 = vpack.c.bf16 %v154, %v153
  %v162 = vpack.c.bf16 %v156, %v155
  %v163 = vpack.c.bf16 %v158, %v157
  %v164 = vpack.c.bf16 %v160, %v159
  %v165 = vld [vmem:[%s4] sm:$0xf]
  %v166 = vld [vmem:[%s4 + $0x4] sm:$0xf]
  %v167 = vld [vmem:[%s4 + $0x8] sm:$0xf]
  %v168 = vld [vmem:[%s4 + $0xc] sm:$0xf]
  %v169 = vld [vmem:[%s5] sm:$0x1]
  %v171 = vlaneseq
  %v172 = vshrl.u32 %v171, 7
  %v173 = vsub.s32 0, %v172
  %v174 = vrot.slane %v169, %v173
  %v180 = vunpack.c.l.b16 %v165
  %v181 = vunpack.c.l.b16 %v166
  %v182 = vunpack.c.l.b16 %v167
  %v183 = vunpack.c.l.b16 %v168
  %v184 = vpack.c.b16 %v181, %v180
  %v185 = vpack.c.b16 %v183, %v182
  %vm188 = vcmask 261120
  %v190 = vsel %vm188, %v161, 0
  %v193 = vsel %vm188, %v162, 0
  %v196 = vsel %vm188, %v163, 0
  %v199 = vsel %vm188, %v164, 0
  %201 = vmatprep.subr.bf16.mxu0 0
  %202 = vmatpush1.bf16.msra.mxu0 %v184
  %203 = vmatprep.subr.bf16.mxu0 0
  %204 = vmatpush1.bf16.msra.mxu0 %v185
  %205 = vmatprep.subr.bf16.mxu0 0
  %206 = vmatpush1.bf16.msra.mxu0 0
  %207 = vmatprep.subr.bf16.mxu0 0
  %208 = vmatpush1.bf16.msra.mxu0 0
  %209 = vmatprep.subr.bf16.mxu0 0
  %210 = vmatpush1.bf16.msra.mxu0 0
  %211 = vmatprep.subr.bf16.mxu0 0
  %212 = vmatpush1.bf16.msra.mxu0 0
  %213 = vmatprep.subr.bf16.mxu0 0
  %214 = vmatpush1.bf16.msra.mxu0 0
  %215 = vmatprep.subr.bf16.mxu0 0
  %216 = vmatpush1.bf16.msra.mxu0 0
  %217 = vmatprep.subr.bf16.mxu0 0
  %218 = vmatpush1.bf16.msra.mxu0 0
  %219 = vmatprep.subr.bf16.mxu0 0
  %220 = vmatpush1.bf16.msra.mxu0 0
  %221 = vmatprep.subr.bf16.mxu0 0
  %222 = vmatpush1.bf16.msra.mxu0 0
  %223 = vmatprep.subr.bf16.mxu0 0
  %224 = vmatpush1.bf16.msra.mxu0 0
  %225 = vmatprep.subr.bf16.mxu0 0
  %226 = vmatpush1.bf16.msra.mxu0 0
  %227 = vmatprep.subr.bf16.mxu0 0
  %228 = vmatpush1.bf16.msra.mxu0 0
  %229 = vmatprep.subr.bf16.mxu0 0
  %230 = vmatpush1.bf16.msra.mxu0 0
  %231 = vmatprep.subr.bf16.mxu0 0
  %232 = vmatpush1.bf16.msra.mxu0 0
  %233 = vmatprep.mubr.bf16.mxu0 0
  %234 = vmatmul.mubr.bf16.gmra.mrb[0].mxu0 %v190
  %v235 = vpop.f32.mrb[0].mxu0
  %v236 = vadd.f32 %v174, %v235
  %v237 = vpop.f32.mrb[0].mxu0
  %v238 = vpop.f32.mrb[0].mxu0
  %v239 = vadd.f32 %v174, %v238
  %v240 = vpop.f32.mrb[0].mxu0
  %241 = vmatprep.mubr.bf16.mxu0 0
  %242 = vmatmul.mubr.bf16.gmra.mrb[0].mxu0 %v193
  %v243 = vpop.f32.mrb[0].mxu0
  %v244 = vadd.f32 %v174, %v243
  %v245 = vpop.f32.mrb[0].mxu0
  %v246 = vpop.f32.mrb[0].mxu0
  %v247 = vadd.f32 %v174, %v246
  %v248 = vpop.f32.mrb[0].mxu0
  %249 = vmatprep.mubr.bf16.mxu0 0
  %250 = vmatmul.mubr.bf16.gmra.mrb[0].mxu0 %v196
  %v251 = vpop.f32.mrb[0].mxu0
  %v252 = vadd.f32 %v174, %v251
  %v253 = vpop.f32.mrb[0].mxu0
  %v254 = vpop.f32.mrb[0].mxu0
  %v255 = vadd.f32 %v174, %v254
  %v256 = vpop.f32.mrb[0].mxu0
  %257 = vmatprep.mubr.bf16.mxu0 0
  %258 = vmatmul.mubr.bf16.gmra.mrb[0].mxu0 %v199
  %v259 = vpop.f32.mrb[0].mxu0
  %v260 = vadd.f32 %v174, %v259
  %v261 = vpop.f32.mrb[0].mxu0
  %v262 = vpop.f32.mrb[0].mxu0
  %v263 = vadd.f32 %v174, %v262
  %v264 = vpop.f32.mrb[0].mxu0
  %265 = vdwg.mxu0
  %v266 = vpack.c.bf16 %v110, %v107
  %v267 = vpack.c.bf16 %v118, %v115
  %v268 = vpack.c.bf16 %v126, %v123
  %v269 = vpack.c.bf16 %v134, %v131
  %v270 = vld [vmem:[%s6] sm:$0xf]
  %v271 = vld [vmem:[%s6 + $0x4] sm:$0xf]
  %v272 = vld [vmem:[%s6 + $0x8] sm:$0xf]
  %v273 = vld [vmem:[%s6 + $0xc] sm:$0xf]
  %v274 = vld [vmem:[%s7] sm:$0x1]
  %v276 = vlaneseq
  %v277 = vshrl.u32 %v276, 7
  %v278 = vsub.s32 0, %v277
  %v279 = vrot.slane %v274, %v278
  %v285 = vunpack.c.l.b16 %v270
  %v286 = vunpack.c.l.b16 %v271
  %v287 = vunpack.c.l.b16 %v272
  %v288 = vunpack.c.l.b16 %v273
  %v289 = vpack.c.b16 %v286, %v285
  %v290 = vpack.c.b16 %v288, %v287
  %v294 = vsel %vm188, %v266, 0
  %v297 = vsel %vm188, %v267, 0
  %v300 = vsel %vm188, %v268, 0
  %v303 = vsel %vm188, %v269, 0
  %305 = vmatprep.subr.bf16.mxu0 0
  %306 = vmatpush1.bf16.msra.mxu0 %v289
  %307 = vmatprep.subr.bf16.mxu0 0
  %308 = vmatpush1.bf16.msra.mxu0 %v290
  %309 = vmatprep.subr.bf16.mxu0 0
  %310 = vmatpush1.bf16.msra.mxu0 0
  %311 = vmatprep.subr.bf16.mxu0 0
  %312 = vmatpush1.bf16.msra.mxu0 0
  %313 = vmatprep.subr.bf16.mxu0 0
  %314 = vmatpush1.bf16.msra.mxu0 0
  %315 = vmatprep.subr.bf16.mxu0 0
  %316 = vmatpush1.bf16.msra.mxu0 0
  %317 = vmatprep.subr.bf16.mxu0 0
  %318 = vmatpush1.bf16.msra.mxu0 0
  %319 = vmatprep.subr.bf16.mxu0 0
  %320 = vmatpush1.bf16.msra.mxu0 0
  %321 = vmatprep.subr.bf16.mxu0 0
  %322 = vmatpush1.bf16.msra.mxu0 0
  %323 = vmatprep.subr.bf16.mxu0 0
  %324 = vmatpush1.bf16.msra.mxu0 0
  %325 = vmatprep.subr.bf16.mxu0 0
  %326 = vmatpush1.bf16.msra.mxu0 0
  %327 = vmatprep.subr.bf16.mxu0 0
  %328 = vmatpush1.bf16.msra.mxu0 0
  %329 = vmatprep.subr.bf16.mxu0 0
  %330 = vmatpush1.bf16.msra.mxu0 0
  %331 = vmatprep.subr.bf16.mxu0 0
  %332 = vmatpush1.bf16.msra.mxu0 0
  %333 = vmatprep.subr.bf16.mxu0 0
  %334 = vmatpush1.bf16.msra.mxu0 0
  %335 = vmatprep.subr.bf16.mxu0 0
  %336 = vmatpush1.bf16.msra.mxu0 0
  %337 = vmatprep.mubr.bf16.mxu0 0
  %338 = vmatmul.mubr.bf16.gmra.mrb[0].mxu0 %v294
  %v339 = vpop.f32.mrb[0].mxu0
  %v340 = vadd.f32 %v279, %v339
  %v341 = vpop.f32.mrb[0].mxu0
  %v342 = vpop.f32.mrb[0].mxu0
  %v343 = vadd.f32 %v279, %v342
  %v344 = vpop.f32.mrb[0].mxu0
  %345 = vmatprep.mubr.bf16.mxu0 0
  %346 = vmatmul.mubr.bf16.gmra.mrb[0].mxu0 %v297
  %v347 = vpop.f32.mrb[0].mxu0
  %v348 = vadd.f32 %v279, %v347
  %v349 = vpop.f32.mrb[0].mxu0
  %v350 = vpop.f32.mrb[0].mxu0
  %v351 = vadd.f32 %v279, %v350
  %v352 = vpop.f32.mrb[0].mxu0
  %353 = vmatprep.mubr.bf16.mxu0 0
  %354 = vmatmul.mubr.bf16.gmra.mrb[0].mxu0 %v300
  %v355 = vpop.f32.mrb[0].mxu0
  %v356 = vadd.f32 %v279, %v355
  %v357 = vpop.f32.mrb[0].mxu0
  %v358 = vpop.f32.mrb[0].mxu0
  %v359 = vadd.f32 %v279, %v358
  %v360 = vpop.f32.mrb[0].mxu0
  %361 = vmatprep.mubr.bf16.mxu0 0
  %362 = vmatmul.mubr.bf16.gmra.mrb[0].mxu0 %v303
  %v363 = vpop.f32.mrb[0].mxu0
  %v364 = vadd.f32 %v279, %v363
  %v365 = vpop.f32.mrb[0].mxu0
  %v366 = vpop.f32.mrb[0].mxu0
  %v367 = vadd.f32 %v279, %v366
  %v368 = vpop.f32.mrb[0].mxu0
  %369 = vdwg.mxu0
  %v370 = vpack.c.bf16 %v239, %v236
  %v371 = vpack.c.bf16 %v247, %v244
  %v372 = vpack.c.bf16 %v255, %v252
  %v373 = vpack.c.bf16 %v263, %v260
  %v378 = vunpack.c.l.b16 %v370
  %v379 = vunpack.c.h.b16 %v370
  %v380 = vunpack.c.l.b16 %v371
  %v381 = vunpack.c.h.b16 %v371
  %v382 = vunpack.c.l.b16 %v372
  %v383 = vunpack.c.h.b16 %v372
  %v384 = vunpack.c.l.b16 %v373
  %v385 = vunpack.c.h.b16 %v373
  %v386 = vpack.c.b16 %v378, %v378
  %v387 = vpack.c.b16 %v379, %v379
  %v388 = vpack.c.b16 %v380, %v380
  %v389 = vpack.c.b16 %v381, %v381
  %v390 = vpack.c.b16 %v382, %v382
  %v391 = vpack.c.b16 %v383, %v383
  %v392 = vpack.c.b16 %v384, %v384
  %v393 = vpack.c.b16 %v385, %v385
  %vm402 = vcmask 257024
  %403 = vst.msk [vmem:[%s8] sm:$0xf] %vm402, %v386
  %404 = vst.msk [vmem:[%s8 + $0x4] sm:$0xf] %vm402, %v387
  %405 = vst.msk [vmem:[%s8 + $0x8] sm:$0xf] %vm402, %v388
  %406 = vst.msk [vmem:[%s8 + $0xc] sm:$0xf] %vm402, %v389
  %407 = vst.msk [vmem:[%s8 + $0x10] sm:$0xf] %vm402, %v390
  %408 = vst.msk [vmem:[%s8 + $0x14] sm:$0xf] %vm402, %v391
  %409 = vst.msk [vmem:[%s8 + $0x18] sm:$0xf] %vm402, %v392
  %410 = vst.msk [vmem:[%s8 + $0x1c] sm:$0xf] %vm402, %v393
  %v411 = vpack.c.bf16 %v343, %v340
  %v412 = vpack.c.bf16 %v351, %v348
  %v413 = vpack.c.bf16 %v359, %v356
  %v414 = vpack.c.bf16 %v367, %v364
  %v419 = vunpack.c.l.b16 %v411
  %v420 = vunpack.c.h.b16 %v411
  %v421 = vunpack.c.l.b16 %v412
  %v422 = vunpack.c.h.b16 %v412
  %v423 = vunpack.c.l.b16 %v413
  %v424 = vunpack.c.h.b16 %v413
  %v425 = vunpack.c.l.b16 %v414
  %v426 = vunpack.c.h.b16 %v414
  %v427 = vpack.c.b16 %v419, %v419
  %v428 = vpack.c.b16 %v420, %v420
  %v429 = vpack.c.b16 %v421, %v421
  %v430 = vpack.c.b16 %v422, %v422
  %v431 = vpack.c.b16 %v423, %v423
  %v432 = vpack.c.b16 %v424, %v424
  %v433 = vpack.c.b16 %v425, %v425
  %v434 = vpack.c.b16 %v426, %v426
  %443 = vst.msk [vmem:[%s9] sm:$0xf] %vm402, %v427
  %444 = vst.msk [vmem:[%s9 + $0x4] sm:$0xf] %vm402, %v428
  %445 = vst.msk [vmem:[%s9 + $0x8] sm:$0xf] %vm402, %v429
  %446 = vst.msk [vmem:[%s9 + $0xc] sm:$0xf] %vm402, %v430
  %447 = vst.msk [vmem:[%s9 + $0x10] sm:$0xf] %vm402, %v431
  %448 = vst.msk [vmem:[%s9 + $0x14] sm:$0xf] %vm402, %v432
  %449 = vst.msk [vmem:[%s9 + $0x18] sm:$0xf] %vm402, %v433
  %450 = vst.msk [vmem:[%s9 + $0x1c] sm:$0xf] %vm402, %v434
  // Predicated region
  $region34: #{mask4former_forward.37} parent=0 // pred_check
    _
  $region35: #{mask4former_forward.37} parent=0 // pred_check_branch
    %452 = sbr.rel (0) target = $region37
  $region36: #{mask4former_forward.37} parent=0 // pred_region
    _
  $region37: #{mask4former_forward.37} parent=0 // pred_fallthru
    _
  // Predicated region
  $region38: #{mask4former_forward.37} parent=0 // pred_check
    _
  $region39: #{mask4former_forward.37} parent=0 // pred_check_branch
    %454 = sbr.rel (0) target = $region41
  $region40: #{mask4former_forward.37} parent=0 // pred_region
    _
  $region41: #{mask4former_forward.37} parent=0 // pred_fallthru
    _
  // Predicated region
  $region42: #{mask4former_forward.37} parent=0 // pred_check
    _
  $region43: #{mask4former_forward.37} parent=0 // pred_check_branch
    %456 = sbr.rel (0) target = $region45
  $region44: #{mask4former_forward.37} parent=0 // pred_region
    _
  $region45: #{mask4former_forward.37} parent=0 // pred_fallthru
    _
  // Predicated region
  $region46: #{mask4former_forward.37} parent=0 // pred_check
    _
  $region47: #{mask4former_forward.37} parent=0 // pred_check_branch
    %458 = sbr.rel (0) target = $region49
  $region48: #{mask4former_forward.37} parent=0 // pred_region
    _
  $region49: #{mask4former_forward.37} parent=0 // pred_fallthru
    _

// kernel: mask4former_forward.41
$region0: #{mask4former_forward.41}
  #allocation0 [shape = 'u32[]', space=smem, size = 0x4, offset = 0x4, fixed_abs, tag = 'smem constant byte address 0x4 - core index']
  #allocation1 [shape = 'u32[144,128]{1,0:T(1,128)}', space=vmem, size = 0x12000, scoped, tag = 'internal scratch']
  %s0 = inlined_call_operand.vmem [shape: f32[16,32], index: 0, kind: input, shape index: {}]
  %s1 = inlined_call_operand.vmem [shape: f32[1,32], index: 1, kind: input, shape index: {}]
  %s2 = inlined_call_operand.vmem [shape: f32[1,32], index: 2, kind: input, shape index: {}]
  %s3 = inlined_call_operand.vmem [shape: bf16[32,6], index: 3, kind: input, shape index: {}]
  %s4 = inlined_call_operand.vmem [shape: f32[1,6], index: 4, kind: input, shape index: {}]
  %s5 = inlined_call_operand.vmem [shape: f32[16,6], index: 5, kind: output, shape index: {}]
  %s6 = sld [smem:[#allocation0]]
  $region30: #{mask4former_forward.41} parent=0
    _
  %s8 = ssub.s32 1, %s6
  %s9 = scalar_select 0, %s8, %s6
  // Predicated region
  $region2: #{mask4former_forward.41} parent=0 // pred_check
    _
  $region3: #{mask4former_forward.41} parent=0 // pred_check_branch
    %11 = sbr.rel (0) target = $region5
  $region4: #{mask4former_forward.41} parent=0 // pred_region
    _
  $region5: #{mask4former_forward.41} parent=0 // pred_fallthru
    _
  // Predicated region
  $region6: #{mask4former_forward.41} parent=0 // pred_check
    _
  $region7: #{mask4former_forward.41} parent=0 // pred_check_branch
    %13 = sbr.rel (0) target = $region9
  $region8: #{mask4former_forward.41} parent=0 // pred_region
    _
  $region9: #{mask4former_forward.41} parent=0 // pred_fallthru
    _
  // Predicated region
  $region10: #{mask4former_forward.41} parent=0 // pred_check
    _
  $region11: #{mask4former_forward.41} parent=0 // pred_check_branch
    %15 = sbr.rel (0) target = $region13
  $region12: #{mask4former_forward.41} parent=0 // pred_region
    _
  $region13: #{mask4former_forward.41} parent=0 // pred_fallthru
    _
  // Predicated region
  $region14: #{mask4former_forward.41} parent=0 // pred_check
    _
  $region15: #{mask4former_forward.41} parent=0 // pred_check_branch
    %17 = sbr.rel (0) target = $region17
  $region16: #{mask4former_forward.41} parent=0 // pred_region
    _
  $region17: #{mask4former_forward.41} parent=0 // pred_fallthru
    _
  // Predicated region
  $region18: #{mask4former_forward.41} parent=0 // pred_check
    _
  $region19: #{mask4former_forward.41} parent=0 // pred_check_branch
    %19 = sbr.rel (0) target = $region21
  $region20: #{mask4former_forward.41} parent=0 // pred_region
    _
  $region21: #{mask4former_forward.41} parent=0 // pred_fallthru
    _
  %v21 = vld [vmem:[%s0] sm:$0xff]
  %v22 = vld [vmem:[%s0 + $0x8] sm:$0xff]
  %v23 = vld [vmem:[%s1] sm:$0x1]
  %v24 = vld [vmem:[%s2] sm:$0x1]
  %vm25 = vcmask 261120
  %v26 = vsel %vm25, %v21, 0.0
  %27 = vadd.xlane.f32.xlu0 %v26
  %v28 = vpop.xlane.xlu0 %27
  %v29 = vsel %vm25, %v22, 0.0
  %30 = vadd.xlane.f32.xlu0 %v29
  %v31 = vpop.xlane.xlu0 %30
  %v32 = vrcp.pop 32.0
  %v33 = vmul.f32 %v28, %v32
  %v34 = vmul.f32 %v31, %v32
  %v35 = vsub.f32 %v21, %v33
  %v36 = vsub.f32 %v22, %v34
  %v37 = vmul.f32 %v35, %v35
  %v38 = vmul.f32 %v36, %v36
  %v39 = vsel %vm25, %v37, 0.0
  %40 = vadd.xlane.f32.xlu0 %v39
  %v41 = vpop.xlane.xlu0 %40
  %v42 = vsel %vm25, %v38, 0.0
  %43 = vadd.xlane.f32.xlu0 %v42
  %v44 = vpop.xlane.xlu0 %43
  %v45 = vmul.f32 %v41, %v32
  %v46 = vmul.f32 %v44, %v32
  %v47 = vadd.f32 %v45, 1e-05
  %v48 = vadd.f32 %v46, 1e-05
  %v49 = vrsqrt.pop %v47
  %v50 = vrsqrt.pop %v48
  %v51 = vmul.f32 %v35, %v49
  %v52 = vmul.f32 %v36, %v50
  %v54 = vlaneseq
  %v55 = vshrl.u32 %v54, 7
  %v56 = vsub.s32 0, %v55
  %v57 = vrot.slane %v23, %v56
  %v59 = vmul.f32 %v51, %v57
  %v60 = vmul.f32 %v52, %v57
  %v62 = vlaneseq
  %v63 = vshrl.u32 %v62, 7
  %v64 = vsub.s32 0, %v63
  %v65 = vrot.slane %v24, %v64
  %v67 = vadd.f32 %v59, %v65
  %v68 = vadd.f32 %v60, %v65
  %v69 = vld [vmem:[%s3] sm:$0xf]
  %v70 = vld [vmem:[%s3 + $0x4] sm:$0xf]
  %v71 = vld [vmem:[%s3 + $0x8] sm:$0xf]
  %v72 = vld [vmem:[%s3 + $0xc] sm:$0xf]
  %v73 = vld [vmem:[%s4] sm:$0x1]
  %v74 = vpack.c.bf16 %v68, %v67
  %v76 = vlaneseq
  %v77 = vshrl.u32 %v76, 7
  %v78 = vsub.s32 0, %v77
  %v79 = vrot.slane %v73, %v78
  %v85 = vunpack.c.l.b16 %v69
  %v86 = vunpack.c.l.b16 %v70
  %v87 = vunpack.c.l.b16 %v71
  %v88 = vunpack.c.l.b16 %v72
  %v89 = vpack.c.b16 %v86, %v85
  %v90 = vpack.c.b16 %v88, %v87
  %v94 = vsel %vm25, %v74, 0
  %96 = vmatprep.subr.bf16.mxu0 0
  %97 = vmatpush1.bf16.msra.mxu0 %v89
  %98 = vmatprep.subr.bf16.mxu0 0
  %99 = vmatpush1.bf16.msra.mxu0 %v90
  %100 = vmatprep.subr.bf16.mxu0 0
  %101 = vmatpush1.bf16.msra.mxu0 0
  %102 = vmatprep.subr.bf16.mxu0 0
  %103 = vmatpush1.bf16.msra.mxu0 0
  %104 = vmatprep.subr.bf16.mxu0 0
  %105 = vmatpush1.bf16.msra.mxu0 0
  %106 = vmatprep.subr.bf16.mxu0 0
  %107 = vmatpush1.bf16.msra.mxu0 0
  %108 = vmatprep.subr.bf16.mxu0 0
  %109 = vmatpush1.bf16.msra.mxu0 0
  %110 = vmatprep.subr.bf16.mxu0 0
  %111 = vmatpush1.bf16.msra.mxu0 0
  %112 = vmatprep.subr.bf16.mxu0 0
  %113 = vmatpush1.bf16.msra.mxu0 0
  %114 = vmatprep.subr.bf16.mxu0 0
  %115 = vmatpush1.bf16.msra.mxu0 0
  %116 = vmatprep.subr.bf16.mxu0 0
  %117 = vmatpush1.bf16.msra.mxu0 0
  %118 = vmatprep.subr.bf16.mxu0 0
  %119 = vmatpush1.bf16.msra.mxu0 0
  %120 = vmatprep.subr.bf16.mxu0 0
  %121 = vmatpush1.bf16.msra.mxu0 0
  %122 = vmatprep.subr.bf16.mxu0 0
  %123 = vmatpush1.bf16.msra.mxu0 0
  %124 = vmatprep.subr.bf16.mxu0 0
  %125 = vmatpush1.bf16.msra.mxu0 0
  %126 = vmatprep.subr.bf16.mxu0 0
  %127 = vmatpush1.bf16.msra.mxu0 0
  %128 = vmatprep.mubr.bf16.mxu0 0
  %129 = vmatmul.mubr.bf16.gmra.mrb[0].mxu0 %v94
  %v130 = vpop.f32.mrb[0].mxu0
  %v131 = vadd.f32 %v79, %v130
  %v132 = vpop.f32.mrb[0].mxu0
  %v133 = vpop.f32.mrb[0].mxu0
  %v134 = vadd.f32 %v79, %v133
  %v135 = vpop.f32.mrb[0].mxu0
  %136 = vdwg.mxu0
  %vm137 = vcmask 48128
  %138 = vst.msk [vmem:[%s5] sm:$0xff] %vm137, %v131
  %139 = vst.msk [vmem:[%s5 + $0x8] sm:$0xff] %vm137, %v134
  // Predicated region
  $region22: #{mask4former_forward.41} parent=0 // pred_check
    _
  $region23: #{mask4former_forward.41} parent=0 // pred_check_branch
    %141 = sbr.rel (0) target = $region25
  $region24: #{mask4former_forward.41} parent=0 // pred_region
    _
  $region25: #{mask4former_forward.41} parent=0 // pred_fallthru
    _
  // Predicated region
  $region26: #{mask4former_forward.41} parent=0 // pred_check
    _
  $region27: #{mask4former_forward.41} parent=0 // pred_check_branch
    %143 = sbr.rel (0) target = $region29
  $region28: #{mask4former_forward.41} parent=0 // pred_region
    _
  $region29: #{mask4former_forward.41} parent=0 // pred_fallthru
    _

// kernel: mask4former_forward.38
$region0: #{mask4former_forward.38}
  #allocation0 [shape = 'u32[]', space=smem, size = 0x4, offset = 0x4, fixed_abs, tag = 'smem constant byte address 0x4 - core index']
  #allocation1 [shape = 'u32[144,128]{1,0:T(1,128)}', space=vmem, size = 0x12000, scoped, tag = 'internal scratch']
  #allocation2 [shape = 'f32[4,8,1]{2,1,0:T(8,128)}', space=vmem, size = 0x4000, scoped, tag = 'scratch operand']
  #allocation3 [shape = 'f32[4,8,1]{2,1,0:T(8,128)}', space=vmem, size = 0x4000, scoped, tag = 'scratch operand']
  #allocation4 [shape = 'f32[4,8,8]{2,1,0:T(8,128)}', space=vmem, size = 0x4000, scoped, tag = 'scratch operand']
  %s0 = inlined_call_operand.vmem [shape: f32[2,8,32], index: 0, kind: input, shape index: {}]
  %s1 = inlined_call_operand.vmem [shape: f32[2,8,32], index: 1, kind: input, shape index: {}]
  %s2 = inlined_call_operand.vmem [shape: bf16[32,32], index: 2, kind: input, shape index: {}]
  %s3 = inlined_call_operand.vmem [shape: f32[1,32], index: 3, kind: input, shape index: {}]
  %s4 = inlined_call_operand.vmem [shape: bf16[2,32,32], index: 4, kind: input, shape index: {}]
  %s5 = inlined_call_operand.vmem [shape: bf16[2,32,32], index: 5, kind: input, shape index: {}]
  %s6 = inlined_call_operand.vmem [shape: s8[2,8,32], index: 6, kind: input, shape index: {}]
  %s7 = inlined_call_operand.vmem [shape: bf16[2,8,32], index: 7, kind: output, shape index: {}]
  %s8 = sld [smem:[#allocation0]]
  $region69: #{mask4former_forward.38} parent=0
    _
  %s10 = ssub.s32 1, %s8
  %s11 = scalar_select 0, %s10, %s8
  loop: start=0, step=1, limit=4
  $region2: #{mask4former_forward.38} parent=0 // loop_pre_header
    _
  $region3: #{mask4former_forward.38} parent=0 // loop_header
    %s13 = sphi 0, %s17
    %p14 = scmp.ge.s32.totalorder %s13, 4
    %s20 = sphi 0, %s32
    %s21 = sphi 0, %s28
    %s22 = sphi 0, %s20
    %s23 = sphi 0, %s21
    %s24 = sphi 0, %s22
    %s25 = sphi 0, %s23
    %s35 = sphi 0, %s37
    %s38 = sphi 0, %s35
    %s39 = sphi 0, %s38
    %s55 = sphi 0, %s39
    %s61 = sphi 0, %s63
    %s64 = sphi 0, %s61
    %s65 = sphi 0, %s64
    %s81 = sphi 0, %s65
    %s85 = sphi 0, %s85
    %s87 = sphi 0, %s85
    %s88 = sphi 0, %s87
    %s102 = sphi 0, %s88
    %s106 = sphi 0, %s106
    %s108 = sphi 0, %s106
    %s109 = sphi 0, %s108
    %s123 = sphi 0, %s109
    %s131 = sphi 0, %s133
    %s134 = sphi 0, %s131
    %s135 = sphi 0, %s134
    %s151 = sphi 0, %s135
    %s159 = sphi 0, %s161
    %s162 = sphi 0, %s159
    %s163 = sphi 0, %s162
    %s179 = sphi 0, %s163
    %s187 = sphi 0, %s189
    %s190 = sphi 0, %s187
    %s191 = sphi 0, %s190
    %s207 = sphi 0, %s191
    %s213 = sphi 0, %s215
    %s216 = sphi 0, %s213
    %s217 = sphi 0, %s216
    %s233 = sphi 0, %s217
  $region4: #{mask4former_forward.38} parent=0 // loop_header_branch
    %16 = sbr.rel (%p14) target = $region8
  $region5: #{mask4former_forward.38} parent=0 // loop_body
    %s18 = ssub.s32 %s13, 1
    %s19 = ssub.s32 %s13, 2
    %s26 = sadd.s32 1, %s21
    %p27 = scmp.ge.s32.totalorder %s26, 1
    %s28 = scalar_select %p27, 0, %s26
    %s29 = sadd.s32 1, %s20
    %s30 = scalar_select %p27, %s29, %s20
    %p31 = scmp.ge.s32.totalorder %s30, 2
    %s32 = scalar_select %p31, 0, %s30
    %s33 = ssub.s32 %s20, %s32
    %p34 = scmp.eq.s32.totalorder %s33, 0
    %s36 = sadd.s32 %s35, 1
    %s37 = scalar_select %p34, %s35, %s36
    %p40 = pneg %p34
    %p41 = scmp.eq.s32.totalorder %s13, 1
    %p42 = por %p40, %p41
    %p43 = scmp.ne.s32.totalorder %s35, %s38
    %p44 = scmp.eq.s32.totalorder %s13, 0
    %p45 = por %p43, %p44
    %p46 = scmp.ne.s32.totalorder %s35, %s38
    %p47 = scmp.eq.s32.totalorder %s18, 1
    %p48 = por %p46, %p47
    %p49 = scmp.ne.s32.totalorder %s38, %s39
    %p50 = scmp.eq.s32.totalorder %s18, 0
    %p51 = por %p49, %p50
    %p52 = scmp.ne.s32.totalorder %s38, %s39
    %p53 = scmp.eq.s32.totalorder %s19, 1
    %p54 = por %p52, %p53
    %p56 = scmp.ne.s32.totalorder %s39, %s55
    %p57 = scmp.eq.s32.totalorder %s19, 0
    %p58 = por %p56, %p57
    %s59 = ssub.s32 %s20, %s32
    %p60 = scmp.eq.s32.totalorder %s59, 0
    %s62 = sadd.s32 %s61, 1
    %s63 = scalar_select %p60, %s61, %s62
    %p66 = pneg %p60
    %p67 = scmp.eq.s32.totalorder %s13, 1
    %p68 = por %p66, %p67
    %p69 = scmp.ne.s32.totalorder %s61, %s64
    %p70 = scmp.eq.s32.totalorder %s13, 0
    %p71 = por %p69, %p70
    %p72 = scmp.ne.s32.totalorder %s61, %s64
    %p73 = scmp.eq.s32.totalorder %s18, 1
    %p74 = por %p72, %p73
    %p75 = scmp.ne.s32.totalorder %s64, %s65
    %p76 = scmp.eq.s32.totalorder %s18, 0
    %p77 = por %p75, %p76
    %p78 = scmp.ne.s32.totalorder %s64, %s65
    %p79 = scmp.eq.s32.totalorder %s19, 1
    %p80 = por %p78, %p79
    %p82 = scmp.ne.s32.totalorder %s65, %s81
    %p83 = scmp.eq.s32.totalorder %s19, 0
    %p84 = por %p82, %p83
    %s86 = sadd.s32 %s85, 1
    %p89 = scmp.eq.s32.totalorder %s13, 1
    %p90 = scmp.ne.s32.totalorder %s85, %s87
    %p91 = scmp.eq.s32.totalorder %s13, 0
    %p92 = por %p90, %p91
    %p93 = scmp.ne.s32.totalorder %s85, %s87
    %p94 = scmp.eq.s32.totalorder %s18, 1
    %p95 = por %p93, %p94
    %p96 = scmp.ne.s32.totalorder %s87, %s88
    %p97 = scmp.eq.s32.totalorder %s18, 0
    %p98 = por %p96, %p97
    %p99 = scmp.ne.s32.totalorder %s87, %s88
    %p100 = scmp.eq.s32.totalorder %s19, 1
    %p101 = por %p99, %p100
    %p103 = scmp.ne.s32.totalorder %s88, %s102
    %p104 = scmp.eq.s32.totalorder %s19, 0
    %p105 = por %p103, %p104
    %s107 = sadd.s32 %s106, 1
    %p110 = scmp.eq.s32.totalorder %s13, 1
    %p111 = scmp.ne.s32.totalorder %s106, %s108
    %p112 = scmp.eq.s32.totalorder %s13, 0
    %p113 = por %p111, %p112
    %p114 = scmp.ne.s32.totalorder %s106, %s108
    %p115 = scmp.eq.s32.totalorder %s18, 1
    %p116 = por %p114, %p115
    %p117 = scmp.ne.s32.totalorder %s108, %s109
    %p118 = scmp.eq.s32.totalorder %s18, 0
    %p119 = por %p117, %p118
    %p120 = scmp.ne.s32.totalorder %s108, %s109
    %p121 = scmp.eq.s32.totalorder %s19, 1
    %p122 = por %p120, %p121
    %p124 = scmp.ne.s32.totalorder %s109, %s123
    %p125 = scmp.eq.s32.totalorder %s19, 0
    %p126 = por %p124, %p125
    %s127 = ssub.s32 %s20, %s32
    %s128 = ssub.s32 %s21, %s28
    %s129 = sor.u32 %s127, %s128
    %p130 = scmp.eq.s32.totalorder %s129, 0
    %s132 = sadd.s32 %s131, 1
    %s133 = scalar_select %p130, %s131, %s132
    %p136 = pneg %p130
    %p137 = scmp.eq.s32.totalorder %s13, 1
    %p138 = por %p136, %p137
    %p139 = scmp.ne.s32.totalorder %s131, %s134
    %p140 = scmp.eq.s32.totalorder %s13, 0
    %p141 = por %p139, %p140
    %p142 = scmp.ne.s32.totalorder %s131, %s134
    %p143 = scmp.eq.s32.totalorder %s18, 1
    %p144 = por %p142, %p143
    %p145 = scmp.ne.s32.totalorder %s134, %s135
    %p146 = scmp.eq.s32.totalorder %s18, 0
    %p147 = por %p145, %p146
    %p148 = scmp.ne.s32.totalorder %s134, %s135
    %p149 = scmp.eq.s32.totalorder %s19, 1
    %p150 = por %p148, %p149
    %p152 = scmp.ne.s32.totalorder %s135, %s151
    %p153 = scmp.eq.s32.totalorder %s19, 0
    %p154 = por %p152, %p153
    %s155 = ssub.s32 %s20, %s32
    %s156 = ssub.s32 %s21, %s28
    %s157 = sor.u32 %s155, %s156
    %p158 = scmp.eq.s32.totalorder %s157, 0
    %s160 = sadd.s32 %s159, 1
    %s161 = scalar_select %p158, %s159, %s160
    %p164 = pneg %p158
    %p165 = scmp.eq.s32.totalorder %s13, 1
    %p166 = por %p164, %p165
    %p167 = scmp.ne.s32.totalorder %s159, %s162
    %p168 = scmp.eq.s32.totalorder %s13, 0
    %p169 = por %p167, %p168
    %p170 = scmp.ne.s32.totalorder %s159, %s162
    %p171 = scmp.eq.s32.totalorder %s18, 1
    %p172 = por %p170, %p171
    %p173 = scmp.ne.s32.totalorder %s162, %s163
    %p174 = scmp.eq.s32.totalorder %s18, 0
    %p175 = por %p173, %p174
    %p176 = scmp.ne.s32.totalorder %s162, %s163
    %p177 = scmp.eq.s32.totalorder %s19, 1
    %p178 = por %p176, %p177
    %p180 = scmp.ne.s32.totalorder %s163, %s179
    %p181 = scmp.eq.s32.totalorder %s19, 0
    %p182 = por %p180, %p181
    %s183 = ssub.s32 %s20, %s32
    %s184 = ssub.s32 %s21, %s28
    %s185 = sor.u32 %s183, %s184
    %p186 = scmp.eq.s32.totalorder %s185, 0
    %s188 = sadd.s32 %s187, 1
    %s189 = scalar_select %p186, %s187, %s188
    %p192 = pneg %p186
    %p193 = scmp.eq.s32.totalorder %s13, 1
    %p194 = por %p192, %p193
    %p195 = scmp.ne.s32.totalorder %s187, %s190
    %p196 = scmp.eq.s32.totalorder %s13, 0
    %p197 = por %p195, %p196
    %p198 = scmp.ne.s32.totalorder %s187, %s190
    %p199 = scmp.eq.s32.totalorder %s18, 1
    %p200 = por %p198, %p199
    %p201 = scmp.ne.s32.totalorder %s190, %s191
    %p202 = scmp.eq.s32.totalorder %s18, 0
    %p203 = por %p201, %p202
    %p204 = scmp.ne.s32.totalorder %s190, %s191
    %p205 = scmp.eq.s32.totalorder %s19, 1
    %p206 = por %p204, %p205
    %p208 = scmp.ne.s32.totalorder %s191, %s207
    %p209 = scmp.eq.s32.totalorder %s19, 0
    %p210 = por %p208, %p209
    %s211 = ssub.s32 %s20, %s32
    %p212 = scmp.eq.s32.totalorder %s211, 0
    %s214 = sadd.s32 %s213, 1
    %s215 = scalar_select %p212, %s213, %s214
    %p218 = pneg %p212
    %p219 = scmp.eq.s32.totalorder %s13, 1
    %p220 = por %p218, %p219
    %p221 = scmp.ne.s32.totalorder %s213, %s216
    %p222 = scmp.eq.s32.totalorder %s13, 0
    %p223 = por %p221, %p222
    %p224 = scmp.ne.s32.totalorder %s213, %s216
    %p225 = scmp.eq.s32.totalorder %s18, 1
    %p226 = por %p224, %p225
    %p227 = scmp.ne.s32.totalorder %s216, %s217
    %p228 = scmp.eq.s32.totalorder %s18, 0
    %p229 = por %p227, %p228
    %p230 = scmp.ne.s32.totalorder %s216, %s217
    %p231 = scmp.eq.s32.totalorder %s19, 1
    %p232 = por %p230, %p231
    %p234 = scmp.ne.s32.totalorder %s217, %s233
    %p235 = scmp.eq.s32.totalorder %s19, 0
    %p236 = por %p234, %p235
    %p237 = scmp.le.s32.totalorder 1, %s13
    %p238 = scmp.lt.s32.totalorder %s13, 3
    %p239 = pnand %p237, %p238
    %p240 = pneg %p239
    // Predicated region
    $region9: #{mask4former_forward.38} parent=5 // pred_check
      _
    $region10: #{mask4former_forward.38} parent=5 // pred_check_branch
      %242 = sbr.rel (%p239) target = $region12
    $region11: #{mask4former_forward.38} parent=5 // pred_region
      %s243 = ssub.s32 %s13, 1
      // Predicated region
      $region13: #{mask4former_forward.38} parent=11 // pred_check
        %p244 = pneg %p98
      $region14: #{mask4former_forward.38} parent=11 // pred_check_branch
        %246 = sbr.rel (%p244) target = $region16
      $region15: #{mask4former_forward.38} parent=11 // pred_region
        _
      $region16: #{mask4former_forward.38} parent=11 // pred_fallthru
        _
      // Predicated region
      $region17: #{mask4former_forward.38} parent=11 // pred_check
        %p247 = pneg %p119
      $region18: #{mask4former_forward.38} parent=11 // pred_check_branch
        %249 = sbr.rel (%p247) target = $region20
      $region19: #{mask4former_forward.38} parent=11 // pred_region
        _
      $region20: #{mask4former_forward.38} parent=11 // pred_fallthru
        _
    $region12: #{mask4former_forward.38} parent=5 // pred_fallthru
      _
    %p250 = scmp.lt.s32.totalorder %s13, 2
    // Predicated region
    $region21: #{mask4former_forward.38} parent=5 // pred_check
      %p251 = pneg %p250
    $region22: #{mask4former_forward.38} parent=5 // pred_check_branch
      %253 = sbr.rel (%p251) target = $region24
    $region23: #{mask4former_forward.38} parent=5 // pred_region
      // Predicated region
      $region25: #{mask4former_forward.38} parent=23 // pred_check
        %p254 = pneg %p45
      $region26: #{mask4former_forward.38} parent=23 // pred_check_branch
        %256 = sbr.rel (%p254) target = $region28
      $region27: #{mask4former_forward.38} parent=23 // pred_region
        %p257 = scmp.lt.s32.totalorder %s20, 1
        %s258 = scalar_select %p257, %s20, 1
        %s259 = smul.addr %s258, 8
        %s260 = scalar_lea.vmem %s0, %s259
      $region28: #{mask4former_forward.38} parent=23 // pred_fallthru
        _
      // Predicated region
      $region29: #{mask4former_forward.38} parent=23 // pred_check
        %p261 = pneg %p71
      $region30: #{mask4former_forward.38} parent=23 // pred_check_branch
        %263 = sbr.rel (%p261) target = $region32
      $region31: #{mask4former_forward.38} parent=23 // pred_region
        %p264 = scmp.lt.s32.totalorder %s20, 1
        %s265 = scalar_select %p264, %s20, 1
        %s266 = smul.addr %s265, 8
        %s267 = scalar_lea.vmem %s1, %s266
      $region32: #{mask4former_forward.38} parent=23 // pred_fallthru
        _
      // Predicated region
      $region33: #{mask4former_forward.38} parent=23 // pred_check
        %p268 = pneg %p141
      $region34: #{mask4former_forward.38} parent=23 // pred_check_branch
        %270 = sbr.rel (%p268) target = $region36
      $region35: #{mask4former_forward.38} parent=23 // pred_region
        %s271 = smul.u32 4, %s21
        %p272 = scmp.lt.s32.totalorder %s20, 1
        %s273 = scalar_select %p272, %s20, 1
        %p274 = scmp.lt.s32.totalorder %s271, 3
        %s275 = scalar_select %p274, %s271, 3
        %s276 = smul.addr %s273, 4
        %s277 = sadd.s32 %s275, %s276
        %s278 = smul.addr %s277, 4
        %s279 = scalar_lea.vmem %s4, %s278
        %s280 = smul.u32 4, %s21
      $region36: #{mask4former_forward.38} parent=23 // pred_fallthru
        _
      // Predicated region
      $region37: #{mask4former_forward.38} parent=23 // pred_check
        %p281 = pneg %p169
      $region38: #{mask4former_forward.38} parent=23 // pred_check_branch
        %283 = sbr.rel (%p281) target = $region40
      $region39: #{mask4former_forward.38} parent=23 // pred_region
        %s284 = smul.u32 4, %s21
        %p285 = scmp.lt.s32.totalorder %s20, 1
        %s286 = scalar_select %p285, %s20, 1
        %p287 = scmp.lt.s32.totalorder %s284, 3
        %s288 = scalar_select %p287, %s284, 3
        %s289 = smul.addr %s286, 4
        %s290 = sadd.s32 %s288, %s289
        %s291 = smul.addr %s290, 4
        %s292 = scalar_lea.vmem %s5, %s291
        %s293 = smul.u32 4, %s21
      $region40: #{mask4former_forward.38} parent=23 // pred_fallthru
        _
      // Predicated region
      $region41: #{mask4former_forward.38} parent=23 // pred_check
        %p294 = pneg %p197
      $region42: #{mask4former_forward.38} parent=23 // pred_check_branch
        %296 = sbr.rel (%p294) target = $region44
      $region43: #{mask4former_forward.38} parent=23 // pred_region
        %p297 = scmp.lt.s32.totalorder %s20, 1
        %s298 = scalar_select %p297, %s20, 1
        %p299 = scmp.lt.s32.totalorder %s21, 0
        %s300 = scalar_select %p299, %s21, 0
        %s301 = sadd.s32 %s300, %s298
        %s302 = smul.addr %s301, 2
        %s303 = scalar_lea.vmem %s6, %s302
      $region44: #{mask4former_forward.38} parent=23 // pred_fallthru
        _
    $region24: #{mask4former_forward.38} parent=5 // pred_fallthru
      _
    %p304 = scmp.le.s32.totalorder 1, %s13
    %p305 = scmp.lt.s32.totalorder %s13, 3
    %p306 = pnand %p304, %p305
    %p307 = pneg %p306
    // Predicated region
    $region45: #{mask4former_forward.38} parent=5 // pred_check
      _
    $region46: #{mask4former_forward.38} parent=5 // pred_check_branch
      %309 = sbr.rel (%p306) target = $region48
    $region47: #{mask4former_forward.38} parent=5 // pred_region
      %s310 = ssub.s32 %s13, 1
      %p311 = scmp.lt.s32.totalorder %s22, 1
      %s312 = scalar_select %p311, %s22, 1
      %s313 = smul.addr %s312, 8
      %s314 = scalar_lea.vmem %s0, %s313
      %p315 = pneg %p51
      %p316 = pneg %p48
      %p317 = scmp.lt.s32.totalorder %s22, 1
      %s318 = scalar_select %p317, %s22, 1
      %s319 = smul.addr %s318, 8
      %s320 = scalar_lea.vmem %s1, %s319
      %p321 = pneg %p77
      %p322 = pneg %p74
      %p323 = pneg %p98
      %p324 = pneg %p95
      %p325 = pneg %p119
      %p326 = pneg %p116
      %s327 = smul.u32 4, %s23
      %p328 = scmp.lt.s32.totalorder %s22, 1
      %s329 = scalar_select %p328, %s22, 1
      %p330 = scmp.lt.s32.totalorder %s327, 3
      %s331 = scalar_select %p330, %s327, 3
      %s332 = smul.addr %s329, 4
      %s333 = sadd.s32 %s331, %s332
      %s334 = smul.addr %s333, 4
      %s335 = scalar_lea.vmem %s4, %s334
      %p336 = pneg %p147
      %p337 = pneg %p144
      %s338 = smul.u32 4, %s23
      %p339 = scmp.lt.s32.totalorder %s22, 1
      %s340 = scalar_select %p339, %s22, 1
      %p341 = scmp.lt.s32.totalorder %s338, 3
      %s342 = scalar_select %p341, %s338, 3
      %s343 = smul.addr %s340, 4
      %s344 = sadd.s32 %s342, %s343
      %s345 = smul.addr %s344, 4
      %s346 = scalar_lea.vmem %s5, %s345
      %p347 = pneg %p175
      %p348 = pneg %p172
      %p349 = scmp.lt.s32.totalorder %s22, 1
      %s350 = scalar_select %p349, %s22, 1
      %p351 = scmp.lt.s32.totalorder %s23, 0
      %s352 = scalar_select %p351, %s23, 0
      %s353 = sadd.s32 %s352, %s350
      %s354 = smul.addr %s353, 2
      %s355 = scalar_lea.vmem %s6, %s354
      %p356 = pneg %p203
      %p357 = pneg %p200
      %p358 = pneg %p229
      %p359 = pneg %p226
      %p360 = scmp.lt.s32.totalorder %s22, 1
      %s361 = scalar_select %p360, %s22, 1
      %s362 = smul.addr %s361, 4
      %s363 = scalar_lea.vmem %s7, %s362
      %p364 = scmp.lt.s32.totalorder %s22, 1
      %s365 = scalar_select %p364, %s22, 1
      %s366 = smul.addr %s365, 8
      %s367 = scalar_lea.vmem %s0, %s366
      %p368 = scmp.lt.s32.totalorder %s22, 1
      %s369 = scalar_select %p368, %s22, 1
      %s370 = smul.addr %s369, 8
      %s371 = scalar_lea.vmem %s1, %s370
      %s372 = smul.u32 4, %s23
      %p373 = scmp.lt.s32.totalorder %s22, 1
      %s374 = scalar_select %p373, %s22, 1
      %p375 = scmp.lt.s32.totalorder %s372, 3
      %s376 = scalar_select %p375, %s372, 3
      %s377 = smul.addr %s374, 4
      %s378 = sadd.s32 %s376, %s377
      %s379 = smul.addr %s378, 4
      %s380 = scalar_lea.vmem %s4, %s379
      %s381 = smul.u32 4, %s23
      %s382 = smul.u32 4, %s23
      %p383 = scmp.lt.s32.totalorder %s22, 1
      %s384 = scalar_select %p383, %s22, 1
      %p385 = scmp.lt.s32.totalorder %s382, 3
      %s386 = scalar_select %p385, %s382, 3
      %s387 = smul.addr %s384, 4
      %s388 = sadd.s32 %s386, %s387
      %s389 = smul.addr %s388, 4
      %s390 = scalar_lea.vmem %s5, %s389
      %s391 = smul.u32 4, %s23
      %p392 = scmp.lt.s32.totalorder %s22, 1
      %s393 = scalar_select %p392, %s22, 1
      %p394 = scmp.lt.s32.totalorder %s23, 0
      %s395 = scalar_select %p394, %s23, 0
      %s396 = sadd.s32 %s395, %s393
      %s397 = smul.addr %s396, 2
      %s398 = scalar_lea.vmem %s6, %s397
      %p399 = scmp.lt.s32.totalorder %s22, 1
      %s400 = scalar_select %p399, %s22, 1
      %s401 = smul.addr %s400, 4
      %s402 = scalar_lea.vmem %s7, %s401
      %p406 = scmp.eq.s32.totalorder %s23, 0
      // Predicated region
      $region49: #{mask4former_forward.38} parent=47 // pred_check
        %p407 = pneg %p406
      $region50: #{mask4former_forward.38} parent=47 // pred_check_branch
        %409 = sbr.rel (%p407) target = $region52
      $region51: #{mask4former_forward.38} parent=47 // pred_region
        %vm410 = vcmask 7168
        %411 = vst.msk [vmem:[#allocation2] sm:$0xff] %vm410, -1e+30
        %412 = vst.msk [vmem:[#allocation2 + $0x8] sm:$0xff] %vm410, -1e+30
        %413 = vst.msk [vmem:[#allocation2 + $0x10] sm:$0xff] %vm410, -1e+30
        %414 = vst.msk [vmem:[#allocation2 + $0x18] sm:$0xff] %vm410, -1e+30
        %415 = vst.msk [vmem:[#allocation3] sm:$0xff] %vm410, 0.0
        %416 = vst.msk [vmem:[#allocation3 + $0x8] sm:$0xff] %vm410, 0.0
        %417 = vst.msk [vmem:[#allocation3 + $0x10] sm:$0xff] %vm410, 0.0
        %418 = vst.msk [vmem:[#allocation3 + $0x18] sm:$0xff] %vm410, 0.0
        %vm419 = vcmask 64512
        %420 = vst.msk [vmem:[#allocation4] sm:$0xff] %vm419, 0.0
        %421 = vst.msk [vmem:[#allocation4 + $0x8] sm:$0xff] %vm419, 0.0
        %422 = vst.msk [vmem:[#allocation4 + $0x10] sm:$0xff] %vm419, 0.0
        %423 = vst.msk [vmem:[#allocation4 + $0x18] sm:$0xff] %vm419, 0.0
      $region52: #{mask4former_forward.38} parent=47 // pred_fallthru
        _
      %v424 = vld [vmem:[%s367] sm:$0xff]
      %v425 = vld [vmem:[%s371] sm:$0xff]
      %v426 = vadd.f32 %v424, %v425
      %v427 = vpack.c.bf16 %v426, %v426
      %v428 = vld [vmem:[%s2] sm:$0xf]
      %v429 = vld [vmem:[%s2 + $0x4] sm:$0xf]
      %v430 = vld [vmem:[%s2 + $0x8] sm:$0xf]
      %v431 = vld [vmem:[%s2 + $0xc] sm:$0xf]
      %v432 = vld [vmem:[%s3] sm:$0x1]
      %v434 = vlaneseq
      %v435 = vshrl.u32 %v434, 7
      %v436 = vsub.s32 0, %v435
      %v437 = vrot.slane %v432, %v436
      %v443 = vunpack.c.l.b16 %v428
      %v444 = vunpack.c.l.b16 %v429
      %v445 = vunpack.c.l.b16 %v430
      %v446 = vunpack.c.l.b16 %v431
      %v447 = vpack.c.b16 %v444, %v443
      %v448 = vpack.c.b16 %v446, %v445
      %vm451 = vcmask 261120
      %v453 = vsel %vm451, %v427, 0
      %455 = vmatprep.subr.bf16.mxu0 0
      %456 = vmatpush1.bf16.msra.mxu0 %v447
      %457 = vmatprep.subr.bf16.mxu0 0
      %458 = vmatpush1.bf16.msra.mxu0 %v448
      %459 = vmatprep.subr.bf16.mxu0 0
      %460 = vmatpush1.bf16.msra.mxu0 0
      %461 = vmatprep.subr.bf16.mxu0 0
      %462 = vmatpush1.bf16.msra.mxu0 0
      %463 = vmatprep.subr.bf16.mxu0 0
      %464 = vmatpush1.bf16.msra.mxu0 0
      %465 = vmatprep.subr.bf16.mxu0 0
      %466 = vmatpush1.bf16.msra.mxu0 0
      %467 = vmatprep.subr.bf16.mxu0 0
      %468 = vmatpush1.bf16.msra.mxu0 0
      %469 = vmatprep.subr.bf16.mxu0 0
      %470 = vmatpush1.bf16.msra.mxu0 0
      %471 = vmatprep.subr.bf16.mxu0 0
      %472 = vmatpush1.bf16.msra.mxu0 0
      %473 = vmatprep.subr.bf16.mxu0 0
      %474 = vmatpush1.bf16.msra.mxu0 0
      %475 = vmatprep.subr.bf16.mxu0 0
      %476 = vmatpush1.bf16.msra.mxu0 0
      %477 = vmatprep.subr.bf16.mxu0 0
      %478 = vmatpush1.bf16.msra.mxu0 0
      %479 = vmatprep.subr.bf16.mxu0 0
      %480 = vmatpush1.bf16.msra.mxu0 0
      %481 = vmatprep.subr.bf16.mxu0 0
      %482 = vmatpush1.bf16.msra.mxu0 0
      %483 = vmatprep.subr.bf16.mxu0 0
      %484 = vmatpush1.bf16.msra.mxu0 0
      %485 = vmatprep.subr.bf16.mxu0 0
      %486 = vmatpush1.bf16.msra.mxu0 0
      %487 = vmatprep.mubr.bf16.mxu0 0
      %488 = vmatmul.mubr.bf16.gmra.mrb[0].mxu0 %v453
      %v489 = vpop.f32.mrb[0].mxu0
      %v490 = vadd.f32 %v437, %v489
      %v491 = vpop.f32.mrb[0].mxu0
      %v492 = vpop.f32.mrb[0].mxu0
      %v493 = vpop.f32.mrb[0].mxu0
      %494 = vdwg.mxu0
      %v495 = vmul.f32 %v490, 0.35355338
      %v496 = vpack.c.bf16 %v495, %v495
      %v497 = vld [vmem:[%s380] sm:$0xf]
      %v498 = vld [vmem:[%s380 + $0x4] sm:$0xf]
      %v499 = vld [vmem:[%s380 + $0x8] sm:$0xf]
      %v500 = vld [vmem:[%s380 + $0xc] sm:$0xf]
      %v501 = vld [vmem:[%s390] sm:$0xf]
      %v502 = vld [vmem:[%s390 + $0x4] sm:$0xf]
      %v503 = vld [vmem:[%s390 + $0x8] sm:$0xf]
      %v504 = vld [vmem:[%s390 + $0xc] sm:$0xf]
      %v505 = vld [vmem:[%s398] sm:$0x3]
      %vm506 = vnez %v505
      %v511 = vunpack.c.l.b16 %v497
      %v512 = vunpack.c.l.b16 %v498
      %v513 = vunpack.c.l.b16 %v499
      %v514 = vunpack.c.l.b16 %v500
      %v515 = vpack.c.b16 %v512, %v511
      %v516 = vpack.c.b16 %v514, %v513
      %vm517 = vcmask 64512
      %v519 = vsel %vm517, %v496, 0
      %v522 = vsel %vm517, %v515, 0
      %v525 = vsel %vm517, %v516, 0
      %527 = vmatprep.subr.bf16.mxu0 0
      %528 = vmatpush1.bf16.xpose.msra.mxu0 %v522
      %529 = vmatprep.subr.bf16.mxu0 0
      %530 = vmatpush1.bf16.xpose.msra.mxu0 %v525
      %531 = vmatprep.subr.bf16.mxu0 0
      %532 = vmatpush1.bf16.xpose.msra.mxu0 0
      %533 = vmatprep.subr.bf16.mxu0 0
      %534 = vmatpush1.bf16.xpose.msra.mxu0 0
      %535 = vmatprep.subr.bf16.mxu0 0
      %536 = vmatpush1.bf16.xpose.msra.mxu0 0
      %537 = vmatprep.subr.bf16.mxu0 0
      %538 = vmatpush1.bf16.xpose.msra.mxu0 0
      %539 = vmatprep.subr.bf16.mxu0 0
      %540 = vmatpush1.bf16.xpose.msra.mxu0 0
      %541 = vmatprep.subr.bf16.mxu0 0
      %542 = vmatpush1.bf16.xpose.msra.mxu0 0
      %543 = vmatprep.subr.bf16.mxu0 0
      %544 = vmatpush1.bf16.xpose.msra.mxu0 0
      %545 = vmatprep.subr.bf16.mxu0 0
      %546 = vmatpush1.bf16.xpose.msra.mxu0 0
      %547 = vmatprep.subr.bf16.mxu0 0
      %548 = vmatpush1.bf16.xpose.msra.mxu0 0
      %549 = vmatprep.subr.bf16.mxu0 0
      %550 = vmatpush1.bf16.xpose.msra.mxu0 0
      %551 = vmatprep.subr.bf16.mxu0 0
      %552 = vmatpush1.bf16.xpose.msra.mxu0 0
      %553 = vmatprep.subr.bf16.mxu0 0
      %554 = vmatpush1.bf16.xpose.msra.mxu0 0
      %555 = vmatprep.subr.bf16.mxu0 0
      %556 = vmatpush1.bf16.xpose.msra.mxu0 0
      %557 = vmatprep.subr.bf16.mxu0 0
      %558 = vmatpush1.bf16.xpose.msra.mxu0 0
      %559 = vmatprep.mubr.bf16.mxu0 0
      %560 = vmatmul.mubr.bf16.gmra.mrb[0].mxu0 %v519
      %v561 = vpop.f32.mrb[0].mxu0
      %v562 = vadd.f32 0.0, %v561
      %v563 = vpop.f32.mrb[0].mxu0
      %v564 = vpop.f32.mrb[0].mxu0
      %v565 = vpop.f32.mrb[0].mxu0
      %566 = vdwg.mxu0
      %v567 = vld [vmem:[#allocation2] sm:$0xff]
      %v568 = vsel %vm451, %v562, -inf
      %569 = vmax.xlane.f32.xlu0 %v568
      %v570 = vpop.xlane.xlu0 %569
      %v571 = vmax.f32 %v567, %v570
      %v572 = vsub.f32 %v567, %v571
      %v573 = vmul.f32 %v572, 1.442695
      %v574 = vpow.pop %v573
      %576 = vset.pattern.permute.xlu0 0
      %577 = vperm.xlu0 %576, %v571
      %v578 = vpop.permute.xlu0 %577
      %v580 = vsub.f32 %v562, %v578
      %v581 = vmul.f32 %v580, 1.442695
      %v582 = vpow.pop %v581
      %v583 = vsel %vm506, 16843009, 0
      %v584 = vunpack.c.0.s8 %v583
      %vm585 = vcmp.ne.s32.totalorder %v584, 0
      %v586 = vsel %vm585, 0.0, %v582
      %v587 = vld [vmem:[#allocation3] sm:$0xff]
      %v588 = vmul.f32 %v574, %v587
      %v589 = vsel %vm451, %v586, 0.0
      %590 = vadd.xlane.f32.xlu0 %v589
      %v591 = vpop.xlane.xlu0 %590
      %v592 = vadd.f32 %v588, %v591
      %vm593 = vcmask 7168
      %594 = vst.msk [vmem:[#allocation3] sm:$0xff] %vm593, %v592
      %v595 = vld [vmem:[#allocation4] sm:$0xff]
      %597 = vset.pattern.permute.xlu0 0
      %598 = vperm.xlu0 %597, %v574
      %v599 = vpop.permute.xlu0 %598
      %v601 = vmul.f32 %v599, %v595
      %v602 = vpack.c.bf16 %v586, %v586
      %v607 = vunpack.c.l.b16 %v501
      %v608 = vunpack.c.l.b16 %v502
      %v609 = vunpack.c.l.b16 %v503
      %v610 = vunpack.c.l.b16 %v504
      %v611 = vpack.c.b16 %v608, %v607
      %v612 = vpack.c.b16 %v610, %v609
      %v616 = vsel %vm451, %v602, 0
      %618 = vmatprep.subr.bf16.mxu0 0
      %619 = vmatpush1.bf16.msra.mxu0 %v611
      %620 = vmatprep.subr.bf16.mxu0 0
      %621 = vmatpush1.bf16.msra.mxu0 %v612
      %622 = vmatprep.subr.bf16.mxu0 0
      %623 = vmatpush1.bf16.msra.mxu0 0
      %624 = vmatprep.subr.bf16.mxu0 0
      %625 = vmatpush1.bf16.msra.mxu0 0
      %626 = vmatprep.subr.bf16.mxu0 0
      %627 = vmatpush1.bf16.msra.mxu0 0
      %628 = vmatprep.subr.bf16.mxu0 0
      %629 = vmatpush1.bf16.msra.mxu0 0
      %630 = vmatprep.subr.bf16.mxu0 0
      %631 = vmatpush1.bf16.msra.mxu0 0
      %632 = vmatprep.subr.bf16.mxu0 0
      %633 = vmatpush1.bf16.msra.mxu0 0
      %634 = vmatprep.subr.bf16.mxu0 0
      %635 = vmatpush1.bf16.msra.mxu0 0
      %636 = vmatprep.subr.bf16.mxu0 0
      %637 = vmatpush1.bf16.msra.mxu0 0
      %638 = vmatprep.subr.bf16.mxu0 0
      %639 = vmatpush1.bf16.msra.mxu0 0
      %640 = vmatprep.subr.bf16.mxu0 0
      %641 = vmatpush1.bf16.msra.mxu0 0
      %642 = vmatprep.subr.bf16.mxu0 0
      %643 = vmatpush1.bf16.msra.mxu0 0
      %644 = vmatprep.subr.bf16.mxu0 0
      %645 = vmatpush1.bf16.msra.mxu0 0
      %646 = vmatprep.subr.bf16.mxu0 0
      %647 = vmatpush1.bf16.msra.mxu0 0
      %648 = vmatprep.subr.bf16.mxu0 0
      %649 = vmatpush1.bf16.msra.mxu0 0
      %650 = vmatprep.mubr.bf16.mxu0 0
      %651 = vmatmul.mubr.bf16.gmra.mrb[0].mxu0 %v616
      %v652 = vpop.f32.mrb[0].mxu0
      %v653 = vadd.f32 0.0, %v652
      %v654 = vpop.f32.mrb[0].mxu0
      %v655 = vpop.f32.mrb[0].mxu0
      %v656 = vpop.f32.mrb[0].mxu0
      %657 = vdwg.mxu0
      %v658 = vadd.f32 %v601, %v653
      %659 = vst.msk [vmem:[#allocation4] sm:$0xff] %vm517, %v658
      %660 = vst.msk [vmem:[#allocation2] sm:$0xff] %vm593, %v571
      %662 = vrot.lane.b32.xlu0 %v496, 120
      %v663 = vpop.permute.xlu0 %662
      %664 = vrot.lane.b32.xlu0 %v515, 120
      %v665 = vpop.permute.xlu0 %664
      %666 = vrot.lane.b32.xlu0 %v516, 120
      %v667 = vpop.permute.xlu0 %666
      %v669 = vsel %vm517, %v663, 0
      %v672 = vsel %vm517, %v665, 0
      %v675 = vsel %vm517, %v667, 0
      %677 = vmatprep.subr.bf16.mxu0 0
      %678 = vmatpush1.bf16.xpose.msra.mxu0 %v672
      %679 = vmatprep.subr.bf16.mxu0 0
      %680 = vmatpush1.bf16.xpose.msra.mxu0 %v675
      %681 = vmatprep.subr.bf16.mxu0 0
      %682 = vmatpush1.bf16.xpose.msra.mxu0 0
      %683 = vmatprep.subr.bf16.mxu0 0
      %684 = vmatpush1.bf16.xpose.msra.mxu0 0
      %685 = vmatprep.subr.bf16.mxu0 0
      %686 = vmatpush1.bf16.xpose.msra.mxu0 0
      %687 = vmatprep.subr.bf16.mxu0 0
      %688 = vmatpush1.bf16.xpose.msra.mxu0 0
      %689 = vmatprep.subr.bf16.mxu0 0
      %690 = vmatpush1.bf16.xpose.msra.mxu0 0
      %691 = vmatprep.subr.bf16.mxu0 0
      %692 = vmatpush1.bf16.xpose.msra.mxu0 0
      %693 = vmatprep.subr.bf16.mxu0 0
      %694 = vmatpush1.bf16.xpose.msra.mxu0 0
      %695 = vmatprep.subr.bf16.mxu0 0
      %696 = vmatpush1.bf16.xpose.msra.mxu0 0
      %697 = vmatprep.subr.bf16.mxu0 0
      %698 = vmatpush1.bf16.xpose.msra.mxu0 0
      %699 = vmatprep.subr.bf16.mxu0 0
      %700 = vmatpush1.bf16.xpose.msra.mxu0 0
      %701 = vmatprep.subr.bf16.mxu0 0
      %702 = vmatpush1.bf16.xpose.msra.mxu0 0
      %703 = vmatprep.subr.bf16.mxu0 0
      %704 = vmatpush1.bf16.xpose.msra.mxu0 0
      %705 = vmatprep.subr.bf16.mxu0 0
      %706 = vmatpush1.bf16.xpose.msra.mxu0 0
      %707 = vmatprep.subr.bf16.mxu0 0
      %708 = vmatpush1.bf16.xpose.msra.mxu0 0
      %709 = vmatprep.mubr.bf16.mxu0 0
      %710 = vmatmul.mubr.bf16.gmra.mrb[0].mxu0 %v669
      %v711 = vpop.f32.mrb[0].mxu0
      %v712 = vadd.f32 0.0, %v711
      %v713 = vpop.f32.mrb[0].mxu0
      %v714 = vpop.f32.mrb[0].mxu0
      %v715 = vpop.f32.mrb[0].mxu0
      %716 = vdwg.mxu0
      %s717 = scalar_lea.vmem [#allocation2], 8
      %v718 = vld [vmem:[%s717] sm:$0xff]
      %v719 = vsel %vm451, %v712, -inf
      %720 = vmax.xlane.f32.xlu0 %v719
      %v721 = vpop.xlane.xlu0 %720
      %v722 = vmax.f32 %v718, %v721
      %v723 = vsub.f32 %v718, %v722
      %v724 = vmul.f32 %v723, 1.442695
      %v725 = vpow.pop %v724
      %727 = vset.pattern.permute.xlu0 0
      %728 = vperm.xlu0 %727, %v722
      %v729 = vpop.permute.xlu0 %728
      %v731 = vsub.f32 %v712, %v729
      %v732 = vmul.f32 %v731, 1.442695
      %v733 = vpow.pop %v732
      %v734 = vsel %vm585, 0.0, %v733
      %s735 = scalar_lea.vmem [#allocation3], 8
      %v736 = vld [vmem:[%s735] sm:$0xff]
      %v737 = vmul.f32 %v725, %v736
      %v738 = vsel %vm451, %v734, 0.0
      %739 = vadd.xlane.f32.xlu0 %v738
      %v740 = vpop.xlane.xlu0 %739
      %v741 = vadd.f32 %v737, %v740
      %742 = vst.msk [vmem:[%s735] sm:$0xff] %vm593, %v741
      %s743 = scalar_lea.vmem [#allocation4], 8
      %v744 = vld [vmem:[%s743] sm:$0xff]
      %746 = vset.pattern.permute.xlu0 0
      %747 = vperm.xlu0 %746, %v725
      %v748 = vpop.permute.xlu0 %747
      %v750 = vmul.f32 %v748, %v744
      %v751 = vpack.c.bf16 %v734, %v734
      %752 = vrot.lane.b32.xlu0 %v611, 120
      %v753 = vpop.permute.xlu0 %752
      %754 = vrot.lane.b32.xlu0 %v612, 120
      %v755 = vpop.permute.xlu0 %754
      %v759 = vsel %vm451, %v751, 0
      %761 = vmatprep.subr.bf16.mxu0 0
      %762 = vmatpush1.bf16.msra.mxu0 %v753
      %763 = vmatprep.subr.bf16.mxu0 0
      %764 = vmatpush1.bf16.msra.mxu0 %v755
      %765 = vmatprep.subr.bf16.mxu0 0
      %766 = vmatpush1.bf16.msra.mxu0 0
      %767 = vmatprep.subr.bf16.mxu0 0
      %768 = vmatpush1.bf16.msra.mxu0 0
      %769 = vmatprep.subr.bf16.mxu0 0
      %770 = vmatpush1.bf16.msra.mxu0 0
      %771 = vmatprep.subr.bf16.mxu0 0
      %772 = vmatpush1.bf16.msra.mxu0 0
      %773 = vmatprep.subr.bf16.mxu0 0
      %774 = vmatpush1.bf16.msra.mxu0 0
      %775 = vmatprep.subr.bf16.mxu0 0
      %776 = vmatpush1.bf16.msra.mxu0 0
      %777 = vmatprep.subr.bf16.mxu0 0
      %778 = vmatpush1.bf16.msra.mxu0 0
      %779 = vmatprep.subr.bf16.mxu0 0
      %780 = vmatpush1.bf16.msra.mxu0 0
      %781 = vmatprep.subr.bf16.mxu0 0
      %782 = vmatpush1.bf16.msra.mxu0 0
      %783 = vmatprep.subr.bf16.mxu0 0
      %784 = vmatpush1.bf16.msra.mxu0 0
      %785 = vmatprep.subr.bf16.mxu0 0
      %786 = vmatpush1.bf16.msra.mxu0 0
      %787 = vmatprep.subr.bf16.mxu0 0
      %788 = vmatpush1.bf16.msra.mxu0 0
      %789 = vmatprep.subr.bf16.mxu0 0
      %790 = vmatpush1.bf16.msra.mxu0 0
      %791 = vmatprep.subr.bf16.mxu0 0
      %792 = vmatpush1.bf16.msra.mxu0 0
      %793 = vmatprep.mubr.bf16.mxu0 0
      %794 = vmatmul.mubr.bf16.gmra.mrb[0].mxu0 %v759
      %v795 = vpop.f32.mrb[0].mxu0
      %v796 = vadd.f32 0.0, %v795
      %v797 = vpop.f32.mrb[0].mxu0
      %v798 = vpop.f32.mrb[0].mxu0
      %v799 = vpop.f32.mrb[0].mxu0
      %800 = vdwg.mxu0
      %v801 = vadd.f32 %v750, %v796
      %802 = vst.msk [vmem:[%s743] sm:$0xff] %vm517, %v801
      %803 = vst.msk [vmem:[%s717] sm:$0xff] %vm593, %v722
      %804 = vrot.lane.b32.xlu0 %v496, 112
      %v805 = vpop.permute.xlu0 %804
      %806 = vrot.lane.b32.xlu0 %v515, 112
      %v807 = vpop.permute.xlu0 %806
      %808 = vrot.lane.b32.xlu0 %v516, 112
      %v809 = vpop.permute.xlu0 %808
      %v811 = vsel %vm517, %v805, 0
      %v814 = vsel %vm517, %v807, 0
      %v817 = vsel %vm517, %v809, 0
      %819 = vmatprep.subr.bf16.mxu0 0
      %820 = vmatpush1.bf16.xpose.msra.mxu0 %v814
      %821 = vmatprep.subr.bf16.mxu0 0
      %822 = vmatpush1.bf16.xpose.msra.mxu0 %v817
      %823 = vmatprep.subr.bf16.mxu0 0
      %824 = vmatpush1.bf16.xpose.msra.mxu0 0
      %825 = vmatprep.subr.bf16.mxu0 0
      %826 = vmatpush1.bf16.xpose.msra.mxu0 0
      %827 = vmatprep.subr.bf16.mxu0 0
      %828 = vmatpush1.bf16.xpose.msra.mxu0 0
      %829 = vmatprep.subr.bf16.mxu0 0
      %830 = vmatpush1.bf16.xpose.msra.mxu0 0
      %831 = vmatprep.subr.bf16.mxu0 0
      %832 = vmatpush1.bf16.xpose.msra.mxu0 0
      %833 = vmatprep.subr.bf16.mxu0 0
      %834 = vmatpush1.bf16.xpose.msra.mxu0 0
      %835 = vmatprep.subr.bf16.mxu0 0
      %836 = vmatpush1.bf16.xpose.msra.mxu0 0
      %837 = vmatprep.subr.bf16.mxu0 0
      %838 = vmatpush1.bf16.xpose.msra.mxu0 0
      %839 = vmatprep.subr.bf16.mxu0 0
      %840 = vmatpush1.bf16.xpose.msra.mxu0 0
      %841 = vmatprep.subr.bf16.mxu0 0
      %842 = vmatpush1.bf16.xpose.msra.mxu0 0
      %843 = vmatprep.subr.bf16.mxu0 0
      %844 = vmatpush1.bf16.xpose.msra.mxu0 0
      %845 = vmatprep.subr.bf16.mxu0 0
      %846 = vmatpush1.bf16.xpose.msra.mxu0 0
      %847 = vmatprep.subr.bf16.mxu0 0
      %848 = vmatpush1.bf16.xpose.msra.mxu0 0
      %849 = vmatprep.subr.bf16.mxu0 0
      %850 = vmatpush1.bf16.xpose.msra.mxu0 0
      %851 = vmatprep.mubr.bf16.mxu0 0
      %852 = vmatmul.mubr.bf16.gmra.mrb[0].mxu0 %v811
      %v853 = vpop.f32.mrb[0].mxu0
      %v854 = vadd.f32 0.0, %v853
      %v855 = vpop.f32.mrb[0].mxu0
      %v856 = vpop.f32.mrb[0].mxu0
      %v857 = vpop.f32.mrb[0].mxu0
      %858 = vdwg.mxu0
      %s859 = scalar_lea.vmem [#allocation2], 16
      %v860 = vld [vmem:[%s859] sm:$0xff]
      %v861 = vsel %vm451, %v854, -inf
      %862 = vmax.xlane.f32.xlu0 %v861
      %v863 = vpop.xlane.xlu0 %862
      %v864 = vmax.f32 %v860, %v863
      %v865 = vsub.f32 %v860, %v864
      %v866 = vmul.f32 %v865, 1.442695
      %v867 = vpow.pop %v866
      %869 = vset.pattern.permute.xlu0 0
      %870 = vperm.xlu0 %869, %v864
      %v871 = vpop.permute.xlu0 %870
      %v873 = vsub.f32 %v854, %v871
      %v874 = vmul.f32 %v873, 1.442695
      %v875 = vpow.pop %v874
      %v876 = vsel %vm585, 0.0, %v875
      %s877 = scalar_lea.vmem [#allocation3], 16
      %v878 = vld [vmem:[%s877] sm:$0xff]
      %v879 = vmul.f32 %v867, %v878
      %v880 = vsel %vm451, %v876, 0.0
      %881 = vadd.xlane.f32.xlu0 %v880
      %v882 = vpop.xlane.xlu0 %881
      %v883 = vadd.f32 %v879, %v882
      %884 = vst.msk [vmem:[%s877] sm:$0xff] %vm593, %v883
      %s885 = scalar_lea.vmem [#allocation4], 16
      %v886 = vld [vmem:[%s885] sm:$0xff]
      %888 = vset.pattern.permute.xlu0 0
      %889 = vperm.xlu0 %888, %v867
      %v890 = vpop.permute.xlu0 %889
      %v892 = vmul.f32 %v890, %v886
      %v893 = vpack.c.bf16 %v876, %v876
      %894 = vrot.lane.b32.xlu0 %v611, 112
      %v895 = vpop.permute.xlu0 %894
      %896 = vrot.lane.b32.xlu0 %v612, 112
      %v897 = vpop.permute.xlu0 %896
      %v901 = vsel %vm451, %v893, 0
      %903 = vmatprep.subr.bf16.mxu0 0
      %904 = vmatpush1.bf16.msra.mxu0 %v895
      %905 = vmatprep.subr.bf16.mxu0 0
      %906 = vmatpush1.bf16.msra.mxu0 %v897
      %907 = vmatprep.subr.bf16.mxu0 0
      %908 = vmatpush1.bf16.msra.mxu0 0
      %909 = vmatprep.subr.bf16.mxu0 0
      %910 = vmatpush1.bf16.msra.mxu0 0
      %911 = vmatprep.subr.bf16.mxu0 0
      %912 = vmatpush1.bf16.msra.mxu0 0
      %913 = vmatprep.subr.bf16.mxu0 0
      %914 = vmatpush1.bf16.msra.mxu0 0
      %915 = vmatprep.subr.bf16.mxu0 0
      %916 = vmatpush1.bf16.msra.mxu0 0
      %917 = vmatprep.subr.bf16.mxu0 0
      %918 = vmatpush1.bf16.msra.mxu0 0
      %919 = vmatprep.subr.bf16.mxu0 0
      %920 = vmatpush1.bf16.msra.mxu0 0
      %921 = vmatprep.subr.bf16.mxu0 0
      %922 = vmatpush1.bf16.msra.mxu0 0
      %923 = vmatprep.subr.bf16.mxu0 0
      %924 = vmatpush1.bf16.msra.mxu0 0
      %925 = vmatprep.subr.bf16.mxu0 0
      %926 = vmatpush1.bf16.msra.mxu0 0
      %927 = vmatprep.subr.bf16.mxu0 0
      %928 = vmatpush1.bf16.msra.mxu0 0
      %929 = vmatprep.subr.bf16.mxu0 0
      %930 = vmatpush1.bf16.msra.mxu0 0
      %931 = vmatprep.subr.bf16.mxu0 0
      %932 = vmatpush1.bf16.msra.mxu0 0
      %933 = vmatprep.subr.bf16.mxu0 0
      %934 = vmatpush1.bf16.msra.mxu0 0
      %935 = vmatprep.mubr.bf16.mxu0 0
      %936 = vmatmul.mubr.bf16.gmra.mrb[0].mxu0 %v901
      %v937 = vpop.f32.mrb[0].mxu0
      %v938 = vadd.f32 0.0, %v937
      %v939 = vpop.f32.mrb[0].mxu0
      %v940 = vpop.f32.mrb[0].mxu0
      %v941 = vpop.f32.mrb[0].mxu0
      %942 = vdwg.mxu0
      %v943 = vadd.f32 %v892, %v938
      %944 = vst.msk [vmem:[%s885] sm:$0xff] %vm517, %v943
      %945 = vst.msk [vmem:[%s859] sm:$0xff] %vm593, %v864
      %946 = vrot.lane.b32.xlu0 %v496, 104
      %v947 = vpop.permute.xlu0 %946
      %948 = vrot.lane.b32.xlu0 %v515, 104
      %v949 = vpop.permute.xlu0 %948
      %950 = vrot.lane.b32.xlu0 %v516, 104
      %v951 = vpop.permute.xlu0 %950
      %v953 = vsel %vm517, %v947, 0
      %v956 = vsel %vm517, %v949, 0
      %v959 = vsel %vm517, %v951, 0
      %961 = vmatprep.subr.bf16.mxu0 0
      %962 = vmatpush1.bf16.xpose.msra.mxu0 %v956
      %963 = vmatprep.subr.bf16.mxu0 0
      %964 = vmatpush1.bf16.xpose.msra.mxu0 %v959
      %965 = vmatprep.subr.bf16.mxu0 0
      %966 = vmatpush1.bf16.xpose.msra.mxu0 0
      %967 = vmatprep.subr.bf16.mxu0 0
      %968 = vmatpush1.bf16.xpose.msra.mxu0 0
      %969 = vmatprep.subr.bf16.mxu0 0
      %970 = vmatpush1.bf16.xpose.msra.mxu0 0
      %971 = vmatprep.subr.bf16.mxu0 0
      %972 = vmatpush1.bf16.xpose.msra.mxu0 0
      %973 = vmatprep.subr.bf16.mxu0 0
      %974 = vmatpush1.bf16.xpose.msra.mxu0 0
      %975 = vmatprep.subr.bf16.mxu0 0
      %976 = vmatpush1.bf16.xpose.msra.mxu0 0
      %977 = vmatprep.subr.bf16.mxu0 0
      %978 = vmatpush1.bf16.xpose.msra.mxu0 0
      %979 = vmatprep.subr.bf16.mxu0 0
      %980 = vmatpush1.bf16.xpose.msra.mxu0 0
      %981 = vmatprep.subr.bf16.mxu0 0
      %982 = vmatpush1.bf16.xpose.msra.mxu0 0
      %983 = vmatprep.subr.bf16.mxu0 0
      %984 = vmatpush1.bf16.xpose.msra.mxu0 0
      %985 = vmatprep.subr.bf16.mxu0 0
      %986 = vmatpush1.bf16.xpose.msra.mxu0 0
      %987 = vmatprep.subr.bf16.mxu0 0
      %988 = vmatpush1.bf16.xpose.msra.mxu0 0
      %989 = vmatprep.subr.bf16.mxu0 0
      %990 = vmatpush1.bf16.xpose.msra.mxu0 0
      %991 = vmatprep.subr.bf16.mxu0 0
      %992 = vmatpush1.bf16.xpose.msra.mxu0 0
      %993 = vmatprep.mubr.bf16.mxu0 0
      %994 = vmatmul.mubr.bf16.gmra.mrb[0].mxu0 %v953
      %v995 = vpop.f32.mrb[0].mxu0
      %v996 = vadd.f32 0.0, %v995
      %v997 = vpop.f32.mrb[0].mxu0
      %v998 = vpop.f32.mrb[0].mxu0
      %v999 = vpop.f32.mrb[0].mxu0
      %1000 = vdwg.mxu0
      %s1001 = scalar_lea.vmem [#allocation2], 24
      %v1002 = vld [vmem:[%s1001] sm:$0xff]
      %v1003 = vsel %vm451, %v996, -inf
      %1004 = vmax.xlane.f32.xlu0 %v1003
      %v1005 = vpop.xlane.xlu0 %1004
      %v1006 = vmax.f32 %v1002, %v1005
      %v1007 = vsub.f32 %v1002, %v1006
      %v1008 = vmul.f32 %v1007, 1.442695
      %v1009 = vpow.pop %v1008
      %1011 = vset.pattern.permute.xlu0 0
      %1012 = vperm.xlu0 %1011, %v1006
      %v1013 = vpop.permute.xlu0 %1012
      %v1015 = vsub.f32 %v996, %v1013
      %v1016 = vmul.f32 %v1015, 1.442695
      %v1017 = vpow.pop %v1016
      %v1018 = vsel %vm585, 0.0, %v1017
      %s1019 = scalar_lea.vmem [#allocation3], 24
      %v1020 = vld [vmem:[%s1019] sm:$0xff]
      %v1021 = vmul.f32 %v1009, %v1020
      %v1022 = vsel %vm451, %v1018, 0.0
      %1023 = vadd.xlane.f32.xlu0 %v1022
      %v1024 = vpop.xlane.xlu0 %1023
      %v1025 = vadd.f32 %v1021, %v1024
      %1026 = vst.msk [vmem:[%s1019] sm:$0xff] %vm593, %v1025
      %s1027 = scalar_lea.vmem [#allocation4], 24
      %v1028 = vld [vmem:[%s1027] sm:$0xff]
      %1030 = vset.pattern.permute.xlu0 0
      %1031 = vperm.xlu0 %1030, %v1009
      %v1032 = vpop.permute.xlu0 %1031
      %v1034 = vmul.f32 %v1032, %v1028
      %v1035 = vpack.c.bf16 %v1018, %v1018
      %1036 = vrot.lane.b32.xlu0 %v611, 104
      %v1037 = vpop.permute.xlu0 %1036
      %1038 = vrot.lane.b32.xlu0 %v612, 104
      %v1039 = vpop.permute.xlu0 %1038
      %v1043 = vsel %vm451, %v1035, 0
      %1045 = vmatprep.subr.bf16.mxu0 0
      %1046 = vmatpush1.bf16.msra.mxu0 %v1037
      %1047 = vmatprep.subr.bf16.mxu0 0
      %1048 = vmatpush1.bf16.msra.mxu0 %v1039
      %1049 = vmatprep.subr.bf16.mxu0 0
      %1050 = vmatpush1.bf16.msra.mxu0 0
      %1051 = vmatprep.subr.bf16.mxu0 0
      %1052 = vmatpush1.bf16.msra.mxu0 0
      %1053 = vmatprep.subr.bf16.mxu0 0
      %1054 = vmatpush1.bf16.msra.mxu0 0
      %1055 = vmatprep.subr.bf16.mxu0 0
      %1056 = vmatpush1.bf16.msra.mxu0 0
      %1057 = vmatprep.subr.bf16.mxu0 0
      %1058 = vmatpush1.bf16.msra.mxu0 0
      %1059 = vmatprep.subr.bf16.mxu0 0
      %1060 = vmatpush1.bf16.msra.mxu0 0
      %1061 = vmatprep.subr.bf16.mxu0 0
      %1062 = vmatpush1.bf16.msra.mxu0 0
      %1063 = vmatprep.subr.bf16.mxu0 0
      %1064 = vmatpush1.bf16.msra.mxu0 0
      %1065 = vmatprep.subr.bf16.mxu0 0
      %1066 = vmatpush1.bf16.msra.mxu0 0
      %1067 = vmatprep.subr.bf16.mxu0 0
      %1068 = vmatpush1.bf16.msra.mxu0 0
      %1069 = vmatprep.subr.bf16.mxu0 0
      %1070 = vmatpush1.bf16.msra.mxu0 0
      %1071 = vmatprep.subr.bf16.mxu0 0
      %1072 = vmatpush1.bf16.msra.mxu0 0
      %1073 = vmatprep.subr.bf16.mxu0 0
      %1074 = vmatpush1.bf16.msra.mxu0 0
      %1075 = vmatprep.subr.bf16.mxu0 0
      %1076 = vmatpush1.bf16.msra.mxu0 0
      %1077 = vmatprep.mubr.bf16.mxu0 0
      %1078 = vmatmul.mubr.bf16.gmra.mrb[0].mxu0 %v1043
      %v1079 = vpop.f32.mrb[0].mxu0
      %v1080 = vadd.f32 0.0, %v1079
      %v1081 = vpop.f32.mrb[0].mxu0
      %v1082 = vpop.f32.mrb[0].mxu0
      %v1083 = vpop.f32.mrb[0].mxu0
      %1084 = vdwg.mxu0
      %v1085 = vadd.f32 %v1034, %v1080
      %1086 = vst.msk [vmem:[%s1027] sm:$0xff] %vm517, %v1085
      %1087 = vst.msk [vmem:[%s1001] sm:$0xff] %vm593, %v1006
      // Predicated region
      $region53: #{mask4former_forward.38} parent=47 // pred_check
        %p1088 = pneg %p406
      $region54: #{mask4former_forward.38} parent=47 // pred_check_branch
        %1090 = sbr.rel (%p1088) target = $region56
      $region55: #{mask4former_forward.38} parent=47 // pred_region
        %v1091 = vld [vmem:[#allocation4] sm:$0xff]
        %v1092 = vld [vmem:[#allocation3] sm:$0xff]
        %v1093 = vrcp.pop %v1092
        %1095 = vset.pattern.permute.xlu0 0
        %1096 = vperm.xlu0 %1095, %v1093
        %v1097 = vpop.permute.xlu0 %1096
        %v1099 = vmul.f32 %v1091, %v1097
        %v1100 = vld [vmem:[%s743] sm:$0xff]
        %v1101 = vld [vmem:[%s735] sm:$0xff]
        %v1102 = vrcp.pop %v1101
        %1104 = vset.pattern.permute.xlu0 0
        %1105 = vperm.xlu0 %1104, %v1102
        %v1106 = vpop.permute.xlu0 %1105
        %v1108 = vmul.f32 %v1100, %v1106
        %v1109 = vld [vmem:[%s885] sm:$0xff]
        %v1110 = vld [vmem:[%s877] sm:$0xff]
        %v1111 = vrcp.pop %v1110
        %1113 = vset.pattern.permute.xlu0 0
        %1114 = vperm.xlu0 %1113, %v1111
        %v1115 = vpop.permute.xlu0 %1114
        %v1117 = vmul.f32 %v1109, %v1115
        %v1118 = vld [vmem:[%s1027] sm:$0xff]
        %v1119 = vld [vmem:[%s1019] sm:$0xff]
        %v1120 = vrcp.pop %v1119
        %1122 = vset.pattern.permute.xlu0 0
        %1123 = vperm.xlu0 %1122, %v1120
        %v1124 = vpop.permute.xlu0 %1123
        %v1126 = vmul.f32 %v1118, %v1124
        %1128 = vrot.lane.b32.xlu0 %v1108, 8
        %v1129 = vpop.permute.xlu0 %1128
        %1132 = vrot.lane.b32.xlu0 %v1117, 16
        %v1133 = vpop.permute.xlu0 %1132
        %1136 = vrot.lane.b32.xlu0 %v1126, 24
        %v1137 = vpop.permute.xlu0 %1136
        %v1139 = vsel %vm517, %v1099, %v1129
        %vm1140 = vcmask 130048
        %v1141 = vsel %vm1140, %v1139, %v1133
        %vm1142 = vcmask 195584
        %v1143 = vsel %vm1142, %v1141, %v1137
        %v1144 = vpack.c.bf16 %v1143, %v1143
        %vm1145 = vcmask 257024
        %1146 = vst.msk [vmem:[%s402] sm:$0xf] %vm1145, %v1144
      $region56: #{mask4former_forward.38} parent=47 // pred_fallthru
        _
      %p1147 = scmp.lt.s32.totalorder %s22, 1
      %s1148 = scalar_select %p1147, %s22, 1
      %s1149 = smul.addr %s1148, 4
      %s1150 = scalar_lea.vmem %s7, %s1149
      // Predicated region
      $region57: #{mask4former_forward.38} parent=47 // pred_check
        %p1151 = pneg %p226
      $region58: #{mask4former_forward.38} parent=47 // pred_check_branch
        %1153 = sbr.rel (%p1151) target = $region60
      $region59: #{mask4former_forward.38} parent=47 // pred_region
        _
      $region60: #{mask4former_forward.38} parent=47 // pred_fallthru
        _
    $region48: #{mask4former_forward.38} parent=5 // pred_fallthru
      _
    %p1154 = scmp.le.s32.totalorder 2, %s13
    // Predicated region
    $region61: #{mask4former_forward.38} parent=5 // pred_check
      %p1155 = pneg %p1154
    $region62: #{mask4former_forward.38} parent=5 // pred_check_branch
      %1157 = sbr.rel (%p1155) target = $region64
    $region63: #{mask4former_forward.38} parent=5 // pred_region
      %s1158 = ssub.s32 %s13, 2
      // Predicated region
      $region65: #{mask4former_forward.38} parent=63 // pred_check
        %p1159 = pneg %p232
      $region66: #{mask4former_forward.38} parent=63 // pred_check_branch
        %1161 = sbr.rel (%p1159) target = $region68
      $region67: #{mask4former_forward.38} parent=63 // pred_region
        %p1162 = scmp.lt.s32.totalorder %s24, 1
        %s1163 = scalar_select %p1162, %s24, 1
        %s1164 = smul.addr %s1163, 4
        %s1165 = scalar_lea.vmem %s7, %s1164
      $region68: #{mask4former_forward.38} parent=63 // pred_fallthru
        _
    $region64: #{mask4former_forward.38} parent=5 // pred_fallthru
      _
  $region6: #{mask4former_forward.38} parent=0 // loop_footer
    %s17 = sadd.s32 1, %s13
  $region7: #{mask4former_forward.38} parent=0 // loop_footer_branch
    %12 = sbr.rel target = $region3
  $region8: #{mask4former_forward.38} parent=0 // loop_exit
    _

// kernel: mask4former_forward.42
$region0: #{mask4former_forward.42}
  #allocation0 [shape = 'u32[]', space=smem, size = 0x4, offset = 0x4, fixed_abs, tag = 'smem constant byte address 0x4 - core index']
  #allocation1 [shape = 'u32[144,128]{1,0:T(1,128)}', space=vmem, size = 0x12000, scoped, tag = 'internal scratch']
  %s0 = inlined_call_operand.vmem [shape: f32[16,32], index: 0, kind: input, shape index: {}]
  %s1 = inlined_call_operand.vmem [shape: f32[1,32], index: 1, kind: input, shape index: {}]
  %s2 = inlined_call_operand.vmem [shape: f32[1,32], index: 2, kind: input, shape index: {}]
  %s3 = inlined_call_operand.vmem [shape: bf16[32,32], index: 3, kind: input, shape index: {}]
  %s4 = inlined_call_operand.vmem [shape: f32[1,32], index: 4, kind: input, shape index: {}]
  %s5 = inlined_call_operand.vmem [shape: bf16[32,32], index: 5, kind: input, shape index: {}]
  %s6 = inlined_call_operand.vmem [shape: f32[1,32], index: 6, kind: input, shape index: {}]
  %s7 = inlined_call_operand.vmem [shape: bf16[32,6], index: 7, kind: input, shape index: {}]
  %s8 = inlined_call_operand.vmem [shape: f32[1,6], index: 8, kind: input, shape index: {}]
  %s9 = inlined_call_operand.vmem [shape: f32[16,6], index: 9, kind: output, shape index: {}]
  %s10 = sld [smem:[#allocation0]]
  $region46: #{mask4former_forward.42} parent=0
    _
  %s12 = ssub.s32 1, %s10
  %s13 = scalar_select 0, %s12, %s10
  // Predicated region
  $region2: #{mask4former_forward.42} parent=0 // pred_check
    _
  $region3: #{mask4former_forward.42} parent=0 // pred_check_branch
    %15 = sbr.rel (0) target = $region5
  $region4: #{mask4former_forward.42} parent=0 // pred_region
    _
  $region5: #{mask4former_forward.42} parent=0 // pred_fallthru
    _
  // Predicated region
  $region6: #{mask4former_forward.42} parent=0 // pred_check
    _
  $region7: #{mask4former_forward.42} parent=0 // pred_check_branch
    %17 = sbr.rel (0) target = $region9
  $region8: #{mask4former_forward.42} parent=0 // pred_region
    _
  $region9: #{mask4former_forward.42} parent=0 // pred_fallthru
    _
  // Predicated region
  $region10: #{mask4former_forward.42} parent=0 // pred_check
    _
  $region11: #{mask4former_forward.42} parent=0 // pred_check_branch
    %19 = sbr.rel (0) target = $region13
  $region12: #{mask4former_forward.42} parent=0 // pred_region
    _
  $region13: #{mask4former_forward.42} parent=0 // pred_fallthru
    _
  // Predicated region
  $region14: #{mask4former_forward.42} parent=0 // pred_check
    _
  $region15: #{mask4former_forward.42} parent=0 // pred_check_branch
    %21 = sbr.rel (0) target = $region17
  $region16: #{mask4former_forward.42} parent=0 // pred_region
    _
  $region17: #{mask4former_forward.42} parent=0 // pred_fallthru
    _
  // Predicated region
  $region18: #{mask4former_forward.42} parent=0 // pred_check
    _
  $region19: #{mask4former_forward.42} parent=0 // pred_check_branch
    %23 = sbr.rel (0) target = $region21
  $region20: #{mask4former_forward.42} parent=0 // pred_region
    _
  $region21: #{mask4former_forward.42} parent=0 // pred_fallthru
    _
  // Predicated region
  $region22: #{mask4former_forward.42} parent=0 // pred_check
    _
  $region23: #{mask4former_forward.42} parent=0 // pred_check_branch
    %25 = sbr.rel (0) target = $region25
  $region24: #{mask4former_forward.42} parent=0 // pred_region
    _
  $region25: #{mask4former_forward.42} parent=0 // pred_fallthru
    _
  // Predicated region
  $region26: #{mask4former_forward.42} parent=0 // pred_check
    _
  $region27: #{mask4former_forward.42} parent=0 // pred_check_branch
    %27 = sbr.rel (0) target = $region29
  $region28: #{mask4former_forward.42} parent=0 // pred_region
    _
  $region29: #{mask4former_forward.42} parent=0 // pred_fallthru
    _
  // Predicated region
  $region30: #{mask4former_forward.42} parent=0 // pred_check
    _
  $region31: #{mask4former_forward.42} parent=0 // pred_check_branch
    %29 = sbr.rel (0) target = $region33
  $region32: #{mask4former_forward.42} parent=0 // pred_region
    _
  $region33: #{mask4former_forward.42} parent=0 // pred_fallthru
    _
  // Predicated region
  $region34: #{mask4former_forward.42} parent=0 // pred_check
    _
  $region35: #{mask4former_forward.42} parent=0 // pred_check_branch
    %31 = sbr.rel (0) target = $region37
  $region36: #{mask4former_forward.42} parent=0 // pred_region
    _
  $region37: #{mask4former_forward.42} parent=0 // pred_fallthru
    _
  %v33 = vld [vmem:[%s0] sm:$0xff]
  %v34 = vld [vmem:[%s0 + $0x8] sm:$0xff]
  %v35 = vld [vmem:[%s1] sm:$0x1]
  %v36 = vld [vmem:[%s2] sm:$0x1]
  %vm37 = vcmask 261120
  %v38 = vsel %vm37, %v33, 0.0
  %39 = vadd.xlane.f32.xlu0 %v38
  %v40 = vpop.xlane.xlu0 %39
  %v41 = vsel %vm37, %v34, 0.0
  %42 = vadd.xlane.f32.xlu0 %v41
  %v43 = vpop.xlane.xlu0 %42
  %v44 = vrcp.pop 32.0
  %v45 = vmul.f32 %v40, %v44
  %v46 = vmul.f32 %v43, %v44
  %v47 = vsub.f32 %v33, %v45
  %v48 = vsub.f32 %v34, %v46
  %v49 = vmul.f32 %v47, %v47
  %v50 = vmul.f32 %v48, %v48
  %v51 = vsel %vm37, %v49, 0.0
  %52 = vadd.xlane.f32.xlu0 %v51
  %v53 = vpop.xlane.xlu0 %52
  %v54 = vsel %vm37, %v50, 0.0
  %55 = vadd.xlane.f32.xlu0 %v54
  %v56 = vpop.xlane.xlu0 %55
  %v57 = vmul.f32 %v53, %v44
  %v58 = vmul.f32 %v56, %v44
  %v59 = vadd.f32 %v57, 1e-05
  %v60 = vadd.f32 %v58, 1e-05
  %v61 = vrsqrt.pop %v59
  %v62 = vrsqrt.pop %v60
  %v63 = vmul.f32 %v47, %v61
  %v64 = vmul.f32 %v48, %v62
  %v66 = vlaneseq
  %v67 = vshrl.u32 %v66, 7
  %v68 = vsub.s32 0, %v67
  %v69 = vrot.slane %v35, %v68
  %v71 = vmul.f32 %v63, %v69
  %v72 = vmul.f32 %v64, %v69
  %v74 = vlaneseq
  %v75 = vshrl.u32 %v74, 7
  %v76 = vsub.s32 0, %v75
  %v77 = vrot.slane %v36, %v76
  %v79 = vadd.f32 %v71, %v77
  %v80 = vadd.f32 %v72, %v77
  %v81 = vld [vmem:[%s3] sm:$0xf]
  %v82 = vld [vmem:[%s3 + $0x4] sm:$0xf]
  %v83 = vld [vmem:[%s3 + $0x8] sm:$0xf]
  %v84 = vld [vmem:[%s3 + $0xc] sm:$0xf]
  %v85 = vld [vmem:[%s4] sm:$0x1]
  %v86 = vpack.c.bf16 %v80, %v79
  %v88 = vlaneseq
  %v89 = vshrl.u32 %v88, 7
  %v90 = vsub.s32 0, %v89
  %v91 = vrot.slane %v85, %v90
  %v97 = vunpack.c.l.b16 %v81
  %v98 = vunpack.c.l.b16 %v82
  %v99 = vunpack.c.l.b16 %v83
  %v100 = vunpack.c.l.b16 %v84
  %v101 = vpack.c.b16 %v98, %v97
  %v102 = vpack.c.b16 %v100, %v99
  %v106 = vsel %vm37, %v86, 0
  %108 = vmatprep.subr.bf16.mxu0 0
  %109 = vmatpush1.bf16.msra.mxu0 %v101
  %110 = vmatprep.subr.bf16.mxu0 0
  %111 = vmatpush1.bf16.msra.mxu0 %v102
  %112 = vmatprep.subr.bf16.mxu0 0
  %113 = vmatpush1.bf16.msra.mxu0 0
  %114 = vmatprep.subr.bf16.mxu0 0
  %115 = vmatpush1.bf16.msra.mxu0 0
  %116 = vmatprep.subr.bf16.mxu0 0
  %117 = vmatpush1.bf16.msra.mxu0 0
  %118 = vmatprep.subr.bf16.mxu0 0
  %119 = vmatpush1.bf16.msra.mxu0 0
  %120 = vmatprep.subr.bf16.mxu0 0
  %121 = vmatpush1.bf16.msra.mxu0 0
  %122 = vmatprep.subr.bf16.mxu0 0
  %123 = vmatpush1.bf16.msra.mxu0 0
  %124 = vmatprep.subr.bf16.mxu0 0
  %125 = vmatpush1.bf16.msra.mxu0 0
  %126 = vmatprep.subr.bf16.mxu0 0
  %127 = vmatpush1.bf16.msra.mxu0 0
  %128 = vmatprep.subr.bf16.mxu0 0
  %129 = vmatpush1.bf16.msra.mxu0 0
  %130 = vmatprep.subr.bf16.mxu0 0
  %131 = vmatpush1.bf16.msra.mxu0 0
  %132 = vmatprep.subr.bf16.mxu0 0
  %133 = vmatpush1.bf16.msra.mxu0 0
  %134 = vmatprep.subr.bf16.mxu0 0
  %135 = vmatpush1.bf16.msra.mxu0 0
  %136 = vmatprep.subr.bf16.mxu0 0
  %137 = vmatpush1.bf16.msra.mxu0 0
  %138 = vmatprep.subr.bf16.mxu0 0
  %139 = vmatpush1.bf16.msra.mxu0 0
  %140 = vmatprep.mubr.bf16.mxu0 0
  %141 = vmatmul.mubr.bf16.gmra.mrb[0].mxu0 %v106
  %v142 = vpop.f32.mrb[0].mxu0
  %v143 = vadd.f32 %v91, %v142
  %v144 = vpop.f32.mrb[0].mxu0
  %v145 = vpop.f32.mrb[0].mxu0
  %v146 = vadd.f32 %v91, %v145
  %v147 = vpop.f32.mrb[0].mxu0
  %148 = vdwg.mxu0
  %v149 = vmax.f32 %v143, 0.0
  %v150 = vmax.f32 %v146, 0.0
  %v151 = vld [vmem:[%s5] sm:$0xf]
  %v152 = vld [vmem:[%s5 + $0x4] sm:$0xf]
  %v153 = vld [vmem:[%s5 + $0x8] sm:$0xf]
  %v154 = vld [vmem:[%s5 + $0xc] sm:$0xf]
  %v155 = vld [vmem:[%s6] sm:$0x1]
  %v156 = vpack.c.bf16 %v150, %v149
  %v158 = vlaneseq
  %v159 = vshrl.u32 %v158, 7
  %v160 = vsub.s32 0, %v159
  %v161 = vrot.slane %v155, %v160
  %v167 = vunpack.c.l.b16 %v151
  %v168 = vunpack.c.l.b16 %v152
  %v169 = vunpack.c.l.b16 %v153
  %v170 = vunpack.c.l.b16 %v154
  %v171 = vpack.c.b16 %v168, %v167
  %v172 = vpack.c.b16 %v170, %v169
  %v176 = vsel %vm37, %v156, 0
  %178 = vmatprep.subr.bf16.mxu0 0
  %179 = vmatpush1.bf16.msra.mxu0 %v171
  %180 = vmatprep.subr.bf16.mxu0 0
  %181 = vmatpush1.bf16.msra.mxu0 %v172
  %182 = vmatprep.subr.bf16.mxu0 0
  %183 = vmatpush1.bf16.msra.mxu0 0
  %184 = vmatprep.subr.bf16.mxu0 0
  %185 = vmatpush1.bf16.msra.mxu0 0
  %186 = vmatprep.subr.bf16.mxu0 0
  %187 = vmatpush1.bf16.msra.mxu0 0
  %188 = vmatprep.subr.bf16.mxu0 0
  %189 = vmatpush1.bf16.msra.mxu0 0
  %190 = vmatprep.subr.bf16.mxu0 0
  %191 = vmatpush1.bf16.msra.mxu0 0
  %192 = vmatprep.subr.bf16.mxu0 0
  %193 = vmatpush1.bf16.msra.mxu0 0
  %194 = vmatprep.subr.bf16.mxu0 0
  %195 = vmatpush1.bf16.msra.mxu0 0
  %196 = vmatprep.subr.bf16.mxu0 0
  %197 = vmatpush1.bf16.msra.mxu0 0
  %198 = vmatprep.subr.bf16.mxu0 0
  %199 = vmatpush1.bf16.msra.mxu0 0
  %200 = vmatprep.subr.bf16.mxu0 0
  %201 = vmatpush1.bf16.msra.mxu0 0
  %202 = vmatprep.subr.bf16.mxu0 0
  %203 = vmatpush1.bf16.msra.mxu0 0
  %204 = vmatprep.subr.bf16.mxu0 0
  %205 = vmatpush1.bf16.msra.mxu0 0
  %206 = vmatprep.subr.bf16.mxu0 0
  %207 = vmatpush1.bf16.msra.mxu0 0
  %208 = vmatprep.subr.bf16.mxu0 0
  %209 = vmatpush1.bf16.msra.mxu0 0
  %210 = vmatprep.mubr.bf16.mxu0 0
  %211 = vmatmul.mubr.bf16.gmra.mrb[0].mxu0 %v176
  %v212 = vpop.f32.mrb[0].mxu0
  %v213 = vadd.f32 %v161, %v212
  %v214 = vpop.f32.mrb[0].mxu0
  %v215 = vpop.f32.mrb[0].mxu0
  %v216 = vadd.f32 %v161, %v215
  %v217 = vpop.f32.mrb[0].mxu0
  %218 = vdwg.mxu0
  %v219 = vmax.f32 %v213, 0.0
  %v220 = vmax.f32 %v216, 0.0
  %v221 = vld [vmem:[%s7] sm:$0xf]
  %v222 = vld [vmem:[%s7 + $0x4] sm:$0xf]
  %v223 = vld [vmem:[%s7 + $0x8] sm:$0xf]
  %v224 = vld [vmem:[%s7 + $0xc] sm:$0xf]
  %v225 = vld [vmem:[%s8] sm:$0x1]
  %v226 = vpack.c.bf16 %v220, %v219
  %v228 = vlaneseq
  %v229 = vshrl.u32 %v228, 7
  %v230 = vsub.s32 0, %v229
  %v231 = vrot.slane %v225, %v230
  %v237 = vunpack.c.l.b16 %v221
  %v238 = vunpack.c.l.b16 %v222
  %v239 = vunpack.c.l.b16 %v223
  %v240 = vunpack.c.l.b16 %v224
  %v241 = vpack.c.b16 %v238, %v237
  %v242 = vpack.c.b16 %v240, %v239
  %v246 = vsel %vm37, %v226, 0
  %248 = vmatprep.subr.bf16.mxu0 0
  %249 = vmatpush1.bf16.msra.mxu0 %v241
  %250 = vmatprep.subr.bf16.mxu0 0
  %251 = vmatpush1.bf16.msra.mxu0 %v242
  %252 = vmatprep.subr.bf16.mxu0 0
  %253 = vmatpush1.bf16.msra.mxu0 0
  %254 = vmatprep.subr.bf16.mxu0 0
  %255 = vmatpush1.bf16.msra.mxu0 0
  %256 = vmatprep.subr.bf16.mxu0 0
  %257 = vmatpush1.bf16.msra.mxu0 0
  %258 = vmatprep.subr.bf16.mxu0 0
  %259 = vmatpush1.bf16.msra.mxu0 0
  %260 = vmatprep.subr.bf16.mxu0 0
  %261 = vmatpush1.bf16.msra.mxu0 0
  %262 = vmatprep.subr.bf16.mxu0 0
  %263 = vmatpush1.bf16.msra.mxu0 0
  %264 = vmatprep.subr.bf16.mxu0 0
  %265 = vmatpush1.bf16.msra.mxu0 0
  %266 = vmatprep.subr.bf16.mxu0 0
  %267 = vmatpush1.bf16.msra.mxu0 0
  %268 = vmatprep.subr.bf16.mxu0 0
  %269 = vmatpush1.bf16.msra.mxu0 0
  %270 = vmatprep.subr.bf16.mxu0 0
  %271 = vmatpush1.bf16.msra.mxu0 0
  %272 = vmatprep.subr.bf16.mxu0 0
  %273 = vmatpush1.bf16.msra.mxu0 0
  %274 = vmatprep.subr.bf16.mxu0 0
  %275 = vmatpush1.bf16.msra.mxu0 0
  %276 = vmatprep.subr.bf16.mxu0 0
  %277 = vmatpush1.bf16.msra.mxu0 0
  %278 = vmatprep.subr.bf16.mxu0 0
  %279 = vmatpush1.bf16.msra.mxu0 0
  %280 = vmatprep.mubr.bf16.mxu0 0
  %281 = vmatmul.mubr.bf16.gmra.mrb[0].mxu0 %v246
  %v282 = vpop.f32.mrb[0].mxu0
  %v283 = vadd.f32 %v231, %v282
  %v284 = vpop.f32.mrb[0].mxu0
  %v285 = vpop.f32.mrb[0].mxu0
  %v286 = vadd.f32 %v231, %v285
  %v287 = vpop.f32.mrb[0].mxu0
  %288 = vdwg.mxu0
  %v289 = vxor.u32 %v283, 2147483648
  %v290 = vxor.u32 %v286, 2147483648
  %v291 = vmul.f32 %v289, 1.442695
  %v292 = vpow.pop %v291
  %v293 = vmul.f32 %v290, 1.442695
  %v294 = vpow.pop %v293
  %v295 = vadd.f32 %v292, 1.0
  %v296 = vadd.f32 %v294, 1.0
  %v297 = vrcp.pop %v295
  %v298 = vmul.f32 1.0, %v297
  %v299 = vrcp.pop %v296
  %v300 = vmul.f32 1.0, %v299
  %vm301 = vcmask 48128
  %302 = vst.msk [vmem:[%s9] sm:$0xff] %vm301, %v298
  %303 = vst.msk [vmem:[%s9 + $0x8] sm:$0xff] %vm301, %v300
  // Predicated region
  $region38: #{mask4former_forward.42} parent=0 // pred_check
    _
  $region39: #{mask4former_forward.42} parent=0 // pred_check_branch
    %305 = sbr.rel (0) target = $region41
  $region40: #{mask4former_forward.42} parent=0 // pred_region
    _
  $region41: #{mask4former_forward.42} parent=0 // pred_fallthru
    _
  // Predicated region
  $region42: #{mask4former_forward.42} parent=0 // pred_check
    _
  $region43: #{mask4former_forward.42} parent=0 // pred_check_branch
    %307 = sbr.rel (0) target = $region45
  $region44: #{mask4former_forward.42} parent=0 // pred_region
    _
  $region45: #{mask4former_forward.42} parent=0 // pred_fallthru
    _

</llo_original>
